<compile_context>
chip_gen: v6e
topology: v6e:2x2x1
jax: 0.10.0
libtpu: 0.0.40
codegen_flags: <defaults>
</compile_context>

<pallas_src>
import math

import jax
import jax.numpy as jnp
from jax.experimental import pallas as pl
from jax.experimental.pallas import tpu as pltpu

NEG_SLOPE = 0.01        # torch F.leaky_relu default
HIGHWAY_BIAS = -2.0     # deepmatcher highway gate bias (assumption)
EPS = 1e-7


def _round_up(x, m):
    return ((x + m - 1) // m) * m


def _leaky_relu(x):
    return jnp.where(x >= 0, x, NEG_SLOPE * x)


def mcan_kernel(
    l_ref, r_ref, m_ref,
    wga0_ref, bca0_ref, wga1_ref, bca1_ref, wtc_ref,
    wgh0_ref, bch0_ref, wgh1_ref, bch1_ref,
    out_ref,
):
    BT, ND = l_ref.shape
    N = m_ref.shape[1] // 2
    D = ND // N
    H = out_ref.shape[1]

    # Lane-dense row loads; every per-token slab below is a free lane slice.
    L = l_ref[...]                         # (BT, N*D)
    R = r_ref[...]                         # (BT, N*D)
    m = m_ref[...]                         # (BT, 2N): [:, :N]=l_mask, [:, N:]=r_mask

    wga0 = wga0_ref[...]; bca0 = bca0_ref[...]
    wga1 = wga1_ref[...]; bca1 = bca1_ref[...]
    wtc = wtc_ref[...]
    wgh0 = wgh0_ref[...]; bch0 = bch0_ref[...]
    wgh1 = wgh1_ref[...]; bch1 = bch1_ref[...]

    def mm(a, w):
        # bf16 (or f32) MXU operands, f32 accumulation.
        return jnp.dot(a.astype(w.dtype), w, preferred_element_type=jnp.float32)

    def sigmoid_fast(x):
        # EUP exp + approximate EUP reciprocal (gate precision non-critical).
        return pl.reciprocal(1.0 + jnp.exp(-x), approx=True)

    def highway_fused(h_in, wg, bcg, width):
        y = mm(h_in, wg) + bcg
        t = _leaky_relu(y[:, :width])
        g = sigmoid_fast(y[:, width:] + HIGHWAY_BIAS)
        return g * t + (1.0 - g) * h_in

    # ---- pairwise |q_i - k_j| for BOTH directions, stacked along rows.
    # Row block k: k <  N -> direction L->R, query = left token k,   keys = R
    #              k >= N -> direction R->L, query = right token k-N, keys = L
    # Lane layout inside a block: key-j-major groups of width D (kron compatible).
    def pair_block(q_slab, k_row):
        return jnp.abs(jnp.tile(q_slab, (1, N)) - k_row)     # (BT, N*D)

    blocks = (
        [pair_block(L[:, i * D:(i + 1) * D], R) for i in range(N)]
        + [pair_block(R[:, i * D:(i + 1) * D], L) for i in range(N)]
    )
    x = jnp.concatenate(blocks, axis=0)                       # (2*N*BT, N*D)

    # ---- highway_layer_alignment: 2 highway layers, transform+gate fused.
    x = highway_fused(x, wga0, bca0, ND)
    x = highway_fused(x, wga1, bca1, ND)

    # ---- linear_token_compare (scalar bias dropped: softmax-invariant).
    sim = mm(x, wtc)                                          # (2*N*BT, N)

    # ---- per-row-block epilogue: softmax -> pad mask -> one-hot -> bmm ->
    #      |q - aligned| -> accumulate classifier layer-0 partials.
    accT = jnp.zeros((BT, 2 * H), jnp.float32)   # cc @ [Wh0 | Gh0] accumulator
    adj = jnp.zeros((BT, D), jnp.float32)        # raw-input fold accumulator

    for k in range(2 * N):
        if k < N:
            q = L[:, k * D:(k + 1) * D]
            V = R
            key_mask = m[:, N:]                  # r_mask
        else:
            i = k - N
            q = R[:, i * D:(i + 1) * D]
            V = L
            key_mask = m[:, :N]                  # l_mask

        s = sim[k * BT:(k + 1) * BT, :]                        # (BT, N)
        mx = jnp.max(s, axis=1, keepdims=True)
        e = jnp.exp(s - mx)
        p = e * pl.reciprocal(jnp.sum(e, axis=1, keepdims=True), approx=True)
        p = p * key_mask                                       # process_pad_token

        # to_one_hot: x*(x==max) / (x*(x==max)+eps)   (exact division).
        row_max = jnp.max(p, axis=1, keepdims=True)
        hard = jnp.where(p == row_max, p, 0.0)
        att = hard / (hard + EPS)                              # (BT, N)

        # bmm(attention, values) for this row block.
        aligned = att[:, 0:1] * V[:, 0:D]
        for j in range(1, N):
            aligned = aligned + att[:, j:j + 1] * V[:, j * D:(j + 1) * D]

        cmp = jnp.abs(q - aligned)                             # (BT, D)
        adj = adj + cmp
        # classifier layer-0 partial: cmp occupies cc lanes [k*D, (k+1)*D).
        accT = accT + mm(cmp, wgh0[k * D:(k + 1) * D, :])      # (BT, 2*H)

    # ---- classifier 2-layer highway. Layer 0 folds the raw input as the
    # scaled sum of H-wide chunks (H == D, so chunks == the cmp token slabs).
    # TODO(synk): HIGHWAY_BIAS=-2, leaky_relu and the sqrt(H/in_dim) raw fold
    # are assumptions about the unshown deepmatcher Transform implementation.
    adj = adj * (H / (2.0 * N * D)) ** 0.5                     # (BT, H)

    y0 = accT + bch0                                           # (BT, 2*H)
    t0 = _leaky_relu(y0[:, :H])
    g0 = sigmoid_fast(y0[:, H:] + HIGHWAY_BIAS)
    h = g0 * t0 + (1.0 - g0) * adj

    h = highway_fused(h, wgh1, bch1, H)

    out_ref[...] = h


def mcan_pallas(left_summary, right_summary, l_mask, r_mask, params,
                *, block_batch=512, matmul_dtype=jnp.bfloat16):
    B, N, D = left_summary.shape
    ND = N * D
    H = params["Wh1"].shape[0]
    assert H == D, "kernel assumes summary feature dim == classifier hidden size"

    # Batch tile: multiple of 8 sublanes; for large B target >=4 grid steps so
    # both v7x TensorCores get >=2 pipelined steps each; capped by block_batch.
    BT = min(block_batch, max(32, _round_up(pl.cdiv(B, 4), 8)))
    BT = min(BT, _round_up(max(B, 1), 8))
    Bp = _round_up(B, BT)

    def pad_b(a):
        if Bp == B:
            return a
        return jnp.pad(a, ((0, Bp - B),) + ((0, 0),) * (a.ndim - 1))

    # Lane-dense (B, N*D) rows; merged (B, 2N) mask (1 = keep).
    l = pad_b(left_summary.astype(jnp.float32).reshape(B, ND))
    r = pad_b(right_summary.astype(jnp.float32).reshape(B, ND))
    m = pad_b(jnp.concatenate(
        [l_mask.reshape(B, N), r_mask.reshape(B, N)], axis=1).astype(jnp.float32))

    # ---- pack weights: block-diagonal kron for per-pair layers, [W|G] fusion.
    eye = jnp.eye(N, dtype=jnp.float32)

    def kron_blk(w):
        return jnp.kron(eye, w)

    def tile_row(v):
        return jnp.tile(v.reshape(1, -1), (1, N))

    wga0 = jnp.concatenate([kron_blk(params["Wa0"]), kron_blk(params["Ga0"])],
                           axis=1).astype(matmul_dtype)            # (ND, 2*ND)
    bca0 = jnp.concatenate([tile_row(params["ba0"]), tile_row(params["ca0"])],
                           axis=1)                                 # (1, 2*ND)
    wga1 = jnp.concatenate([kron_blk(params["Wa1"]), kron_blk(params["Ga1"])],
                           axis=1).astype(matmul_dtype)
    bca1 = jnp.concatenate([tile_row(params["ba1"]), tile_row(params["ca1"])],
                           axis=1)
    wtc = kron_blk(params["w_tc"]).astype(matmul_dtype)            # (ND, N)
    wgh0 = jnp.concatenate([params["Wh0"], params["Gh0"]],
                           axis=1).astype(matmul_dtype)            # (2*ND, 2*H)
    bch0 = jnp.concatenate([params["bh0"], params["ch0"]]).reshape(1, -1)
    wgh1 = jnp.concatenate([params["Wh1"], params["Gh1"]],
                           axis=1).astype(matmul_dtype)            # (H, 2*H)
    bch1 = jnp.concatenate([params["bh1"], params["ch1"]]).reshape(1, -1)

    weights = [wga0, bca0, wga1, bca1, wtc, wgh0, bch0, wgh1, bch1]

    data_specs = [
        pl.BlockSpec((BT, ND), lambda b: (b, 0)),
        pl.BlockSpec((BT, ND), lambda b: (b, 0)),
        pl.BlockSpec((BT, 2 * N), lambda b: (b, 0)),
    ]
    # Weight index_maps are constant, so Pallas never re-DMAs them across steps.
    w_specs = [pl.BlockSpec(w.shape, lambda b: (0, 0)) for w in weights]

    h = pl.pallas_call(
        mcan_kernel,
        out_shape=jax.ShapeDtypeStruct((Bp, H), jnp.float32),
        grid_spec=pltpu.PrefetchScalarGridSpec(
            num_scalar_prefetch=0,
            grid=(Bp // BT,),
            in_specs=data_specs + w_specs,
            out_specs=pl.BlockSpec((BT, H), lambda b: (b, 0)),
        ),
        compiler_params=pltpu.CompilerParams(
            dimension_semantics=("parallel",),
            vmem_limit_bytes=32 * 1024 * 1024),
    )(l, r, m, *weights)

    h = h[:B]
    # label Linear(H, 2) + log_softmax kept outside the kernel so the Pallas
    # output block stays a (BT, H) store instead of a width-2 masked store.
    logits = h @ params["Wl"] + params["bl"]
    return jax.nn.log_softmax(logits, axis=-1)


def init_params(key, N, D):
    H = D
    keys = iter(jax.random.split(key, 24))

    def lin(i, o):
        return jax.random.normal(next(keys), (i, o), jnp.float32) / math.sqrt(i)

    def bias(o):
        return 0.01 * jax.random.normal(next(keys), (o,), jnp.float32)

    return dict(
        # highway_layer_alignment (2-layer-highway, D -> D)
        Wa0=lin(D, D), ba0=bias(D), Ga0=lin(D, D), ca0=bias(D),
        Wa1=lin(D, D), ba1=bias(D), Ga1=lin(D, D), ca1=bias(D),
        # linear_token_compare (D -> 1); bias unused (softmax-invariant)
        w_tc=lin(D, 1), b_tc=bias(1),
        # highway_layer (2-layer-highway, 2*N*D -> H)
        Wh0=lin(2 * N * D, H), bh0=bias(H),
        Gh0=lin(2 * N * D, H), ch0=bias(H),
        Wh1=lin(H, H), bh1=bias(H),
        Gh1=lin(H, H), ch1=bias(H),
        # label (H -> 2)
        Wl=lin(H, 2), bl=bias(2),
    )


if __name__ == "__main__":
    B, N, D = 256, 4, 32    # batch, #canonical text fields, summary/hidden size
    key = jax.random.PRNGKey(0)
    k_l, k_r, k_p = jax.random.split(key, 3)

    left_summary_all = jax.random.normal(k_l, (B, N, D), jnp.float32)
    right_summary_all = jax.random.normal(k_r, (B, N, D), jnp.float32)
    # pad masks derived from attribute lengths in the reference (1 = keep)
    l_mask = jnp.ones((B, N), jnp.float32).at[1, 0].set(0.0)
    r_mask = jnp.ones((B, N), jnp.float32).at[0, N - 1].set(0.0)

    params = init_params(k_p, N, D)

    forward = jax.jit(mcan_pallas)
    out = forward(left_summary_all, right_summary_all, l_mask, r_mask, params)
    out = jax.block_until_ready(out)
    assert out.shape == (B, 2)
    assert bool(jnp.all(jnp.isfinite(out)))
    print("KERNEL_OK")
</pallas_src>

<mosaic_0001>
module attributes {stable_mosaic.version = 11 : i64} {
  func.func @mcan_kernel(%arg0: i32, %arg1: memref<64x128xf32, #tpu.memory_space<vmem>>, %arg2: memref<64x128xf32, #tpu.memory_space<vmem>>, %arg3: memref<64x8xf32, #tpu.memory_space<vmem>>, %arg4: memref<128x256xbf16, #tpu.memory_space<vmem>>, %arg5: memref<1x256xf32, #tpu.memory_space<vmem>>, %arg6: memref<128x256xbf16, #tpu.memory_space<vmem>>, %arg7: memref<1x256xf32, #tpu.memory_space<vmem>>, %arg8: memref<128x4xbf16, #tpu.memory_space<vmem>>, %arg9: memref<256x64xbf16, #tpu.memory_space<vmem>>, %arg10: memref<1x64xf32, #tpu.memory_space<vmem>>, %arg11: memref<32x64xbf16, #tpu.memory_space<vmem>>, %arg12: memref<1x64xf32, #tpu.memory_space<vmem>>, %arg13: memref<64x32xf32, #tpu.memory_space<vmem>>) attributes {dimension_semantics = [#tpu.dimension_semantics<parallel>], iteration_bounds = array<i64: 4>, scalar_prefetch = 0 : i64, scratch_operands = 0 : i64, tpu.core_type = #tpu.core_type<tc>, window_params = [{transform_indices = @transform_0, window_bounds = array<i64: 64, 128>}, {transform_indices = @transform_1, window_bounds = array<i64: 64, 128>}, {transform_indices = @transform_2, window_bounds = array<i64: 64, 8>}, {pipeline_mode = #tpu.pipeline_mode<synchronous>, transform_indices = @transform_3, window_bounds = array<i64: 128, 256>}, {pipeline_mode = #tpu.pipeline_mode<synchronous>, transform_indices = @transform_4, window_bounds = array<i64: 1, 256>}, {pipeline_mode = #tpu.pipeline_mode<synchronous>, transform_indices = @transform_5, window_bounds = array<i64: 128, 256>}, {pipeline_mode = #tpu.pipeline_mode<synchronous>, transform_indices = @transform_6, window_bounds = array<i64: 1, 256>}, {pipeline_mode = #tpu.pipeline_mode<synchronous>, transform_indices = @transform_7, window_bounds = array<i64: 128, 4>}, {pipeline_mode = #tpu.pipeline_mode<synchronous>, transform_indices = @transform_8, window_bounds = array<i64: 256, 64>}, {pipeline_mode = #tpu.pipeline_mode<synchronous>, transform_indices = @transform_9, window_bounds = array<i64: 1, 64>}, {pipeline_mode = #tpu.pipeline_mode<synchronous>, transform_indices = @transform_10, window_bounds = array<i64: 32, 64>}, {pipeline_mode = #tpu.pipeline_mode<synchronous>, transform_indices = @transform_11, window_bounds = array<i64: 1, 64>}, {transform_indices = @transform_12, window_bounds = array<i64: 64, 32>}]} {
    %c0 = arith.constant 0 : index
    %c0_0 = arith.constant 0 : index
    %0 = vector.load %arg1[%c0, %c0_0] : memref<64x128xf32, #tpu.memory_space<vmem>>, vector<64x128xf32>
    %c0_1 = arith.constant 0 : index
    %c0_2 = arith.constant 0 : index
    %1 = vector.load %arg2[%c0_1, %c0_2] : memref<64x128xf32, #tpu.memory_space<vmem>>, vector<64x128xf32>
    %c0_3 = arith.constant 0 : index
    %c0_4 = arith.constant 0 : index
    %2 = vector.load %arg3[%c0_3, %c0_4] : memref<64x8xf32, #tpu.memory_space<vmem>>, vector<64x8xf32>
    %c0_5 = arith.constant 0 : index
    %c0_6 = arith.constant 0 : index
    %3 = vector.load %arg4[%c0_5, %c0_6] : memref<128x256xbf16, #tpu.memory_space<vmem>>, vector<128x256xbf16>
    %c0_7 = arith.constant 0 : index
    %c0_8 = arith.constant 0 : index
    %4 = vector.load %arg5[%c0_7, %c0_8] : memref<1x256xf32, #tpu.memory_space<vmem>>, vector<1x256xf32>
    %c0_9 = arith.constant 0 : index
    %c0_10 = arith.constant 0 : index
    %5 = vector.load %arg6[%c0_9, %c0_10] : memref<128x256xbf16, #tpu.memory_space<vmem>>, vector<128x256xbf16>
    %c0_11 = arith.constant 0 : index
    %c0_12 = arith.constant 0 : index
    %6 = vector.load %arg7[%c0_11, %c0_12] : memref<1x256xf32, #tpu.memory_space<vmem>>, vector<1x256xf32>
    %c0_13 = arith.constant 0 : index
    %c0_14 = arith.constant 0 : index
    %7 = vector.load %arg8[%c0_13, %c0_14] : memref<128x4xbf16, #tpu.memory_space<vmem>>, vector<128x4xbf16>
    %c0_15 = arith.constant 0 : index
    %c0_16 = arith.constant 0 : index
    %8 = vector.load %arg9[%c0_15, %c0_16] : memref<256x64xbf16, #tpu.memory_space<vmem>>, vector<256x64xbf16>
    %c0_17 = arith.constant 0 : index
    %c0_18 = arith.constant 0 : index
    %9 = vector.load %arg10[%c0_17, %c0_18] : memref<1x64xf32, #tpu.memory_space<vmem>>, vector<1x64xf32>
    %c0_19 = arith.constant 0 : index
    %c0_20 = arith.constant 0 : index
    %10 = vector.load %arg11[%c0_19, %c0_20] : memref<32x64xbf16, #tpu.memory_space<vmem>>, vector<32x64xbf16>
    %c0_21 = arith.constant 0 : index
    %c0_22 = arith.constant 0 : index
    %11 = vector.load %arg12[%c0_21, %c0_22] : memref<1x64xf32, #tpu.memory_space<vmem>>, vector<1x64xf32>
    %12 = vector.extract_strided_slice %0 {offsets = [0, 0], sizes = [64, 32], strides = [1, 1]} : vector<64x128xf32> to vector<64x32xf32>
    %13 = tpu.concatenate %12, %12, %12, %12 in 1 : vector<64x32xf32>, vector<64x32xf32>, vector<64x32xf32>, vector<64x32xf32> -> vector<64x128xf32>
    %14 = arith.subf %13, %1 : vector<64x128xf32>
    %15 = math.absf %14 : vector<64x128xf32>
    %16 = vector.extract_strided_slice %0 {offsets = [0, 32], sizes = [64, 32], strides = [1, 1]} : vector<64x128xf32> to vector<64x32xf32>
    %17 = tpu.concatenate %16, %16, %16, %16 in 1 : vector<64x32xf32>, vector<64x32xf32>, vector<64x32xf32>, vector<64x32xf32> -> vector<64x128xf32>
    %18 = arith.subf %17, %1 : vector<64x128xf32>
    %19 = math.absf %18 : vector<64x128xf32>
    %20 = vector.extract_strided_slice %0 {offsets = [0, 64], sizes = [64, 32], strides = [1, 1]} : vector<64x128xf32> to vector<64x32xf32>
    %21 = tpu.concatenate %20, %20, %20, %20 in 1 : vector<64x32xf32>, vector<64x32xf32>, vector<64x32xf32>, vector<64x32xf32> -> vector<64x128xf32>
    %22 = arith.subf %21, %1 : vector<64x128xf32>
    %23 = math.absf %22 : vector<64x128xf32>
    %24 = vector.extract_strided_slice %0 {offsets = [0, 96], sizes = [64, 32], strides = [1, 1]} : vector<64x128xf32> to vector<64x32xf32>
    %25 = tpu.concatenate %24, %24, %24, %24 in 1 : vector<64x32xf32>, vector<64x32xf32>, vector<64x32xf32>, vector<64x32xf32> -> vector<64x128xf32>
    %26 = arith.subf %25, %1 : vector<64x128xf32>
    %27 = math.absf %26 : vector<64x128xf32>
    %28 = vector.extract_strided_slice %1 {offsets = [0, 0], sizes = [64, 32], strides = [1, 1]} : vector<64x128xf32> to vector<64x32xf32>
    %29 = tpu.concatenate %28, %28, %28, %28 in 1 : vector<64x32xf32>, vector<64x32xf32>, vector<64x32xf32>, vector<64x32xf32> -> vector<64x128xf32>
    %30 = arith.subf %29, %0 : vector<64x128xf32>
    %31 = math.absf %30 : vector<64x128xf32>
    %32 = vector.extract_strided_slice %1 {offsets = [0, 32], sizes = [64, 32], strides = [1, 1]} : vector<64x128xf32> to vector<64x32xf32>
    %33 = tpu.concatenate %32, %32, %32, %32 in 1 : vector<64x32xf32>, vector<64x32xf32>, vector<64x32xf32>, vector<64x32xf32> -> vector<64x128xf32>
    %34 = arith.subf %33, %0 : vector<64x128xf32>
    %35 = math.absf %34 : vector<64x128xf32>
    %36 = vector.extract_strided_slice %1 {offsets = [0, 64], sizes = [64, 32], strides = [1, 1]} : vector<64x128xf32> to vector<64x32xf32>
    %37 = tpu.concatenate %36, %36, %36, %36 in 1 : vector<64x32xf32>, vector<64x32xf32>, vector<64x32xf32>, vector<64x32xf32> -> vector<64x128xf32>
    %38 = arith.subf %37, %0 : vector<64x128xf32>
    %39 = math.absf %38 : vector<64x128xf32>
    %40 = vector.extract_strided_slice %1 {offsets = [0, 96], sizes = [64, 32], strides = [1, 1]} : vector<64x128xf32> to vector<64x32xf32>
    %41 = tpu.concatenate %40, %40, %40, %40 in 1 : vector<64x32xf32>, vector<64x32xf32>, vector<64x32xf32>, vector<64x32xf32> -> vector<64x128xf32>
    %42 = arith.subf %41, %0 : vector<64x128xf32>
    %43 = math.absf %42 : vector<64x128xf32>
    %44 = tpu.concatenate %15, %19, %23, %27, %31, %35, %39, %43 in 0 : vector<64x128xf32>, vector<64x128xf32>, vector<64x128xf32>, vector<64x128xf32>, vector<64x128xf32>, vector<64x128xf32>, vector<64x128xf32>, vector<64x128xf32> -> vector<512x128xf32>
    %45 = arith.truncf %44 : vector<512x128xf32> to vector<512x128xbf16>
    %cst = arith.constant dense<0.000000e+00> : vector<512x256xf32>
    %46 = tpu.matmul %45, %3, %cst {dimension_numbers = #tpu.dot_dimension_numbers<[1], [0], [0], [1], [0, 0, 1, 1], [], []>} : vector<512x128xbf16>, vector<128x256xbf16>, vector<512x256xf32> -> vector<512x256xf32>
    %47 = vector.broadcast %4 : vector<1x256xf32> to vector<512x256xf32>
    %48 = arith.addf %46, %47 : vector<512x256xf32>
    %49 = vector.extract_strided_slice %48 {offsets = [0, 0], sizes = [512, 128], strides = [1, 1]} : vector<512x256xf32> to vector<512x128xf32>
    %cst_23 = arith.constant 0.000000e+00 : f32
    %50 = vector.broadcast %cst_23 : f32 to vector<512x128xf32>
    %51 = arith.cmpf oge, %49, %50 : vector<512x128xf32>
    %cst_24 = arith.constant 0.00999999977 : f32
    %52 = vector.broadcast %cst_24 : f32 to vector<512x128xf32>
    %53 = arith.mulf %52, %49 : vector<512x128xf32>
    %54 = arith.select %51, %49, %53 : vector<512x128xi1>, vector<512x128xf32>
    %55 = vector.extract_strided_slice %48 {offsets = [0, 128], sizes = [512, 128], strides = [1, 1]} : vector<512x256xf32> to vector<512x128xf32>
    %cst_25 = arith.constant -2.000000e+00 : f32
    %56 = vector.broadcast %cst_25 : f32 to vector<512x128xf32>
    %57 = arith.addf %55, %56 : vector<512x128xf32>
    %cst_26 = arith.constant 0.000000e+00 : f32
    %58 = vector.broadcast %cst_26 : f32 to vector<512x128xf32>
    %59 = arith.subf %58, %57 : vector<512x128xf32>
    %60 = math.exp %59 : vector<512x128xf32>
    %cst_27 = arith.constant 1.000000e+00 : f32
    %61 = vector.broadcast %cst_27 : f32 to vector<512x128xf32>
    %62 = arith.addf %61, %60 : vector<512x128xf32>
    %63 = tpu.reciprocal %62 {approx = true} : vector<512x128xf32> -> vector<512x128xf32>
    %64 = arith.mulf %63, %54 : vector<512x128xf32>
    %cst_28 = arith.constant 1.000000e+00 : f32
    %65 = vector.broadcast %cst_28 : f32 to vector<512x128xf32>
    %66 = arith.subf %65, %63 : vector<512x128xf32>
    %67 = arith.mulf %66, %44 : vector<512x128xf32>
    %68 = arith.addf %64, %67 : vector<512x128xf32>
    %69 = arith.truncf %68 : vector<512x128xf32> to vector<512x128xbf16>
    %cst_29 = arith.constant dense<0.000000e+00> : vector<512x256xf32>
    %70 = tpu.matmul %69, %5, %cst_29 {dimension_numbers = #tpu.dot_dimension_numbers<[1], [0], [0], [1], [0, 0, 1, 1], [], []>} : vector<512x128xbf16>, vector<128x256xbf16>, vector<512x256xf32> -> vector<512x256xf32>
    %71 = vector.broadcast %6 : vector<1x256xf32> to vector<512x256xf32>
    %72 = arith.addf %70, %71 : vector<512x256xf32>
    %73 = vector.extract_strided_slice %72 {offsets = [0, 0], sizes = [512, 128], strides = [1, 1]} : vector<512x256xf32> to vector<512x128xf32>
    %cst_30 = arith.constant 0.000000e+00 : f32
    %74 = vector.broadcast %cst_30 : f32 to vector<512x128xf32>
    %75 = arith.cmpf oge, %73, %74 : vector<512x128xf32>
    %cst_31 = arith.constant 0.00999999977 : f32
    %76 = vector.broadcast %cst_31 : f32 to vector<512x128xf32>
    %77 = arith.mulf %76, %73 : vector<512x128xf32>
    %78 = arith.select %75, %73, %77 : vector<512x128xi1>, vector<512x128xf32>
    %79 = vector.extract_strided_slice %72 {offsets = [0, 128], sizes = [512, 128], strides = [1, 1]} : vector<512x256xf32> to vector<512x128xf32>
    %cst_32 = arith.constant -2.000000e+00 : f32
    %80 = vector.broadcast %cst_32 : f32 to vector<512x128xf32>
    %81 = arith.addf %79, %80 : vector<512x128xf32>
    %cst_33 = arith.constant 0.000000e+00 : f32
    %82 = vector.broadcast %cst_33 : f32 to vector<512x128xf32>
    %83 = arith.subf %82, %81 : vector<512x128xf32>
    %84 = math.exp %83 : vector<512x128xf32>
    %cst_34 = arith.constant 1.000000e+00 : f32
    %85 = vector.broadcast %cst_34 : f32 to vector<512x128xf32>
    %86 = arith.addf %85, %84 : vector<512x128xf32>
    %87 = tpu.reciprocal %86 {approx = true} : vector<512x128xf32> -> vector<512x128xf32>
    %88 = arith.mulf %87, %78 : vector<512x128xf32>
    %cst_35 = arith.constant 1.000000e+00 : f32
    %89 = vector.broadcast %cst_35 : f32 to vector<512x128xf32>
    %90 = arith.subf %89, %87 : vector<512x128xf32>
    %91 = arith.mulf %90, %68 : vector<512x128xf32>
    %92 = arith.addf %88, %91 : vector<512x128xf32>
    %93 = arith.truncf %92 : vector<512x128xf32> to vector<512x128xbf16>
    %cst_36 = arith.constant dense<0.000000e+00> : vector<512x4xf32>
    %94 = tpu.matmul %93, %7, %cst_36 {dimension_numbers = #tpu.dot_dimension_numbers<[1], [0], [0], [1], [0, 0, 1, 1], [], []>} : vector<512x128xbf16>, vector<128x4xbf16>, vector<512x4xf32> -> vector<512x4xf32>
    %cst_37 = arith.constant 0.000000e+00 : f32
    %95 = vector.broadcast %cst_37 : f32 to vector<64x64xf32>
    %cst_38 = arith.constant 0.000000e+00 : f32
    %96 = vector.broadcast %cst_38 : f32 to vector<64x32xf32>
    %97 = vector.extract_strided_slice %0 {offsets = [0, 0], sizes = [64, 32], strides = [1, 1]} : vector<64x128xf32> to vector<64x32xf32>
    %98 = vector.extract_strided_slice %2 {offsets = [0, 4], sizes = [64, 4], strides = [1, 1]} : vector<64x8xf32> to vector<64x4xf32>
    %99 = vector.extract_strided_slice %94 {offsets = [0, 0], sizes = [64, 4], strides = [1, 1]} : vector<512x4xf32> to vector<64x4xf32>
    %cst_39 = arith.constant dense<0xFF800000> : vector<64xf32>
    %100 = vector.multi_reduction <maximumf>, %99, %cst_39 [1] : vector<64x4xf32> to vector<64xf32>
    %101 = vector.shape_cast %100 : vector<64xf32> to vector<64x1xf32>
    %102 = vector.broadcast %101 : vector<64x1xf32> to vector<64x4xf32>
    %103 = arith.subf %99, %102 : vector<64x4xf32>
    %104 = math.exp %103 : vector<64x4xf32>
    %cst_40 = arith.constant dense<0.000000e+00> : vector<64xf32>
    %105 = vector.multi_reduction <add>, %104, %cst_40 [1] : vector<64x4xf32> to vector<64xf32>
    %106 = vector.shape_cast %105 : vector<64xf32> to vector<64x1xf32>
    %107 = tpu.reciprocal %106 {approx = true} : vector<64x1xf32> -> vector<64x1xf32>
    %108 = vector.broadcast %107 : vector<64x1xf32> to vector<64x4xf32>
    %109 = arith.mulf %104, %108 : vector<64x4xf32>
    %110 = arith.mulf %109, %98 : vector<64x4xf32>
    %cst_41 = arith.constant dense<0xFF800000> : vector<64xf32>
    %111 = vector.multi_reduction <maximumf>, %110, %cst_41 [1] : vector<64x4xf32> to vector<64xf32>
    %112 = vector.shape_cast %111 : vector<64xf32> to vector<64x1xf32>
    %113 = vector.broadcast %112 : vector<64x1xf32> to vector<64x4xf32>
    %114 = arith.cmpf oeq, %110, %113 : vector<64x4xf32>
    %cst_42 = arith.constant 0.000000e+00 : f32
    %115 = vector.broadcast %cst_42 : f32 to vector<64x4xf32>
    %116 = arith.select %114, %110, %115 : vector<64x4xi1>, vector<64x4xf32>
    %cst_43 = arith.constant 1.000000e-07 : f32
    %117 = vector.broadcast %cst_43 : f32 to vector<64x4xf32>
    %118 = arith.addf %116, %117 : vector<64x4xf32>
    %119 = arith.divf %116, %118 : vector<64x4xf32>
    %120 = vector.extract_strided_slice %119 {offsets = [0, 0], sizes = [64, 1], strides = [1, 1]} : vector<64x4xf32> to vector<64x1xf32>
    %121 = vector.extract_strided_slice %1 {offsets = [0, 0], sizes = [64, 32], strides = [1, 1]} : vector<64x128xf32> to vector<64x32xf32>
    %122 = vector.broadcast %120 : vector<64x1xf32> to vector<64x32xf32>
    %123 = arith.mulf %122, %121 : vector<64x32xf32>
    %124 = vector.extract_strided_slice %119 {offsets = [0, 1], sizes = [64, 1], strides = [1, 1]} : vector<64x4xf32> to vector<64x1xf32>
    %125 = vector.extract_strided_slice %1 {offsets = [0, 32], sizes = [64, 32], strides = [1, 1]} : vector<64x128xf32> to vector<64x32xf32>
    %126 = vector.broadcast %124 : vector<64x1xf32> to vector<64x32xf32>
    %127 = arith.mulf %126, %125 : vector<64x32xf32>
    %128 = arith.addf %123, %127 : vector<64x32xf32>
    %129 = vector.extract_strided_slice %119 {offsets = [0, 2], sizes = [64, 1], strides = [1, 1]} : vector<64x4xf32> to vector<64x1xf32>
    %130 = vector.extract_strided_slice %1 {offsets = [0, 64], sizes = [64, 32], strides = [1, 1]} : vector<64x128xf32> to vector<64x32xf32>
    %131 = vector.broadcast %129 : vector<64x1xf32> to vector<64x32xf32>
    %132 = arith.mulf %131, %130 : vector<64x32xf32>
    %133 = arith.addf %128, %132 : vector<64x32xf32>
    %134 = vector.extract_strided_slice %119 {offsets = [0, 3], sizes = [64, 1], strides = [1, 1]} : vector<64x4xf32> to vector<64x1xf32>
    %135 = vector.extract_strided_slice %1 {offsets = [0, 96], sizes = [64, 32], strides = [1, 1]} : vector<64x128xf32> to vector<64x32xf32>
    %136 = vector.broadcast %134 : vector<64x1xf32> to vector<64x32xf32>
    %137 = arith.mulf %136, %135 : vector<64x32xf32>
    %138 = arith.addf %133, %137 : vector<64x32xf32>
    %139 = arith.subf %97, %138 : vector<64x32xf32>
    %140 = math.absf %139 : vector<64x32xf32>
    %141 = arith.addf %96, %140 : vector<64x32xf32>
    %142 = vector.extract_strided_slice %8 {offsets = [0, 0], sizes = [32, 64], strides = [1, 1]} : vector<256x64xbf16> to vector<32x64xbf16>
    %143 = arith.truncf %140 : vector<64x32xf32> to vector<64x32xbf16>
    %cst_44 = arith.constant dense<0.000000e+00> : vector<64x64xf32>
    %144 = tpu.matmul %143, %142, %cst_44 {dimension_numbers = #tpu.dot_dimension_numbers<[1], [0], [0], [1], [0, 0, 1, 1], [], []>} : vector<64x32xbf16>, vector<32x64xbf16>, vector<64x64xf32> -> vector<64x64xf32>
    %145 = arith.addf %95, %144 : vector<64x64xf32>
    %146 = vector.extract_strided_slice %0 {offsets = [0, 32], sizes = [64, 32], strides = [1, 1]} : vector<64x128xf32> to vector<64x32xf32>
    %147 = vector.extract_strided_slice %2 {offsets = [0, 4], sizes = [64, 4], strides = [1, 1]} : vector<64x8xf32> to vector<64x4xf32>
    %148 = vector.extract_strided_slice %94 {offsets = [64, 0], sizes = [64, 4], strides = [1, 1]} : vector<512x4xf32> to vector<64x4xf32>
    %cst_45 = arith.constant dense<0xFF800000> : vector<64xf32>
    %149 = vector.multi_reduction <maximumf>, %148, %cst_45 [1] : vector<64x4xf32> to vector<64xf32>
    %150 = vector.shape_cast %149 : vector<64xf32> to vector<64x1xf32>
    %151 = vector.broadcast %150 : vector<64x1xf32> to vector<64x4xf32>
    %152 = arith.subf %148, %151 : vector<64x4xf32>
    %153 = math.exp %152 : vector<64x4xf32>
    %cst_46 = arith.constant dense<0.000000e+00> : vector<64xf32>
    %154 = vector.multi_reduction <add>, %153, %cst_46 [1] : vector<64x4xf32> to vector<64xf32>
    %155 = vector.shape_cast %154 : vector<64xf32> to vector<64x1xf32>
    %156 = tpu.reciprocal %155 {approx = true} : vector<64x1xf32> -> vector<64x1xf32>
    %157 = vector.broadcast %156 : vector<64x1xf32> to vector<64x4xf32>
    %158 = arith.mulf %153, %157 : vector<64x4xf32>
    %159 = arith.mulf %158, %147 : vector<64x4xf32>
    %cst_47 = arith.constant dense<0xFF800000> : vector<64xf32>
    %160 = vector.multi_reduction <maximumf>, %159, %cst_47 [1] : vector<64x4xf32> to vector<64xf32>
    %161 = vector.shape_cast %160 : vector<64xf32> to vector<64x1xf32>
    %162 = vector.broadcast %161 : vector<64x1xf32> to vector<64x4xf32>
    %163 = arith.cmpf oeq, %159, %162 : vector<64x4xf32>
    %cst_48 = arith.constant 0.000000e+00 : f32
    %164 = vector.broadcast %cst_48 : f32 to vector<64x4xf32>
    %165 = arith.select %163, %159, %164 : vector<64x4xi1>, vector<64x4xf32>
    %cst_49 = arith.constant 1.000000e-07 : f32
    %166 = vector.broadcast %cst_49 : f32 to vector<64x4xf32>
    %167 = arith.addf %165, %166 : vector<64x4xf32>
    %168 = arith.divf %165, %167 : vector<64x4xf32>
    %169 = vector.extract_strided_slice %168 {offsets = [0, 0], sizes = [64, 1], strides = [1, 1]} : vector<64x4xf32> to vector<64x1xf32>
    %170 = vector.extract_strided_slice %1 {offsets = [0, 0], sizes = [64, 32], strides = [1, 1]} : vector<64x128xf32> to vector<64x32xf32>
    %171 = vector.broadcast %169 : vector<64x1xf32> to vector<64x32xf32>
    %172 = arith.mulf %171, %170 : vector<64x32xf32>
    %173 = vector.extract_strided_slice %168 {offsets = [0, 1], sizes = [64, 1], strides = [1, 1]} : vector<64x4xf32> to vector<64x1xf32>
    %174 = vector.extract_strided_slice %1 {offsets = [0, 32], sizes = [64, 32], strides = [1, 1]} : vector<64x128xf32> to vector<64x32xf32>
    %175 = vector.broadcast %173 : vector<64x1xf32> to vector<64x32xf32>
    %176 = arith.mulf %175, %174 : vector<64x32xf32>
    %177 = arith.addf %172, %176 : vector<64x32xf32>
    %178 = vector.extract_strided_slice %168 {offsets = [0, 2], sizes = [64, 1], strides = [1, 1]} : vector<64x4xf32> to vector<64x1xf32>
    %179 = vector.extract_strided_slice %1 {offsets = [0, 64], sizes = [64, 32], strides = [1, 1]} : vector<64x128xf32> to vector<64x32xf32>
    %180 = vector.broadcast %178 : vector<64x1xf32> to vector<64x32xf32>
    %181 = arith.mulf %180, %179 : vector<64x32xf32>
    %182 = arith.addf %177, %181 : vector<64x32xf32>
    %183 = vector.extract_strided_slice %168 {offsets = [0, 3], sizes = [64, 1], strides = [1, 1]} : vector<64x4xf32> to vector<64x1xf32>
    %184 = vector.extract_strided_slice %1 {offsets = [0, 96], sizes = [64, 32], strides = [1, 1]} : vector<64x128xf32> to vector<64x32xf32>
    %185 = vector.broadcast %183 : vector<64x1xf32> to vector<64x32xf32>
    %186 = arith.mulf %185, %184 : vector<64x32xf32>
    %187 = arith.addf %182, %186 : vector<64x32xf32>
    %188 = arith.subf %146, %187 : vector<64x32xf32>
    %189 = math.absf %188 : vector<64x32xf32>
    %190 = arith.addf %141, %189 : vector<64x32xf32>
    %191 = vector.extract_strided_slice %8 {offsets = [32, 0], sizes = [32, 64], strides = [1, 1]} : vector<256x64xbf16> to vector<32x64xbf16>
    %192 = arith.truncf %189 : vector<64x32xf32> to vector<64x32xbf16>
    %cst_50 = arith.constant dense<0.000000e+00> : vector<64x64xf32>
    %193 = tpu.matmul %192, %191, %cst_50 {dimension_numbers = #tpu.dot_dimension_numbers<[1], [0], [0], [1], [0, 0, 1, 1], [], []>} : vector<64x32xbf16>, vector<32x64xbf16>, vector<64x64xf32> -> vector<64x64xf32>
    %194 = arith.addf %145, %193 : vector<64x64xf32>
    %195 = vector.extract_strided_slice %0 {offsets = [0, 64], sizes = [64, 32], strides = [1, 1]} : vector<64x128xf32> to vector<64x32xf32>
    %196 = vector.extract_strided_slice %2 {offsets = [0, 4], sizes = [64, 4], strides = [1, 1]} : vector<64x8xf32> to vector<64x4xf32>
    %197 = vector.extract_strided_slice %94 {offsets = [128, 0], sizes = [64, 4], strides = [1, 1]} : vector<512x4xf32> to vector<64x4xf32>
    %cst_51 = arith.constant dense<0xFF800000> : vector<64xf32>
    %198 = vector.multi_reduction <maximumf>, %197, %cst_51 [1] : vector<64x4xf32> to vector<64xf32>
    %199 = vector.shape_cast %198 : vector<64xf32> to vector<64x1xf32>
    %200 = vector.broadcast %199 : vector<64x1xf32> to vector<64x4xf32>
    %201 = arith.subf %197, %200 : vector<64x4xf32>
    %202 = math.exp %201 : vector<64x4xf32>
    %cst_52 = arith.constant dense<0.000000e+00> : vector<64xf32>
    %203 = vector.multi_reduction <add>, %202, %cst_52 [1] : vector<64x4xf32> to vector<64xf32>
    %204 = vector.shape_cast %203 : vector<64xf32> to vector<64x1xf32>
    %205 = tpu.reciprocal %204 {approx = true} : vector<64x1xf32> -> vector<64x1xf32>
    %206 = vector.broadcast %205 : vector<64x1xf32> to vector<64x4xf32>
    %207 = arith.mulf %202, %206 : vector<64x4xf32>
    %208 = arith.mulf %207, %196 : vector<64x4xf32>
    %cst_53 = arith.constant dense<0xFF800000> : vector<64xf32>
    %209 = vector.multi_reduction <maximumf>, %208, %cst_53 [1] : vector<64x4xf32> to vector<64xf32>
    %210 = vector.shape_cast %209 : vector<64xf32> to vector<64x1xf32>
    %211 = vector.broadcast %210 : vector<64x1xf32> to vector<64x4xf32>
    %212 = arith.cmpf oeq, %208, %211 : vector<64x4xf32>
    %cst_54 = arith.constant 0.000000e+00 : f32
    %213 = vector.broadcast %cst_54 : f32 to vector<64x4xf32>
    %214 = arith.select %212, %208, %213 : vector<64x4xi1>, vector<64x4xf32>
    %cst_55 = arith.constant 1.000000e-07 : f32
    %215 = vector.broadcast %cst_55 : f32 to vector<64x4xf32>
    %216 = arith.addf %214, %215 : vector<64x4xf32>
    %217 = arith.divf %214, %216 : vector<64x4xf32>
    %218 = vector.extract_strided_slice %217 {offsets = [0, 0], sizes = [64, 1], strides = [1, 1]} : vector<64x4xf32> to vector<64x1xf32>
    %219 = vector.extract_strided_slice %1 {offsets = [0, 0], sizes = [64, 32], strides = [1, 1]} : vector<64x128xf32> to vector<64x32xf32>
    %220 = vector.broadcast %218 : vector<64x1xf32> to vector<64x32xf32>
    %221 = arith.mulf %220, %219 : vector<64x32xf32>
    %222 = vector.extract_strided_slice %217 {offsets = [0, 1], sizes = [64, 1], strides = [1, 1]} : vector<64x4xf32> to vector<64x1xf32>
    %223 = vector.extract_strided_slice %1 {offsets = [0, 32], sizes = [64, 32], strides = [1, 1]} : vector<64x128xf32> to vector<64x32xf32>
    %224 = vector.broadcast %222 : vector<64x1xf32> to vector<64x32xf32>
    %225 = arith.mulf %224, %223 : vector<64x32xf32>
    %226 = arith.addf %221, %225 : vector<64x32xf32>
    %227 = vector.extract_strided_slice %217 {offsets = [0, 2], sizes = [64, 1], strides = [1, 1]} : vector<64x4xf32> to vector<64x1xf32>
    %228 = vector.extract_strided_slice %1 {offsets = [0, 64], sizes = [64, 32], strides = [1, 1]} : vector<64x128xf32> to vector<64x32xf32>
    %229 = vector.broadcast %227 : vector<64x1xf32> to vector<64x32xf32>
    %230 = arith.mulf %229, %228 : vector<64x32xf32>
    %231 = arith.addf %226, %230 : vector<64x32xf32>
    %232 = vector.extract_strided_slice %217 {offsets = [0, 3], sizes = [64, 1], strides = [1, 1]} : vector<64x4xf32> to vector<64x1xf32>
    %233 = vector.extract_strided_slice %1 {offsets = [0, 96], sizes = [64, 32], strides = [1, 1]} : vector<64x128xf32> to vector<64x32xf32>
    %234 = vector.broadcast %232 : vector<64x1xf32> to vector<64x32xf32>
    %235 = arith.mulf %234, %233 : vector<64x32xf32>
    %236 = arith.addf %231, %235 : vector<64x32xf32>
    %237 = arith.subf %195, %236 : vector<64x32xf32>
    %238 = math.absf %237 : vector<64x32xf32>
    %239 = arith.addf %190, %238 : vector<64x32xf32>
    %240 = vector.extract_strided_slice %8 {offsets = [64, 0], sizes = [32, 64], strides = [1, 1]} : vector<256x64xbf16> to vector<32x64xbf16>
    %241 = arith.truncf %238 : vector<64x32xf32> to vector<64x32xbf16>
    %cst_56 = arith.constant dense<0.000000e+00> : vector<64x64xf32>
    %242 = tpu.matmul %241, %240, %cst_56 {dimension_numbers = #tpu.dot_dimension_numbers<[1], [0], [0], [1], [0, 0, 1, 1], [], []>} : vector<64x32xbf16>, vector<32x64xbf16>, vector<64x64xf32> -> vector<64x64xf32>
    %243 = arith.addf %194, %242 : vector<64x64xf32>
    %244 = vector.extract_strided_slice %0 {offsets = [0, 96], sizes = [64, 32], strides = [1, 1]} : vector<64x128xf32> to vector<64x32xf32>
    %245 = vector.extract_strided_slice %2 {offsets = [0, 4], sizes = [64, 4], strides = [1, 1]} : vector<64x8xf32> to vector<64x4xf32>
    %246 = vector.extract_strided_slice %94 {offsets = [192, 0], sizes = [64, 4], strides = [1, 1]} : vector<512x4xf32> to vector<64x4xf32>
    %cst_57 = arith.constant dense<0xFF800000> : vector<64xf32>
    %247 = vector.multi_reduction <maximumf>, %246, %cst_57 [1] : vector<64x4xf32> to vector<64xf32>
    %248 = vector.shape_cast %247 : vector<64xf32> to vector<64x1xf32>
    %249 = vector.broadcast %248 : vector<64x1xf32> to vector<64x4xf32>
    %250 = arith.subf %246, %249 : vector<64x4xf32>
    %251 = math.exp %250 : vector<64x4xf32>
    %cst_58 = arith.constant dense<0.000000e+00> : vector<64xf32>
    %252 = vector.multi_reduction <add>, %251, %cst_58 [1] : vector<64x4xf32> to vector<64xf32>
    %253 = vector.shape_cast %252 : vector<64xf32> to vector<64x1xf32>
    %254 = tpu.reciprocal %253 {approx = true} : vector<64x1xf32> -> vector<64x1xf32>
    %255 = vector.broadcast %254 : vector<64x1xf32> to vector<64x4xf32>
    %256 = arith.mulf %251, %255 : vector<64x4xf32>
    %257 = arith.mulf %256, %245 : vector<64x4xf32>
    %cst_59 = arith.constant dense<0xFF800000> : vector<64xf32>
    %258 = vector.multi_reduction <maximumf>, %257, %cst_59 [1] : vector<64x4xf32> to vector<64xf32>
    %259 = vector.shape_cast %258 : vector<64xf32> to vector<64x1xf32>
    %260 = vector.broadcast %259 : vector<64x1xf32> to vector<64x4xf32>
    %261 = arith.cmpf oeq, %257, %260 : vector<64x4xf32>
    %cst_60 = arith.constant 0.000000e+00 : f32
    %262 = vector.broadcast %cst_60 : f32 to vector<64x4xf32>
    %263 = arith.select %261, %257, %262 : vector<64x4xi1>, vector<64x4xf32>
    %cst_61 = arith.constant 1.000000e-07 : f32
    %264 = vector.broadcast %cst_61 : f32 to vector<64x4xf32>
    %265 = arith.addf %263, %264 : vector<64x4xf32>
    %266 = arith.divf %263, %265 : vector<64x4xf32>
    %267 = vector.extract_strided_slice %266 {offsets = [0, 0], sizes = [64, 1], strides = [1, 1]} : vector<64x4xf32> to vector<64x1xf32>
    %268 = vector.extract_strided_slice %1 {offsets = [0, 0], sizes = [64, 32], strides = [1, 1]} : vector<64x128xf32> to vector<64x32xf32>
    %269 = vector.broadcast %267 : vector<64x1xf32> to vector<64x32xf32>
    %270 = arith.mulf %269, %268 : vector<64x32xf32>
    %271 = vector.extract_strided_slice %266 {offsets = [0, 1], sizes = [64, 1], strides = [1, 1]} : vector<64x4xf32> to vector<64x1xf32>
    %272 = vector.extract_strided_slice %1 {offsets = [0, 32], sizes = [64, 32], strides = [1, 1]} : vector<64x128xf32> to vector<64x32xf32>
    %273 = vector.broadcast %271 : vector<64x1xf32> to vector<64x32xf32>
    %274 = arith.mulf %273, %272 : vector<64x32xf32>
    %275 = arith.addf %270, %274 : vector<64x32xf32>
    %276 = vector.extract_strided_slice %266 {offsets = [0, 2], sizes = [64, 1], strides = [1, 1]} : vector<64x4xf32> to vector<64x1xf32>
    %277 = vector.extract_strided_slice %1 {offsets = [0, 64], sizes = [64, 32], strides = [1, 1]} : vector<64x128xf32> to vector<64x32xf32>
    %278 = vector.broadcast %276 : vector<64x1xf32> to vector<64x32xf32>
    %279 = arith.mulf %278, %277 : vector<64x32xf32>
    %280 = arith.addf %275, %279 : vector<64x32xf32>
    %281 = vector.extract_strided_slice %266 {offsets = [0, 3], sizes = [64, 1], strides = [1, 1]} : vector<64x4xf32> to vector<64x1xf32>
    %282 = vector.extract_strided_slice %1 {offsets = [0, 96], sizes = [64, 32], strides = [1, 1]} : vector<64x128xf32> to vector<64x32xf32>
    %283 = vector.broadcast %281 : vector<64x1xf32> to vector<64x32xf32>
    %284 = arith.mulf %283, %282 : vector<64x32xf32>
    %285 = arith.addf %280, %284 : vector<64x32xf32>
    %286 = arith.subf %244, %285 : vector<64x32xf32>
    %287 = math.absf %286 : vector<64x32xf32>
    %288 = arith.addf %239, %287 : vector<64x32xf32>
    %289 = vector.extract_strided_slice %8 {offsets = [96, 0], sizes = [32, 64], strides = [1, 1]} : vector<256x64xbf16> to vector<32x64xbf16>
    %290 = arith.truncf %287 : vector<64x32xf32> to vector<64x32xbf16>
    %cst_62 = arith.constant dense<0.000000e+00> : vector<64x64xf32>
    %291 = tpu.matmul %290, %289, %cst_62 {dimension_numbers = #tpu.dot_dimension_numbers<[1], [0], [0], [1], [0, 0, 1, 1], [], []>} : vector<64x32xbf16>, vector<32x64xbf16>, vector<64x64xf32> -> vector<64x64xf32>
    %292 = arith.addf %243, %291 : vector<64x64xf32>
    %293 = vector.extract_strided_slice %1 {offsets = [0, 0], sizes = [64, 32], strides = [1, 1]} : vector<64x128xf32> to vector<64x32xf32>
    %294 = vector.extract_strided_slice %2 {offsets = [0, 0], sizes = [64, 4], strides = [1, 1]} : vector<64x8xf32> to vector<64x4xf32>
    %295 = vector.extract_strided_slice %94 {offsets = [256, 0], sizes = [64, 4], strides = [1, 1]} : vector<512x4xf32> to vector<64x4xf32>
    %cst_63 = arith.constant dense<0xFF800000> : vector<64xf32>
    %296 = vector.multi_reduction <maximumf>, %295, %cst_63 [1] : vector<64x4xf32> to vector<64xf32>
    %297 = vector.shape_cast %296 : vector<64xf32> to vector<64x1xf32>
    %298 = vector.broadcast %297 : vector<64x1xf32> to vector<64x4xf32>
    %299 = arith.subf %295, %298 : vector<64x4xf32>
    %300 = math.exp %299 : vector<64x4xf32>
    %cst_64 = arith.constant dense<0.000000e+00> : vector<64xf32>
    %301 = vector.multi_reduction <add>, %300, %cst_64 [1] : vector<64x4xf32> to vector<64xf32>
    %302 = vector.shape_cast %301 : vector<64xf32> to vector<64x1xf32>
    %303 = tpu.reciprocal %302 {approx = true} : vector<64x1xf32> -> vector<64x1xf32>
    %304 = vector.broadcast %303 : vector<64x1xf32> to vector<64x4xf32>
    %305 = arith.mulf %300, %304 : vector<64x4xf32>
    %306 = arith.mulf %305, %294 : vector<64x4xf32>
    %cst_65 = arith.constant dense<0xFF800000> : vector<64xf32>
    %307 = vector.multi_reduction <maximumf>, %306, %cst_65 [1] : vector<64x4xf32> to vector<64xf32>
    %308 = vector.shape_cast %307 : vector<64xf32> to vector<64x1xf32>
    %309 = vector.broadcast %308 : vector<64x1xf32> to vector<64x4xf32>
    %310 = arith.cmpf oeq, %306, %309 : vector<64x4xf32>
    %cst_66 = arith.constant 0.000000e+00 : f32
    %311 = vector.broadcast %cst_66 : f32 to vector<64x4xf32>
    %312 = arith.select %310, %306, %311 : vector<64x4xi1>, vector<64x4xf32>
    %cst_67 = arith.constant 1.000000e-07 : f32
    %313 = vector.broadcast %cst_67 : f32 to vector<64x4xf32>
    %314 = arith.addf %312, %313 : vector<64x4xf32>
    %315 = arith.divf %312, %314 : vector<64x4xf32>
    %316 = vector.extract_strided_slice %315 {offsets = [0, 0], sizes = [64, 1], strides = [1, 1]} : vector<64x4xf32> to vector<64x1xf32>
    %317 = vector.extract_strided_slice %0 {offsets = [0, 0], sizes = [64, 32], strides = [1, 1]} : vector<64x128xf32> to vector<64x32xf32>
    %318 = vector.broadcast %316 : vector<64x1xf32> to vector<64x32xf32>
    %319 = arith.mulf %318, %317 : vector<64x32xf32>
    %320 = vector.extract_strided_slice %315 {offsets = [0, 1], sizes = [64, 1], strides = [1, 1]} : vector<64x4xf32> to vector<64x1xf32>
    %321 = vector.extract_strided_slice %0 {offsets = [0, 32], sizes = [64, 32], strides = [1, 1]} : vector<64x128xf32> to vector<64x32xf32>
    %322 = vector.broadcast %320 : vector<64x1xf32> to vector<64x32xf32>
    %323 = arith.mulf %322, %321 : vector<64x32xf32>
    %324 = arith.addf %319, %323 : vector<64x32xf32>
    %325 = vector.extract_strided_slice %315 {offsets = [0, 2], sizes = [64, 1], strides = [1, 1]} : vector<64x4xf32> to vector<64x1xf32>
    %326 = vector.extract_strided_slice %0 {offsets = [0, 64], sizes = [64, 32], strides = [1, 1]} : vector<64x128xf32> to vector<64x32xf32>
    %327 = vector.broadcast %325 : vector<64x1xf32> to vector<64x32xf32>
    %328 = arith.mulf %327, %326 : vector<64x32xf32>
    %329 = arith.addf %324, %328 : vector<64x32xf32>
    %330 = vector.extract_strided_slice %315 {offsets = [0, 3], sizes = [64, 1], strides = [1, 1]} : vector<64x4xf32> to vector<64x1xf32>
    %331 = vector.extract_strided_slice %0 {offsets = [0, 96], sizes = [64, 32], strides = [1, 1]} : vector<64x128xf32> to vector<64x32xf32>
    %332 = vector.broadcast %330 : vector<64x1xf32> to vector<64x32xf32>
    %333 = arith.mulf %332, %331 : vector<64x32xf32>
    %334 = arith.addf %329, %333 : vector<64x32xf32>
    %335 = arith.subf %293, %334 : vector<64x32xf32>
    %336 = math.absf %335 : vector<64x32xf32>
    %337 = arith.addf %288, %336 : vector<64x32xf32>
    %338 = vector.extract_strided_slice %8 {offsets = [128, 0], sizes = [32, 64], strides = [1, 1]} : vector<256x64xbf16> to vector<32x64xbf16>
    %339 = arith.truncf %336 : vector<64x32xf32> to vector<64x32xbf16>
    %cst_68 = arith.constant dense<0.000000e+00> : vector<64x64xf32>
    %340 = tpu.matmul %339, %338, %cst_68 {dimension_numbers = #tpu.dot_dimension_numbers<[1], [0], [0], [1], [0, 0, 1, 1], [], []>} : vector<64x32xbf16>, vector<32x64xbf16>, vector<64x64xf32> -> vector<64x64xf32>
    %341 = arith.addf %292, %340 : vector<64x64xf32>
    %342 = vector.extract_strided_slice %1 {offsets = [0, 32], sizes = [64, 32], strides = [1, 1]} : vector<64x128xf32> to vector<64x32xf32>
    %343 = vector.extract_strided_slice %2 {offsets = [0, 0], sizes = [64, 4], strides = [1, 1]} : vector<64x8xf32> to vector<64x4xf32>
    %344 = vector.extract_strided_slice %94 {offsets = [320, 0], sizes = [64, 4], strides = [1, 1]} : vector<512x4xf32> to vector<64x4xf32>
    %cst_69 = arith.constant dense<0xFF800000> : vector<64xf32>
    %345 = vector.multi_reduction <maximumf>, %344, %cst_69 [1] : vector<64x4xf32> to vector<64xf32>
    %346 = vector.shape_cast %345 : vector<64xf32> to vector<64x1xf32>
    %347 = vector.broadcast %346 : vector<64x1xf32> to vector<64x4xf32>
    %348 = arith.subf %344, %347 : vector<64x4xf32>
    %349 = math.exp %348 : vector<64x4xf32>
    %cst_70 = arith.constant dense<0.000000e+00> : vector<64xf32>
    %350 = vector.multi_reduction <add>, %349, %cst_70 [1] : vector<64x4xf32> to vector<64xf32>
    %351 = vector.shape_cast %350 : vector<64xf32> to vector<64x1xf32>
    %352 = tpu.reciprocal %351 {approx = true} : vector<64x1xf32> -> vector<64x1xf32>
    %353 = vector.broadcast %352 : vector<64x1xf32> to vector<64x4xf32>
    %354 = arith.mulf %349, %353 : vector<64x4xf32>
    %355 = arith.mulf %354, %343 : vector<64x4xf32>
    %cst_71 = arith.constant dense<0xFF800000> : vector<64xf32>
    %356 = vector.multi_reduction <maximumf>, %355, %cst_71 [1] : vector<64x4xf32> to vector<64xf32>
    %357 = vector.shape_cast %356 : vector<64xf32> to vector<64x1xf32>
    %358 = vector.broadcast %357 : vector<64x1xf32> to vector<64x4xf32>
    %359 = arith.cmpf oeq, %355, %358 : vector<64x4xf32>
    %cst_72 = arith.constant 0.000000e+00 : f32
    %360 = vector.broadcast %cst_72 : f32 to vector<64x4xf32>
    %361 = arith.select %359, %355, %360 : vector<64x4xi1>, vector<64x4xf32>
    %cst_73 = arith.constant 1.000000e-07 : f32
    %362 = vector.broadcast %cst_73 : f32 to vector<64x4xf32>
    %363 = arith.addf %361, %362 : vector<64x4xf32>
    %364 = arith.divf %361, %363 : vector<64x4xf32>
    %365 = vector.extract_strided_slice %364 {offsets = [0, 0], sizes = [64, 1], strides = [1, 1]} : vector<64x4xf32> to vector<64x1xf32>
    %366 = vector.extract_strided_slice %0 {offsets = [0, 0], sizes = [64, 32], strides = [1, 1]} : vector<64x128xf32> to vector<64x32xf32>
    %367 = vector.broadcast %365 : vector<64x1xf32> to vector<64x32xf32>
    %368 = arith.mulf %367, %366 : vector<64x32xf32>
    %369 = vector.extract_strided_slice %364 {offsets = [0, 1], sizes = [64, 1], strides = [1, 1]} : vector<64x4xf32> to vector<64x1xf32>
    %370 = vector.extract_strided_slice %0 {offsets = [0, 32], sizes = [64, 32], strides = [1, 1]} : vector<64x128xf32> to vector<64x32xf32>
    %371 = vector.broadcast %369 : vector<64x1xf32> to vector<64x32xf32>
    %372 = arith.mulf %371, %370 : vector<64x32xf32>
    %373 = arith.addf %368, %372 : vector<64x32xf32>
    %374 = vector.extract_strided_slice %364 {offsets = [0, 2], sizes = [64, 1], strides = [1, 1]} : vector<64x4xf32> to vector<64x1xf32>
    %375 = vector.extract_strided_slice %0 {offsets = [0, 64], sizes = [64, 32], strides = [1, 1]} : vector<64x128xf32> to vector<64x32xf32>
    %376 = vector.broadcast %374 : vector<64x1xf32> to vector<64x32xf32>
    %377 = arith.mulf %376, %375 : vector<64x32xf32>
    %378 = arith.addf %373, %377 : vector<64x32xf32>
    %379 = vector.extract_strided_slice %364 {offsets = [0, 3], sizes = [64, 1], strides = [1, 1]} : vector<64x4xf32> to vector<64x1xf32>
    %380 = vector.extract_strided_slice %0 {offsets = [0, 96], sizes = [64, 32], strides = [1, 1]} : vector<64x128xf32> to vector<64x32xf32>
    %381 = vector.broadcast %379 : vector<64x1xf32> to vector<64x32xf32>
    %382 = arith.mulf %381, %380 : vector<64x32xf32>
    %383 = arith.addf %378, %382 : vector<64x32xf32>
    %384 = arith.subf %342, %383 : vector<64x32xf32>
    %385 = math.absf %384 : vector<64x32xf32>
    %386 = arith.addf %337, %385 : vector<64x32xf32>
    %387 = vector.extract_strided_slice %8 {offsets = [160, 0], sizes = [32, 64], strides = [1, 1]} : vector<256x64xbf16> to vector<32x64xbf16>
    %388 = arith.truncf %385 : vector<64x32xf32> to vector<64x32xbf16>
    %cst_74 = arith.constant dense<0.000000e+00> : vector<64x64xf32>
    %389 = tpu.matmul %388, %387, %cst_74 {dimension_numbers = #tpu.dot_dimension_numbers<[1], [0], [0], [1], [0, 0, 1, 1], [], []>} : vector<64x32xbf16>, vector<32x64xbf16>, vector<64x64xf32> -> vector<64x64xf32>
    %390 = arith.addf %341, %389 : vector<64x64xf32>
    %391 = vector.extract_strided_slice %1 {offsets = [0, 64], sizes = [64, 32], strides = [1, 1]} : vector<64x128xf32> to vector<64x32xf32>
    %392 = vector.extract_strided_slice %2 {offsets = [0, 0], sizes = [64, 4], strides = [1, 1]} : vector<64x8xf32> to vector<64x4xf32>
    %393 = vector.extract_strided_slice %94 {offsets = [384, 0], sizes = [64, 4], strides = [1, 1]} : vector<512x4xf32> to vector<64x4xf32>
    %cst_75 = arith.constant dense<0xFF800000> : vector<64xf32>
    %394 = vector.multi_reduction <maximumf>, %393, %cst_75 [1] : vector<64x4xf32> to vector<64xf32>
    %395 = vector.shape_cast %394 : vector<64xf32> to vector<64x1xf32>
    %396 = vector.broadcast %395 : vector<64x1xf32> to vector<64x4xf32>
    %397 = arith.subf %393, %396 : vector<64x4xf32>
    %398 = math.exp %397 : vector<64x4xf32>
    %cst_76 = arith.constant dense<0.000000e+00> : vector<64xf32>
    %399 = vector.multi_reduction <add>, %398, %cst_76 [1] : vector<64x4xf32> to vector<64xf32>
    %400 = vector.shape_cast %399 : vector<64xf32> to vector<64x1xf32>
    %401 = tpu.reciprocal %400 {approx = true} : vector<64x1xf32> -> vector<64x1xf32>
    %402 = vector.broadcast %401 : vector<64x1xf32> to vector<64x4xf32>
    %403 = arith.mulf %398, %402 : vector<64x4xf32>
    %404 = arith.mulf %403, %392 : vector<64x4xf32>
    %cst_77 = arith.constant dense<0xFF800000> : vector<64xf32>
    %405 = vector.multi_reduction <maximumf>, %404, %cst_77 [1] : vector<64x4xf32> to vector<64xf32>
    %406 = vector.shape_cast %405 : vector<64xf32> to vector<64x1xf32>
    %407 = vector.broadcast %406 : vector<64x1xf32> to vector<64x4xf32>
    %408 = arith.cmpf oeq, %404, %407 : vector<64x4xf32>
    %cst_78 = arith.constant 0.000000e+00 : f32
    %409 = vector.broadcast %cst_78 : f32 to vector<64x4xf32>
    %410 = arith.select %408, %404, %409 : vector<64x4xi1>, vector<64x4xf32>
    %cst_79 = arith.constant 1.000000e-07 : f32
    %411 = vector.broadcast %cst_79 : f32 to vector<64x4xf32>
    %412 = arith.addf %410, %411 : vector<64x4xf32>
    %413 = arith.divf %410, %412 : vector<64x4xf32>
    %414 = vector.extract_strided_slice %413 {offsets = [0, 0], sizes = [64, 1], strides = [1, 1]} : vector<64x4xf32> to vector<64x1xf32>
    %415 = vector.extract_strided_slice %0 {offsets = [0, 0], sizes = [64, 32], strides = [1, 1]} : vector<64x128xf32> to vector<64x32xf32>
    %416 = vector.broadcast %414 : vector<64x1xf32> to vector<64x32xf32>
    %417 = arith.mulf %416, %415 : vector<64x32xf32>
    %418 = vector.extract_strided_slice %413 {offsets = [0, 1], sizes = [64, 1], strides = [1, 1]} : vector<64x4xf32> to vector<64x1xf32>
    %419 = vector.extract_strided_slice %0 {offsets = [0, 32], sizes = [64, 32], strides = [1, 1]} : vector<64x128xf32> to vector<64x32xf32>
    %420 = vector.broadcast %418 : vector<64x1xf32> to vector<64x32xf32>
    %421 = arith.mulf %420, %419 : vector<64x32xf32>
    %422 = arith.addf %417, %421 : vector<64x32xf32>
    %423 = vector.extract_strided_slice %413 {offsets = [0, 2], sizes = [64, 1], strides = [1, 1]} : vector<64x4xf32> to vector<64x1xf32>
    %424 = vector.extract_strided_slice %0 {offsets = [0, 64], sizes = [64, 32], strides = [1, 1]} : vector<64x128xf32> to vector<64x32xf32>
    %425 = vector.broadcast %423 : vector<64x1xf32> to vector<64x32xf32>
    %426 = arith.mulf %425, %424 : vector<64x32xf32>
    %427 = arith.addf %422, %426 : vector<64x32xf32>
    %428 = vector.extract_strided_slice %413 {offsets = [0, 3], sizes = [64, 1], strides = [1, 1]} : vector<64x4xf32> to vector<64x1xf32>
    %429 = vector.extract_strided_slice %0 {offsets = [0, 96], sizes = [64, 32], strides = [1, 1]} : vector<64x128xf32> to vector<64x32xf32>
    %430 = vector.broadcast %428 : vector<64x1xf32> to vector<64x32xf32>
    %431 = arith.mulf %430, %429 : vector<64x32xf32>
    %432 = arith.addf %427, %431 : vector<64x32xf32>
    %433 = arith.subf %391, %432 : vector<64x32xf32>
    %434 = math.absf %433 : vector<64x32xf32>
    %435 = arith.addf %386, %434 : vector<64x32xf32>
    %436 = vector.extract_strided_slice %8 {offsets = [192, 0], sizes = [32, 64], strides = [1, 1]} : vector<256x64xbf16> to vector<32x64xbf16>
    %437 = arith.truncf %434 : vector<64x32xf32> to vector<64x32xbf16>
    %cst_80 = arith.constant dense<0.000000e+00> : vector<64x64xf32>
    %438 = tpu.matmul %437, %436, %cst_80 {dimension_numbers = #tpu.dot_dimension_numbers<[1], [0], [0], [1], [0, 0, 1, 1], [], []>} : vector<64x32xbf16>, vector<32x64xbf16>, vector<64x64xf32> -> vector<64x64xf32>
    %439 = arith.addf %390, %438 : vector<64x64xf32>
    %440 = vector.extract_strided_slice %1 {offsets = [0, 96], sizes = [64, 32], strides = [1, 1]} : vector<64x128xf32> to vector<64x32xf32>
    %441 = vector.extract_strided_slice %2 {offsets = [0, 0], sizes = [64, 4], strides = [1, 1]} : vector<64x8xf32> to vector<64x4xf32>
    %442 = vector.extract_strided_slice %94 {offsets = [448, 0], sizes = [64, 4], strides = [1, 1]} : vector<512x4xf32> to vector<64x4xf32>
    %cst_81 = arith.constant dense<0xFF800000> : vector<64xf32>
    %443 = vector.multi_reduction <maximumf>, %442, %cst_81 [1] : vector<64x4xf32> to vector<64xf32>
    %444 = vector.shape_cast %443 : vector<64xf32> to vector<64x1xf32>
    %445 = vector.broadcast %444 : vector<64x1xf32> to vector<64x4xf32>
    %446 = arith.subf %442, %445 : vector<64x4xf32>
    %447 = math.exp %446 : vector<64x4xf32>
    %cst_82 = arith.constant dense<0.000000e+00> : vector<64xf32>
    %448 = vector.multi_reduction <add>, %447, %cst_82 [1] : vector<64x4xf32> to vector<64xf32>
    %449 = vector.shape_cast %448 : vector<64xf32> to vector<64x1xf32>
    %450 = tpu.reciprocal %449 {approx = true} : vector<64x1xf32> -> vector<64x1xf32>
    %451 = vector.broadcast %450 : vector<64x1xf32> to vector<64x4xf32>
    %452 = arith.mulf %447, %451 : vector<64x4xf32>
    %453 = arith.mulf %452, %441 : vector<64x4xf32>
    %cst_83 = arith.constant dense<0xFF800000> : vector<64xf32>
    %454 = vector.multi_reduction <maximumf>, %453, %cst_83 [1] : vector<64x4xf32> to vector<64xf32>
    %455 = vector.shape_cast %454 : vector<64xf32> to vector<64x1xf32>
    %456 = vector.broadcast %455 : vector<64x1xf32> to vector<64x4xf32>
    %457 = arith.cmpf oeq, %453, %456 : vector<64x4xf32>
    %cst_84 = arith.constant 0.000000e+00 : f32
    %458 = vector.broadcast %cst_84 : f32 to vector<64x4xf32>
    %459 = arith.select %457, %453, %458 : vector<64x4xi1>, vector<64x4xf32>
    %cst_85 = arith.constant 1.000000e-07 : f32
    %460 = vector.broadcast %cst_85 : f32 to vector<64x4xf32>
    %461 = arith.addf %459, %460 : vector<64x4xf32>
    %462 = arith.divf %459, %461 : vector<64x4xf32>
    %463 = vector.extract_strided_slice %462 {offsets = [0, 0], sizes = [64, 1], strides = [1, 1]} : vector<64x4xf32> to vector<64x1xf32>
    %464 = vector.extract_strided_slice %0 {offsets = [0, 0], sizes = [64, 32], strides = [1, 1]} : vector<64x128xf32> to vector<64x32xf32>
    %465 = vector.broadcast %463 : vector<64x1xf32> to vector<64x32xf32>
    %466 = arith.mulf %465, %464 : vector<64x32xf32>
    %467 = vector.extract_strided_slice %462 {offsets = [0, 1], sizes = [64, 1], strides = [1, 1]} : vector<64x4xf32> to vector<64x1xf32>
    %468 = vector.extract_strided_slice %0 {offsets = [0, 32], sizes = [64, 32], strides = [1, 1]} : vector<64x128xf32> to vector<64x32xf32>
    %469 = vector.broadcast %467 : vector<64x1xf32> to vector<64x32xf32>
    %470 = arith.mulf %469, %468 : vector<64x32xf32>
    %471 = arith.addf %466, %470 : vector<64x32xf32>
    %472 = vector.extract_strided_slice %462 {offsets = [0, 2], sizes = [64, 1], strides = [1, 1]} : vector<64x4xf32> to vector<64x1xf32>
    %473 = vector.extract_strided_slice %0 {offsets = [0, 64], sizes = [64, 32], strides = [1, 1]} : vector<64x128xf32> to vector<64x32xf32>
    %474 = vector.broadcast %472 : vector<64x1xf32> to vector<64x32xf32>
    %475 = arith.mulf %474, %473 : vector<64x32xf32>
    %476 = arith.addf %471, %475 : vector<64x32xf32>
    %477 = vector.extract_strided_slice %462 {offsets = [0, 3], sizes = [64, 1], strides = [1, 1]} : vector<64x4xf32> to vector<64x1xf32>
    %478 = vector.extract_strided_slice %0 {offsets = [0, 96], sizes = [64, 32], strides = [1, 1]} : vector<64x128xf32> to vector<64x32xf32>
    %479 = vector.broadcast %477 : vector<64x1xf32> to vector<64x32xf32>
    %480 = arith.mulf %479, %478 : vector<64x32xf32>
    %481 = arith.addf %476, %480 : vector<64x32xf32>
    %482 = arith.subf %440, %481 : vector<64x32xf32>
    %483 = math.absf %482 : vector<64x32xf32>
    %484 = arith.addf %435, %483 : vector<64x32xf32>
    %485 = vector.extract_strided_slice %8 {offsets = [224, 0], sizes = [32, 64], strides = [1, 1]} : vector<256x64xbf16> to vector<32x64xbf16>
    %486 = arith.truncf %483 : vector<64x32xf32> to vector<64x32xbf16>
    %cst_86 = arith.constant dense<0.000000e+00> : vector<64x64xf32>
    %487 = tpu.matmul %486, %485, %cst_86 {dimension_numbers = #tpu.dot_dimension_numbers<[1], [0], [0], [1], [0, 0, 1, 1], [], []>} : vector<64x32xbf16>, vector<32x64xbf16>, vector<64x64xf32> -> vector<64x64xf32>
    %488 = arith.addf %439, %487 : vector<64x64xf32>
    %cst_87 = arith.constant 0.353553385 : f32
    %489 = vector.broadcast %cst_87 : f32 to vector<64x32xf32>
    %490 = arith.mulf %484, %489 : vector<64x32xf32>
    %491 = vector.broadcast %9 : vector<1x64xf32> to vector<64x64xf32>
    %492 = arith.addf %488, %491 : vector<64x64xf32>
    %493 = vector.extract_strided_slice %492 {offsets = [0, 0], sizes = [64, 32], strides = [1, 1]} : vector<64x64xf32> to vector<64x32xf32>
    %cst_88 = arith.constant 0.000000e+00 : f32
    %494 = vector.broadcast %cst_88 : f32 to vector<64x32xf32>
    %495 = arith.cmpf oge, %493, %494 : vector<64x32xf32>
    %cst_89 = arith.constant 0.00999999977 : f32
    %496 = vector.broadcast %cst_89 : f32 to vector<64x32xf32>
    %497 = arith.mulf %496, %493 : vector<64x32xf32>
    %498 = arith.select %495, %493, %497 : vector<64x32xi1>, vector<64x32xf32>
    %499 = vector.extract_strided_slice %492 {offsets = [0, 32], sizes = [64, 32], strides = [1, 1]} : vector<64x64xf32> to vector<64x32xf32>
    %cst_90 = arith.constant -2.000000e+00 : f32
    %500 = vector.broadcast %cst_90 : f32 to vector<64x32xf32>
    %501 = arith.addf %499, %500 : vector<64x32xf32>
    %cst_91 = arith.constant 0.000000e+00 : f32
    %502 = vector.broadcast %cst_91 : f32 to vector<64x32xf32>
    %503 = arith.subf %502, %501 : vector<64x32xf32>
    %504 = math.exp %503 : vector<64x32xf32>
    %cst_92 = arith.constant 1.000000e+00 : f32
    %505 = vector.broadcast %cst_92 : f32 to vector<64x32xf32>
    %506 = arith.addf %505, %504 : vector<64x32xf32>
    %507 = tpu.reciprocal %506 {approx = true} : vector<64x32xf32> -> vector<64x32xf32>
    %508 = arith.mulf %507, %498 : vector<64x32xf32>
    %cst_93 = arith.constant 1.000000e+00 : f32
    %509 = vector.broadcast %cst_93 : f32 to vector<64x32xf32>
    %510 = arith.subf %509, %507 : vector<64x32xf32>
    %511 = arith.mulf %510, %490 : vector<64x32xf32>
    %512 = arith.addf %508, %511 : vector<64x32xf32>
    %513 = arith.truncf %512 : vector<64x32xf32> to vector<64x32xbf16>
    %cst_94 = arith.constant dense<0.000000e+00> : vector<64x64xf32>
    %514 = tpu.matmul %513, %10, %cst_94 {dimension_numbers = #tpu.dot_dimension_numbers<[1], [0], [0], [1], [0, 0, 1, 1], [], []>} : vector<64x32xbf16>, vector<32x64xbf16>, vector<64x64xf32> -> vector<64x64xf32>
    %515 = vector.broadcast %11 : vector<1x64xf32> to vector<64x64xf32>
    %516 = arith.addf %514, %515 : vector<64x64xf32>
    %517 = vector.extract_strided_slice %516 {offsets = [0, 0], sizes = [64, 32], strides = [1, 1]} : vector<64x64xf32> to vector<64x32xf32>
    %cst_95 = arith.constant 0.000000e+00 : f32
    %518 = vector.broadcast %cst_95 : f32 to vector<64x32xf32>
    %519 = arith.cmpf oge, %517, %518 : vector<64x32xf32>
    %cst_96 = arith.constant 0.00999999977 : f32
    %520 = vector.broadcast %cst_96 : f32 to vector<64x32xf32>
    %521 = arith.mulf %520, %517 : vector<64x32xf32>
    %522 = arith.select %519, %517, %521 : vector<64x32xi1>, vector<64x32xf32>
    %523 = vector.extract_strided_slice %516 {offsets = [0, 32], sizes = [64, 32], strides = [1, 1]} : vector<64x64xf32> to vector<64x32xf32>
    %cst_97 = arith.constant -2.000000e+00 : f32
    %524 = vector.broadcast %cst_97 : f32 to vector<64x32xf32>
    %525 = arith.addf %523, %524 : vector<64x32xf32>
    %cst_98 = arith.constant 0.000000e+00 : f32
    %526 = vector.broadcast %cst_98 : f32 to vector<64x32xf32>
    %527 = arith.subf %526, %525 : vector<64x32xf32>
    %528 = math.exp %527 : vector<64x32xf32>
    %cst_99 = arith.constant 1.000000e+00 : f32
    %529 = vector.broadcast %cst_99 : f32 to vector<64x32xf32>
    %530 = arith.addf %529, %528 : vector<64x32xf32>
    %531 = tpu.reciprocal %530 {approx = true} : vector<64x32xf32> -> vector<64x32xf32>
    %532 = arith.mulf %531, %522 : vector<64x32xf32>
    %cst_100 = arith.constant 1.000000e+00 : f32
    %533 = vector.broadcast %cst_100 : f32 to vector<64x32xf32>
    %534 = arith.subf %533, %531 : vector<64x32xf32>
    %535 = arith.mulf %534, %512 : vector<64x32xf32>
    %536 = arith.addf %532, %535 : vector<64x32xf32>
    %c0_101 = arith.constant 0 : index
    %c0_102 = arith.constant 0 : index
    %537 = vector.load %arg13[%c0_101, %c0_102] : memref<64x32xf32, #tpu.memory_space<vmem>>, vector<64x32xf32>
    tpu.vector_store %arg13[%c0_101, %c0_102], %536 {strides = array<i32>} : memref<64x32xf32, #tpu.memory_space<vmem>>, vector<64x32xf32>,
    return
  }
  func.func @transform_0(%arg0: i32) -> (i32, i32) {
    %c0_i32 = arith.constant 0 : i32
    %c0_i32_0 = arith.constant 0 : i32
    return %arg0, %c0_i32 : i32, i32
  }
  func.func @transform_1(%arg0: i32) -> (i32, i32) {
    %c0_i32 = arith.constant 0 : i32
    %c0_i32_0 = arith.constant 0 : i32
    return %arg0, %c0_i32 : i32, i32
  }
  func.func @transform_2(%arg0: i32) -> (i32, i32) {
    %c0_i32 = arith.constant 0 : i32
    %c0_i32_0 = arith.constant 0 : i32
    return %arg0, %c0_i32 : i32, i32
  }
  func.func @transform_3(%arg0: i32) -> (i32, i32) {
    %c0_i32 = arith.constant 0 : i32
    %c0_i32_0 = arith.constant 0 : i32
    %c0_i32_1 = arith.constant 0 : i32
    return %c0_i32, %c0_i32_0 : i32, i32
  }
  func.func @transform_4(%arg0: i32) -> (i32, i32) {
    %c0_i32 = arith.constant 0 : i32
    %c0_i32_0 = arith.constant 0 : i32
    %c0_i32_1 = arith.constant 0 : i32
    return %c0_i32, %c0_i32_0 : i32, i32
  }
  func.func @transform_5(%arg0: i32) -> (i32, i32) {
    %c0_i32 = arith.constant 0 : i32
    %c0_i32_0 = arith.constant 0 : i32
    %c0_i32_1 = arith.constant 0 : i32
    return %c0_i32, %c0_i32_0 : i32, i32
  }
  func.func @transform_6(%arg0: i32) -> (i32, i32) {
    %c0_i32 = arith.constant 0 : i32
    %c0_i32_0 = arith.constant 0 : i32
    %c0_i32_1 = arith.constant 0 : i32
    return %c0_i32, %c0_i32_0 : i32, i32
  }
  func.func @transform_7(%arg0: i32) -> (i32, i32) {
    %c0_i32 = arith.constant 0 : i32
    %c0_i32_0 = arith.constant 0 : i32
    %c0_i32_1 = arith.constant 0 : i32
    return %c0_i32, %c0_i32_0 : i32, i32
  }
  func.func @transform_8(%arg0: i32) -> (i32, i32) {
    %c0_i32 = arith.constant 0 : i32
    %c0_i32_0 = arith.constant 0 : i32
    %c0_i32_1 = arith.constant 0 : i32
    return %c0_i32, %c0_i32_0 : i32, i32
  }
  func.func @transform_9(%arg0: i32) -> (i32, i32) {
    %c0_i32 = arith.constant 0 : i32
    %c0_i32_0 = arith.constant 0 : i32
    %c0_i32_1 = arith.constant 0 : i32
    return %c0_i32, %c0_i32_0 : i32, i32
  }
  func.func @transform_10(%arg0: i32) -> (i32, i32) {
    %c0_i32 = arith.constant 0 : i32
    %c0_i32_0 = arith.constant 0 : i32
    %c0_i32_1 = arith.constant 0 : i32
    return %c0_i32, %c0_i32_0 : i32, i32
  }
  func.func @transform_11(%arg0: i32) -> (i32, i32) {
    %c0_i32 = arith.constant 0 : i32
    %c0_i32_0 = arith.constant 0 : i32
    %c0_i32_1 = arith.constant 0 : i32
    return %c0_i32, %c0_i32_0 : i32, i32
  }
  func.func @transform_12(%arg0: i32) -> (i32, i32) {
    %c0_i32 = arith.constant 0 : i32
    %c0_i32_0 = arith.constant 0 : i32
    return %arg0, %c0_i32 : i32, i32
  }
}

</mosaic_0001>

<llo_original>
// kernel: mcan_pallas.1
$region0: #{mcan_pallas.1}
  #allocation0 [shape = 'u32[]', space=smem, size = 0x4, offset = 0x4, fixed_abs, tag = 'smem constant byte address 0x4 - core index']
  #allocation1 [shape = 'u32[144,128]{1,0:T(1,128)}', space=vmem, size = 0x12000, scoped, tag = 'internal scratch']
  %s0 = inlined_call_operand.vmem [shape: f32[256,128], index: 0, kind: input, shape index: {}]
  %s1 = inlined_call_operand.vmem [shape: f32[256,128], index: 1, kind: input, shape index: {}]
  %s2 = inlined_call_operand.vmem [shape: f32[256,8], index: 2, kind: input, shape index: {}]
  %s3 = inlined_call_operand.vmem [shape: bf16[128,256], index: 3, kind: input, shape index: {}]
  %s4 = inlined_call_operand.vmem [shape: f32[1,256], index: 4, kind: input, shape index: {}]
  %s5 = inlined_call_operand.vmem [shape: bf16[128,256], index: 5, kind: input, shape index: {}]
  %s6 = inlined_call_operand.vmem [shape: f32[1,256], index: 6, kind: input, shape index: {}]
  %s7 = inlined_call_operand.vmem [shape: bf16[128,4], index: 7, kind: input, shape index: {}]
  %s8 = inlined_call_operand.vmem [shape: bf16[256,64], index: 8, kind: input, shape index: {}]
  %s9 = inlined_call_operand.vmem [shape: f32[1,64], index: 9, kind: input, shape index: {}]
  %s10 = inlined_call_operand.vmem [shape: bf16[32,64], index: 10, kind: input, shape index: {}]
  %s11 = inlined_call_operand.vmem [shape: f32[1,64], index: 11, kind: input, shape index: {}]
  %s12 = inlined_call_operand.vmem [shape: f32[256,32], index: 12, kind: output, shape index: {}]
  %s13 = sld [smem:[#allocation0]]
  $region81: #{mcan_pallas.1} parent=0
    _
  %s15 = ssub.s32 1, %s13
  %s16 = scalar_select 0, %s15, %s13
  loop: start=0, step=1, limit=6
  $region2: #{mcan_pallas.1} parent=0 // loop_pre_header
    _
  $region3: #{mcan_pallas.1} parent=0 // loop_header
    %s18 = sphi 0, %s22
    %p19 = scmp.ge.s32.totalorder %s18, 6
    %s28 = sphi 0, %s30
    %s31 = sphi 0, %s28
    %s32 = sphi 0, %s31
    %s48 = sphi 0, %s32
    %s54 = sphi 0, %s56
    %s57 = sphi 0, %s54
    %s58 = sphi 0, %s57
    %s74 = sphi 0, %s58
    %s80 = sphi 0, %s82
    %s83 = sphi 0, %s80
    %s84 = sphi 0, %s83
    %s100 = sphi 0, %s84
    %s104 = sphi 0, %s104
    %s106 = sphi 0, %s104
    %s107 = sphi 0, %s106
    %s121 = sphi 0, %s107
    %s125 = sphi 0, %s125
    %s127 = sphi 0, %s125
    %s128 = sphi 0, %s127
    %s142 = sphi 0, %s128
    %s146 = sphi 0, %s146
    %s148 = sphi 0, %s146
    %s149 = sphi 0, %s148
    %s163 = sphi 0, %s149
    %s167 = sphi 0, %s167
    %s169 = sphi 0, %s167
    %s170 = sphi 0, %s169
    %s184 = sphi 0, %s170
    %s188 = sphi 0, %s188
    %s190 = sphi 0, %s188
    %s191 = sphi 0, %s190
    %s205 = sphi 0, %s191
    %s209 = sphi 0, %s209
    %s211 = sphi 0, %s209
    %s212 = sphi 0, %s211
    %s226 = sphi 0, %s212
    %s230 = sphi 0, %s230
    %s232 = sphi 0, %s230
    %s233 = sphi 0, %s232
    %s247 = sphi 0, %s233
    %s251 = sphi 0, %s251
    %s253 = sphi 0, %s251
    %s254 = sphi 0, %s253
    %s268 = sphi 0, %s254
    %s272 = sphi 0, %s272
    %s274 = sphi 0, %s272
    %s275 = sphi 0, %s274
    %s289 = sphi 0, %s275
    %s295 = sphi 0, %s297
    %s298 = sphi 0, %s295
    %s299 = sphi 0, %s298
    %s315 = sphi 0, %s299
  $region4: #{mcan_pallas.1} parent=0 // loop_header_branch
    %21 = sbr.rel (%p19) target = $region8
  $region5: #{mcan_pallas.1} parent=0 // loop_body
    %s23 = ssub.s32 %s18, 1
    %s24 = ssub.s32 %s18, 2
    %s25 = sadd.s32 %s18, 1
    %s26 = ssub.s32 %s18, %s25
    %p27 = scmp.eq.s32.totalorder %s26, 0
    %s29 = sadd.s32 %s28, 1
    %s30 = scalar_select %p27, %s28, %s29
    %p33 = pneg %p27
    %p34 = scmp.eq.s32.totalorder %s18, 3
    %p35 = por %p33, %p34
    %p36 = scmp.ne.s32.totalorder %s28, %s31
    %p37 = scmp.eq.s32.totalorder %s18, 0
    %p38 = por %p36, %p37
    %p39 = scmp.ne.s32.totalorder %s28, %s31
    %p40 = scmp.eq.s32.totalorder %s23, 3
    %p41 = por %p39, %p40
    %p42 = scmp.ne.s32.totalorder %s31, %s32
    %p43 = scmp.eq.s32.totalorder %s23, 0
    %p44 = por %p42, %p43
    %p45 = scmp.ne.s32.totalorder %s31, %s32
    %p46 = scmp.eq.s32.totalorder %s24, 3
    %p47 = por %p45, %p46
    %p49 = scmp.ne.s32.totalorder %s32, %s48
    %p50 = scmp.eq.s32.totalorder %s24, 0
    %p51 = por %p49, %p50
    %s52 = ssub.s32 %s18, %s25
    %p53 = scmp.eq.s32.totalorder %s52, 0
    %s55 = sadd.s32 %s54, 1
    %s56 = scalar_select %p53, %s54, %s55
    %p59 = pneg %p53
    %p60 = scmp.eq.s32.totalorder %s18, 3
    %p61 = por %p59, %p60
    %p62 = scmp.ne.s32.totalorder %s54, %s57
    %p63 = scmp.eq.s32.totalorder %s18, 0
    %p64 = por %p62, %p63
    %p65 = scmp.ne.s32.totalorder %s54, %s57
    %p66 = scmp.eq.s32.totalorder %s23, 3
    %p67 = por %p65, %p66
    %p68 = scmp.ne.s32.totalorder %s57, %s58
    %p69 = scmp.eq.s32.totalorder %s23, 0
    %p70 = por %p68, %p69
    %p71 = scmp.ne.s32.totalorder %s57, %s58
    %p72 = scmp.eq.s32.totalorder %s24, 3
    %p73 = por %p71, %p72
    %p75 = scmp.ne.s32.totalorder %s58, %s74
    %p76 = scmp.eq.s32.totalorder %s24, 0
    %p77 = por %p75, %p76
    %s78 = ssub.s32 %s18, %s25
    %p79 = scmp.eq.s32.totalorder %s78, 0
    %s81 = sadd.s32 %s80, 1
    %s82 = scalar_select %p79, %s80, %s81
    %p85 = pneg %p79
    %p86 = scmp.eq.s32.totalorder %s18, 3
    %p87 = por %p85, %p86
    %p88 = scmp.ne.s32.totalorder %s80, %s83
    %p89 = scmp.eq.s32.totalorder %s18, 0
    %p90 = por %p88, %p89
    %p91 = scmp.ne.s32.totalorder %s80, %s83
    %p92 = scmp.eq.s32.totalorder %s23, 3
    %p93 = por %p91, %p92
    %p94 = scmp.ne.s32.totalorder %s83, %s84
    %p95 = scmp.eq.s32.totalorder %s23, 0
    %p96 = por %p94, %p95
    %p97 = scmp.ne.s32.totalorder %s83, %s84
    %p98 = scmp.eq.s32.totalorder %s24, 3
    %p99 = por %p97, %p98
    %p101 = scmp.ne.s32.totalorder %s84, %s100
    %p102 = scmp.eq.s32.totalorder %s24, 0
    %p103 = por %p101, %p102
    %s105 = sadd.s32 %s104, 1
    %p108 = scmp.eq.s32.totalorder %s18, 3
    %p109 = scmp.ne.s32.totalorder %s104, %s106
    %p110 = scmp.eq.s32.totalorder %s18, 0
    %p111 = por %p109, %p110
    %p112 = scmp.ne.s32.totalorder %s104, %s106
    %p113 = scmp.eq.s32.totalorder %s23, 3
    %p114 = por %p112, %p113
    %p115 = scmp.ne.s32.totalorder %s106, %s107
    %p116 = scmp.eq.s32.totalorder %s23, 0
    %p117 = por %p115, %p116
    %p118 = scmp.ne.s32.totalorder %s106, %s107
    %p119 = scmp.eq.s32.totalorder %s24, 3
    %p120 = por %p118, %p119
    %p122 = scmp.ne.s32.totalorder %s107, %s121
    %p123 = scmp.eq.s32.totalorder %s24, 0
    %p124 = por %p122, %p123
    %s126 = sadd.s32 %s125, 1
    %p129 = scmp.eq.s32.totalorder %s18, 3
    %p130 = scmp.ne.s32.totalorder %s125, %s127
    %p131 = scmp.eq.s32.totalorder %s18, 0
    %p132 = por %p130, %p131
    %p133 = scmp.ne.s32.totalorder %s125, %s127
    %p134 = scmp.eq.s32.totalorder %s23, 3
    %p135 = por %p133, %p134
    %p136 = scmp.ne.s32.totalorder %s127, %s128
    %p137 = scmp.eq.s32.totalorder %s23, 0
    %p138 = por %p136, %p137
    %p139 = scmp.ne.s32.totalorder %s127, %s128
    %p140 = scmp.eq.s32.totalorder %s24, 3
    %p141 = por %p139, %p140
    %p143 = scmp.ne.s32.totalorder %s128, %s142
    %p144 = scmp.eq.s32.totalorder %s24, 0
    %p145 = por %p143, %p144
    %s147 = sadd.s32 %s146, 1
    %p150 = scmp.eq.s32.totalorder %s18, 3
    %p151 = scmp.ne.s32.totalorder %s146, %s148
    %p152 = scmp.eq.s32.totalorder %s18, 0
    %p153 = por %p151, %p152
    %p154 = scmp.ne.s32.totalorder %s146, %s148
    %p155 = scmp.eq.s32.totalorder %s23, 3
    %p156 = por %p154, %p155
    %p157 = scmp.ne.s32.totalorder %s148, %s149
    %p158 = scmp.eq.s32.totalorder %s23, 0
    %p159 = por %p157, %p158
    %p160 = scmp.ne.s32.totalorder %s148, %s149
    %p161 = scmp.eq.s32.totalorder %s24, 3
    %p162 = por %p160, %p161
    %p164 = scmp.ne.s32.totalorder %s149, %s163
    %p165 = scmp.eq.s32.totalorder %s24, 0
    %p166 = por %p164, %p165
    %s168 = sadd.s32 %s167, 1
    %p171 = scmp.eq.s32.totalorder %s18, 3
    %p172 = scmp.ne.s32.totalorder %s167, %s169
    %p173 = scmp.eq.s32.totalorder %s18, 0
    %p174 = por %p172, %p173
    %p175 = scmp.ne.s32.totalorder %s167, %s169
    %p176 = scmp.eq.s32.totalorder %s23, 3
    %p177 = por %p175, %p176
    %p178 = scmp.ne.s32.totalorder %s169, %s170
    %p179 = scmp.eq.s32.totalorder %s23, 0
    %p180 = por %p178, %p179
    %p181 = scmp.ne.s32.totalorder %s169, %s170
    %p182 = scmp.eq.s32.totalorder %s24, 3
    %p183 = por %p181, %p182
    %p185 = scmp.ne.s32.totalorder %s170, %s184
    %p186 = scmp.eq.s32.totalorder %s24, 0
    %p187 = por %p185, %p186
    %s189 = sadd.s32 %s188, 1
    %p192 = scmp.eq.s32.totalorder %s18, 3
    %p193 = scmp.ne.s32.totalorder %s188, %s190
    %p194 = scmp.eq.s32.totalorder %s18, 0
    %p195 = por %p193, %p194
    %p196 = scmp.ne.s32.totalorder %s188, %s190
    %p197 = scmp.eq.s32.totalorder %s23, 3
    %p198 = por %p196, %p197
    %p199 = scmp.ne.s32.totalorder %s190, %s191
    %p200 = scmp.eq.s32.totalorder %s23, 0
    %p201 = por %p199, %p200
    %p202 = scmp.ne.s32.totalorder %s190, %s191
    %p203 = scmp.eq.s32.totalorder %s24, 3
    %p204 = por %p202, %p203
    %p206 = scmp.ne.s32.totalorder %s191, %s205
    %p207 = scmp.eq.s32.totalorder %s24, 0
    %p208 = por %p206, %p207
    %s210 = sadd.s32 %s209, 1
    %p213 = scmp.eq.s32.totalorder %s18, 3
    %p214 = scmp.ne.s32.totalorder %s209, %s211
    %p215 = scmp.eq.s32.totalorder %s18, 0
    %p216 = por %p214, %p215
    %p217 = scmp.ne.s32.totalorder %s209, %s211
    %p218 = scmp.eq.s32.totalorder %s23, 3
    %p219 = por %p217, %p218
    %p220 = scmp.ne.s32.totalorder %s211, %s212
    %p221 = scmp.eq.s32.totalorder %s23, 0
    %p222 = por %p220, %p221
    %p223 = scmp.ne.s32.totalorder %s211, %s212
    %p224 = scmp.eq.s32.totalorder %s24, 3
    %p225 = por %p223, %p224
    %p227 = scmp.ne.s32.totalorder %s212, %s226
    %p228 = scmp.eq.s32.totalorder %s24, 0
    %p229 = por %p227, %p228
    %s231 = sadd.s32 %s230, 1
    %p234 = scmp.eq.s32.totalorder %s18, 3
    %p235 = scmp.ne.s32.totalorder %s230, %s232
    %p236 = scmp.eq.s32.totalorder %s18, 0
    %p237 = por %p235, %p236
    %p238 = scmp.ne.s32.totalorder %s230, %s232
    %p239 = scmp.eq.s32.totalorder %s23, 3
    %p240 = por %p238, %p239
    %p241 = scmp.ne.s32.totalorder %s232, %s233
    %p242 = scmp.eq.s32.totalorder %s23, 0
    %p243 = por %p241, %p242
    %p244 = scmp.ne.s32.totalorder %s232, %s233
    %p245 = scmp.eq.s32.totalorder %s24, 3
    %p246 = por %p244, %p245
    %p248 = scmp.ne.s32.totalorder %s233, %s247
    %p249 = scmp.eq.s32.totalorder %s24, 0
    %p250 = por %p248, %p249
    %s252 = sadd.s32 %s251, 1
    %p255 = scmp.eq.s32.totalorder %s18, 3
    %p256 = scmp.ne.s32.totalorder %s251, %s253
    %p257 = scmp.eq.s32.totalorder %s18, 0
    %p258 = por %p256, %p257
    %p259 = scmp.ne.s32.totalorder %s251, %s253
    %p260 = scmp.eq.s32.totalorder %s23, 3
    %p261 = por %p259, %p260
    %p262 = scmp.ne.s32.totalorder %s253, %s254
    %p263 = scmp.eq.s32.totalorder %s23, 0
    %p264 = por %p262, %p263
    %p265 = scmp.ne.s32.totalorder %s253, %s254
    %p266 = scmp.eq.s32.totalorder %s24, 3
    %p267 = por %p265, %p266
    %p269 = scmp.ne.s32.totalorder %s254, %s268
    %p270 = scmp.eq.s32.totalorder %s24, 0
    %p271 = por %p269, %p270
    %s273 = sadd.s32 %s272, 1
    %p276 = scmp.eq.s32.totalorder %s18, 3
    %p277 = scmp.ne.s32.totalorder %s272, %s274
    %p278 = scmp.eq.s32.totalorder %s18, 0
    %p279 = por %p277, %p278
    %p280 = scmp.ne.s32.totalorder %s272, %s274
    %p281 = scmp.eq.s32.totalorder %s23, 3
    %p282 = por %p280, %p281
    %p283 = scmp.ne.s32.totalorder %s274, %s275
    %p284 = scmp.eq.s32.totalorder %s23, 0
    %p285 = por %p283, %p284
    %p286 = scmp.ne.s32.totalorder %s274, %s275
    %p287 = scmp.eq.s32.totalorder %s24, 3
    %p288 = por %p286, %p287
    %p290 = scmp.ne.s32.totalorder %s275, %s289
    %p291 = scmp.eq.s32.totalorder %s24, 0
    %p292 = por %p290, %p291
    %s293 = ssub.s32 %s18, %s25
    %p294 = scmp.eq.s32.totalorder %s293, 0
    %s296 = sadd.s32 %s295, 1
    %s297 = scalar_select %p294, %s295, %s296
    %p300 = pneg %p294
    %p301 = scmp.eq.s32.totalorder %s18, 3
    %p302 = por %p300, %p301
    %p303 = scmp.ne.s32.totalorder %s295, %s298
    %p304 = scmp.eq.s32.totalorder %s18, 0
    %p305 = por %p303, %p304
    %p306 = scmp.ne.s32.totalorder %s295, %s298
    %p307 = scmp.eq.s32.totalorder %s23, 3
    %p308 = por %p306, %p307
    %p309 = scmp.ne.s32.totalorder %s298, %s299
    %p310 = scmp.eq.s32.totalorder %s23, 0
    %p311 = por %p309, %p310
    %p312 = scmp.ne.s32.totalorder %s298, %s299
    %p313 = scmp.eq.s32.totalorder %s24, 3
    %p314 = por %p312, %p313
    %p316 = scmp.ne.s32.totalorder %s299, %s315
    %p317 = scmp.eq.s32.totalorder %s24, 0
    %p318 = por %p316, %p317
    %p319 = scmp.le.s32.totalorder 1, %s18
    %p320 = scmp.lt.s32.totalorder %s18, 5
    %p321 = pnand %p319, %p320
    %p322 = pneg %p321
    // Predicated region
    $region9: #{mcan_pallas.1} parent=5 // pred_check
      _
    $region10: #{mcan_pallas.1} parent=5 // pred_check_branch
      %324 = sbr.rel (%p321) target = $region12
    $region11: #{mcan_pallas.1} parent=5 // pred_region
      %s325 = ssub.s32 %s18, 1
      // Predicated region
      $region13: #{mcan_pallas.1} parent=11 // pred_check
        %p326 = pneg %p117
      $region14: #{mcan_pallas.1} parent=11 // pred_check_branch
        %328 = sbr.rel (%p326) target = $region16
      $region15: #{mcan_pallas.1} parent=11 // pred_region
        _
      $region16: #{mcan_pallas.1} parent=11 // pred_fallthru
        _
      // Predicated region
      $region17: #{mcan_pallas.1} parent=11 // pred_check
        %p329 = pneg %p138
      $region18: #{mcan_pallas.1} parent=11 // pred_check_branch
        %331 = sbr.rel (%p329) target = $region20
      $region19: #{mcan_pallas.1} parent=11 // pred_region
        _
      $region20: #{mcan_pallas.1} parent=11 // pred_fallthru
        _
      // Predicated region
      $region21: #{mcan_pallas.1} parent=11 // pred_check
        %p332 = pneg %p159
      $region22: #{mcan_pallas.1} parent=11 // pred_check_branch
        %334 = sbr.rel (%p332) target = $region24
      $region23: #{mcan_pallas.1} parent=11 // pred_region
        _
      $region24: #{mcan_pallas.1} parent=11 // pred_fallthru
        _
      // Predicated region
      $region25: #{mcan_pallas.1} parent=11 // pred_check
        %p335 = pneg %p180
      $region26: #{mcan_pallas.1} parent=11 // pred_check_branch
        %337 = sbr.rel (%p335) target = $region28
      $region27: #{mcan_pallas.1} parent=11 // pred_region
        _
      $region28: #{mcan_pallas.1} parent=11 // pred_fallthru
        _
      // Predicated region
      $region29: #{mcan_pallas.1} parent=11 // pred_check
        %p338 = pneg %p201
      $region30: #{mcan_pallas.1} parent=11 // pred_check_branch
        %340 = sbr.rel (%p338) target = $region32
      $region31: #{mcan_pallas.1} parent=11 // pred_region
        _
      $region32: #{mcan_pallas.1} parent=11 // pred_fallthru
        _
      // Predicated region
      $region33: #{mcan_pallas.1} parent=11 // pred_check
        %p341 = pneg %p222
      $region34: #{mcan_pallas.1} parent=11 // pred_check_branch
        %343 = sbr.rel (%p341) target = $region36
      $region35: #{mcan_pallas.1} parent=11 // pred_region
        _
      $region36: #{mcan_pallas.1} parent=11 // pred_fallthru
        _
      // Predicated region
      $region37: #{mcan_pallas.1} parent=11 // pred_check
        %p344 = pneg %p243
      $region38: #{mcan_pallas.1} parent=11 // pred_check_branch
        %346 = sbr.rel (%p344) target = $region40
      $region39: #{mcan_pallas.1} parent=11 // pred_region
        _
      $region40: #{mcan_pallas.1} parent=11 // pred_fallthru
        _
      // Predicated region
      $region41: #{mcan_pallas.1} parent=11 // pred_check
        %p347 = pneg %p264
      $region42: #{mcan_pallas.1} parent=11 // pred_check_branch
        %349 = sbr.rel (%p347) target = $region44
      $region43: #{mcan_pallas.1} parent=11 // pred_region
        _
      $region44: #{mcan_pallas.1} parent=11 // pred_fallthru
        _
      // Predicated region
      $region45: #{mcan_pallas.1} parent=11 // pred_check
        %p350 = pneg %p285
      $region46: #{mcan_pallas.1} parent=11 // pred_check_branch
        %352 = sbr.rel (%p350) target = $region48
      $region47: #{mcan_pallas.1} parent=11 // pred_region
        _
      $region48: #{mcan_pallas.1} parent=11 // pred_fallthru
        _
    $region12: #{mcan_pallas.1} parent=5 // pred_fallthru
      _
    %p353 = scmp.lt.s32.totalorder %s18, 4
    // Predicated region
    $region49: #{mcan_pallas.1} parent=5 // pred_check
      %p354 = pneg %p353
    $region50: #{mcan_pallas.1} parent=5 // pred_check_branch
      %356 = sbr.rel (%p354) target = $region52
    $region51: #{mcan_pallas.1} parent=5 // pred_region
      // Predicated region
      $region53: #{mcan_pallas.1} parent=51 // pred_check
        %p357 = pneg %p38
      $region54: #{mcan_pallas.1} parent=51 // pred_check_branch
        %359 = sbr.rel (%p357) target = $region56
      $region55: #{mcan_pallas.1} parent=51 // pred_region
        %s360 = smul.u32 8, %s18
        %p361 = scmp.lt.s32.totalorder %s360, 31
        %s362 = scalar_select %p361, %s360, 31
        %s363 = smul.addr %s362, 8
        %s364 = scalar_lea.vmem %s0, %s363
        %s365 = smul.u32 8, %s18
      $region56: #{mcan_pallas.1} parent=51 // pred_fallthru
        _
      // Predicated region
      $region57: #{mcan_pallas.1} parent=51 // pred_check
        %p366 = pneg %p64
      $region58: #{mcan_pallas.1} parent=51 // pred_check_branch
        %368 = sbr.rel (%p366) target = $region60
      $region59: #{mcan_pallas.1} parent=51 // pred_region
        %s369 = smul.u32 8, %s18
        %p370 = scmp.lt.s32.totalorder %s369, 31
        %s371 = scalar_select %p370, %s369, 31
        %s372 = smul.addr %s371, 8
        %s373 = scalar_lea.vmem %s1, %s372
        %s374 = smul.u32 8, %s18
      $region60: #{mcan_pallas.1} parent=51 // pred_fallthru
        _
      // Predicated region
      $region61: #{mcan_pallas.1} parent=51 // pred_check
        %p375 = pneg %p90
      $region62: #{mcan_pallas.1} parent=51 // pred_check_branch
        %377 = sbr.rel (%p375) target = $region64
      $region63: #{mcan_pallas.1} parent=51 // pred_region
        %s378 = smul.u32 8, %s18
        %p379 = scmp.lt.s32.totalorder %s378, 31
        %s380 = scalar_select %p379, %s378, 31
        %s381 = smul.addr %s380, 8
        %s382 = scalar_lea.vmem %s2, %s381
        %s383 = smul.u32 8, %s18
      $region64: #{mcan_pallas.1} parent=51 // pred_fallthru
        _
    $region52: #{mcan_pallas.1} parent=5 // pred_fallthru
      _
    %p384 = scmp.le.s32.totalorder 1, %s18
    %p385 = scmp.lt.s32.totalorder %s18, 5
    %p386 = pnand %p384, %p385
    %p387 = pneg %p386
    // Predicated region
    $region65: #{mcan_pallas.1} parent=5 // pred_check
      _
    $region66: #{mcan_pallas.1} parent=5 // pred_check_branch
      %389 = sbr.rel (%p386) target = $region68
    $region67: #{mcan_pallas.1} parent=5 // pred_region
      %s390 = ssub.s32 %s18, 1
      %s391 = smul.u32 8, %s23
      %p392 = scmp.lt.s32.totalorder %s391, 31
      %s393 = scalar_select %p392, %s391, 31
      %s394 = smul.addr %s393, 8
      %s395 = scalar_lea.vmem %s0, %s394
      %p396 = pneg %p44
      %p397 = pneg %p41
      %s398 = smul.u32 8, %s23
      %p399 = scmp.lt.s32.totalorder %s398, 31
      %s400 = scalar_select %p399, %s398, 31
      %s401 = smul.addr %s400, 8
      %s402 = scalar_lea.vmem %s1, %s401
      %p403 = pneg %p70
      %p404 = pneg %p67
      %s405 = smul.u32 8, %s23
      %p406 = scmp.lt.s32.totalorder %s405, 31
      %s407 = scalar_select %p406, %s405, 31
      %s408 = smul.addr %s407, 8
      %s409 = scalar_lea.vmem %s2, %s408
      %p410 = pneg %p96
      %p411 = pneg %p93
      %p412 = pneg %p117
      %p413 = pneg %p114
      %p414 = pneg %p138
      %p415 = pneg %p135
      %p416 = pneg %p159
      %p417 = pneg %p156
      %p418 = pneg %p180
      %p419 = pneg %p177
      %p420 = pneg %p201
      %p421 = pneg %p198
      %p422 = pneg %p222
      %p423 = pneg %p219
      %p424 = pneg %p243
      %p425 = pneg %p240
      %p426 = pneg %p264
      %p427 = pneg %p261
      %p428 = pneg %p285
      %p429 = pneg %p282
      %p430 = pneg %p311
      %p431 = pneg %p308
      %s432 = smul.u32 8, %s23
      %p433 = scmp.lt.s32.totalorder %s432, 31
      %s434 = scalar_select %p433, %s432, 31
      %s435 = smul.addr %s434, 8
      %s436 = scalar_lea.vmem %s12, %s435
      %s437 = smul.u32 8, %s23
      %p438 = scmp.lt.s32.totalorder %s437, 31
      %s439 = scalar_select %p438, %s437, 31
      %s440 = smul.addr %s439, 8
      %s441 = scalar_lea.vmem %s0, %s440
      %s442 = smul.u32 8, %s23
      %s443 = smul.u32 8, %s23
      %p444 = scmp.lt.s32.totalorder %s443, 31
      %s445 = scalar_select %p444, %s443, 31
      %s446 = smul.addr %s445, 8
      %s447 = scalar_lea.vmem %s1, %s446
      %s448 = smul.u32 8, %s23
      %s449 = smul.u32 8, %s23
      %p450 = scmp.lt.s32.totalorder %s449, 31
      %s451 = scalar_select %p450, %s449, 31
      %s452 = smul.addr %s451, 8
      %s453 = scalar_lea.vmem %s2, %s452
      %s454 = smul.u32 8, %s23
      %s455 = smul.u32 8, %s23
      %p456 = scmp.lt.s32.totalorder %s455, 31
      %s457 = scalar_select %p456, %s455, 31
      %s458 = smul.addr %s457, 8
      %s459 = scalar_lea.vmem %s12, %s458
      %s460 = smul.u32 8, %s23
      %v462 = vld [vmem:[%s441] sm:$0xff]
      %v463 = vld [vmem:[%s441 + $0x8] sm:$0xff]
      %v464 = vld [vmem:[%s441 + $0x10] sm:$0xff]
      %v465 = vld [vmem:[%s441 + $0x18] sm:$0xff]
      %v466 = vld [vmem:[%s441 + $0x20] sm:$0xff]
      %v467 = vld [vmem:[%s441 + $0x28] sm:$0xff]
      %v468 = vld [vmem:[%s441 + $0x30] sm:$0xff]
      %v469 = vld [vmem:[%s441 + $0x38] sm:$0xff]
      %v470 = vld [vmem:[%s447] sm:$0xff]
      %v471 = vld [vmem:[%s447 + $0x8] sm:$0xff]
      %v472 = vld [vmem:[%s447 + $0x10] sm:$0xff]
      %v473 = vld [vmem:[%s447 + $0x18] sm:$0xff]
      %v474 = vld [vmem:[%s447 + $0x20] sm:$0xff]
      %v475 = vld [vmem:[%s447 + $0x28] sm:$0xff]
      %v476 = vld [vmem:[%s447 + $0x30] sm:$0xff]
      %v477 = vld [vmem:[%s447 + $0x38] sm:$0xff]
      %v478 = vld [vmem:[%s453] sm:$0xff]
      %v479 = vld [vmem:[%s453 + $0x8] sm:$0xff]
      %v480 = vld [vmem:[%s453 + $0x10] sm:$0xff]
      %v481 = vld [vmem:[%s453 + $0x18] sm:$0xff]
      %v482 = vld [vmem:[%s453 + $0x20] sm:$0xff]
      %v483 = vld [vmem:[%s453 + $0x28] sm:$0xff]
      %v484 = vld [vmem:[%s453 + $0x30] sm:$0xff]
      %v485 = vld [vmem:[%s453 + $0x38] sm:$0xff]
      %v486 = vld [vmem:[%s3] sm:$0xff]
      %v487 = vld [vmem:[%s3 + $0x8] sm:$0xff]
      %v488 = vld [vmem:[%s3 + $0x10] sm:$0xff]
      %v489 = vld [vmem:[%s3 + $0x18] sm:$0xff]
      %v490 = vld [vmem:[%s3 + $0x20] sm:$0xff]
      %v491 = vld [vmem:[%s3 + $0x28] sm:$0xff]
      %v492 = vld [vmem:[%s3 + $0x30] sm:$0xff]
      %v493 = vld [vmem:[%s3 + $0x38] sm:$0xff]
      %v494 = vld [vmem:[%s3 + $0x40] sm:$0xff]
      %v495 = vld [vmem:[%s3 + $0x48] sm:$0xff]
      %v496 = vld [vmem:[%s3 + $0x50] sm:$0xff]
      %v497 = vld [vmem:[%s3 + $0x58] sm:$0xff]
      %v498 = vld [vmem:[%s3 + $0x60] sm:$0xff]
      %v499 = vld [vmem:[%s3 + $0x68] sm:$0xff]
      %v500 = vld [vmem:[%s3 + $0x70] sm:$0xff]
      %v501 = vld [vmem:[%s3 + $0x78] sm:$0xff]
      %v502 = vld [vmem:[%s4] sm:$0x3]
      %v503 = vld [vmem:[%s5] sm:$0xff]
      %v504 = vld [vmem:[%s5 + $0x8] sm:$0xff]
      %v505 = vld [vmem:[%s5 + $0x10] sm:$0xff]
      %v506 = vld [vmem:[%s5 + $0x18] sm:$0xff]
      %v507 = vld [vmem:[%s5 + $0x20] sm:$0xff]
      %v508 = vld [vmem:[%s5 + $0x28] sm:$0xff]
      %v509 = vld [vmem:[%s5 + $0x30] sm:$0xff]
      %v510 = vld [vmem:[%s5 + $0x38] sm:$0xff]
      %v511 = vld [vmem:[%s5 + $0x40] sm:$0xff]
      %v512 = vld [vmem:[%s5 + $0x48] sm:$0xff]
      %v513 = vld [vmem:[%s5 + $0x50] sm:$0xff]
      %v514 = vld [vmem:[%s5 + $0x58] sm:$0xff]
      %v515 = vld [vmem:[%s5 + $0x60] sm:$0xff]
      %v516 = vld [vmem:[%s5 + $0x68] sm:$0xff]
      %v517 = vld [vmem:[%s5 + $0x70] sm:$0xff]
      %v518 = vld [vmem:[%s5 + $0x78] sm:$0xff]
      %v519 = vld [vmem:[%s6] sm:$0x3]
      %v520 = vld [vmem:[%s7] sm:$0xf]
      %v521 = vld [vmem:[%s7 + $0x4] sm:$0xf]
      %v522 = vld [vmem:[%s7 + $0x8] sm:$0xf]
      %v523 = vld [vmem:[%s7 + $0xc] sm:$0xf]
      %v524 = vld [vmem:[%s7 + $0x10] sm:$0xf]
      %v525 = vld [vmem:[%s7 + $0x14] sm:$0xf]
      %v526 = vld [vmem:[%s7 + $0x18] sm:$0xf]
      %v527 = vld [vmem:[%s7 + $0x1c] sm:$0xf]
      %v528 = vld [vmem:[%s7 + $0x20] sm:$0xf]
      %v529 = vld [vmem:[%s7 + $0x24] sm:$0xf]
      %v530 = vld [vmem:[%s7 + $0x28] sm:$0xf]
      %v531 = vld [vmem:[%s7 + $0x2c] sm:$0xf]
      %v532 = vld [vmem:[%s7 + $0x30] sm:$0xf]
      %v533 = vld [vmem:[%s7 + $0x34] sm:$0xf]
      %v534 = vld [vmem:[%s7 + $0x38] sm:$0xf]
      %v535 = vld [vmem:[%s7 + $0x3c] sm:$0xf]
      %v536 = vld [vmem:[%s8] sm:$0xf]
      %v537 = vld [vmem:[%s8 + $0x4] sm:$0xf]
      %v538 = vld [vmem:[%s8 + $0x8] sm:$0xf]
      %v539 = vld [vmem:[%s8 + $0xc] sm:$0xf]
      %v540 = vld [vmem:[%s8 + $0x10] sm:$0xf]
      %v541 = vld [vmem:[%s8 + $0x14] sm:$0xf]
      %v542 = vld [vmem:[%s8 + $0x18] sm:$0xf]
      %v543 = vld [vmem:[%s8 + $0x1c] sm:$0xf]
      %v544 = vld [vmem:[%s8 + $0x20] sm:$0xf]
      %v545 = vld [vmem:[%s8 + $0x24] sm:$0xf]
      %v546 = vld [vmem:[%s8 + $0x28] sm:$0xf]
      %v547 = vld [vmem:[%s8 + $0x2c] sm:$0xf]
      %v548 = vld [vmem:[%s8 + $0x30] sm:$0xf]
      %v549 = vld [vmem:[%s8 + $0x34] sm:$0xf]
      %v550 = vld [vmem:[%s8 + $0x38] sm:$0xf]
      %v551 = vld [vmem:[%s8 + $0x3c] sm:$0xf]
      %v552 = vld [vmem:[%s8 + $0x40] sm:$0xf]
      %v553 = vld [vmem:[%s8 + $0x44] sm:$0xf]
      %v554 = vld [vmem:[%s8 + $0x48] sm:$0xf]
      %v555 = vld [vmem:[%s8 + $0x4c] sm:$0xf]
      %v556 = vld [vmem:[%s8 + $0x50] sm:$0xf]
      %v557 = vld [vmem:[%s8 + $0x54] sm:$0xf]
      %v558 = vld [vmem:[%s8 + $0x58] sm:$0xf]
      %v559 = vld [vmem:[%s8 + $0x5c] sm:$0xf]
      %v560 = vld [vmem:[%s8 + $0x60] sm:$0xf]
      %v561 = vld [vmem:[%s8 + $0x64] sm:$0xf]
      %v562 = vld [vmem:[%s8 + $0x68] sm:$0xf]
      %v563 = vld [vmem:[%s8 + $0x6c] sm:$0xf]
      %v564 = vld [vmem:[%s8 + $0x70] sm:$0xf]
      %v565 = vld [vmem:[%s8 + $0x74] sm:$0xf]
      %v566 = vld [vmem:[%s8 + $0x78] sm:$0xf]
      %v567 = vld [vmem:[%s8 + $0x7c] sm:$0xf]
      %v568 = vld [vmem:[%s9] sm:$0x1]
      %v569 = vld [vmem:[%s10] sm:$0xf]
      %v570 = vld [vmem:[%s10 + $0x4] sm:$0xf]
      %v571 = vld [vmem:[%s10 + $0x8] sm:$0xf]
      %v572 = vld [vmem:[%s10 + $0xc] sm:$0xf]
      %v573 = vld [vmem:[%s11] sm:$0x1]
      %582 = vrot.lane.b32.xlu0 %v462, 32
      %v583 = vpop.permute.xlu0 %582
      %584 = vrot.lane.b32.xlu0 %v463, 32
      %v585 = vpop.permute.xlu0 %584
      %586 = vrot.lane.b32.xlu0 %v464, 32
      %v587 = vpop.permute.xlu0 %586
      %588 = vrot.lane.b32.xlu0 %v465, 32
      %v589 = vpop.permute.xlu0 %588
      %590 = vrot.lane.b32.xlu0 %v466, 32
      %v591 = vpop.permute.xlu0 %590
      %592 = vrot.lane.b32.xlu0 %v467, 32
      %v593 = vpop.permute.xlu0 %592
      %594 = vrot.lane.b32.xlu0 %v468, 32
      %v595 = vpop.permute.xlu0 %594
      %596 = vrot.lane.b32.xlu0 %v469, 32
      %v597 = vpop.permute.xlu0 %596
      %606 = vrot.lane.b32.xlu0 %v462, 64
      %v607 = vpop.permute.xlu0 %606
      %608 = vrot.lane.b32.xlu0 %v463, 64
      %v609 = vpop.permute.xlu0 %608
      %610 = vrot.lane.b32.xlu0 %v464, 64
      %v611 = vpop.permute.xlu0 %610
      %612 = vrot.lane.b32.xlu0 %v465, 64
      %v613 = vpop.permute.xlu0 %612
      %614 = vrot.lane.b32.xlu0 %v466, 64
      %v615 = vpop.permute.xlu0 %614
      %616 = vrot.lane.b32.xlu0 %v467, 64
      %v617 = vpop.permute.xlu0 %616
      %618 = vrot.lane.b32.xlu0 %v468, 64
      %v619 = vpop.permute.xlu0 %618
      %620 = vrot.lane.b32.xlu0 %v469, 64
      %v621 = vpop.permute.xlu0 %620
      %630 = vrot.lane.b32.xlu0 %v462, 96
      %v631 = vpop.permute.xlu0 %630
      %632 = vrot.lane.b32.xlu0 %v463, 96
      %v633 = vpop.permute.xlu0 %632
      %634 = vrot.lane.b32.xlu0 %v464, 96
      %v635 = vpop.permute.xlu0 %634
      %636 = vrot.lane.b32.xlu0 %v465, 96
      %v637 = vpop.permute.xlu0 %636
      %638 = vrot.lane.b32.xlu0 %v466, 96
      %v639 = vpop.permute.xlu0 %638
      %640 = vrot.lane.b32.xlu0 %v467, 96
      %v641 = vpop.permute.xlu0 %640
      %642 = vrot.lane.b32.xlu0 %v468, 96
      %v643 = vpop.permute.xlu0 %642
      %644 = vrot.lane.b32.xlu0 %v469, 96
      %v645 = vpop.permute.xlu0 %644
      %vm654 = vcmask 261120
      %v655 = vsel %vm654, %v462, %v583
      %v656 = vsel %vm654, %v463, %v585
      %v657 = vsel %vm654, %v464, %v587
      %v658 = vsel %vm654, %v465, %v589
      %v659 = vsel %vm654, %v466, %v591
      %v660 = vsel %vm654, %v467, %v593
      %v661 = vsel %vm654, %v468, %v595
      %v662 = vsel %vm654, %v469, %v597
      %vm663 = vcmask 523264
      %v664 = vsel %vm663, %v655, %v607
      %v665 = vsel %vm663, %v656, %v609
      %v666 = vsel %vm663, %v657, %v611
      %v667 = vsel %vm663, %v658, %v613
      %v668 = vsel %vm663, %v659, %v615
      %v669 = vsel %vm663, %v660, %v617
      %v670 = vsel %vm663, %v661, %v619
      %v671 = vsel %vm663, %v662, %v621
      %vm672 = vcmask 785408
      %v673 = vsel %vm672, %v664, %v631
      %v674 = vsel %vm672, %v665, %v633
      %v675 = vsel %vm672, %v666, %v635
      %v676 = vsel %vm672, %v667, %v637
      %v677 = vsel %vm672, %v668, %v639
      %v678 = vsel %vm672, %v669, %v641
      %v679 = vsel %vm672, %v670, %v643
      %v680 = vsel %vm672, %v671, %v645
      %v681 = vsub.f32 %v673, %v470
      %v682 = vsub.f32 %v674, %v471
      %v683 = vsub.f32 %v675, %v472
      %v684 = vsub.f32 %v676, %v473
      %v685 = vsub.f32 %v677, %v474
      %v686 = vsub.f32 %v678, %v475
      %v687 = vsub.f32 %v679, %v476
      %v688 = vsub.f32 %v680, %v477
      %v689 = vand.u32 2147483647, %v681
      %v690 = vand.u32 2147483647, %v682
      %v691 = vand.u32 2147483647, %v683
      %v692 = vand.u32 2147483647, %v684
      %v693 = vand.u32 2147483647, %v685
      %v694 = vand.u32 2147483647, %v686
      %v695 = vand.u32 2147483647, %v687
      %v696 = vand.u32 2147483647, %v688
      %v697 = vsel %vm654, %v631, %v462
      %v698 = vsel %vm654, %v633, %v463
      %v699 = vsel %vm654, %v635, %v464
      %v700 = vsel %vm654, %v637, %v465
      %v701 = vsel %vm654, %v639, %v466
      %v702 = vsel %vm654, %v641, %v467
      %v703 = vsel %vm654, %v643, %v468
      %v704 = vsel %vm654, %v645, %v469
      %v705 = vsel %vm663, %v697, %v583
      %v706 = vsel %vm663, %v698, %v585
      %v707 = vsel %vm663, %v699, %v587
      %v708 = vsel %vm663, %v700, %v589
      %v709 = vsel %vm663, %v701, %v591
      %v710 = vsel %vm663, %v702, %v593
      %v711 = vsel %vm663, %v703, %v595
      %v712 = vsel %vm663, %v704, %v597
      %v713 = vsel %vm672, %v705, %v607
      %v714 = vsel %vm672, %v706, %v609
      %v715 = vsel %vm672, %v707, %v611
      %v716 = vsel %vm672, %v708, %v613
      %v717 = vsel %vm672, %v709, %v615
      %v718 = vsel %vm672, %v710, %v617
      %v719 = vsel %vm672, %v711, %v619
      %v720 = vsel %vm672, %v712, %v621
      %v721 = vsub.f32 %v713, %v470
      %v722 = vsub.f32 %v714, %v471
      %v723 = vsub.f32 %v715, %v472
      %v724 = vsub.f32 %v716, %v473
      %v725 = vsub.f32 %v717, %v474
      %v726 = vsub.f32 %v718, %v475
      %v727 = vsub.f32 %v719, %v476
      %v728 = vsub.f32 %v720, %v477
      %v729 = vand.u32 2147483647, %v721
      %v730 = vand.u32 2147483647, %v722
      %v731 = vand.u32 2147483647, %v723
      %v732 = vand.u32 2147483647, %v724
      %v733 = vand.u32 2147483647, %v725
      %v734 = vand.u32 2147483647, %v726
      %v735 = vand.u32 2147483647, %v727
      %v736 = vand.u32 2147483647, %v728
      %v737 = vsel %vm654, %v607, %v631
      %v738 = vsel %vm654, %v609, %v633
      %v739 = vsel %vm654, %v611, %v635
      %v740 = vsel %vm654, %v613, %v637
      %v741 = vsel %vm654, %v615, %v639
      %v742 = vsel %vm654, %v617, %v641
      %v743 = vsel %vm654, %v619, %v643
      %v744 = vsel %vm654, %v621, %v645
      %v745 = vsel %vm663, %v737, %v462
      %v746 = vsel %vm663, %v738, %v463
      %v747 = vsel %vm663, %v739, %v464
      %v748 = vsel %vm663, %v740, %v465
      %v749 = vsel %vm663, %v741, %v466
      %v750 = vsel %vm663, %v742, %v467
      %v751 = vsel %vm663, %v743, %v468
      %v752 = vsel %vm663, %v744, %v469
      %v753 = vsel %vm672, %v745, %v583
      %v754 = vsel %vm672, %v746, %v585
      %v755 = vsel %vm672, %v747, %v587
      %v756 = vsel %vm672, %v748, %v589
      %v757 = vsel %vm672, %v749, %v591
      %v758 = vsel %vm672, %v750, %v593
      %v759 = vsel %vm672, %v751, %v595
      %v760 = vsel %vm672, %v752, %v597
      %v761 = vsub.f32 %v753, %v470
      %v762 = vsub.f32 %v754, %v471
      %v763 = vsub.f32 %v755, %v472
      %v764 = vsub.f32 %v756, %v473
      %v765 = vsub.f32 %v757, %v474
      %v766 = vsub.f32 %v758, %v475
      %v767 = vsub.f32 %v759, %v476
      %v768 = vsub.f32 %v760, %v477
      %v769 = vand.u32 2147483647, %v761
      %v770 = vand.u32 2147483647, %v762
      %v771 = vand.u32 2147483647, %v763
      %v772 = vand.u32 2147483647, %v764
      %v773 = vand.u32 2147483647, %v765
      %v774 = vand.u32 2147483647, %v766
      %v775 = vand.u32 2147483647, %v767
      %v776 = vand.u32 2147483647, %v768
      %v777 = vsel %vm654, %v583, %v607
      %v778 = vsel %vm654, %v585, %v609
      %v779 = vsel %vm654, %v587, %v611
      %v780 = vsel %vm654, %v589, %v613
      %v781 = vsel %vm654, %v591, %v615
      %v782 = vsel %vm654, %v593, %v617
      %v783 = vsel %vm654, %v595, %v619
      %v784 = vsel %vm654, %v597, %v621
      %v785 = vsel %vm663, %v777, %v631
      %v786 = vsel %vm663, %v778, %v633
      %v787 = vsel %vm663, %v779, %v635
      %v788 = vsel %vm663, %v780, %v637
      %v789 = vsel %vm663, %v781, %v639
      %v790 = vsel %vm663, %v782, %v641
      %v791 = vsel %vm663, %v783, %v643
      %v792 = vsel %vm663, %v784, %v645
      %v793 = vsel %vm672, %v785, %v462
      %v794 = vsel %vm672, %v786, %v463
      %v795 = vsel %vm672, %v787, %v464
      %v796 = vsel %vm672, %v788, %v465
      %v797 = vsel %vm672, %v789, %v466
      %v798 = vsel %vm672, %v790, %v467
      %v799 = vsel %vm672, %v791, %v468
      %v800 = vsel %vm672, %v792, %v469
      %v801 = vsub.f32 %v793, %v470
      %v802 = vsub.f32 %v794, %v471
      %v803 = vsub.f32 %v795, %v472
      %v804 = vsub.f32 %v796, %v473
      %v805 = vsub.f32 %v797, %v474
      %v806 = vsub.f32 %v798, %v475
      %v807 = vsub.f32 %v799, %v476
      %v808 = vsub.f32 %v800, %v477
      %v809 = vand.u32 2147483647, %v801
      %v810 = vand.u32 2147483647, %v802
      %v811 = vand.u32 2147483647, %v803
      %v812 = vand.u32 2147483647, %v804
      %v813 = vand.u32 2147483647, %v805
      %v814 = vand.u32 2147483647, %v806
      %v815 = vand.u32 2147483647, %v807
      %v816 = vand.u32 2147483647, %v808
      %825 = vrot.lane.b32.xlu0 %v470, 32
      %v826 = vpop.permute.xlu0 %825
      %827 = vrot.lane.b32.xlu0 %v471, 32
      %v828 = vpop.permute.xlu0 %827
      %829 = vrot.lane.b32.xlu0 %v472, 32
      %v830 = vpop.permute.xlu0 %829
      %831 = vrot.lane.b32.xlu0 %v473, 32
      %v832 = vpop.permute.xlu0 %831
      %833 = vrot.lane.b32.xlu0 %v474, 32
      %v834 = vpop.permute.xlu0 %833
      %835 = vrot.lane.b32.xlu0 %v475, 32
      %v836 = vpop.permute.xlu0 %835
      %837 = vrot.lane.b32.xlu0 %v476, 32
      %v838 = vpop.permute.xlu0 %837
      %839 = vrot.lane.b32.xlu0 %v477, 32
      %v840 = vpop.permute.xlu0 %839
      %849 = vrot.lane.b32.xlu0 %v470, 64
      %v850 = vpop.permute.xlu0 %849
      %851 = vrot.lane.b32.xlu0 %v471, 64
      %v852 = vpop.permute.xlu0 %851
      %853 = vrot.lane.b32.xlu0 %v472, 64
      %v854 = vpop.permute.xlu0 %853
      %855 = vrot.lane.b32.xlu0 %v473, 64
      %v856 = vpop.permute.xlu0 %855
      %857 = vrot.lane.b32.xlu0 %v474, 64
      %v858 = vpop.permute.xlu0 %857
      %859 = vrot.lane.b32.xlu0 %v475, 64
      %v860 = vpop.permute.xlu0 %859
      %861 = vrot.lane.b32.xlu0 %v476, 64
      %v862 = vpop.permute.xlu0 %861
      %863 = vrot.lane.b32.xlu0 %v477, 64
      %v864 = vpop.permute.xlu0 %863
      %873 = vrot.lane.b32.xlu0 %v470, 96
      %v874 = vpop.permute.xlu0 %873
      %875 = vrot.lane.b32.xlu0 %v471, 96
      %v876 = vpop.permute.xlu0 %875
      %877 = vrot.lane.b32.xlu0 %v472, 96
      %v878 = vpop.permute.xlu0 %877
      %879 = vrot.lane.b32.xlu0 %v473, 96
      %v880 = vpop.permute.xlu0 %879
      %881 = vrot.lane.b32.xlu0 %v474, 96
      %v882 = vpop.permute.xlu0 %881
      %883 = vrot.lane.b32.xlu0 %v475, 96
      %v884 = vpop.permute.xlu0 %883
      %885 = vrot.lane.b32.xlu0 %v476, 96
      %v886 = vpop.permute.xlu0 %885
      %887 = vrot.lane.b32.xlu0 %v477, 96
      %v888 = vpop.permute.xlu0 %887
      %v897 = vsel %vm654, %v470, %v826
      %v898 = vsel %vm654, %v471, %v828
      %v899 = vsel %vm654, %v472, %v830
      %v900 = vsel %vm654, %v473, %v832
      %v901 = vsel %vm654, %v474, %v834
      %v902 = vsel %vm654, %v475, %v836
      %v903 = vsel %vm654, %v476, %v838
      %v904 = vsel %vm654, %v477, %v840
      %v905 = vsel %vm663, %v897, %v850
      %v906 = vsel %vm663, %v898, %v852
      %v907 = vsel %vm663, %v899, %v854
      %v908 = vsel %vm663, %v900, %v856
      %v909 = vsel %vm663, %v901, %v858
      %v910 = vsel %vm663, %v902, %v860
      %v911 = vsel %vm663, %v903, %v862
      %v912 = vsel %vm663, %v904, %v864
      %v913 = vsel %vm672, %v905, %v874
      %v914 = vsel %vm672, %v906, %v876
      %v915 = vsel %vm672, %v907, %v878
      %v916 = vsel %vm672, %v908, %v880
      %v917 = vsel %vm672, %v909, %v882
      %v918 = vsel %vm672, %v910, %v884
      %v919 = vsel %vm672, %v911, %v886
      %v920 = vsel %vm672, %v912, %v888
      %v921 = vsub.f32 %v913, %v462
      %v922 = vsub.f32 %v914, %v463
      %v923 = vsub.f32 %v915, %v464
      %v924 = vsub.f32 %v916, %v465
      %v925 = vsub.f32 %v917, %v466
      %v926 = vsub.f32 %v918, %v467
      %v927 = vsub.f32 %v919, %v468
      %v928 = vsub.f32 %v920, %v469
      %v929 = vand.u32 2147483647, %v921
      %v930 = vand.u32 2147483647, %v922
      %v931 = vand.u32 2147483647, %v923
      %v932 = vand.u32 2147483647, %v924
      %v933 = vand.u32 2147483647, %v925
      %v934 = vand.u32 2147483647, %v926
      %v935 = vand.u32 2147483647, %v927
      %v936 = vand.u32 2147483647, %v928
      %v937 = vsel %vm654, %v874, %v470
      %v938 = vsel %vm654, %v876, %v471
      %v939 = vsel %vm654, %v878, %v472
      %v940 = vsel %vm654, %v880, %v473
      %v941 = vsel %vm654, %v882, %v474
      %v942 = vsel %vm654, %v884, %v475
      %v943 = vsel %vm654, %v886, %v476
      %v944 = vsel %vm654, %v888, %v477
      %v945 = vsel %vm663, %v937, %v826
      %v946 = vsel %vm663, %v938, %v828
      %v947 = vsel %vm663, %v939, %v830
      %v948 = vsel %vm663, %v940, %v832
      %v949 = vsel %vm663, %v941, %v834
      %v950 = vsel %vm663, %v942, %v836
      %v951 = vsel %vm663, %v943, %v838
      %v952 = vsel %vm663, %v944, %v840
      %v953 = vsel %vm672, %v945, %v850
      %v954 = vsel %vm672, %v946, %v852
      %v955 = vsel %vm672, %v947, %v854
      %v956 = vsel %vm672, %v948, %v856
      %v957 = vsel %vm672, %v949, %v858
      %v958 = vsel %vm672, %v950, %v860
      %v959 = vsel %vm672, %v951, %v862
      %v960 = vsel %vm672, %v952, %v864
      %v961 = vsub.f32 %v953, %v462
      %v962 = vsub.f32 %v954, %v463
      %v963 = vsub.f32 %v955, %v464
      %v964 = vsub.f32 %v956, %v465
      %v965 = vsub.f32 %v957, %v466
      %v966 = vsub.f32 %v958, %v467
      %v967 = vsub.f32 %v959, %v468
      %v968 = vsub.f32 %v960, %v469
      %v969 = vand.u32 2147483647, %v961
      %v970 = vand.u32 2147483647, %v962
      %v971 = vand.u32 2147483647, %v963
      %v972 = vand.u32 2147483647, %v964
      %v973 = vand.u32 2147483647, %v965
      %v974 = vand.u32 2147483647, %v966
      %v975 = vand.u32 2147483647, %v967
      %v976 = vand.u32 2147483647, %v968
      %v977 = vsel %vm654, %v850, %v874
      %v978 = vsel %vm654, %v852, %v876
      %v979 = vsel %vm654, %v854, %v878
      %v980 = vsel %vm654, %v856, %v880
      %v981 = vsel %vm654, %v858, %v882
      %v982 = vsel %vm654, %v860, %v884
      %v983 = vsel %vm654, %v862, %v886
      %v984 = vsel %vm654, %v864, %v888
      %v985 = vsel %vm663, %v977, %v470
      %v986 = vsel %vm663, %v978, %v471
      %v987 = vsel %vm663, %v979, %v472
      %v988 = vsel %vm663, %v980, %v473
      %v989 = vsel %vm663, %v981, %v474
      %v990 = vsel %vm663, %v982, %v475
      %v991 = vsel %vm663, %v983, %v476
      %v992 = vsel %vm663, %v984, %v477
      %v993 = vsel %vm672, %v985, %v826
      %v994 = vsel %vm672, %v986, %v828
      %v995 = vsel %vm672, %v987, %v830
      %v996 = vsel %vm672, %v988, %v832
      %v997 = vsel %vm672, %v989, %v834
      %v998 = vsel %vm672, %v990, %v836
      %v999 = vsel %vm672, %v991, %v838
      %v1000 = vsel %vm672, %v992, %v840
      %v1001 = vsub.f32 %v993, %v462
      %v1002 = vsub.f32 %v994, %v463
      %v1003 = vsub.f32 %v995, %v464
      %v1004 = vsub.f32 %v996, %v465
      %v1005 = vsub.f32 %v997, %v466
      %v1006 = vsub.f32 %v998, %v467
      %v1007 = vsub.f32 %v999, %v468
      %v1008 = vsub.f32 %v1000, %v469
      %v1009 = vand.u32 2147483647, %v1001
      %v1010 = vand.u32 2147483647, %v1002
      %v1011 = vand.u32 2147483647, %v1003
      %v1012 = vand.u32 2147483647, %v1004
      %v1013 = vand.u32 2147483647, %v1005
      %v1014 = vand.u32 2147483647, %v1006
      %v1015 = vand.u32 2147483647, %v1007
      %v1016 = vand.u32 2147483647, %v1008
      %v1017 = vsel %vm654, %v826, %v850
      %v1018 = vsel %vm654, %v828, %v852
      %v1019 = vsel %vm654, %v830, %v854
      %v1020 = vsel %vm654, %v832, %v856
      %v1021 = vsel %vm654, %v834, %v858
      %v1022 = vsel %vm654, %v836, %v860
      %v1023 = vsel %vm654, %v838, %v862
      %v1024 = vsel %vm654, %v840, %v864
      %v1025 = vsel %vm663, %v1017, %v874
      %v1026 = vsel %vm663, %v1018, %v876
      %v1027 = vsel %vm663, %v1019, %v878
      %v1028 = vsel %vm663, %v1020, %v880
      %v1029 = vsel %vm663, %v1021, %v882
      %v1030 = vsel %vm663, %v1022, %v884
      %v1031 = vsel %vm663, %v1023, %v886
      %v1032 = vsel %vm663, %v1024, %v888
      %v1033 = vsel %vm672, %v1025, %v470
      %v1034 = vsel %vm672, %v1026, %v471
      %v1035 = vsel %vm672, %v1027, %v472
      %v1036 = vsel %vm672, %v1028, %v473
      %v1037 = vsel %vm672, %v1029, %v474
      %v1038 = vsel %vm672, %v1030, %v475
      %v1039 = vsel %vm672, %v1031, %v476
      %v1040 = vsel %vm672, %v1032, %v477
      %v1041 = vsub.f32 %v1033, %v462
      %v1042 = vsub.f32 %v1034, %v463
      %v1043 = vsub.f32 %v1035, %v464
      %v1044 = vsub.f32 %v1036, %v465
      %v1045 = vsub.f32 %v1037, %v466
      %v1046 = vsub.f32 %v1038, %v467
      %v1047 = vsub.f32 %v1039, %v468
      %v1048 = vsub.f32 %v1040, %v469
      %v1049 = vand.u32 2147483647, %v1041
      %v1050 = vand.u32 2147483647, %v1042
      %v1051 = vand.u32 2147483647, %v1043
      %v1052 = vand.u32 2147483647, %v1044
      %v1053 = vand.u32 2147483647, %v1045
      %v1054 = vand.u32 2147483647, %v1046
      %v1055 = vand.u32 2147483647, %v1047
      %v1056 = vand.u32 2147483647, %v1048
      %v1057 = vpack.c.bf16 %v690, %v689
      %v1058 = vpack.c.bf16 %v692, %v691
      %v1059 = vpack.c.bf16 %v694, %v693
      %v1060 = vpack.c.bf16 %v696, %v695
      %v1061 = vpack.c.bf16 %v730, %v729
      %v1062 = vpack.c.bf16 %v732, %v731
      %v1063 = vpack.c.bf16 %v734, %v733
      %v1064 = vpack.c.bf16 %v736, %v735
      %v1065 = vpack.c.bf16 %v770, %v769
      %v1066 = vpack.c.bf16 %v772, %v771
      %v1067 = vpack.c.bf16 %v774, %v773
      %v1068 = vpack.c.bf16 %v776, %v775
      %v1069 = vpack.c.bf16 %v810, %v809
      %v1070 = vpack.c.bf16 %v812, %v811
      %v1071 = vpack.c.bf16 %v814, %v813
      %v1072 = vpack.c.bf16 %v816, %v815
      %v1073 = vpack.c.bf16 %v930, %v929
      %v1074 = vpack.c.bf16 %v932, %v931
      %v1075 = vpack.c.bf16 %v934, %v933
      %v1076 = vpack.c.bf16 %v936, %v935
      %v1077 = vpack.c.bf16 %v970, %v969
      %v1078 = vpack.c.bf16 %v972, %v971
      %v1079 = vpack.c.bf16 %v974, %v973
      %v1080 = vpack.c.bf16 %v976, %v975
      %v1081 = vpack.c.bf16 %v1010, %v1009
      %v1082 = vpack.c.bf16 %v1012, %v1011
      %v1083 = vpack.c.bf16 %v1014, %v1013
      %v1084 = vpack.c.bf16 %v1016, %v1015
      %v1085 = vpack.c.bf16 %v1050, %v1049
      %v1086 = vpack.c.bf16 %v1052, %v1051
      %v1087 = vpack.c.bf16 %v1054, %v1053
      %v1088 = vpack.c.bf16 %v1056, %v1055
      %v1090 = vlaneseq
      %v1091 = vshrl.u32 %v1090, 7
      %v1092 = vsub.s32 0, %v1091
      %v1093 = vrot.slane %v502, %v1092
      %v1094 = vlaneseq
      %v1095 = vshrl.u32 %v1094, 7
      %v1096 = vsub.s32 1, %v1095
      %v1097 = vrot.slane %v502, %v1096
      %v1116 = vunpack.c.l.b16 %v486
      %v1117 = vunpack.c.h.b16 %v486
      %v1118 = vunpack.c.l.b16 %v487
      %v1119 = vunpack.c.h.b16 %v487
      %v1120 = vunpack.c.l.b16 %v488
      %v1121 = vunpack.c.h.b16 %v488
      %v1122 = vunpack.c.l.b16 %v489
      %v1123 = vunpack.c.h.b16 %v489
      %v1124 = vunpack.c.l.b16 %v490
      %v1125 = vunpack.c.h.b16 %v490
      %v1126 = vunpack.c.l.b16 %v491
      %v1127 = vunpack.c.h.b16 %v491
      %v1128 = vunpack.c.l.b16 %v492
      %v1129 = vunpack.c.h.b16 %v492
      %v1130 = vunpack.c.l.b16 %v493
      %v1131 = vunpack.c.h.b16 %v493
      %v1132 = vunpack.c.l.b16 %v494
      %v1133 = vunpack.c.h.b16 %v494
      %v1134 = vunpack.c.l.b16 %v495
      %v1135 = vunpack.c.h.b16 %v495
      %v1136 = vunpack.c.l.b16 %v496
      %v1137 = vunpack.c.h.b16 %v496
      %v1138 = vunpack.c.l.b16 %v497
      %v1139 = vunpack.c.h.b16 %v497
      %v1140 = vunpack.c.l.b16 %v498
      %v1141 = vunpack.c.h.b16 %v498
      %v1142 = vunpack.c.l.b16 %v499
      %v1143 = vunpack.c.h.b16 %v499
      %v1144 = vunpack.c.l.b16 %v500
      %v1145 = vunpack.c.h.b16 %v500
      %v1146 = vunpack.c.l.b16 %v501
      %v1147 = vunpack.c.h.b16 %v501
      %v1148 = vpack.c.b16 %v1118, %v1116
      %v1149 = vpack.c.b16 %v1119, %v1117
      %v1150 = vpack.c.b16 %v1122, %v1120
      %v1151 = vpack.c.b16 %v1123, %v1121
      %v1152 = vpack.c.b16 %v1126, %v1124
      %v1153 = vpack.c.b16 %v1127, %v1125
      %v1154 = vpack.c.b16 %v1130, %v1128
      %v1155 = vpack.c.b16 %v1131, %v1129
      %v1156 = vpack.c.b16 %v1134, %v1132
      %v1157 = vpack.c.b16 %v1135, %v1133
      %v1158 = vpack.c.b16 %v1138, %v1136
      %v1159 = vpack.c.b16 %v1139, %v1137
      %v1160 = vpack.c.b16 %v1142, %v1140
      %v1161 = vpack.c.b16 %v1143, %v1141
      %v1162 = vpack.c.b16 %v1146, %v1144
      %v1163 = vpack.c.b16 %v1147, %v1145
      %1180 = vmatprep.subr.bf16.mxu0 %v1163
      %1181 = vmatpush1.bf16.msra.mxu0 %v1162
      %1182 = vmatprep.subr.bf16.mxu0 %v1161
      %1183 = vmatpush1.bf16.msra.mxu0 %v1160
      %1184 = vmatprep.subr.bf16.mxu0 %v1159
      %1185 = vmatpush1.bf16.msra.mxu0 %v1158
      %1186 = vmatprep.subr.bf16.mxu0 %v1157
      %1187 = vmatpush1.bf16.msra.mxu0 %v1156
      %1188 = vmatprep.subr.bf16.mxu0 %v1155
      %1189 = vmatpush1.bf16.msra.mxu0 %v1154
      %1190 = vmatprep.subr.bf16.mxu0 %v1153
      %1191 = vmatpush1.bf16.msra.mxu0 %v1152
      %1192 = vmatprep.subr.bf16.mxu0 %v1151
      %1193 = vmatpush1.bf16.msra.mxu0 %v1150
      %1194 = vmatprep.subr.bf16.mxu0 %v1149
      %1195 = vmatpush1.bf16.msra.mxu0 %v1148
      %1196 = vmatprep.subr.bf16.mxu0 0
      %1197 = vmatpush2.bf16.msra.mxu0 0
      %1198 = vmatprep.subr.bf16.mxu0 0
      %1199 = vmatpush2.bf16.msra.mxu0 0
      %1200 = vmatprep.subr.bf16.mxu0 0
      %1201 = vmatpush2.bf16.msra.mxu0 0
      %1202 = vmatprep.subr.bf16.mxu0 0
      %1203 = vmatpush2.bf16.msra.mxu0 0
      %1204 = vmatprep.subr.bf16.mxu0 0
      %1205 = vmatpush2.bf16.msra.mxu0 0
      %1206 = vmatprep.subr.bf16.mxu0 0
      %1207 = vmatpush2.bf16.msra.mxu0 0
      %1208 = vmatprep.subr.bf16.mxu0 0
      %1209 = vmatpush2.bf16.msra.mxu0 0
      %1210 = vmatprep.subr.bf16.mxu0 0
      %1211 = vmatpush2.bf16.msra.mxu0 0
      %1212 = vmatprep.mubr.bf16.mxu0 0
      %1213 = vmatmul.mubr.bf16.gmra.mxu0 %v1057
      %v1214 = vpop.f32.mrf.mxu0
      %v1215 = vadd.f32 %v1093, %v1214
      %v1216 = vpop.f32.mrf.mxu0
      %v1217 = vadd.f32 %v1097, %v1216
      %v1218 = vpop.f32.mrf.mxu0
      %v1219 = vadd.f32 %v1093, %v1218
      %v1220 = vpop.f32.mrf.mxu0
      %v1221 = vadd.f32 %v1097, %v1220
      %1222 = vmatprep.mubr.bf16.mxu0 0
      %1223 = vmatmul.mubr.bf16.gmra.mxu0 %v1058
      %v1224 = vpop.f32.mrf.mxu0
      %v1225 = vadd.f32 %v1093, %v1224
      %v1226 = vpop.f32.mrf.mxu0
      %v1227 = vadd.f32 %v1097, %v1226
      %v1228 = vpop.f32.mrf.mxu0
      %v1229 = vadd.f32 %v1093, %v1228
      %v1230 = vpop.f32.mrf.mxu0
      %v1231 = vadd.f32 %v1097, %v1230
      %1232 = vmatprep.mubr.bf16.mxu0 0
      %1233 = vmatmul.mubr.bf16.gmra.mxu0 %v1059
      %v1234 = vpop.f32.mrf.mxu0
      %v1235 = vadd.f32 %v1093, %v1234
      %v1236 = vpop.f32.mrf.mxu0
      %v1237 = vadd.f32 %v1097, %v1236
      %v1238 = vpop.f32.mrf.mxu0
      %v1239 = vadd.f32 %v1093, %v1238
      %v1240 = vpop.f32.mrf.mxu0
      %v1241 = vadd.f32 %v1097, %v1240
      %1242 = vmatprep.mubr.bf16.mxu0 0
      %1243 = vmatmul.mubr.bf16.gmra.mxu0 %v1060
      %v1244 = vpop.f32.mrf.mxu0
      %v1245 = vadd.f32 %v1093, %v1244
      %v1246 = vpop.f32.mrf.mxu0
      %v1247 = vadd.f32 %v1097, %v1246
      %v1248 = vpop.f32.mrf.mxu0
      %v1249 = vadd.f32 %v1093, %v1248
      %v1250 = vpop.f32.mrf.mxu0
      %v1251 = vadd.f32 %v1097, %v1250
      %1252 = vmatprep.mubr.bf16.mxu0 0
      %1253 = vmatmul.mubr.bf16.gmra.mxu0 %v1061
      %v1254 = vpop.f32.mrf.mxu0
      %v1255 = vadd.f32 %v1093, %v1254
      %v1256 = vpop.f32.mrf.mxu0
      %v1257 = vadd.f32 %v1097, %v1256
      %v1258 = vpop.f32.mrf.mxu0
      %v1259 = vadd.f32 %v1093, %v1258
      %v1260 = vpop.f32.mrf.mxu0
      %v1261 = vadd.f32 %v1097, %v1260
      %1262 = vmatprep.mubr.bf16.mxu0 0
      %1263 = vmatmul.mubr.bf16.gmra.mxu0 %v1062
      %v1264 = vpop.f32.mrf.mxu0
      %v1265 = vadd.f32 %v1093, %v1264
      %v1266 = vpop.f32.mrf.mxu0
      %v1267 = vadd.f32 %v1097, %v1266
      %v1268 = vpop.f32.mrf.mxu0
      %v1269 = vadd.f32 %v1093, %v1268
      %v1270 = vpop.f32.mrf.mxu0
      %v1271 = vadd.f32 %v1097, %v1270
      %1272 = vmatprep.mubr.bf16.mxu0 0
      %1273 = vmatmul.mubr.bf16.gmra.mxu0 %v1063
      %v1274 = vpop.f32.mrf.mxu0
      %v1275 = vadd.f32 %v1093, %v1274
      %v1276 = vpop.f32.mrf.mxu0
      %v1277 = vadd.f32 %v1097, %v1276
      %v1278 = vpop.f32.mrf.mxu0
      %v1279 = vadd.f32 %v1093, %v1278
      %v1280 = vpop.f32.mrf.mxu0
      %v1281 = vadd.f32 %v1097, %v1280
      %1282 = vmatprep.mubr.bf16.mxu0 0
      %1283 = vmatmul.mubr.bf16.gmra.mxu0 %v1064
      %v1284 = vpop.f32.mrf.mxu0
      %v1285 = vadd.f32 %v1093, %v1284
      %v1286 = vpop.f32.mrf.mxu0
      %v1287 = vadd.f32 %v1097, %v1286
      %v1288 = vpop.f32.mrf.mxu0
      %v1289 = vadd.f32 %v1093, %v1288
      %v1290 = vpop.f32.mrf.mxu0
      %v1291 = vadd.f32 %v1097, %v1290
      %1292 = vmatprep.mubr.bf16.mxu0 0
      %1293 = vmatmul.mubr.bf16.gmra.mxu0 %v1065
      %v1294 = vpop.f32.mrf.mxu0
      %v1295 = vadd.f32 %v1093, %v1294
      %v1296 = vpop.f32.mrf.mxu0
      %v1297 = vadd.f32 %v1097, %v1296
      %v1298 = vpop.f32.mrf.mxu0
      %v1299 = vadd.f32 %v1093, %v1298
      %v1300 = vpop.f32.mrf.mxu0
      %v1301 = vadd.f32 %v1097, %v1300
      %1302 = vmatprep.mubr.bf16.mxu0 0
      %1303 = vmatmul.mubr.bf16.gmra.mxu0 %v1066
      %v1304 = vpop.f32.mrf.mxu0
      %v1305 = vadd.f32 %v1093, %v1304
      %v1306 = vpop.f32.mrf.mxu0
      %v1307 = vadd.f32 %v1097, %v1306
      %v1308 = vpop.f32.mrf.mxu0
      %v1309 = vadd.f32 %v1093, %v1308
      %v1310 = vpop.f32.mrf.mxu0
      %v1311 = vadd.f32 %v1097, %v1310
      %1312 = vmatprep.mubr.bf16.mxu0 0
      %1313 = vmatmul.mubr.bf16.gmra.mxu0 %v1067
      %v1314 = vpop.f32.mrf.mxu0
      %v1315 = vadd.f32 %v1093, %v1314
      %v1316 = vpop.f32.mrf.mxu0
      %v1317 = vadd.f32 %v1097, %v1316
      %v1318 = vpop.f32.mrf.mxu0
      %v1319 = vadd.f32 %v1093, %v1318
      %v1320 = vpop.f32.mrf.mxu0
      %v1321 = vadd.f32 %v1097, %v1320
      %1322 = vmatprep.mubr.bf16.mxu0 0
      %1323 = vmatmul.mubr.bf16.gmra.mxu0 %v1068
      %v1324 = vpop.f32.mrf.mxu0
      %v1325 = vadd.f32 %v1093, %v1324
      %v1326 = vpop.f32.mrf.mxu0
      %v1327 = vadd.f32 %v1097, %v1326
      %v1328 = vpop.f32.mrf.mxu0
      %v1329 = vadd.f32 %v1093, %v1328
      %v1330 = vpop.f32.mrf.mxu0
      %v1331 = vadd.f32 %v1097, %v1330
      %1332 = vmatprep.mubr.bf16.mxu0 0
      %1333 = vmatmul.mubr.bf16.gmra.mxu0 %v1069
      %v1334 = vpop.f32.mrf.mxu0
      %v1335 = vadd.f32 %v1093, %v1334
      %v1336 = vpop.f32.mrf.mxu0
      %v1337 = vadd.f32 %v1097, %v1336
      %v1338 = vpop.f32.mrf.mxu0
      %v1339 = vadd.f32 %v1093, %v1338
      %v1340 = vpop.f32.mrf.mxu0
      %v1341 = vadd.f32 %v1097, %v1340
      %1342 = vmatprep.mubr.bf16.mxu0 0
      %1343 = vmatmul.mubr.bf16.gmra.mxu0 %v1070
      %v1344 = vpop.f32.mrf.mxu0
      %v1345 = vadd.f32 %v1093, %v1344
      %v1346 = vpop.f32.mrf.mxu0
      %v1347 = vadd.f32 %v1097, %v1346
      %v1348 = vpop.f32.mrf.mxu0
      %v1349 = vadd.f32 %v1093, %v1348
      %v1350 = vpop.f32.mrf.mxu0
      %v1351 = vadd.f32 %v1097, %v1350
      %1352 = vmatprep.mubr.bf16.mxu0 0
      %1353 = vmatmul.mubr.bf16.gmra.mxu0 %v1071
      %v1354 = vpop.f32.mrf.mxu0
      %v1355 = vadd.f32 %v1093, %v1354
      %v1356 = vpop.f32.mrf.mxu0
      %v1357 = vadd.f32 %v1097, %v1356
      %v1358 = vpop.f32.mrf.mxu0
      %v1359 = vadd.f32 %v1093, %v1358
      %v1360 = vpop.f32.mrf.mxu0
      %v1361 = vadd.f32 %v1097, %v1360
      %1362 = vmatprep.mubr.bf16.mxu0 0
      %1363 = vmatmul.mubr.bf16.gmra.mxu0 %v1072
      %v1364 = vpop.f32.mrf.mxu0
      %v1365 = vadd.f32 %v1093, %v1364
      %v1366 = vpop.f32.mrf.mxu0
      %v1367 = vadd.f32 %v1097, %v1366
      %v1368 = vpop.f32.mrf.mxu0
      %v1369 = vadd.f32 %v1093, %v1368
      %v1370 = vpop.f32.mrf.mxu0
      %v1371 = vadd.f32 %v1097, %v1370
      %1372 = vmatprep.mubr.bf16.mxu0 0
      %1373 = vmatmul.mubr.bf16.gmra.mxu0 %v1073
      %v1374 = vpop.f32.mrf.mxu0
      %v1375 = vadd.f32 %v1093, %v1374
      %v1376 = vpop.f32.mrf.mxu0
      %v1377 = vadd.f32 %v1097, %v1376
      %v1378 = vpop.f32.mrf.mxu0
      %v1379 = vadd.f32 %v1093, %v1378
      %v1380 = vpop.f32.mrf.mxu0
      %v1381 = vadd.f32 %v1097, %v1380
      %1382 = vmatprep.mubr.bf16.mxu0 0
      %1383 = vmatmul.mubr.bf16.gmra.mxu0 %v1074
      %v1384 = vpop.f32.mrf.mxu0
      %v1385 = vadd.f32 %v1093, %v1384
      %v1386 = vpop.f32.mrf.mxu0
      %v1387 = vadd.f32 %v1097, %v1386
      %v1388 = vpop.f32.mrf.mxu0
      %v1389 = vadd.f32 %v1093, %v1388
      %v1390 = vpop.f32.mrf.mxu0
      %v1391 = vadd.f32 %v1097, %v1390
      %1392 = vmatprep.mubr.bf16.mxu0 0
      %1393 = vmatmul.mubr.bf16.gmra.mxu0 %v1075
      %v1394 = vpop.f32.mrf.mxu0
      %v1395 = vadd.f32 %v1093, %v1394
      %v1396 = vpop.f32.mrf.mxu0
      %v1397 = vadd.f32 %v1097, %v1396
      %v1398 = vpop.f32.mrf.mxu0
      %v1399 = vadd.f32 %v1093, %v1398
      %v1400 = vpop.f32.mrf.mxu0
      %v1401 = vadd.f32 %v1097, %v1400
      %1402 = vmatprep.mubr.bf16.mxu0 0
      %1403 = vmatmul.mubr.bf16.gmra.mxu0 %v1076
      %v1404 = vpop.f32.mrf.mxu0
      %v1405 = vadd.f32 %v1093, %v1404
      %v1406 = vpop.f32.mrf.mxu0
      %v1407 = vadd.f32 %v1097, %v1406
      %v1408 = vpop.f32.mrf.mxu0
      %v1409 = vadd.f32 %v1093, %v1408
      %v1410 = vpop.f32.mrf.mxu0
      %v1411 = vadd.f32 %v1097, %v1410
      %1412 = vmatprep.mubr.bf16.mxu0 0
      %1413 = vmatmul.mubr.bf16.gmra.mxu0 %v1077
      %v1414 = vpop.f32.mrf.mxu0
      %v1415 = vadd.f32 %v1093, %v1414
      %v1416 = vpop.f32.mrf.mxu0
      %v1417 = vadd.f32 %v1097, %v1416
      %v1418 = vpop.f32.mrf.mxu0
      %v1419 = vadd.f32 %v1093, %v1418
      %v1420 = vpop.f32.mrf.mxu0
      %v1421 = vadd.f32 %v1097, %v1420
      %1422 = vmatprep.mubr.bf16.mxu0 0
      %1423 = vmatmul.mubr.bf16.gmra.mxu0 %v1078
      %v1424 = vpop.f32.mrf.mxu0
      %v1425 = vadd.f32 %v1093, %v1424
      %v1426 = vpop.f32.mrf.mxu0
      %v1427 = vadd.f32 %v1097, %v1426
      %v1428 = vpop.f32.mrf.mxu0
      %v1429 = vadd.f32 %v1093, %v1428
      %v1430 = vpop.f32.mrf.mxu0
      %v1431 = vadd.f32 %v1097, %v1430
      %1432 = vmatprep.mubr.bf16.mxu0 0
      %1433 = vmatmul.mubr.bf16.gmra.mxu0 %v1079
      %v1434 = vpop.f32.mrf.mxu0
      %v1435 = vadd.f32 %v1093, %v1434
      %v1436 = vpop.f32.mrf.mxu0
      %v1437 = vadd.f32 %v1097, %v1436
      %v1438 = vpop.f32.mrf.mxu0
      %v1439 = vadd.f32 %v1093, %v1438
      %v1440 = vpop.f32.mrf.mxu0
      %v1441 = vadd.f32 %v1097, %v1440
      %1442 = vmatprep.mubr.bf16.mxu0 0
      %1443 = vmatmul.mubr.bf16.gmra.mxu0 %v1080
      %v1444 = vpop.f32.mrf.mxu0
      %v1445 = vadd.f32 %v1093, %v1444
      %v1446 = vpop.f32.mrf.mxu0
      %v1447 = vadd.f32 %v1097, %v1446
      %v1448 = vpop.f32.mrf.mxu0
      %v1449 = vadd.f32 %v1093, %v1448
      %v1450 = vpop.f32.mrf.mxu0
      %v1451 = vadd.f32 %v1097, %v1450
      %1452 = vmatprep.mubr.bf16.mxu0 0
      %1453 = vmatmul.mubr.bf16.gmra.mxu0 %v1081
      %v1454 = vpop.f32.mrf.mxu0
      %v1455 = vadd.f32 %v1093, %v1454
      %v1456 = vpop.f32.mrf.mxu0
      %v1457 = vadd.f32 %v1097, %v1456
      %v1458 = vpop.f32.mrf.mxu0
      %v1459 = vadd.f32 %v1093, %v1458
      %v1460 = vpop.f32.mrf.mxu0
      %v1461 = vadd.f32 %v1097, %v1460
      %1462 = vmatprep.mubr.bf16.mxu0 0
      %1463 = vmatmul.mubr.bf16.gmra.mxu0 %v1082
      %v1464 = vpop.f32.mrf.mxu0
      %v1465 = vadd.f32 %v1093, %v1464
      %v1466 = vpop.f32.mrf.mxu0
      %v1467 = vadd.f32 %v1097, %v1466
      %v1468 = vpop.f32.mrf.mxu0
      %v1469 = vadd.f32 %v1093, %v1468
      %v1470 = vpop.f32.mrf.mxu0
      %v1471 = vadd.f32 %v1097, %v1470
      %1472 = vmatprep.mubr.bf16.mxu0 0
      %1473 = vmatmul.mubr.bf16.gmra.mxu0 %v1083
      %v1474 = vpop.f32.mrf.mxu0
      %v1475 = vadd.f32 %v1093, %v1474
      %v1476 = vpop.f32.mrf.mxu0
      %v1477 = vadd.f32 %v1097, %v1476
      %v1478 = vpop.f32.mrf.mxu0
      %v1479 = vadd.f32 %v1093, %v1478
      %v1480 = vpop.f32.mrf.mxu0
      %v1481 = vadd.f32 %v1097, %v1480
      %1482 = vmatprep.mubr.bf16.mxu0 0
      %1483 = vmatmul.mubr.bf16.gmra.mxu0 %v1084
      %v1484 = vpop.f32.mrf.mxu0
      %v1485 = vadd.f32 %v1093, %v1484
      %v1486 = vpop.f32.mrf.mxu0
      %v1487 = vadd.f32 %v1097, %v1486
      %v1488 = vpop.f32.mrf.mxu0
      %v1489 = vadd.f32 %v1093, %v1488
      %v1490 = vpop.f32.mrf.mxu0
      %v1491 = vadd.f32 %v1097, %v1490
      %1492 = vmatprep.mubr.bf16.mxu0 0
      %1493 = vmatmul.mubr.bf16.gmra.mxu0 %v1085
      %v1494 = vpop.f32.mrf.mxu0
      %v1495 = vadd.f32 %v1093, %v1494
      %v1496 = vpop.f32.mrf.mxu0
      %v1497 = vadd.f32 %v1097, %v1496
      %v1498 = vpop.f32.mrf.mxu0
      %v1499 = vadd.f32 %v1093, %v1498
      %v1500 = vpop.f32.mrf.mxu0
      %v1501 = vadd.f32 %v1097, %v1500
      %1502 = vmatprep.mubr.bf16.mxu0 0
      %1503 = vmatmul.mubr.bf16.gmra.mxu0 %v1086
      %v1504 = vpop.f32.mrf.mxu0
      %v1505 = vadd.f32 %v1093, %v1504
      %v1506 = vpop.f32.mrf.mxu0
      %v1507 = vadd.f32 %v1097, %v1506
      %v1508 = vpop.f32.mrf.mxu0
      %v1509 = vadd.f32 %v1093, %v1508
      %v1510 = vpop.f32.mrf.mxu0
      %v1511 = vadd.f32 %v1097, %v1510
      %1512 = vmatprep.mubr.bf16.mxu0 0
      %1513 = vmatmul.mubr.bf16.gmra.mxu0 %v1087
      %v1514 = vpop.f32.mrf.mxu0
      %v1515 = vadd.f32 %v1093, %v1514
      %v1516 = vpop.f32.mrf.mxu0
      %v1517 = vadd.f32 %v1097, %v1516
      %v1518 = vpop.f32.mrf.mxu0
      %v1519 = vadd.f32 %v1093, %v1518
      %v1520 = vpop.f32.mrf.mxu0
      %v1521 = vadd.f32 %v1097, %v1520
      %1522 = vmatprep.mubr.bf16.mxu0 0
      %1523 = vmatmul.mubr.bf16.gmra.mxu0 %v1088
      %v1524 = vpop.f32.mrf.mxu0
      %v1525 = vadd.f32 %v1093, %v1524
      %v1526 = vpop.f32.mrf.mxu0
      %v1527 = vadd.f32 %v1097, %v1526
      %v1528 = vpop.f32.mrf.mxu0
      %v1529 = vadd.f32 %v1093, %v1528
      %v1530 = vpop.f32.mrf.mxu0
      %v1531 = vadd.f32 %v1097, %v1530
      %1532 = vdwg.mxu0
      %vm1533 = vcmp.ge.f32.partialorder %v1215, 0.0
      %vm1534 = vcmp.ge.f32.partialorder %v1219, 0.0
      %vm1535 = vcmp.ge.f32.partialorder %v1225, 0.0
      %vm1536 = vcmp.ge.f32.partialorder %v1229, 0.0
      %vm1537 = vcmp.ge.f32.partialorder %v1235, 0.0
      %vm1538 = vcmp.ge.f32.partialorder %v1239, 0.0
      %vm1539 = vcmp.ge.f32.partialorder %v1245, 0.0
      %vm1540 = vcmp.ge.f32.partialorder %v1249, 0.0
      %vm1541 = vcmp.ge.f32.partialorder %v1255, 0.0
      %vm1542 = vcmp.ge.f32.partialorder %v1259, 0.0
      %vm1543 = vcmp.ge.f32.partialorder %v1265, 0.0
      %vm1544 = vcmp.ge.f32.partialorder %v1269, 0.0
      %vm1545 = vcmp.ge.f32.partialorder %v1275, 0.0
      %vm1546 = vcmp.ge.f32.partialorder %v1279, 0.0
      %vm1547 = vcmp.ge.f32.partialorder %v1285, 0.0
      %vm1548 = vcmp.ge.f32.partialorder %v1289, 0.0
      %vm1549 = vcmp.ge.f32.partialorder %v1295, 0.0
      %vm1550 = vcmp.ge.f32.partialorder %v1299, 0.0
      %vm1551 = vcmp.ge.f32.partialorder %v1305, 0.0
      %vm1552 = vcmp.ge.f32.partialorder %v1309, 0.0
      %vm1553 = vcmp.ge.f32.partialorder %v1315, 0.0
      %vm1554 = vcmp.ge.f32.partialorder %v1319, 0.0
      %vm1555 = vcmp.ge.f32.partialorder %v1325, 0.0
      %vm1556 = vcmp.ge.f32.partialorder %v1329, 0.0
      %vm1557 = vcmp.ge.f32.partialorder %v1335, 0.0
      %vm1558 = vcmp.ge.f32.partialorder %v1339, 0.0
      %vm1559 = vcmp.ge.f32.partialorder %v1345, 0.0
      %vm1560 = vcmp.ge.f32.partialorder %v1349, 0.0
      %vm1561 = vcmp.ge.f32.partialorder %v1355, 0.0
      %vm1562 = vcmp.ge.f32.partialorder %v1359, 0.0
      %vm1563 = vcmp.ge.f32.partialorder %v1365, 0.0
      %vm1564 = vcmp.ge.f32.partialorder %v1369, 0.0
      %vm1565 = vcmp.ge.f32.partialorder %v1375, 0.0
      %vm1566 = vcmp.ge.f32.partialorder %v1379, 0.0
      %vm1567 = vcmp.ge.f32.partialorder %v1385, 0.0
      %vm1568 = vcmp.ge.f32.partialorder %v1389, 0.0
      %vm1569 = vcmp.ge.f32.partialorder %v1395, 0.0
      %vm1570 = vcmp.ge.f32.partialorder %v1399, 0.0
      %vm1571 = vcmp.ge.f32.partialorder %v1405, 0.0
      %vm1572 = vcmp.ge.f32.partialorder %v1409, 0.0
      %vm1573 = vcmp.ge.f32.partialorder %v1415, 0.0
      %vm1574 = vcmp.ge.f32.partialorder %v1419, 0.0
      %vm1575 = vcmp.ge.f32.partialorder %v1425, 0.0
      %vm1576 = vcmp.ge.f32.partialorder %v1429, 0.0
      %vm1577 = vcmp.ge.f32.partialorder %v1435, 0.0
      %vm1578 = vcmp.ge.f32.partialorder %v1439, 0.0
      %vm1579 = vcmp.ge.f32.partialorder %v1445, 0.0
      %vm1580 = vcmp.ge.f32.partialorder %v1449, 0.0
      %vm1581 = vcmp.ge.f32.partialorder %v1455, 0.0
      %vm1582 = vcmp.ge.f32.partialorder %v1459, 0.0
      %vm1583 = vcmp.ge.f32.partialorder %v1465, 0.0
      %vm1584 = vcmp.ge.f32.partialorder %v1469, 0.0
      %vm1585 = vcmp.ge.f32.partialorder %v1475, 0.0
      %vm1586 = vcmp.ge.f32.partialorder %v1479, 0.0
      %vm1587 = vcmp.ge.f32.partialorder %v1485, 0.0
      %vm1588 = vcmp.ge.f32.partialorder %v1489, 0.0
      %vm1589 = vcmp.ge.f32.partialorder %v1495, 0.0
      %vm1590 = vcmp.ge.f32.partialorder %v1499, 0.0
      %vm1591 = vcmp.ge.f32.partialorder %v1505, 0.0
      %vm1592 = vcmp.ge.f32.partialorder %v1509, 0.0
      %vm1593 = vcmp.ge.f32.partialorder %v1515, 0.0
      %vm1594 = vcmp.ge.f32.partialorder %v1519, 0.0
      %vm1595 = vcmp.ge.f32.partialorder %v1525, 0.0
      %vm1596 = vcmp.ge.f32.partialorder %v1529, 0.0
      %v1597 = vmul.f32 %v1215, 0.01
      %v1598 = vmul.f32 %v1219, 0.01
      %v1599 = vmul.f32 %v1225, 0.01
      %v1600 = vmul.f32 %v1229, 0.01
      %v1601 = vmul.f32 %v1235, 0.01
      %v1602 = vmul.f32 %v1239, 0.01
      %v1603 = vmul.f32 %v1245, 0.01
      %v1604 = vmul.f32 %v1249, 0.01
      %v1605 = vmul.f32 %v1255, 0.01
      %v1606 = vmul.f32 %v1259, 0.01
      %v1607 = vmul.f32 %v1265, 0.01
      %v1608 = vmul.f32 %v1269, 0.01
      %v1609 = vmul.f32 %v1275, 0.01
      %v1610 = vmul.f32 %v1279, 0.01
      %v1611 = vmul.f32 %v1285, 0.01
      %v1612 = vmul.f32 %v1289, 0.01
      %v1613 = vmul.f32 %v1295, 0.01
      %v1614 = vmul.f32 %v1299, 0.01
      %v1615 = vmul.f32 %v1305, 0.01
      %v1616 = vmul.f32 %v1309, 0.01
      %v1617 = vmul.f32 %v1315, 0.01
      %v1618 = vmul.f32 %v1319, 0.01
      %v1619 = vmul.f32 %v1325, 0.01
      %v1620 = vmul.f32 %v1329, 0.01
      %v1621 = vmul.f32 %v1335, 0.01
      %v1622 = vmul.f32 %v1339, 0.01
      %v1623 = vmul.f32 %v1345, 0.01
      %v1624 = vmul.f32 %v1349, 0.01
      %v1625 = vmul.f32 %v1355, 0.01
      %v1626 = vmul.f32 %v1359, 0.01
      %v1627 = vmul.f32 %v1365, 0.01
      %v1628 = vmul.f32 %v1369, 0.01
      %v1629 = vmul.f32 %v1375, 0.01
      %v1630 = vmul.f32 %v1379, 0.01
      %v1631 = vmul.f32 %v1385, 0.01
      %v1632 = vmul.f32 %v1389, 0.01
      %v1633 = vmul.f32 %v1395, 0.01
      %v1634 = vmul.f32 %v1399, 0.01
      %v1635 = vmul.f32 %v1405, 0.01
      %v1636 = vmul.f32 %v1409, 0.01
      %v1637 = vmul.f32 %v1415, 0.01
      %v1638 = vmul.f32 %v1419, 0.01
      %v1639 = vmul.f32 %v1425, 0.01
      %v1640 = vmul.f32 %v1429, 0.01
      %v1641 = vmul.f32 %v1435, 0.01
      %v1642 = vmul.f32 %v1439, 0.01
      %v1643 = vmul.f32 %v1445, 0.01
      %v1644 = vmul.f32 %v1449, 0.01
      %v1645 = vmul.f32 %v1455, 0.01
      %v1646 = vmul.f32 %v1459, 0.01
      %v1647 = vmul.f32 %v1465, 0.01
      %v1648 = vmul.f32 %v1469, 0.01
      %v1649 = vmul.f32 %v1475, 0.01
      %v1650 = vmul.f32 %v1479, 0.01
      %v1651 = vmul.f32 %v1485, 0.01
      %v1652 = vmul.f32 %v1489, 0.01
      %v1653 = vmul.f32 %v1495, 0.01
      %v1654 = vmul.f32 %v1499, 0.01
      %v1655 = vmul.f32 %v1505, 0.01
      %v1656 = vmul.f32 %v1509, 0.01
      %v1657 = vmul.f32 %v1515, 0.01
      %v1658 = vmul.f32 %v1519, 0.01
      %v1659 = vmul.f32 %v1525, 0.01
      %v1660 = vmul.f32 %v1529, 0.01
      %v1661 = vsel %vm1533, %v1215, %v1597
      %v1662 = vsel %vm1534, %v1219, %v1598
      %v1663 = vsel %vm1535, %v1225, %v1599
      %v1664 = vsel %vm1536, %v1229, %v1600
      %v1665 = vsel %vm1537, %v1235, %v1601
      %v1666 = vsel %vm1538, %v1239, %v1602
      %v1667 = vsel %vm1539, %v1245, %v1603
      %v1668 = vsel %vm1540, %v1249, %v1604
      %v1669 = vsel %vm1541, %v1255, %v1605
      %v1670 = vsel %vm1542, %v1259, %v1606
      %v1671 = vsel %vm1543, %v1265, %v1607
      %v1672 = vsel %vm1544, %v1269, %v1608
      %v1673 = vsel %vm1545, %v1275, %v1609
      %v1674 = vsel %vm1546, %v1279, %v1610
      %v1675 = vsel %vm1547, %v1285, %v1611
      %v1676 = vsel %vm1548, %v1289, %v1612
      %v1677 = vsel %vm1549, %v1295, %v1613
      %v1678 = vsel %vm1550, %v1299, %v1614
      %v1679 = vsel %vm1551, %v1305, %v1615
      %v1680 = vsel %vm1552, %v1309, %v1616
      %v1681 = vsel %vm1553, %v1315, %v1617
      %v1682 = vsel %vm1554, %v1319, %v1618
      %v1683 = vsel %vm1555, %v1325, %v1619
      %v1684 = vsel %vm1556, %v1329, %v1620
      %v1685 = vsel %vm1557, %v1335, %v1621
      %v1686 = vsel %vm1558, %v1339, %v1622
      %v1687 = vsel %vm1559, %v1345, %v1623
      %v1688 = vsel %vm1560, %v1349, %v1624
      %v1689 = vsel %vm1561, %v1355, %v1625
      %v1690 = vsel %vm1562, %v1359, %v1626
      %v1691 = vsel %vm1563, %v1365, %v1627
      %v1692 = vsel %vm1564, %v1369, %v1628
      %v1693 = vsel %vm1565, %v1375, %v1629
      %v1694 = vsel %vm1566, %v1379, %v1630
      %v1695 = vsel %vm1567, %v1385, %v1631
      %v1696 = vsel %vm1568, %v1389, %v1632
      %v1697 = vsel %vm1569, %v1395, %v1633
      %v1698 = vsel %vm1570, %v1399, %v1634
      %v1699 = vsel %vm1571, %v1405, %v1635
      %v1700 = vsel %vm1572, %v1409, %v1636
      %v1701 = vsel %vm1573, %v1415, %v1637
      %v1702 = vsel %vm1574, %v1419, %v1638
      %v1703 = vsel %vm1575, %v1425, %v1639
      %v1704 = vsel %vm1576, %v1429, %v1640
      %v1705 = vsel %vm1577, %v1435, %v1641
      %v1706 = vsel %vm1578, %v1439, %v1642
      %v1707 = vsel %vm1579, %v1445, %v1643
      %v1708 = vsel %vm1580, %v1449, %v1644
      %v1709 = vsel %vm1581, %v1455, %v1645
      %v1710 = vsel %vm1582, %v1459, %v1646
      %v1711 = vsel %vm1583, %v1465, %v1647
      %v1712 = vsel %vm1584, %v1469, %v1648
      %v1713 = vsel %vm1585, %v1475, %v1649
      %v1714 = vsel %vm1586, %v1479, %v1650
      %v1715 = vsel %vm1587, %v1485, %v1651
      %v1716 = vsel %vm1588, %v1489, %v1652
      %v1717 = vsel %vm1589, %v1495, %v1653
      %v1718 = vsel %vm1590, %v1499, %v1654
      %v1719 = vsel %vm1591, %v1505, %v1655
      %v1720 = vsel %vm1592, %v1509, %v1656
      %v1721 = vsel %vm1593, %v1515, %v1657
      %v1722 = vsel %vm1594, %v1519, %v1658
      %v1723 = vsel %vm1595, %v1525, %v1659
      %v1724 = vsel %vm1596, %v1529, %v1660
      %v1725 = vadd.f32 %v1217, -2.0
      %v1726 = vadd.f32 %v1221, -2.0
      %v1727 = vadd.f32 %v1227, -2.0
      %v1728 = vadd.f32 %v1231, -2.0
      %v1729 = vadd.f32 %v1237, -2.0
      %v1730 = vadd.f32 %v1241, -2.0
      %v1731 = vadd.f32 %v1247, -2.0
      %v1732 = vadd.f32 %v1251, -2.0
      %v1733 = vadd.f32 %v1257, -2.0
      %v1734 = vadd.f32 %v1261, -2.0
      %v1735 = vadd.f32 %v1267, -2.0
      %v1736 = vadd.f32 %v1271, -2.0
      %v1737 = vadd.f32 %v1277, -2.0
      %v1738 = vadd.f32 %v1281, -2.0
      %v1739 = vadd.f32 %v1287, -2.0
      %v1740 = vadd.f32 %v1291, -2.0
      %v1741 = vadd.f32 %v1297, -2.0
      %v1742 = vadd.f32 %v1301, -2.0
      %v1743 = vadd.f32 %v1307, -2.0
      %v1744 = vadd.f32 %v1311, -2.0
      %v1745 = vadd.f32 %v1317, -2.0
      %v1746 = vadd.f32 %v1321, -2.0
      %v1747 = vadd.f32 %v1327, -2.0
      %v1748 = vadd.f32 %v1331, -2.0
      %v1749 = vadd.f32 %v1337, -2.0
      %v1750 = vadd.f32 %v1341, -2.0
      %v1751 = vadd.f32 %v1347, -2.0
      %v1752 = vadd.f32 %v1351, -2.0
      %v1753 = vadd.f32 %v1357, -2.0
      %v1754 = vadd.f32 %v1361, -2.0
      %v1755 = vadd.f32 %v1367, -2.0
      %v1756 = vadd.f32 %v1371, -2.0
      %v1757 = vadd.f32 %v1377, -2.0
      %v1758 = vadd.f32 %v1381, -2.0
      %v1759 = vadd.f32 %v1387, -2.0
      %v1760 = vadd.f32 %v1391, -2.0
      %v1761 = vadd.f32 %v1397, -2.0
      %v1762 = vadd.f32 %v1401, -2.0
      %v1763 = vadd.f32 %v1407, -2.0
      %v1764 = vadd.f32 %v1411, -2.0
      %v1765 = vadd.f32 %v1417, -2.0
      %v1766 = vadd.f32 %v1421, -2.0
      %v1767 = vadd.f32 %v1427, -2.0
      %v1768 = vadd.f32 %v1431, -2.0
      %v1769 = vadd.f32 %v1437, -2.0
      %v1770 = vadd.f32 %v1441, -2.0
      %v1771 = vadd.f32 %v1447, -2.0
      %v1772 = vadd.f32 %v1451, -2.0
      %v1773 = vadd.f32 %v1457, -2.0
      %v1774 = vadd.f32 %v1461, -2.0
      %v1775 = vadd.f32 %v1467, -2.0
      %v1776 = vadd.f32 %v1471, -2.0
      %v1777 = vadd.f32 %v1477, -2.0
      %v1778 = vadd.f32 %v1481, -2.0
      %v1779 = vadd.f32 %v1487, -2.0
      %v1780 = vadd.f32 %v1491, -2.0
      %v1781 = vadd.f32 %v1497, -2.0
      %v1782 = vadd.f32 %v1501, -2.0
      %v1783 = vadd.f32 %v1507, -2.0
      %v1784 = vadd.f32 %v1511, -2.0
      %v1785 = vadd.f32 %v1517, -2.0
      %v1786 = vadd.f32 %v1521, -2.0
      %v1787 = vadd.f32 %v1527, -2.0
      %v1788 = vadd.f32 %v1531, -2.0
      %v1789 = vsub.f32 0.0, %v1725
      %v1790 = vsub.f32 0.0, %v1726
      %v1791 = vsub.f32 0.0, %v1727
      %v1792 = vsub.f32 0.0, %v1728
      %v1793 = vsub.f32 0.0, %v1729
      %v1794 = vsub.f32 0.0, %v1730
      %v1795 = vsub.f32 0.0, %v1731
      %v1796 = vsub.f32 0.0, %v1732
      %v1797 = vsub.f32 0.0, %v1733
      %v1798 = vsub.f32 0.0, %v1734
      %v1799 = vsub.f32 0.0, %v1735
      %v1800 = vsub.f32 0.0, %v1736
      %v1801 = vsub.f32 0.0, %v1737
      %v1802 = vsub.f32 0.0, %v1738
      %v1803 = vsub.f32 0.0, %v1739
      %v1804 = vsub.f32 0.0, %v1740
      %v1805 = vsub.f32 0.0, %v1741
      %v1806 = vsub.f32 0.0, %v1742
      %v1807 = vsub.f32 0.0, %v1743
      %v1808 = vsub.f32 0.0, %v1744
      %v1809 = vsub.f32 0.0, %v1745
      %v1810 = vsub.f32 0.0, %v1746
      %v1811 = vsub.f32 0.0, %v1747
      %v1812 = vsub.f32 0.0, %v1748
      %v1813 = vsub.f32 0.0, %v1749
      %v1814 = vsub.f32 0.0, %v1750
      %v1815 = vsub.f32 0.0, %v1751
      %v1816 = vsub.f32 0.0, %v1752
      %v1817 = vsub.f32 0.0, %v1753
      %v1818 = vsub.f32 0.0, %v1754
      %v1819 = vsub.f32 0.0, %v1755
      %v1820 = vsub.f32 0.0, %v1756
      %v1821 = vsub.f32 0.0, %v1757
      %v1822 = vsub.f32 0.0, %v1758
      %v1823 = vsub.f32 0.0, %v1759
      %v1824 = vsub.f32 0.0, %v1760
      %v1825 = vsub.f32 0.0, %v1761
      %v1826 = vsub.f32 0.0, %v1762
      %v1827 = vsub.f32 0.0, %v1763
      %v1828 = vsub.f32 0.0, %v1764
      %v1829 = vsub.f32 0.0, %v1765
      %v1830 = vsub.f32 0.0, %v1766
      %v1831 = vsub.f32 0.0, %v1767
      %v1832 = vsub.f32 0.0, %v1768
      %v1833 = vsub.f32 0.0, %v1769
      %v1834 = vsub.f32 0.0, %v1770
      %v1835 = vsub.f32 0.0, %v1771
      %v1836 = vsub.f32 0.0, %v1772
      %v1837 = vsub.f32 0.0, %v1773
      %v1838 = vsub.f32 0.0, %v1774
      %v1839 = vsub.f32 0.0, %v1775
      %v1840 = vsub.f32 0.0, %v1776
      %v1841 = vsub.f32 0.0, %v1777
      %v1842 = vsub.f32 0.0, %v1778
      %v1843 = vsub.f32 0.0, %v1779
      %v1844 = vsub.f32 0.0, %v1780
      %v1845 = vsub.f32 0.0, %v1781
      %v1846 = vsub.f32 0.0, %v1782
      %v1847 = vsub.f32 0.0, %v1783
      %v1848 = vsub.f32 0.0, %v1784
      %v1849 = vsub.f32 0.0, %v1785
      %v1850 = vsub.f32 0.0, %v1786
      %v1851 = vsub.f32 0.0, %v1787
      %v1852 = vsub.f32 0.0, %v1788
      %v1853 = vmul.f32 %v1789, 1.442695
      %v1854 = vpow.pop %v1853
      %v1855 = vmul.f32 %v1790, 1.442695
      %v1856 = vpow.pop %v1855
      %v1857 = vmul.f32 %v1791, 1.442695
      %v1858 = vpow.pop %v1857
      %v1859 = vmul.f32 %v1792, 1.442695
      %v1860 = vpow.pop %v1859
      %v1861 = vmul.f32 %v1793, 1.442695
      %v1862 = vpow.pop %v1861
      %v1863 = vmul.f32 %v1794, 1.442695
      %v1864 = vpow.pop %v1863
      %v1865 = vmul.f32 %v1795, 1.442695
      %v1866 = vpow.pop %v1865
      %v1867 = vmul.f32 %v1796, 1.442695
      %v1868 = vpow.pop %v1867
      %v1869 = vmul.f32 %v1797, 1.442695
      %v1870 = vpow.pop %v1869
      %v1871 = vmul.f32 %v1798, 1.442695
      %v1872 = vpow.pop %v1871
      %v1873 = vmul.f32 %v1799, 1.442695
      %v1874 = vpow.pop %v1873
      %v1875 = vmul.f32 %v1800, 1.442695
      %v1876 = vpow.pop %v1875
      %v1877 = vmul.f32 %v1801, 1.442695
      %v1878 = vpow.pop %v1877
      %v1879 = vmul.f32 %v1802, 1.442695
      %v1880 = vpow.pop %v1879
      %v1881 = vmul.f32 %v1803, 1.442695
      %v1882 = vpow.pop %v1881
      %v1883 = vmul.f32 %v1804, 1.442695
      %v1884 = vpow.pop %v1883
      %v1885 = vmul.f32 %v1805, 1.442695
      %v1886 = vpow.pop %v1885
      %v1887 = vmul.f32 %v1806, 1.442695
      %v1888 = vpow.pop %v1887
      %v1889 = vmul.f32 %v1807, 1.442695
      %v1890 = vpow.pop %v1889
      %v1891 = vmul.f32 %v1808, 1.442695
      %v1892 = vpow.pop %v1891
      %v1893 = vmul.f32 %v1809, 1.442695
      %v1894 = vpow.pop %v1893
      %v1895 = vmul.f32 %v1810, 1.442695
      %v1896 = vpow.pop %v1895
      %v1897 = vmul.f32 %v1811, 1.442695
      %v1898 = vpow.pop %v1897
      %v1899 = vmul.f32 %v1812, 1.442695
      %v1900 = vpow.pop %v1899
      %v1901 = vmul.f32 %v1813, 1.442695
      %v1902 = vpow.pop %v1901
      %v1903 = vmul.f32 %v1814, 1.442695
      %v1904 = vpow.pop %v1903
      %v1905 = vmul.f32 %v1815, 1.442695
      %v1906 = vpow.pop %v1905
      %v1907 = vmul.f32 %v1816, 1.442695
      %v1908 = vpow.pop %v1907
      %v1909 = vmul.f32 %v1817, 1.442695
      %v1910 = vpow.pop %v1909
      %v1911 = vmul.f32 %v1818, 1.442695
      %v1912 = vpow.pop %v1911
      %v1913 = vmul.f32 %v1819, 1.442695
      %v1914 = vpow.pop %v1913
      %v1915 = vmul.f32 %v1820, 1.442695
      %v1916 = vpow.pop %v1915
      %v1917 = vmul.f32 %v1821, 1.442695
      %v1918 = vpow.pop %v1917
      %v1919 = vmul.f32 %v1822, 1.442695
      %v1920 = vpow.pop %v1919
      %v1921 = vmul.f32 %v1823, 1.442695
      %v1922 = vpow.pop %v1921
      %v1923 = vmul.f32 %v1824, 1.442695
      %v1924 = vpow.pop %v1923
      %v1925 = vmul.f32 %v1825, 1.442695
      %v1926 = vpow.pop %v1925
      %v1927 = vmul.f32 %v1826, 1.442695
      %v1928 = vpow.pop %v1927
      %v1929 = vmul.f32 %v1827, 1.442695
      %v1930 = vpow.pop %v1929
      %v1931 = vmul.f32 %v1828, 1.442695
      %v1932 = vpow.pop %v1931
      %v1933 = vmul.f32 %v1829, 1.442695
      %v1934 = vpow.pop %v1933
      %v1935 = vmul.f32 %v1830, 1.442695
      %v1936 = vpow.pop %v1935
      %v1937 = vmul.f32 %v1831, 1.442695
      %v1938 = vpow.pop %v1937
      %v1939 = vmul.f32 %v1832, 1.442695
      %v1940 = vpow.pop %v1939
      %v1941 = vmul.f32 %v1833, 1.442695
      %v1942 = vpow.pop %v1941
      %v1943 = vmul.f32 %v1834, 1.442695
      %v1944 = vpow.pop %v1943
      %v1945 = vmul.f32 %v1835, 1.442695
      %v1946 = vpow.pop %v1945
      %v1947 = vmul.f32 %v1836, 1.442695
      %v1948 = vpow.pop %v1947
      %v1949 = vmul.f32 %v1837, 1.442695
      %v1950 = vpow.pop %v1949
      %v1951 = vmul.f32 %v1838, 1.442695
      %v1952 = vpow.pop %v1951
      %v1953 = vmul.f32 %v1839, 1.442695
      %v1954 = vpow.pop %v1953
      %v1955 = vmul.f32 %v1840, 1.442695
      %v1956 = vpow.pop %v1955
      %v1957 = vmul.f32 %v1841, 1.442695
      %v1958 = vpow.pop %v1957
      %v1959 = vmul.f32 %v1842, 1.442695
      %v1960 = vpow.pop %v1959
      %v1961 = vmul.f32 %v1843, 1.442695
      %v1962 = vpow.pop %v1961
      %v1963 = vmul.f32 %v1844, 1.442695
      %v1964 = vpow.pop %v1963
      %v1965 = vmul.f32 %v1845, 1.442695
      %v1966 = vpow.pop %v1965
      %v1967 = vmul.f32 %v1846, 1.442695
      %v1968 = vpow.pop %v1967
      %v1969 = vmul.f32 %v1847, 1.442695
      %v1970 = vpow.pop %v1969
      %v1971 = vmul.f32 %v1848, 1.442695
      %v1972 = vpow.pop %v1971
      %v1973 = vmul.f32 %v1849, 1.442695
      %v1974 = vpow.pop %v1973
      %v1975 = vmul.f32 %v1850, 1.442695
      %v1976 = vpow.pop %v1975
      %v1977 = vmul.f32 %v1851, 1.442695
      %v1978 = vpow.pop %v1977
      %v1979 = vmul.f32 %v1852, 1.442695
      %v1980 = vpow.pop %v1979
      %v1981 = vadd.f32 %v1854, 1.0
      %v1982 = vadd.f32 %v1856, 1.0
      %v1983 = vadd.f32 %v1858, 1.0
      %v1984 = vadd.f32 %v1860, 1.0
      %v1985 = vadd.f32 %v1862, 1.0
      %v1986 = vadd.f32 %v1864, 1.0
      %v1987 = vadd.f32 %v1866, 1.0
      %v1988 = vadd.f32 %v1868, 1.0
      %v1989 = vadd.f32 %v1870, 1.0
      %v1990 = vadd.f32 %v1872, 1.0
      %v1991 = vadd.f32 %v1874, 1.0
      %v1992 = vadd.f32 %v1876, 1.0
      %v1993 = vadd.f32 %v1878, 1.0
      %v1994 = vadd.f32 %v1880, 1.0
      %v1995 = vadd.f32 %v1882, 1.0
      %v1996 = vadd.f32 %v1884, 1.0
      %v1997 = vadd.f32 %v1886, 1.0
      %v1998 = vadd.f32 %v1888, 1.0
      %v1999 = vadd.f32 %v1890, 1.0
      %v2000 = vadd.f32 %v1892, 1.0
      %v2001 = vadd.f32 %v1894, 1.0
      %v2002 = vadd.f32 %v1896, 1.0
      %v2003 = vadd.f32 %v1898, 1.0
      %v2004 = vadd.f32 %v1900, 1.0
      %v2005 = vadd.f32 %v1902, 1.0
      %v2006 = vadd.f32 %v1904, 1.0
      %v2007 = vadd.f32 %v1906, 1.0
      %v2008 = vadd.f32 %v1908, 1.0
      %v2009 = vadd.f32 %v1910, 1.0
      %v2010 = vadd.f32 %v1912, 1.0
      %v2011 = vadd.f32 %v1914, 1.0
      %v2012 = vadd.f32 %v1916, 1.0
      %v2013 = vadd.f32 %v1918, 1.0
      %v2014 = vadd.f32 %v1920, 1.0
      %v2015 = vadd.f32 %v1922, 1.0
      %v2016 = vadd.f32 %v1924, 1.0
      %v2017 = vadd.f32 %v1926, 1.0
      %v2018 = vadd.f32 %v1928, 1.0
      %v2019 = vadd.f32 %v1930, 1.0
      %v2020 = vadd.f32 %v1932, 1.0
      %v2021 = vadd.f32 %v1934, 1.0
      %v2022 = vadd.f32 %v1936, 1.0
      %v2023 = vadd.f32 %v1938, 1.0
      %v2024 = vadd.f32 %v1940, 1.0
      %v2025 = vadd.f32 %v1942, 1.0
      %v2026 = vadd.f32 %v1944, 1.0
      %v2027 = vadd.f32 %v1946, 1.0
      %v2028 = vadd.f32 %v1948, 1.0
      %v2029 = vadd.f32 %v1950, 1.0
      %v2030 = vadd.f32 %v1952, 1.0
      %v2031 = vadd.f32 %v1954, 1.0
      %v2032 = vadd.f32 %v1956, 1.0
      %v2033 = vadd.f32 %v1958, 1.0
      %v2034 = vadd.f32 %v1960, 1.0
      %v2035 = vadd.f32 %v1962, 1.0
      %v2036 = vadd.f32 %v1964, 1.0
      %v2037 = vadd.f32 %v1966, 1.0
      %v2038 = vadd.f32 %v1968, 1.0
      %v2039 = vadd.f32 %v1970, 1.0
      %v2040 = vadd.f32 %v1972, 1.0
      %v2041 = vadd.f32 %v1974, 1.0
      %v2042 = vadd.f32 %v1976, 1.0
      %v2043 = vadd.f32 %v1978, 1.0
      %v2044 = vadd.f32 %v1980, 1.0
      %v2045 = vrcp.pop %v1981
      %v2046 = vrcp.pop %v1982
      %v2047 = vrcp.pop %v1983
      %v2048 = vrcp.pop %v1984
      %v2049 = vrcp.pop %v1985
      %v2050 = vrcp.pop %v1986
      %v2051 = vrcp.pop %v1987
      %v2052 = vrcp.pop %v1988
      %v2053 = vrcp.pop %v1989
      %v2054 = vrcp.pop %v1990
      %v2055 = vrcp.pop %v1991
      %v2056 = vrcp.pop %v1992
      %v2057 = vrcp.pop %v1993
      %v2058 = vrcp.pop %v1994
      %v2059 = vrcp.pop %v1995
      %v2060 = vrcp.pop %v1996
      %v2061 = vrcp.pop %v1997
      %v2062 = vrcp.pop %v1998
      %v2063 = vrcp.pop %v1999
      %v2064 = vrcp.pop %v2000
      %v2065 = vrcp.pop %v2001
      %v2066 = vrcp.pop %v2002
      %v2067 = vrcp.pop %v2003
      %v2068 = vrcp.pop %v2004
      %v2069 = vrcp.pop %v2005
      %v2070 = vrcp.pop %v2006
      %v2071 = vrcp.pop %v2007
      %v2072 = vrcp.pop %v2008
      %v2073 = vrcp.pop %v2009
      %v2074 = vrcp.pop %v2010
      %v2075 = vrcp.pop %v2011
      %v2076 = vrcp.pop %v2012
      %v2077 = vrcp.pop %v2013
      %v2078 = vrcp.pop %v2014
      %v2079 = vrcp.pop %v2015
      %v2080 = vrcp.pop %v2016
      %v2081 = vrcp.pop %v2017
      %v2082 = vrcp.pop %v2018
      %v2083 = vrcp.pop %v2019
      %v2084 = vrcp.pop %v2020
      %v2085 = vrcp.pop %v2021
      %v2086 = vrcp.pop %v2022
      %v2087 = vrcp.pop %v2023
      %v2088 = vrcp.pop %v2024
      %v2089 = vrcp.pop %v2025
      %v2090 = vrcp.pop %v2026
      %v2091 = vrcp.pop %v2027
      %v2092 = vrcp.pop %v2028
      %v2093 = vrcp.pop %v2029
      %v2094 = vrcp.pop %v2030
      %v2095 = vrcp.pop %v2031
      %v2096 = vrcp.pop %v2032
      %v2097 = vrcp.pop %v2033
      %v2098 = vrcp.pop %v2034
      %v2099 = vrcp.pop %v2035
      %v2100 = vrcp.pop %v2036
      %v2101 = vrcp.pop %v2037
      %v2102 = vrcp.pop %v2038
      %v2103 = vrcp.pop %v2039
      %v2104 = vrcp.pop %v2040
      %v2105 = vrcp.pop %v2041
      %v2106 = vrcp.pop %v2042
      %v2107 = vrcp.pop %v2043
      %v2108 = vrcp.pop %v2044
      %v2109 = vmul.f32 %v2045, %v1661
      %v2110 = vmul.f32 %v2046, %v1662
      %v2111 = vmul.f32 %v2047, %v1663
      %v2112 = vmul.f32 %v2048, %v1664
      %v2113 = vmul.f32 %v2049, %v1665
      %v2114 = vmul.f32 %v2050, %v1666
      %v2115 = vmul.f32 %v2051, %v1667
      %v2116 = vmul.f32 %v2052, %v1668
      %v2117 = vmul.f32 %v2053, %v1669
      %v2118 = vmul.f32 %v2054, %v1670
      %v2119 = vmul.f32 %v2055, %v1671
      %v2120 = vmul.f32 %v2056, %v1672
      %v2121 = vmul.f32 %v2057, %v1673
      %v2122 = vmul.f32 %v2058, %v1674
      %v2123 = vmul.f32 %v2059, %v1675
      %v2124 = vmul.f32 %v2060, %v1676
      %v2125 = vmul.f32 %v2061, %v1677
      %v2126 = vmul.f32 %v2062, %v1678
      %v2127 = vmul.f32 %v2063, %v1679
      %v2128 = vmul.f32 %v2064, %v1680
      %v2129 = vmul.f32 %v2065, %v1681
      %v2130 = vmul.f32 %v2066, %v1682
      %v2131 = vmul.f32 %v2067, %v1683
      %v2132 = vmul.f32 %v2068, %v1684
      %v2133 = vmul.f32 %v2069, %v1685
      %v2134 = vmul.f32 %v2070, %v1686
      %v2135 = vmul.f32 %v2071, %v1687
      %v2136 = vmul.f32 %v2072, %v1688
      %v2137 = vmul.f32 %v2073, %v1689
      %v2138 = vmul.f32 %v2074, %v1690
      %v2139 = vmul.f32 %v2075, %v1691
      %v2140 = vmul.f32 %v2076, %v1692
      %v2141 = vmul.f32 %v2077, %v1693
      %v2142 = vmul.f32 %v2078, %v1694
      %v2143 = vmul.f32 %v2079, %v1695
      %v2144 = vmul.f32 %v2080, %v1696
      %v2145 = vmul.f32 %v2081, %v1697
      %v2146 = vmul.f32 %v2082, %v1698
      %v2147 = vmul.f32 %v2083, %v1699
      %v2148 = vmul.f32 %v2084, %v1700
      %v2149 = vmul.f32 %v2085, %v1701
      %v2150 = vmul.f32 %v2086, %v1702
      %v2151 = vmul.f32 %v2087, %v1703
      %v2152 = vmul.f32 %v2088, %v1704
      %v2153 = vmul.f32 %v2089, %v1705
      %v2154 = vmul.f32 %v2090, %v1706
      %v2155 = vmul.f32 %v2091, %v1707
      %v2156 = vmul.f32 %v2092, %v1708
      %v2157 = vmul.f32 %v2093, %v1709
      %v2158 = vmul.f32 %v2094, %v1710
      %v2159 = vmul.f32 %v2095, %v1711
      %v2160 = vmul.f32 %v2096, %v1712
      %v2161 = vmul.f32 %v2097, %v1713
      %v2162 = vmul.f32 %v2098, %v1714
      %v2163 = vmul.f32 %v2099, %v1715
      %v2164 = vmul.f32 %v2100, %v1716
      %v2165 = vmul.f32 %v2101, %v1717
      %v2166 = vmul.f32 %v2102, %v1718
      %v2167 = vmul.f32 %v2103, %v1719
      %v2168 = vmul.f32 %v2104, %v1720
      %v2169 = vmul.f32 %v2105, %v1721
      %v2170 = vmul.f32 %v2106, %v1722
      %v2171 = vmul.f32 %v2107, %v1723
      %v2172 = vmul.f32 %v2108, %v1724
      %v2173 = vsub.f32 1.0, %v2045
      %v2174 = vsub.f32 1.0, %v2046
      %v2175 = vsub.f32 1.0, %v2047
      %v2176 = vsub.f32 1.0, %v2048
      %v2177 = vsub.f32 1.0, %v2049
      %v2178 = vsub.f32 1.0, %v2050
      %v2179 = vsub.f32 1.0, %v2051
      %v2180 = vsub.f32 1.0, %v2052
      %v2181 = vsub.f32 1.0, %v2053
      %v2182 = vsub.f32 1.0, %v2054
      %v2183 = vsub.f32 1.0, %v2055
      %v2184 = vsub.f32 1.0, %v2056
      %v2185 = vsub.f32 1.0, %v2057
      %v2186 = vsub.f32 1.0, %v2058
      %v2187 = vsub.f32 1.0, %v2059
      %v2188 = vsub.f32 1.0, %v2060
      %v2189 = vsub.f32 1.0, %v2061
      %v2190 = vsub.f32 1.0, %v2062
      %v2191 = vsub.f32 1.0, %v2063
      %v2192 = vsub.f32 1.0, %v2064
      %v2193 = vsub.f32 1.0, %v2065
      %v2194 = vsub.f32 1.0, %v2066
      %v2195 = vsub.f32 1.0, %v2067
      %v2196 = vsub.f32 1.0, %v2068
      %v2197 = vsub.f32 1.0, %v2069
      %v2198 = vsub.f32 1.0, %v2070
      %v2199 = vsub.f32 1.0, %v2071
      %v2200 = vsub.f32 1.0, %v2072
      %v2201 = vsub.f32 1.0, %v2073
      %v2202 = vsub.f32 1.0, %v2074
      %v2203 = vsub.f32 1.0, %v2075
      %v2204 = vsub.f32 1.0, %v2076
      %v2205 = vsub.f32 1.0, %v2077
      %v2206 = vsub.f32 1.0, %v2078
      %v2207 = vsub.f32 1.0, %v2079
      %v2208 = vsub.f32 1.0, %v2080
      %v2209 = vsub.f32 1.0, %v2081
      %v2210 = vsub.f32 1.0, %v2082
      %v2211 = vsub.f32 1.0, %v2083
      %v2212 = vsub.f32 1.0, %v2084
      %v2213 = vsub.f32 1.0, %v2085
      %v2214 = vsub.f32 1.0, %v2086
      %v2215 = vsub.f32 1.0, %v2087
      %v2216 = vsub.f32 1.0, %v2088
      %v2217 = vsub.f32 1.0, %v2089
      %v2218 = vsub.f32 1.0, %v2090
      %v2219 = vsub.f32 1.0, %v2091
      %v2220 = vsub.f32 1.0, %v2092
      %v2221 = vsub.f32 1.0, %v2093
      %v2222 = vsub.f32 1.0, %v2094
      %v2223 = vsub.f32 1.0, %v2095
      %v2224 = vsub.f32 1.0, %v2096
      %v2225 = vsub.f32 1.0, %v2097
      %v2226 = vsub.f32 1.0, %v2098
      %v2227 = vsub.f32 1.0, %v2099
      %v2228 = vsub.f32 1.0, %v2100
      %v2229 = vsub.f32 1.0, %v2101
      %v2230 = vsub.f32 1.0, %v2102
      %v2231 = vsub.f32 1.0, %v2103
      %v2232 = vsub.f32 1.0, %v2104
      %v2233 = vsub.f32 1.0, %v2105
      %v2234 = vsub.f32 1.0, %v2106
      %v2235 = vsub.f32 1.0, %v2107
      %v2236 = vsub.f32 1.0, %v2108
      %v2237 = vmul.f32 %v2173, %v689
      %v2238 = vmul.f32 %v2174, %v690
      %v2239 = vmul.f32 %v2175, %v691
      %v2240 = vmul.f32 %v2176, %v692
      %v2241 = vmul.f32 %v2177, %v693
      %v2242 = vmul.f32 %v2178, %v694
      %v2243 = vmul.f32 %v2179, %v695
      %v2244 = vmul.f32 %v2180, %v696
      %v2245 = vmul.f32 %v2181, %v729
      %v2246 = vmul.f32 %v2182, %v730
      %v2247 = vmul.f32 %v2183, %v731
      %v2248 = vmul.f32 %v2184, %v732
      %v2249 = vmul.f32 %v2185, %v733
      %v2250 = vmul.f32 %v2186, %v734
      %v2251 = vmul.f32 %v2187, %v735
      %v2252 = vmul.f32 %v2188, %v736
      %v2253 = vmul.f32 %v2189, %v769
      %v2254 = vmul.f32 %v2190, %v770
      %v2255 = vmul.f32 %v2191, %v771
      %v2256 = vmul.f32 %v2192, %v772
      %v2257 = vmul.f32 %v2193, %v773
      %v2258 = vmul.f32 %v2194, %v774
      %v2259 = vmul.f32 %v2195, %v775
      %v2260 = vmul.f32 %v2196, %v776
      %v2261 = vmul.f32 %v2197, %v809
      %v2262 = vmul.f32 %v2198, %v810
      %v2263 = vmul.f32 %v2199, %v811
      %v2264 = vmul.f32 %v2200, %v812
      %v2265 = vmul.f32 %v2201, %v813
      %v2266 = vmul.f32 %v2202, %v814
      %v2267 = vmul.f32 %v2203, %v815
      %v2268 = vmul.f32 %v2204, %v816
      %v2269 = vmul.f32 %v2205, %v929
      %v2270 = vmul.f32 %v2206, %v930
      %v2271 = vmul.f32 %v2207, %v931
      %v2272 = vmul.f32 %v2208, %v932
      %v2273 = vmul.f32 %v2209, %v933
      %v2274 = vmul.f32 %v2210, %v934
      %v2275 = vmul.f32 %v2211, %v935
      %v2276 = vmul.f32 %v2212, %v936
      %v2277 = vmul.f32 %v2213, %v969
      %v2278 = vmul.f32 %v2214, %v970
      %v2279 = vmul.f32 %v2215, %v971
      %v2280 = vmul.f32 %v2216, %v972
      %v2281 = vmul.f32 %v2217, %v973
      %v2282 = vmul.f32 %v2218, %v974
      %v2283 = vmul.f32 %v2219, %v975
      %v2284 = vmul.f32 %v2220, %v976
      %v2285 = vmul.f32 %v2221, %v1009
      %v2286 = vmul.f32 %v2222, %v1010
      %v2287 = vmul.f32 %v2223, %v1011
      %v2288 = vmul.f32 %v2224, %v1012
      %v2289 = vmul.f32 %v2225, %v1013
      %v2290 = vmul.f32 %v2226, %v1014
      %v2291 = vmul.f32 %v2227, %v1015
      %v2292 = vmul.f32 %v2228, %v1016
      %v2293 = vmul.f32 %v2229, %v1049
      %v2294 = vmul.f32 %v2230, %v1050
      %v2295 = vmul.f32 %v2231, %v1051
      %v2296 = vmul.f32 %v2232, %v1052
      %v2297 = vmul.f32 %v2233, %v1053
      %v2298 = vmul.f32 %v2234, %v1054
      %v2299 = vmul.f32 %v2235, %v1055
      %v2300 = vmul.f32 %v2236, %v1056
      %v2301 = vadd.f32 %v2109, %v2237
      %v2302 = vadd.f32 %v2110, %v2238
      %v2303 = vadd.f32 %v2111, %v2239
      %v2304 = vadd.f32 %v2112, %v2240
      %v2305 = vadd.f32 %v2113, %v2241
      %v2306 = vadd.f32 %v2114, %v2242
      %v2307 = vadd.f32 %v2115, %v2243
      %v2308 = vadd.f32 %v2116, %v2244
      %v2309 = vadd.f32 %v2117, %v2245
      %v2310 = vadd.f32 %v2118, %v2246
      %v2311 = vadd.f32 %v2119, %v2247
      %v2312 = vadd.f32 %v2120, %v2248
      %v2313 = vadd.f32 %v2121, %v2249
      %v2314 = vadd.f32 %v2122, %v2250
      %v2315 = vadd.f32 %v2123, %v2251
      %v2316 = vadd.f32 %v2124, %v2252
      %v2317 = vadd.f32 %v2125, %v2253
      %v2318 = vadd.f32 %v2126, %v2254
      %v2319 = vadd.f32 %v2127, %v2255
      %v2320 = vadd.f32 %v2128, %v2256
      %v2321 = vadd.f32 %v2129, %v2257
      %v2322 = vadd.f32 %v2130, %v2258
      %v2323 = vadd.f32 %v2131, %v2259
      %v2324 = vadd.f32 %v2132, %v2260
      %v2325 = vadd.f32 %v2133, %v2261
      %v2326 = vadd.f32 %v2134, %v2262
      %v2327 = vadd.f32 %v2135, %v2263
      %v2328 = vadd.f32 %v2136, %v2264
      %v2329 = vadd.f32 %v2137, %v2265
      %v2330 = vadd.f32 %v2138, %v2266
      %v2331 = vadd.f32 %v2139, %v2267
      %v2332 = vadd.f32 %v2140, %v2268
      %v2333 = vadd.f32 %v2141, %v2269
      %v2334 = vadd.f32 %v2142, %v2270
      %v2335 = vadd.f32 %v2143, %v2271
      %v2336 = vadd.f32 %v2144, %v2272
      %v2337 = vadd.f32 %v2145, %v2273
      %v2338 = vadd.f32 %v2146, %v2274
      %v2339 = vadd.f32 %v2147, %v2275
      %v2340 = vadd.f32 %v2148, %v2276
      %v2341 = vadd.f32 %v2149, %v2277
      %v2342 = vadd.f32 %v2150, %v2278
      %v2343 = vadd.f32 %v2151, %v2279
      %v2344 = vadd.f32 %v2152, %v2280
      %v2345 = vadd.f32 %v2153, %v2281
      %v2346 = vadd.f32 %v2154, %v2282
      %v2347 = vadd.f32 %v2155, %v2283
      %v2348 = vadd.f32 %v2156, %v2284
      %v2349 = vadd.f32 %v2157, %v2285
      %v2350 = vadd.f32 %v2158, %v2286
      %v2351 = vadd.f32 %v2159, %v2287
      %v2352 = vadd.f32 %v2160, %v2288
      %v2353 = vadd.f32 %v2161, %v2289
      %v2354 = vadd.f32 %v2162, %v2290
      %v2355 = vadd.f32 %v2163, %v2291
      %v2356 = vadd.f32 %v2164, %v2292
      %v2357 = vadd.f32 %v2165, %v2293
      %v2358 = vadd.f32 %v2166, %v2294
      %v2359 = vadd.f32 %v2167, %v2295
      %v2360 = vadd.f32 %v2168, %v2296
      %v2361 = vadd.f32 %v2169, %v2297
      %v2362 = vadd.f32 %v2170, %v2298
      %v2363 = vadd.f32 %v2171, %v2299
      %v2364 = vadd.f32 %v2172, %v2300
      %v2365 = vpack.c.bf16 %v2302, %v2301
      %v2366 = vpack.c.bf16 %v2304, %v2303
      %v2367 = vpack.c.bf16 %v2306, %v2305
      %v2368 = vpack.c.bf16 %v2308, %v2307
      %v2369 = vpack.c.bf16 %v2310, %v2309
      %v2370 = vpack.c.bf16 %v2312, %v2311
      %v2371 = vpack.c.bf16 %v2314, %v2313
      %v2372 = vpack.c.bf16 %v2316, %v2315
      %v2373 = vpack.c.bf16 %v2318, %v2317
      %v2374 = vpack.c.bf16 %v2320, %v2319
      %v2375 = vpack.c.bf16 %v2322, %v2321
      %v2376 = vpack.c.bf16 %v2324, %v2323
      %v2377 = vpack.c.bf16 %v2326, %v2325
      %v2378 = vpack.c.bf16 %v2328, %v2327
      %v2379 = vpack.c.bf16 %v2330, %v2329
      %v2380 = vpack.c.bf16 %v2332, %v2331
      %v2381 = vpack.c.bf16 %v2334, %v2333
      %v2382 = vpack.c.bf16 %v2336, %v2335
      %v2383 = vpack.c.bf16 %v2338, %v2337
      %v2384 = vpack.c.bf16 %v2340, %v2339
      %v2385 = vpack.c.bf16 %v2342, %v2341
      %v2386 = vpack.c.bf16 %v2344, %v2343
      %v2387 = vpack.c.bf16 %v2346, %v2345
      %v2388 = vpack.c.bf16 %v2348, %v2347
      %v2389 = vpack.c.bf16 %v2350, %v2349
      %v2390 = vpack.c.bf16 %v2352, %v2351
      %v2391 = vpack.c.bf16 %v2354, %v2353
      %v2392 = vpack.c.bf16 %v2356, %v2355
      %v2393 = vpack.c.bf16 %v2358, %v2357
      %v2394 = vpack.c.bf16 %v2360, %v2359
      %v2395 = vpack.c.bf16 %v2362, %v2361
      %v2396 = vpack.c.bf16 %v2364, %v2363
      %v2398 = vlaneseq
      %v2399 = vshrl.u32 %v2398, 7
      %v2400 = vsub.s32 0, %v2399
      %v2401 = vrot.slane %v519, %v2400
      %v2402 = vlaneseq
      %v2403 = vshrl.u32 %v2402, 7
      %v2404 = vsub.s32 1, %v2403
      %v2405 = vrot.slane %v519, %v2404
      %v2424 = vunpack.c.l.b16 %v503
      %v2425 = vunpack.c.h.b16 %v503
      %v2426 = vunpack.c.l.b16 %v504
      %v2427 = vunpack.c.h.b16 %v504
      %v2428 = vunpack.c.l.b16 %v505
      %v2429 = vunpack.c.h.b16 %v505
      %v2430 = vunpack.c.l.b16 %v506
      %v2431 = vunpack.c.h.b16 %v506
      %v2432 = vunpack.c.l.b16 %v507
      %v2433 = vunpack.c.h.b16 %v507
      %v2434 = vunpack.c.l.b16 %v508
      %v2435 = vunpack.c.h.b16 %v508
      %v2436 = vunpack.c.l.b16 %v509
      %v2437 = vunpack.c.h.b16 %v509
      %v2438 = vunpack.c.l.b16 %v510
      %v2439 = vunpack.c.h.b16 %v510
      %v2440 = vunpack.c.l.b16 %v511
      %v2441 = vunpack.c.h.b16 %v511
      %v2442 = vunpack.c.l.b16 %v512
      %v2443 = vunpack.c.h.b16 %v512
      %v2444 = vunpack.c.l.b16 %v513
      %v2445 = vunpack.c.h.b16 %v513
      %v2446 = vunpack.c.l.b16 %v514
      %v2447 = vunpack.c.h.b16 %v514
      %v2448 = vunpack.c.l.b16 %v515
      %v2449 = vunpack.c.h.b16 %v515
      %v2450 = vunpack.c.l.b16 %v516
      %v2451 = vunpack.c.h.b16 %v516
      %v2452 = vunpack.c.l.b16 %v517
      %v2453 = vunpack.c.h.b16 %v517
      %v2454 = vunpack.c.l.b16 %v518
      %v2455 = vunpack.c.h.b16 %v518
      %v2456 = vpack.c.b16 %v2426, %v2424
      %v2457 = vpack.c.b16 %v2427, %v2425
      %v2458 = vpack.c.b16 %v2430, %v2428
      %v2459 = vpack.c.b16 %v2431, %v2429
      %v2460 = vpack.c.b16 %v2434, %v2432
      %v2461 = vpack.c.b16 %v2435, %v2433
      %v2462 = vpack.c.b16 %v2438, %v2436
      %v2463 = vpack.c.b16 %v2439, %v2437
      %v2464 = vpack.c.b16 %v2442, %v2440
      %v2465 = vpack.c.b16 %v2443, %v2441
      %v2466 = vpack.c.b16 %v2446, %v2444
      %v2467 = vpack.c.b16 %v2447, %v2445
      %v2468 = vpack.c.b16 %v2450, %v2448
      %v2469 = vpack.c.b16 %v2451, %v2449
      %v2470 = vpack.c.b16 %v2454, %v2452
      %v2471 = vpack.c.b16 %v2455, %v2453
      %2488 = vmatprep.subr.bf16.mxu0 %v2471
      %2489 = vmatpush1.bf16.msra.mxu0 %v2470
      %2490 = vmatprep.subr.bf16.mxu0 %v2469
      %2491 = vmatpush1.bf16.msra.mxu0 %v2468
      %2492 = vmatprep.subr.bf16.mxu0 %v2467
      %2493 = vmatpush1.bf16.msra.mxu0 %v2466
      %2494 = vmatprep.subr.bf16.mxu0 %v2465
      %2495 = vmatpush1.bf16.msra.mxu0 %v2464
      %2496 = vmatprep.subr.bf16.mxu0 %v2463
      %2497 = vmatpush1.bf16.msra.mxu0 %v2462
      %2498 = vmatprep.subr.bf16.mxu0 %v2461
      %2499 = vmatpush1.bf16.msra.mxu0 %v2460
      %2500 = vmatprep.subr.bf16.mxu0 %v2459
      %2501 = vmatpush1.bf16.msra.mxu0 %v2458
      %2502 = vmatprep.subr.bf16.mxu0 %v2457
      %2503 = vmatpush1.bf16.msra.mxu0 %v2456
      %2504 = vmatprep.subr.bf16.mxu0 0
      %2505 = vmatpush2.bf16.msra.mxu0 0
      %2506 = vmatprep.subr.bf16.mxu0 0
      %2507 = vmatpush2.bf16.msra.mxu0 0
      %2508 = vmatprep.subr.bf16.mxu0 0
      %2509 = vmatpush2.bf16.msra.mxu0 0
      %2510 = vmatprep.subr.bf16.mxu0 0
      %2511 = vmatpush2.bf16.msra.mxu0 0
      %2512 = vmatprep.subr.bf16.mxu0 0
      %2513 = vmatpush2.bf16.msra.mxu0 0
      %2514 = vmatprep.subr.bf16.mxu0 0
      %2515 = vmatpush2.bf16.msra.mxu0 0
      %2516 = vmatprep.subr.bf16.mxu0 0
      %2517 = vmatpush2.bf16.msra.mxu0 0
      %2518 = vmatprep.subr.bf16.mxu0 0
      %2519 = vmatpush2.bf16.msra.mxu0 0
      %2520 = vmatprep.mubr.bf16.mxu0 0
      %2521 = vmatmul.mubr.bf16.gmra.mxu0 %v2365
      %v2522 = vpop.f32.mrf.mxu0
      %v2523 = vadd.f32 %v2401, %v2522
      %v2524 = vpop.f32.mrf.mxu0
      %v2525 = vadd.f32 %v2405, %v2524
      %v2526 = vpop.f32.mrf.mxu0
      %v2527 = vadd.f32 %v2401, %v2526
      %v2528 = vpop.f32.mrf.mxu0
      %v2529 = vadd.f32 %v2405, %v2528
      %2530 = vmatprep.mubr.bf16.mxu0 0
      %2531 = vmatmul.mubr.bf16.gmra.mxu0 %v2366
      %v2532 = vpop.f32.mrf.mxu0
      %v2533 = vadd.f32 %v2401, %v2532
      %v2534 = vpop.f32.mrf.mxu0
      %v2535 = vadd.f32 %v2405, %v2534
      %v2536 = vpop.f32.mrf.mxu0
      %v2537 = vadd.f32 %v2401, %v2536
      %v2538 = vpop.f32.mrf.mxu0
      %v2539 = vadd.f32 %v2405, %v2538
      %2540 = vmatprep.mubr.bf16.mxu0 0
      %2541 = vmatmul.mubr.bf16.gmra.mxu0 %v2367
      %v2542 = vpop.f32.mrf.mxu0
      %v2543 = vadd.f32 %v2401, %v2542
      %v2544 = vpop.f32.mrf.mxu0
      %v2545 = vadd.f32 %v2405, %v2544
      %v2546 = vpop.f32.mrf.mxu0
      %v2547 = vadd.f32 %v2401, %v2546
      %v2548 = vpop.f32.mrf.mxu0
      %v2549 = vadd.f32 %v2405, %v2548
      %2550 = vmatprep.mubr.bf16.mxu0 0
      %2551 = vmatmul.mubr.bf16.gmra.mxu0 %v2368
      %v2552 = vpop.f32.mrf.mxu0
      %v2553 = vadd.f32 %v2401, %v2552
      %v2554 = vpop.f32.mrf.mxu0
      %v2555 = vadd.f32 %v2405, %v2554
      %v2556 = vpop.f32.mrf.mxu0
      %v2557 = vadd.f32 %v2401, %v2556
      %v2558 = vpop.f32.mrf.mxu0
      %v2559 = vadd.f32 %v2405, %v2558
      %2560 = vmatprep.mubr.bf16.mxu0 0
      %2561 = vmatmul.mubr.bf16.gmra.mxu0 %v2369
      %v2562 = vpop.f32.mrf.mxu0
      %v2563 = vadd.f32 %v2401, %v2562
      %v2564 = vpop.f32.mrf.mxu0
      %v2565 = vadd.f32 %v2405, %v2564
      %v2566 = vpop.f32.mrf.mxu0
      %v2567 = vadd.f32 %v2401, %v2566
      %v2568 = vpop.f32.mrf.mxu0
      %v2569 = vadd.f32 %v2405, %v2568
      %2570 = vmatprep.mubr.bf16.mxu0 0
      %2571 = vmatmul.mubr.bf16.gmra.mxu0 %v2370
      %v2572 = vpop.f32.mrf.mxu0
      %v2573 = vadd.f32 %v2401, %v2572
      %v2574 = vpop.f32.mrf.mxu0
      %v2575 = vadd.f32 %v2405, %v2574
      %v2576 = vpop.f32.mrf.mxu0
      %v2577 = vadd.f32 %v2401, %v2576
      %v2578 = vpop.f32.mrf.mxu0
      %v2579 = vadd.f32 %v2405, %v2578
      %2580 = vmatprep.mubr.bf16.mxu0 0
      %2581 = vmatmul.mubr.bf16.gmra.mxu0 %v2371
      %v2582 = vpop.f32.mrf.mxu0
      %v2583 = vadd.f32 %v2401, %v2582
      %v2584 = vpop.f32.mrf.mxu0
      %v2585 = vadd.f32 %v2405, %v2584
      %v2586 = vpop.f32.mrf.mxu0
      %v2587 = vadd.f32 %v2401, %v2586
      %v2588 = vpop.f32.mrf.mxu0
      %v2589 = vadd.f32 %v2405, %v2588
      %2590 = vmatprep.mubr.bf16.mxu0 0
      %2591 = vmatmul.mubr.bf16.gmra.mxu0 %v2372
      %v2592 = vpop.f32.mrf.mxu0
      %v2593 = vadd.f32 %v2401, %v2592
      %v2594 = vpop.f32.mrf.mxu0
      %v2595 = vadd.f32 %v2405, %v2594
      %v2596 = vpop.f32.mrf.mxu0
      %v2597 = vadd.f32 %v2401, %v2596
      %v2598 = vpop.f32.mrf.mxu0
      %v2599 = vadd.f32 %v2405, %v2598
      %2600 = vmatprep.mubr.bf16.mxu0 0
      %2601 = vmatmul.mubr.bf16.gmra.mxu0 %v2373
      %v2602 = vpop.f32.mrf.mxu0
      %v2603 = vadd.f32 %v2401, %v2602
      %v2604 = vpop.f32.mrf.mxu0
      %v2605 = vadd.f32 %v2405, %v2604
      %v2606 = vpop.f32.mrf.mxu0
      %v2607 = vadd.f32 %v2401, %v2606
      %v2608 = vpop.f32.mrf.mxu0
      %v2609 = vadd.f32 %v2405, %v2608
      %2610 = vmatprep.mubr.bf16.mxu0 0
      %2611 = vmatmul.mubr.bf16.gmra.mxu0 %v2374
      %v2612 = vpop.f32.mrf.mxu0
      %v2613 = vadd.f32 %v2401, %v2612
      %v2614 = vpop.f32.mrf.mxu0
      %v2615 = vadd.f32 %v2405, %v2614
      %v2616 = vpop.f32.mrf.mxu0
      %v2617 = vadd.f32 %v2401, %v2616
      %v2618 = vpop.f32.mrf.mxu0
      %v2619 = vadd.f32 %v2405, %v2618
      %2620 = vmatprep.mubr.bf16.mxu0 0
      %2621 = vmatmul.mubr.bf16.gmra.mxu0 %v2375
      %v2622 = vpop.f32.mrf.mxu0
      %v2623 = vadd.f32 %v2401, %v2622
      %v2624 = vpop.f32.mrf.mxu0
      %v2625 = vadd.f32 %v2405, %v2624
      %v2626 = vpop.f32.mrf.mxu0
      %v2627 = vadd.f32 %v2401, %v2626
      %v2628 = vpop.f32.mrf.mxu0
      %v2629 = vadd.f32 %v2405, %v2628
      %2630 = vmatprep.mubr.bf16.mxu0 0
      %2631 = vmatmul.mubr.bf16.gmra.mxu0 %v2376
      %v2632 = vpop.f32.mrf.mxu0
      %v2633 = vadd.f32 %v2401, %v2632
      %v2634 = vpop.f32.mrf.mxu0
      %v2635 = vadd.f32 %v2405, %v2634
      %v2636 = vpop.f32.mrf.mxu0
      %v2637 = vadd.f32 %v2401, %v2636
      %v2638 = vpop.f32.mrf.mxu0
      %v2639 = vadd.f32 %v2405, %v2638
      %2640 = vmatprep.mubr.bf16.mxu0 0
      %2641 = vmatmul.mubr.bf16.gmra.mxu0 %v2377
      %v2642 = vpop.f32.mrf.mxu0
      %v2643 = vadd.f32 %v2401, %v2642
      %v2644 = vpop.f32.mrf.mxu0
      %v2645 = vadd.f32 %v2405, %v2644
      %v2646 = vpop.f32.mrf.mxu0
      %v2647 = vadd.f32 %v2401, %v2646
      %v2648 = vpop.f32.mrf.mxu0
      %v2649 = vadd.f32 %v2405, %v2648
      %2650 = vmatprep.mubr.bf16.mxu0 0
      %2651 = vmatmul.mubr.bf16.gmra.mxu0 %v2378
      %v2652 = vpop.f32.mrf.mxu0
      %v2653 = vadd.f32 %v2401, %v2652
      %v2654 = vpop.f32.mrf.mxu0
      %v2655 = vadd.f32 %v2405, %v2654
      %v2656 = vpop.f32.mrf.mxu0
      %v2657 = vadd.f32 %v2401, %v2656
      %v2658 = vpop.f32.mrf.mxu0
      %v2659 = vadd.f32 %v2405, %v2658
      %2660 = vmatprep.mubr.bf16.mxu0 0
      %2661 = vmatmul.mubr.bf16.gmra.mxu0 %v2379
      %v2662 = vpop.f32.mrf.mxu0
      %v2663 = vadd.f32 %v2401, %v2662
      %v2664 = vpop.f32.mrf.mxu0
      %v2665 = vadd.f32 %v2405, %v2664
      %v2666 = vpop.f32.mrf.mxu0
      %v2667 = vadd.f32 %v2401, %v2666
      %v2668 = vpop.f32.mrf.mxu0
      %v2669 = vadd.f32 %v2405, %v2668
      %2670 = vmatprep.mubr.bf16.mxu0 0
      %2671 = vmatmul.mubr.bf16.gmra.mxu0 %v2380
      %v2672 = vpop.f32.mrf.mxu0
      %v2673 = vadd.f32 %v2401, %v2672
      %v2674 = vpop.f32.mrf.mxu0
      %v2675 = vadd.f32 %v2405, %v2674
      %v2676 = vpop.f32.mrf.mxu0
      %v2677 = vadd.f32 %v2401, %v2676
      %v2678 = vpop.f32.mrf.mxu0
      %v2679 = vadd.f32 %v2405, %v2678
      %2680 = vmatprep.mubr.bf16.mxu0 0
      %2681 = vmatmul.mubr.bf16.gmra.mxu0 %v2381
      %v2682 = vpop.f32.mrf.mxu0
      %v2683 = vadd.f32 %v2401, %v2682
      %v2684 = vpop.f32.mrf.mxu0
      %v2685 = vadd.f32 %v2405, %v2684
      %v2686 = vpop.f32.mrf.mxu0
      %v2687 = vadd.f32 %v2401, %v2686
      %v2688 = vpop.f32.mrf.mxu0
      %v2689 = vadd.f32 %v2405, %v2688
      %2690 = vmatprep.mubr.bf16.mxu0 0
      %2691 = vmatmul.mubr.bf16.gmra.mxu0 %v2382
      %v2692 = vpop.f32.mrf.mxu0
      %v2693 = vadd.f32 %v2401, %v2692
      %v2694 = vpop.f32.mrf.mxu0
      %v2695 = vadd.f32 %v2405, %v2694
      %v2696 = vpop.f32.mrf.mxu0
      %v2697 = vadd.f32 %v2401, %v2696
      %v2698 = vpop.f32.mrf.mxu0
      %v2699 = vadd.f32 %v2405, %v2698
      %2700 = vmatprep.mubr.bf16.mxu0 0
      %2701 = vmatmul.mubr.bf16.gmra.mxu0 %v2383
      %v2702 = vpop.f32.mrf.mxu0
      %v2703 = vadd.f32 %v2401, %v2702
      %v2704 = vpop.f32.mrf.mxu0
      %v2705 = vadd.f32 %v2405, %v2704
      %v2706 = vpop.f32.mrf.mxu0
      %v2707 = vadd.f32 %v2401, %v2706
      %v2708 = vpop.f32.mrf.mxu0
      %v2709 = vadd.f32 %v2405, %v2708
      %2710 = vmatprep.mubr.bf16.mxu0 0
      %2711 = vmatmul.mubr.bf16.gmra.mxu0 %v2384
      %v2712 = vpop.f32.mrf.mxu0
      %v2713 = vadd.f32 %v2401, %v2712
      %v2714 = vpop.f32.mrf.mxu0
      %v2715 = vadd.f32 %v2405, %v2714
      %v2716 = vpop.f32.mrf.mxu0
      %v2717 = vadd.f32 %v2401, %v2716
      %v2718 = vpop.f32.mrf.mxu0
      %v2719 = vadd.f32 %v2405, %v2718
      %2720 = vmatprep.mubr.bf16.mxu0 0
      %2721 = vmatmul.mubr.bf16.gmra.mxu0 %v2385
      %v2722 = vpop.f32.mrf.mxu0
      %v2723 = vadd.f32 %v2401, %v2722
      %v2724 = vpop.f32.mrf.mxu0
      %v2725 = vadd.f32 %v2405, %v2724
      %v2726 = vpop.f32.mrf.mxu0
      %v2727 = vadd.f32 %v2401, %v2726
      %v2728 = vpop.f32.mrf.mxu0
      %v2729 = vadd.f32 %v2405, %v2728
      %2730 = vmatprep.mubr.bf16.mxu0 0
      %2731 = vmatmul.mubr.bf16.gmra.mxu0 %v2386
      %v2732 = vpop.f32.mrf.mxu0
      %v2733 = vadd.f32 %v2401, %v2732
      %v2734 = vpop.f32.mrf.mxu0
      %v2735 = vadd.f32 %v2405, %v2734
      %v2736 = vpop.f32.mrf.mxu0
      %v2737 = vadd.f32 %v2401, %v2736
      %v2738 = vpop.f32.mrf.mxu0
      %v2739 = vadd.f32 %v2405, %v2738
      %2740 = vmatprep.mubr.bf16.mxu0 0
      %2741 = vmatmul.mubr.bf16.gmra.mxu0 %v2387
      %v2742 = vpop.f32.mrf.mxu0
      %v2743 = vadd.f32 %v2401, %v2742
      %v2744 = vpop.f32.mrf.mxu0
      %v2745 = vadd.f32 %v2405, %v2744
      %v2746 = vpop.f32.mrf.mxu0
      %v2747 = vadd.f32 %v2401, %v2746
      %v2748 = vpop.f32.mrf.mxu0
      %v2749 = vadd.f32 %v2405, %v2748
      %2750 = vmatprep.mubr.bf16.mxu0 0
      %2751 = vmatmul.mubr.bf16.gmra.mxu0 %v2388
      %v2752 = vpop.f32.mrf.mxu0
      %v2753 = vadd.f32 %v2401, %v2752
      %v2754 = vpop.f32.mrf.mxu0
      %v2755 = vadd.f32 %v2405, %v2754
      %v2756 = vpop.f32.mrf.mxu0
      %v2757 = vadd.f32 %v2401, %v2756
      %v2758 = vpop.f32.mrf.mxu0
      %v2759 = vadd.f32 %v2405, %v2758
      %2760 = vmatprep.mubr.bf16.mxu0 0
      %2761 = vmatmul.mubr.bf16.gmra.mxu0 %v2389
      %v2762 = vpop.f32.mrf.mxu0
      %v2763 = vadd.f32 %v2401, %v2762
      %v2764 = vpop.f32.mrf.mxu0
      %v2765 = vadd.f32 %v2405, %v2764
      %v2766 = vpop.f32.mrf.mxu0
      %v2767 = vadd.f32 %v2401, %v2766
      %v2768 = vpop.f32.mrf.mxu0
      %v2769 = vadd.f32 %v2405, %v2768
      %2770 = vmatprep.mubr.bf16.mxu0 0
      %2771 = vmatmul.mubr.bf16.gmra.mxu0 %v2390
      %v2772 = vpop.f32.mrf.mxu0
      %v2773 = vadd.f32 %v2401, %v2772
      %v2774 = vpop.f32.mrf.mxu0
      %v2775 = vadd.f32 %v2405, %v2774
      %v2776 = vpop.f32.mrf.mxu0
      %v2777 = vadd.f32 %v2401, %v2776
      %v2778 = vpop.f32.mrf.mxu0
      %v2779 = vadd.f32 %v2405, %v2778
      %2780 = vmatprep.mubr.bf16.mxu0 0
      %2781 = vmatmul.mubr.bf16.gmra.mxu0 %v2391
      %v2782 = vpop.f32.mrf.mxu0
      %v2783 = vadd.f32 %v2401, %v2782
      %v2784 = vpop.f32.mrf.mxu0
      %v2785 = vadd.f32 %v2405, %v2784
      %v2786 = vpop.f32.mrf.mxu0
      %v2787 = vadd.f32 %v2401, %v2786
      %v2788 = vpop.f32.mrf.mxu0
      %v2789 = vadd.f32 %v2405, %v2788
      %2790 = vmatprep.mubr.bf16.mxu0 0
      %2791 = vmatmul.mubr.bf16.gmra.mxu0 %v2392
      %v2792 = vpop.f32.mrf.mxu0
      %v2793 = vadd.f32 %v2401, %v2792
      %v2794 = vpop.f32.mrf.mxu0
      %v2795 = vadd.f32 %v2405, %v2794
      %v2796 = vpop.f32.mrf.mxu0
      %v2797 = vadd.f32 %v2401, %v2796
      %v2798 = vpop.f32.mrf.mxu0
      %v2799 = vadd.f32 %v2405, %v2798
      %2800 = vmatprep.mubr.bf16.mxu0 0
      %2801 = vmatmul.mubr.bf16.gmra.mxu0 %v2393
      %v2802 = vpop.f32.mrf.mxu0
      %v2803 = vadd.f32 %v2401, %v2802
      %v2804 = vpop.f32.mrf.mxu0
      %v2805 = vadd.f32 %v2405, %v2804
      %v2806 = vpop.f32.mrf.mxu0
      %v2807 = vadd.f32 %v2401, %v2806
      %v2808 = vpop.f32.mrf.mxu0
      %v2809 = vadd.f32 %v2405, %v2808
      %2810 = vmatprep.mubr.bf16.mxu0 0
      %2811 = vmatmul.mubr.bf16.gmra.mxu0 %v2394
      %v2812 = vpop.f32.mrf.mxu0
      %v2813 = vadd.f32 %v2401, %v2812
      %v2814 = vpop.f32.mrf.mxu0
      %v2815 = vadd.f32 %v2405, %v2814
      %v2816 = vpop.f32.mrf.mxu0
      %v2817 = vadd.f32 %v2401, %v2816
      %v2818 = vpop.f32.mrf.mxu0
      %v2819 = vadd.f32 %v2405, %v2818
      %2820 = vmatprep.mubr.bf16.mxu0 0
      %2821 = vmatmul.mubr.bf16.gmra.mxu0 %v2395
      %v2822 = vpop.f32.mrf.mxu0
      %v2823 = vadd.f32 %v2401, %v2822
      %v2824 = vpop.f32.mrf.mxu0
      %v2825 = vadd.f32 %v2405, %v2824
      %v2826 = vpop.f32.mrf.mxu0
      %v2827 = vadd.f32 %v2401, %v2826
      %v2828 = vpop.f32.mrf.mxu0
      %v2829 = vadd.f32 %v2405, %v2828
      %2830 = vmatprep.mubr.bf16.mxu0 0
      %2831 = vmatmul.mubr.bf16.gmra.mxu0 %v2396
      %v2832 = vpop.f32.mrf.mxu0
      %v2833 = vadd.f32 %v2401, %v2832
      %v2834 = vpop.f32.mrf.mxu0
      %v2835 = vadd.f32 %v2405, %v2834
      %v2836 = vpop.f32.mrf.mxu0
      %v2837 = vadd.f32 %v2401, %v2836
      %v2838 = vpop.f32.mrf.mxu0
      %v2839 = vadd.f32 %v2405, %v2838
      %2840 = vdwg.mxu0
      %vm2841 = vcmp.ge.f32.partialorder %v2523, 0.0
      %vm2842 = vcmp.ge.f32.partialorder %v2527, 0.0
      %vm2843 = vcmp.ge.f32.partialorder %v2533, 0.0
      %vm2844 = vcmp.ge.f32.partialorder %v2537, 0.0
      %vm2845 = vcmp.ge.f32.partialorder %v2543, 0.0
      %vm2846 = vcmp.ge.f32.partialorder %v2547, 0.0
      %vm2847 = vcmp.ge.f32.partialorder %v2553, 0.0
      %vm2848 = vcmp.ge.f32.partialorder %v2557, 0.0
      %vm2849 = vcmp.ge.f32.partialorder %v2563, 0.0
      %vm2850 = vcmp.ge.f32.partialorder %v2567, 0.0
      %vm2851 = vcmp.ge.f32.partialorder %v2573, 0.0
      %vm2852 = vcmp.ge.f32.partialorder %v2577, 0.0
      %vm2853 = vcmp.ge.f32.partialorder %v2583, 0.0
      %vm2854 = vcmp.ge.f32.partialorder %v2587, 0.0
      %vm2855 = vcmp.ge.f32.partialorder %v2593, 0.0
      %vm2856 = vcmp.ge.f32.partialorder %v2597, 0.0
      %vm2857 = vcmp.ge.f32.partialorder %v2603, 0.0
      %vm2858 = vcmp.ge.f32.partialorder %v2607, 0.0
      %vm2859 = vcmp.ge.f32.partialorder %v2613, 0.0
      %vm2860 = vcmp.ge.f32.partialorder %v2617, 0.0
      %vm2861 = vcmp.ge.f32.partialorder %v2623, 0.0
      %vm2862 = vcmp.ge.f32.partialorder %v2627, 0.0
      %vm2863 = vcmp.ge.f32.partialorder %v2633, 0.0
      %vm2864 = vcmp.ge.f32.partialorder %v2637, 0.0
      %vm2865 = vcmp.ge.f32.partialorder %v2643, 0.0
      %vm2866 = vcmp.ge.f32.partialorder %v2647, 0.0
      %vm2867 = vcmp.ge.f32.partialorder %v2653, 0.0
      %vm2868 = vcmp.ge.f32.partialorder %v2657, 0.0
      %vm2869 = vcmp.ge.f32.partialorder %v2663, 0.0
      %vm2870 = vcmp.ge.f32.partialorder %v2667, 0.0
      %vm2871 = vcmp.ge.f32.partialorder %v2673, 0.0
      %vm2872 = vcmp.ge.f32.partialorder %v2677, 0.0
      %vm2873 = vcmp.ge.f32.partialorder %v2683, 0.0
      %vm2874 = vcmp.ge.f32.partialorder %v2687, 0.0
      %vm2875 = vcmp.ge.f32.partialorder %v2693, 0.0
      %vm2876 = vcmp.ge.f32.partialorder %v2697, 0.0
      %vm2877 = vcmp.ge.f32.partialorder %v2703, 0.0
      %vm2878 = vcmp.ge.f32.partialorder %v2707, 0.0
      %vm2879 = vcmp.ge.f32.partialorder %v2713, 0.0
      %vm2880 = vcmp.ge.f32.partialorder %v2717, 0.0
      %vm2881 = vcmp.ge.f32.partialorder %v2723, 0.0
      %vm2882 = vcmp.ge.f32.partialorder %v2727, 0.0
      %vm2883 = vcmp.ge.f32.partialorder %v2733, 0.0
      %vm2884 = vcmp.ge.f32.partialorder %v2737, 0.0
      %vm2885 = vcmp.ge.f32.partialorder %v2743, 0.0
      %vm2886 = vcmp.ge.f32.partialorder %v2747, 0.0
      %vm2887 = vcmp.ge.f32.partialorder %v2753, 0.0
      %vm2888 = vcmp.ge.f32.partialorder %v2757, 0.0
      %vm2889 = vcmp.ge.f32.partialorder %v2763, 0.0
      %vm2890 = vcmp.ge.f32.partialorder %v2767, 0.0
      %vm2891 = vcmp.ge.f32.partialorder %v2773, 0.0
      %vm2892 = vcmp.ge.f32.partialorder %v2777, 0.0
      %vm2893 = vcmp.ge.f32.partialorder %v2783, 0.0
      %vm2894 = vcmp.ge.f32.partialorder %v2787, 0.0
      %vm2895 = vcmp.ge.f32.partialorder %v2793, 0.0
      %vm2896 = vcmp.ge.f32.partialorder %v2797, 0.0
      %vm2897 = vcmp.ge.f32.partialorder %v2803, 0.0
      %vm2898 = vcmp.ge.f32.partialorder %v2807, 0.0
      %vm2899 = vcmp.ge.f32.partialorder %v2813, 0.0
      %vm2900 = vcmp.ge.f32.partialorder %v2817, 0.0
      %vm2901 = vcmp.ge.f32.partialorder %v2823, 0.0
      %vm2902 = vcmp.ge.f32.partialorder %v2827, 0.0
      %vm2903 = vcmp.ge.f32.partialorder %v2833, 0.0
      %vm2904 = vcmp.ge.f32.partialorder %v2837, 0.0
      %v2905 = vmul.f32 %v2523, 0.01
      %v2906 = vmul.f32 %v2527, 0.01
      %v2907 = vmul.f32 %v2533, 0.01
      %v2908 = vmul.f32 %v2537, 0.01
      %v2909 = vmul.f32 %v2543, 0.01
      %v2910 = vmul.f32 %v2547, 0.01
      %v2911 = vmul.f32 %v2553, 0.01
      %v2912 = vmul.f32 %v2557, 0.01
      %v2913 = vmul.f32 %v2563, 0.01
      %v2914 = vmul.f32 %v2567, 0.01
      %v2915 = vmul.f32 %v2573, 0.01
      %v2916 = vmul.f32 %v2577, 0.01
      %v2917 = vmul.f32 %v2583, 0.01
      %v2918 = vmul.f32 %v2587, 0.01
      %v2919 = vmul.f32 %v2593, 0.01
      %v2920 = vmul.f32 %v2597, 0.01
      %v2921 = vmul.f32 %v2603, 0.01
      %v2922 = vmul.f32 %v2607, 0.01
      %v2923 = vmul.f32 %v2613, 0.01
      %v2924 = vmul.f32 %v2617, 0.01
      %v2925 = vmul.f32 %v2623, 0.01
      %v2926 = vmul.f32 %v2627, 0.01
      %v2927 = vmul.f32 %v2633, 0.01
      %v2928 = vmul.f32 %v2637, 0.01
      %v2929 = vmul.f32 %v2643, 0.01
      %v2930 = vmul.f32 %v2647, 0.01
      %v2931 = vmul.f32 %v2653, 0.01
      %v2932 = vmul.f32 %v2657, 0.01
      %v2933 = vmul.f32 %v2663, 0.01
      %v2934 = vmul.f32 %v2667, 0.01
      %v2935 = vmul.f32 %v2673, 0.01
      %v2936 = vmul.f32 %v2677, 0.01
      %v2937 = vmul.f32 %v2683, 0.01
      %v2938 = vmul.f32 %v2687, 0.01
      %v2939 = vmul.f32 %v2693, 0.01
      %v2940 = vmul.f32 %v2697, 0.01
      %v2941 = vmul.f32 %v2703, 0.01
      %v2942 = vmul.f32 %v2707, 0.01
      %v2943 = vmul.f32 %v2713, 0.01
      %v2944 = vmul.f32 %v2717, 0.01
      %v2945 = vmul.f32 %v2723, 0.01
      %v2946 = vmul.f32 %v2727, 0.01
      %v2947 = vmul.f32 %v2733, 0.01
      %v2948 = vmul.f32 %v2737, 0.01
      %v2949 = vmul.f32 %v2743, 0.01
      %v2950 = vmul.f32 %v2747, 0.01
      %v2951 = vmul.f32 %v2753, 0.01
      %v2952 = vmul.f32 %v2757, 0.01
      %v2953 = vmul.f32 %v2763, 0.01
      %v2954 = vmul.f32 %v2767, 0.01
      %v2955 = vmul.f32 %v2773, 0.01
      %v2956 = vmul.f32 %v2777, 0.01
      %v2957 = vmul.f32 %v2783, 0.01
      %v2958 = vmul.f32 %v2787, 0.01
      %v2959 = vmul.f32 %v2793, 0.01
      %v2960 = vmul.f32 %v2797, 0.01
      %v2961 = vmul.f32 %v2803, 0.01
      %v2962 = vmul.f32 %v2807, 0.01
      %v2963 = vmul.f32 %v2813, 0.01
      %v2964 = vmul.f32 %v2817, 0.01
      %v2965 = vmul.f32 %v2823, 0.01
      %v2966 = vmul.f32 %v2827, 0.01
      %v2967 = vmul.f32 %v2833, 0.01
      %v2968 = vmul.f32 %v2837, 0.01
      %v2969 = vsel %vm2841, %v2523, %v2905
      %v2970 = vsel %vm2842, %v2527, %v2906
      %v2971 = vsel %vm2843, %v2533, %v2907
      %v2972 = vsel %vm2844, %v2537, %v2908
      %v2973 = vsel %vm2845, %v2543, %v2909
      %v2974 = vsel %vm2846, %v2547, %v2910
      %v2975 = vsel %vm2847, %v2553, %v2911
      %v2976 = vsel %vm2848, %v2557, %v2912
      %v2977 = vsel %vm2849, %v2563, %v2913
      %v2978 = vsel %vm2850, %v2567, %v2914
      %v2979 = vsel %vm2851, %v2573, %v2915
      %v2980 = vsel %vm2852, %v2577, %v2916
      %v2981 = vsel %vm2853, %v2583, %v2917
      %v2982 = vsel %vm2854, %v2587, %v2918
      %v2983 = vsel %vm2855, %v2593, %v2919
      %v2984 = vsel %vm2856, %v2597, %v2920
      %v2985 = vsel %vm2857, %v2603, %v2921
      %v2986 = vsel %vm2858, %v2607, %v2922
      %v2987 = vsel %vm2859, %v2613, %v2923
      %v2988 = vsel %vm2860, %v2617, %v2924
      %v2989 = vsel %vm2861, %v2623, %v2925
      %v2990 = vsel %vm2862, %v2627, %v2926
      %v2991 = vsel %vm2863, %v2633, %v2927
      %v2992 = vsel %vm2864, %v2637, %v2928
      %v2993 = vsel %vm2865, %v2643, %v2929
      %v2994 = vsel %vm2866, %v2647, %v2930
      %v2995 = vsel %vm2867, %v2653, %v2931
      %v2996 = vsel %vm2868, %v2657, %v2932
      %v2997 = vsel %vm2869, %v2663, %v2933
      %v2998 = vsel %vm2870, %v2667, %v2934
      %v2999 = vsel %vm2871, %v2673, %v2935
      %v3000 = vsel %vm2872, %v2677, %v2936
      %v3001 = vsel %vm2873, %v2683, %v2937
      %v3002 = vsel %vm2874, %v2687, %v2938
      %v3003 = vsel %vm2875, %v2693, %v2939
      %v3004 = vsel %vm2876, %v2697, %v2940
      %v3005 = vsel %vm2877, %v2703, %v2941
      %v3006 = vsel %vm2878, %v2707, %v2942
      %v3007 = vsel %vm2879, %v2713, %v2943
      %v3008 = vsel %vm2880, %v2717, %v2944
      %v3009 = vsel %vm2881, %v2723, %v2945
      %v3010 = vsel %vm2882, %v2727, %v2946
      %v3011 = vsel %vm2883, %v2733, %v2947
      %v3012 = vsel %vm2884, %v2737, %v2948
      %v3013 = vsel %vm2885, %v2743, %v2949
      %v3014 = vsel %vm2886, %v2747, %v2950
      %v3015 = vsel %vm2887, %v2753, %v2951
      %v3016 = vsel %vm2888, %v2757, %v2952
      %v3017 = vsel %vm2889, %v2763, %v2953
      %v3018 = vsel %vm2890, %v2767, %v2954
      %v3019 = vsel %vm2891, %v2773, %v2955
      %v3020 = vsel %vm2892, %v2777, %v2956
      %v3021 = vsel %vm2893, %v2783, %v2957
      %v3022 = vsel %vm2894, %v2787, %v2958
      %v3023 = vsel %vm2895, %v2793, %v2959
      %v3024 = vsel %vm2896, %v2797, %v2960
      %v3025 = vsel %vm2897, %v2803, %v2961
      %v3026 = vsel %vm2898, %v2807, %v2962
      %v3027 = vsel %vm2899, %v2813, %v2963
      %v3028 = vsel %vm2900, %v2817, %v2964
      %v3029 = vsel %vm2901, %v2823, %v2965
      %v3030 = vsel %vm2902, %v2827, %v2966
      %v3031 = vsel %vm2903, %v2833, %v2967
      %v3032 = vsel %vm2904, %v2837, %v2968
      %v3033 = vadd.f32 %v2525, -2.0
      %v3034 = vadd.f32 %v2529, -2.0
      %v3035 = vadd.f32 %v2535, -2.0
      %v3036 = vadd.f32 %v2539, -2.0
      %v3037 = vadd.f32 %v2545, -2.0
      %v3038 = vadd.f32 %v2549, -2.0
      %v3039 = vadd.f32 %v2555, -2.0
      %v3040 = vadd.f32 %v2559, -2.0
      %v3041 = vadd.f32 %v2565, -2.0
      %v3042 = vadd.f32 %v2569, -2.0
      %v3043 = vadd.f32 %v2575, -2.0
      %v3044 = vadd.f32 %v2579, -2.0
      %v3045 = vadd.f32 %v2585, -2.0
      %v3046 = vadd.f32 %v2589, -2.0
      %v3047 = vadd.f32 %v2595, -2.0
      %v3048 = vadd.f32 %v2599, -2.0
      %v3049 = vadd.f32 %v2605, -2.0
      %v3050 = vadd.f32 %v2609, -2.0
      %v3051 = vadd.f32 %v2615, -2.0
      %v3052 = vadd.f32 %v2619, -2.0
      %v3053 = vadd.f32 %v2625, -2.0
      %v3054 = vadd.f32 %v2629, -2.0
      %v3055 = vadd.f32 %v2635, -2.0
      %v3056 = vadd.f32 %v2639, -2.0
      %v3057 = vadd.f32 %v2645, -2.0
      %v3058 = vadd.f32 %v2649, -2.0
      %v3059 = vadd.f32 %v2655, -2.0
      %v3060 = vadd.f32 %v2659, -2.0
      %v3061 = vadd.f32 %v2665, -2.0
      %v3062 = vadd.f32 %v2669, -2.0
      %v3063 = vadd.f32 %v2675, -2.0
      %v3064 = vadd.f32 %v2679, -2.0
      %v3065 = vadd.f32 %v2685, -2.0
      %v3066 = vadd.f32 %v2689, -2.0
      %v3067 = vadd.f32 %v2695, -2.0
      %v3068 = vadd.f32 %v2699, -2.0
      %v3069 = vadd.f32 %v2705, -2.0
      %v3070 = vadd.f32 %v2709, -2.0
      %v3071 = vadd.f32 %v2715, -2.0
      %v3072 = vadd.f32 %v2719, -2.0
      %v3073 = vadd.f32 %v2725, -2.0
      %v3074 = vadd.f32 %v2729, -2.0
      %v3075 = vadd.f32 %v2735, -2.0
      %v3076 = vadd.f32 %v2739, -2.0
      %v3077 = vadd.f32 %v2745, -2.0
      %v3078 = vadd.f32 %v2749, -2.0
      %v3079 = vadd.f32 %v2755, -2.0
      %v3080 = vadd.f32 %v2759, -2.0
      %v3081 = vadd.f32 %v2765, -2.0
      %v3082 = vadd.f32 %v2769, -2.0
      %v3083 = vadd.f32 %v2775, -2.0
      %v3084 = vadd.f32 %v2779, -2.0
      %v3085 = vadd.f32 %v2785, -2.0
      %v3086 = vadd.f32 %v2789, -2.0
      %v3087 = vadd.f32 %v2795, -2.0
      %v3088 = vadd.f32 %v2799, -2.0
      %v3089 = vadd.f32 %v2805, -2.0
      %v3090 = vadd.f32 %v2809, -2.0
      %v3091 = vadd.f32 %v2815, -2.0
      %v3092 = vadd.f32 %v2819, -2.0
      %v3093 = vadd.f32 %v2825, -2.0
      %v3094 = vadd.f32 %v2829, -2.0
      %v3095 = vadd.f32 %v2835, -2.0
      %v3096 = vadd.f32 %v2839, -2.0
      %v3097 = vsub.f32 0.0, %v3033
      %v3098 = vsub.f32 0.0, %v3034
      %v3099 = vsub.f32 0.0, %v3035
      %v3100 = vsub.f32 0.0, %v3036
      %v3101 = vsub.f32 0.0, %v3037
      %v3102 = vsub.f32 0.0, %v3038
      %v3103 = vsub.f32 0.0, %v3039
      %v3104 = vsub.f32 0.0, %v3040
      %v3105 = vsub.f32 0.0, %v3041
      %v3106 = vsub.f32 0.0, %v3042
      %v3107 = vsub.f32 0.0, %v3043
      %v3108 = vsub.f32 0.0, %v3044
      %v3109 = vsub.f32 0.0, %v3045
      %v3110 = vsub.f32 0.0, %v3046
      %v3111 = vsub.f32 0.0, %v3047
      %v3112 = vsub.f32 0.0, %v3048
      %v3113 = vsub.f32 0.0, %v3049
      %v3114 = vsub.f32 0.0, %v3050
      %v3115 = vsub.f32 0.0, %v3051
      %v3116 = vsub.f32 0.0, %v3052
      %v3117 = vsub.f32 0.0, %v3053
      %v3118 = vsub.f32 0.0, %v3054
      %v3119 = vsub.f32 0.0, %v3055
      %v3120 = vsub.f32 0.0, %v3056
      %v3121 = vsub.f32 0.0, %v3057
      %v3122 = vsub.f32 0.0, %v3058
      %v3123 = vsub.f32 0.0, %v3059
      %v3124 = vsub.f32 0.0, %v3060
      %v3125 = vsub.f32 0.0, %v3061
      %v3126 = vsub.f32 0.0, %v3062
      %v3127 = vsub.f32 0.0, %v3063
      %v3128 = vsub.f32 0.0, %v3064
      %v3129 = vsub.f32 0.0, %v3065
      %v3130 = vsub.f32 0.0, %v3066
      %v3131 = vsub.f32 0.0, %v3067
      %v3132 = vsub.f32 0.0, %v3068
      %v3133 = vsub.f32 0.0, %v3069
      %v3134 = vsub.f32 0.0, %v3070
      %v3135 = vsub.f32 0.0, %v3071
      %v3136 = vsub.f32 0.0, %v3072
      %v3137 = vsub.f32 0.0, %v3073
      %v3138 = vsub.f32 0.0, %v3074
      %v3139 = vsub.f32 0.0, %v3075
      %v3140 = vsub.f32 0.0, %v3076
      %v3141 = vsub.f32 0.0, %v3077
      %v3142 = vsub.f32 0.0, %v3078
      %v3143 = vsub.f32 0.0, %v3079
      %v3144 = vsub.f32 0.0, %v3080
      %v3145 = vsub.f32 0.0, %v3081
      %v3146 = vsub.f32 0.0, %v3082
      %v3147 = vsub.f32 0.0, %v3083
      %v3148 = vsub.f32 0.0, %v3084
      %v3149 = vsub.f32 0.0, %v3085
      %v3150 = vsub.f32 0.0, %v3086
      %v3151 = vsub.f32 0.0, %v3087
      %v3152 = vsub.f32 0.0, %v3088
      %v3153 = vsub.f32 0.0, %v3089
      %v3154 = vsub.f32 0.0, %v3090
      %v3155 = vsub.f32 0.0, %v3091
      %v3156 = vsub.f32 0.0, %v3092
      %v3157 = vsub.f32 0.0, %v3093
      %v3158 = vsub.f32 0.0, %v3094
      %v3159 = vsub.f32 0.0, %v3095
      %v3160 = vsub.f32 0.0, %v3096
      %v3161 = vmul.f32 %v3097, 1.442695
      %v3162 = vpow.pop %v3161
      %v3163 = vmul.f32 %v3098, 1.442695
      %v3164 = vpow.pop %v3163
      %v3165 = vmul.f32 %v3099, 1.442695
      %v3166 = vpow.pop %v3165
      %v3167 = vmul.f32 %v3100, 1.442695
      %v3168 = vpow.pop %v3167
      %v3169 = vmul.f32 %v3101, 1.442695
      %v3170 = vpow.pop %v3169
      %v3171 = vmul.f32 %v3102, 1.442695
      %v3172 = vpow.pop %v3171
      %v3173 = vmul.f32 %v3103, 1.442695
      %v3174 = vpow.pop %v3173
      %v3175 = vmul.f32 %v3104, 1.442695
      %v3176 = vpow.pop %v3175
      %v3177 = vmul.f32 %v3105, 1.442695
      %v3178 = vpow.pop %v3177
      %v3179 = vmul.f32 %v3106, 1.442695
      %v3180 = vpow.pop %v3179
      %v3181 = vmul.f32 %v3107, 1.442695
      %v3182 = vpow.pop %v3181
      %v3183 = vmul.f32 %v3108, 1.442695
      %v3184 = vpow.pop %v3183
      %v3185 = vmul.f32 %v3109, 1.442695
      %v3186 = vpow.pop %v3185
      %v3187 = vmul.f32 %v3110, 1.442695
      %v3188 = vpow.pop %v3187
      %v3189 = vmul.f32 %v3111, 1.442695
      %v3190 = vpow.pop %v3189
      %v3191 = vmul.f32 %v3112, 1.442695
      %v3192 = vpow.pop %v3191
      %v3193 = vmul.f32 %v3113, 1.442695
      %v3194 = vpow.pop %v3193
      %v3195 = vmul.f32 %v3114, 1.442695
      %v3196 = vpow.pop %v3195
      %v3197 = vmul.f32 %v3115, 1.442695
      %v3198 = vpow.pop %v3197
      %v3199 = vmul.f32 %v3116, 1.442695
      %v3200 = vpow.pop %v3199
      %v3201 = vmul.f32 %v3117, 1.442695
      %v3202 = vpow.pop %v3201
      %v3203 = vmul.f32 %v3118, 1.442695
      %v3204 = vpow.pop %v3203
      %v3205 = vmul.f32 %v3119, 1.442695
      %v3206 = vpow.pop %v3205
      %v3207 = vmul.f32 %v3120, 1.442695
      %v3208 = vpow.pop %v3207
      %v3209 = vmul.f32 %v3121, 1.442695
      %v3210 = vpow.pop %v3209
      %v3211 = vmul.f32 %v3122, 1.442695
      %v3212 = vpow.pop %v3211
      %v3213 = vmul.f32 %v3123, 1.442695
      %v3214 = vpow.pop %v3213
      %v3215 = vmul.f32 %v3124, 1.442695
      %v3216 = vpow.pop %v3215
      %v3217 = vmul.f32 %v3125, 1.442695
      %v3218 = vpow.pop %v3217
      %v3219 = vmul.f32 %v3126, 1.442695
      %v3220 = vpow.pop %v3219
      %v3221 = vmul.f32 %v3127, 1.442695
      %v3222 = vpow.pop %v3221
      %v3223 = vmul.f32 %v3128, 1.442695
      %v3224 = vpow.pop %v3223
      %v3225 = vmul.f32 %v3129, 1.442695
      %v3226 = vpow.pop %v3225
      %v3227 = vmul.f32 %v3130, 1.442695
      %v3228 = vpow.pop %v3227
      %v3229 = vmul.f32 %v3131, 1.442695
      %v3230 = vpow.pop %v3229
      %v3231 = vmul.f32 %v3132, 1.442695
      %v3232 = vpow.pop %v3231
      %v3233 = vmul.f32 %v3133, 1.442695
      %v3234 = vpow.pop %v3233
      %v3235 = vmul.f32 %v3134, 1.442695
      %v3236 = vpow.pop %v3235
      %v3237 = vmul.f32 %v3135, 1.442695
      %v3238 = vpow.pop %v3237
      %v3239 = vmul.f32 %v3136, 1.442695
      %v3240 = vpow.pop %v3239
      %v3241 = vmul.f32 %v3137, 1.442695
      %v3242 = vpow.pop %v3241
      %v3243 = vmul.f32 %v3138, 1.442695
      %v3244 = vpow.pop %v3243
      %v3245 = vmul.f32 %v3139, 1.442695
      %v3246 = vpow.pop %v3245
      %v3247 = vmul.f32 %v3140, 1.442695
      %v3248 = vpow.pop %v3247
      %v3249 = vmul.f32 %v3141, 1.442695
      %v3250 = vpow.pop %v3249
      %v3251 = vmul.f32 %v3142, 1.442695
      %v3252 = vpow.pop %v3251
      %v3253 = vmul.f32 %v3143, 1.442695
      %v3254 = vpow.pop %v3253
      %v3255 = vmul.f32 %v3144, 1.442695
      %v3256 = vpow.pop %v3255
      %v3257 = vmul.f32 %v3145, 1.442695
      %v3258 = vpow.pop %v3257
      %v3259 = vmul.f32 %v3146, 1.442695
      %v3260 = vpow.pop %v3259
      %v3261 = vmul.f32 %v3147, 1.442695
      %v3262 = vpow.pop %v3261
      %v3263 = vmul.f32 %v3148, 1.442695
      %v3264 = vpow.pop %v3263
      %v3265 = vmul.f32 %v3149, 1.442695
      %v3266 = vpow.pop %v3265
      %v3267 = vmul.f32 %v3150, 1.442695
      %v3268 = vpow.pop %v3267
      %v3269 = vmul.f32 %v3151, 1.442695
      %v3270 = vpow.pop %v3269
      %v3271 = vmul.f32 %v3152, 1.442695
      %v3272 = vpow.pop %v3271
      %v3273 = vmul.f32 %v3153, 1.442695
      %v3274 = vpow.pop %v3273
      %v3275 = vmul.f32 %v3154, 1.442695
      %v3276 = vpow.pop %v3275
      %v3277 = vmul.f32 %v3155, 1.442695
      %v3278 = vpow.pop %v3277
      %v3279 = vmul.f32 %v3156, 1.442695
      %v3280 = vpow.pop %v3279
      %v3281 = vmul.f32 %v3157, 1.442695
      %v3282 = vpow.pop %v3281
      %v3283 = vmul.f32 %v3158, 1.442695
      %v3284 = vpow.pop %v3283
      %v3285 = vmul.f32 %v3159, 1.442695
      %v3286 = vpow.pop %v3285
      %v3287 = vmul.f32 %v3160, 1.442695
      %v3288 = vpow.pop %v3287
      %v3289 = vadd.f32 %v3162, 1.0
      %v3290 = vadd.f32 %v3164, 1.0
      %v3291 = vadd.f32 %v3166, 1.0
      %v3292 = vadd.f32 %v3168, 1.0
      %v3293 = vadd.f32 %v3170, 1.0
      %v3294 = vadd.f32 %v3172, 1.0
      %v3295 = vadd.f32 %v3174, 1.0
      %v3296 = vadd.f32 %v3176, 1.0
      %v3297 = vadd.f32 %v3178, 1.0
      %v3298 = vadd.f32 %v3180, 1.0
      %v3299 = vadd.f32 %v3182, 1.0
      %v3300 = vadd.f32 %v3184, 1.0
      %v3301 = vadd.f32 %v3186, 1.0
      %v3302 = vadd.f32 %v3188, 1.0
      %v3303 = vadd.f32 %v3190, 1.0
      %v3304 = vadd.f32 %v3192, 1.0
      %v3305 = vadd.f32 %v3194, 1.0
      %v3306 = vadd.f32 %v3196, 1.0
      %v3307 = vadd.f32 %v3198, 1.0
      %v3308 = vadd.f32 %v3200, 1.0
      %v3309 = vadd.f32 %v3202, 1.0
      %v3310 = vadd.f32 %v3204, 1.0
      %v3311 = vadd.f32 %v3206, 1.0
      %v3312 = vadd.f32 %v3208, 1.0
      %v3313 = vadd.f32 %v3210, 1.0
      %v3314 = vadd.f32 %v3212, 1.0
      %v3315 = vadd.f32 %v3214, 1.0
      %v3316 = vadd.f32 %v3216, 1.0
      %v3317 = vadd.f32 %v3218, 1.0
      %v3318 = vadd.f32 %v3220, 1.0
      %v3319 = vadd.f32 %v3222, 1.0
      %v3320 = vadd.f32 %v3224, 1.0
      %v3321 = vadd.f32 %v3226, 1.0
      %v3322 = vadd.f32 %v3228, 1.0
      %v3323 = vadd.f32 %v3230, 1.0
      %v3324 = vadd.f32 %v3232, 1.0
      %v3325 = vadd.f32 %v3234, 1.0
      %v3326 = vadd.f32 %v3236, 1.0
      %v3327 = vadd.f32 %v3238, 1.0
      %v3328 = vadd.f32 %v3240, 1.0
      %v3329 = vadd.f32 %v3242, 1.0
      %v3330 = vadd.f32 %v3244, 1.0
      %v3331 = vadd.f32 %v3246, 1.0
      %v3332 = vadd.f32 %v3248, 1.0
      %v3333 = vadd.f32 %v3250, 1.0
      %v3334 = vadd.f32 %v3252, 1.0
      %v3335 = vadd.f32 %v3254, 1.0
      %v3336 = vadd.f32 %v3256, 1.0
      %v3337 = vadd.f32 %v3258, 1.0
      %v3338 = vadd.f32 %v3260, 1.0
      %v3339 = vadd.f32 %v3262, 1.0
      %v3340 = vadd.f32 %v3264, 1.0
      %v3341 = vadd.f32 %v3266, 1.0
      %v3342 = vadd.f32 %v3268, 1.0
      %v3343 = vadd.f32 %v3270, 1.0
      %v3344 = vadd.f32 %v3272, 1.0
      %v3345 = vadd.f32 %v3274, 1.0
      %v3346 = vadd.f32 %v3276, 1.0
      %v3347 = vadd.f32 %v3278, 1.0
      %v3348 = vadd.f32 %v3280, 1.0
      %v3349 = vadd.f32 %v3282, 1.0
      %v3350 = vadd.f32 %v3284, 1.0
      %v3351 = vadd.f32 %v3286, 1.0
      %v3352 = vadd.f32 %v3288, 1.0
      %v3353 = vrcp.pop %v3289
      %v3354 = vrcp.pop %v3290
      %v3355 = vrcp.pop %v3291
      %v3356 = vrcp.pop %v3292
      %v3357 = vrcp.pop %v3293
      %v3358 = vrcp.pop %v3294
      %v3359 = vrcp.pop %v3295
      %v3360 = vrcp.pop %v3296
      %v3361 = vrcp.pop %v3297
      %v3362 = vrcp.pop %v3298
      %v3363 = vrcp.pop %v3299
      %v3364 = vrcp.pop %v3300
      %v3365 = vrcp.pop %v3301
      %v3366 = vrcp.pop %v3302
      %v3367 = vrcp.pop %v3303
      %v3368 = vrcp.pop %v3304
      %v3369 = vrcp.pop %v3305
      %v3370 = vrcp.pop %v3306
      %v3371 = vrcp.pop %v3307
      %v3372 = vrcp.pop %v3308
      %v3373 = vrcp.pop %v3309
      %v3374 = vrcp.pop %v3310
      %v3375 = vrcp.pop %v3311
      %v3376 = vrcp.pop %v3312
      %v3377 = vrcp.pop %v3313
      %v3378 = vrcp.pop %v3314
      %v3379 = vrcp.pop %v3315
      %v3380 = vrcp.pop %v3316
      %v3381 = vrcp.pop %v3317
      %v3382 = vrcp.pop %v3318
      %v3383 = vrcp.pop %v3319
      %v3384 = vrcp.pop %v3320
      %v3385 = vrcp.pop %v3321
      %v3386 = vrcp.pop %v3322
      %v3387 = vrcp.pop %v3323
      %v3388 = vrcp.pop %v3324
      %v3389 = vrcp.pop %v3325
      %v3390 = vrcp.pop %v3326
      %v3391 = vrcp.pop %v3327
      %v3392 = vrcp.pop %v3328
      %v3393 = vrcp.pop %v3329
      %v3394 = vrcp.pop %v3330
      %v3395 = vrcp.pop %v3331
      %v3396 = vrcp.pop %v3332
      %v3397 = vrcp.pop %v3333
      %v3398 = vrcp.pop %v3334
      %v3399 = vrcp.pop %v3335
      %v3400 = vrcp.pop %v3336
      %v3401 = vrcp.pop %v3337
      %v3402 = vrcp.pop %v3338
      %v3403 = vrcp.pop %v3339
      %v3404 = vrcp.pop %v3340
      %v3405 = vrcp.pop %v3341
      %v3406 = vrcp.pop %v3342
      %v3407 = vrcp.pop %v3343
      %v3408 = vrcp.pop %v3344
      %v3409 = vrcp.pop %v3345
      %v3410 = vrcp.pop %v3346
      %v3411 = vrcp.pop %v3347
      %v3412 = vrcp.pop %v3348
      %v3413 = vrcp.pop %v3349
      %v3414 = vrcp.pop %v3350
      %v3415 = vrcp.pop %v3351
      %v3416 = vrcp.pop %v3352
      %v3417 = vmul.f32 %v3353, %v2969
      %v3418 = vmul.f32 %v3354, %v2970
      %v3419 = vmul.f32 %v3355, %v2971
      %v3420 = vmul.f32 %v3356, %v2972
      %v3421 = vmul.f32 %v3357, %v2973
      %v3422 = vmul.f32 %v3358, %v2974
      %v3423 = vmul.f32 %v3359, %v2975
      %v3424 = vmul.f32 %v3360, %v2976
      %v3425 = vmul.f32 %v3361, %v2977
      %v3426 = vmul.f32 %v3362, %v2978
      %v3427 = vmul.f32 %v3363, %v2979
      %v3428 = vmul.f32 %v3364, %v2980
      %v3429 = vmul.f32 %v3365, %v2981
      %v3430 = vmul.f32 %v3366, %v2982
      %v3431 = vmul.f32 %v3367, %v2983
      %v3432 = vmul.f32 %v3368, %v2984
      %v3433 = vmul.f32 %v3369, %v2985
      %v3434 = vmul.f32 %v3370, %v2986
      %v3435 = vmul.f32 %v3371, %v2987
      %v3436 = vmul.f32 %v3372, %v2988
      %v3437 = vmul.f32 %v3373, %v2989
      %v3438 = vmul.f32 %v3374, %v2990
      %v3439 = vmul.f32 %v3375, %v2991
      %v3440 = vmul.f32 %v3376, %v2992
      %v3441 = vmul.f32 %v3377, %v2993
      %v3442 = vmul.f32 %v3378, %v2994
      %v3443 = vmul.f32 %v3379, %v2995
      %v3444 = vmul.f32 %v3380, %v2996
      %v3445 = vmul.f32 %v3381, %v2997
      %v3446 = vmul.f32 %v3382, %v2998
      %v3447 = vmul.f32 %v3383, %v2999
      %v3448 = vmul.f32 %v3384, %v3000
      %v3449 = vmul.f32 %v3385, %v3001
      %v3450 = vmul.f32 %v3386, %v3002
      %v3451 = vmul.f32 %v3387, %v3003
      %v3452 = vmul.f32 %v3388, %v3004
      %v3453 = vmul.f32 %v3389, %v3005
      %v3454 = vmul.f32 %v3390, %v3006
      %v3455 = vmul.f32 %v3391, %v3007
      %v3456 = vmul.f32 %v3392, %v3008
      %v3457 = vmul.f32 %v3393, %v3009
      %v3458 = vmul.f32 %v3394, %v3010
      %v3459 = vmul.f32 %v3395, %v3011
      %v3460 = vmul.f32 %v3396, %v3012
      %v3461 = vmul.f32 %v3397, %v3013
      %v3462 = vmul.f32 %v3398, %v3014
      %v3463 = vmul.f32 %v3399, %v3015
      %v3464 = vmul.f32 %v3400, %v3016
      %v3465 = vmul.f32 %v3401, %v3017
      %v3466 = vmul.f32 %v3402, %v3018
      %v3467 = vmul.f32 %v3403, %v3019
      %v3468 = vmul.f32 %v3404, %v3020
      %v3469 = vmul.f32 %v3405, %v3021
      %v3470 = vmul.f32 %v3406, %v3022
      %v3471 = vmul.f32 %v3407, %v3023
      %v3472 = vmul.f32 %v3408, %v3024
      %v3473 = vmul.f32 %v3409, %v3025
      %v3474 = vmul.f32 %v3410, %v3026
      %v3475 = vmul.f32 %v3411, %v3027
      %v3476 = vmul.f32 %v3412, %v3028
      %v3477 = vmul.f32 %v3413, %v3029
      %v3478 = vmul.f32 %v3414, %v3030
      %v3479 = vmul.f32 %v3415, %v3031
      %v3480 = vmul.f32 %v3416, %v3032
      %v3481 = vsub.f32 1.0, %v3353
      %v3482 = vsub.f32 1.0, %v3354
      %v3483 = vsub.f32 1.0, %v3355
      %v3484 = vsub.f32 1.0, %v3356
      %v3485 = vsub.f32 1.0, %v3357
      %v3486 = vsub.f32 1.0, %v3358
      %v3487 = vsub.f32 1.0, %v3359
      %v3488 = vsub.f32 1.0, %v3360
      %v3489 = vsub.f32 1.0, %v3361
      %v3490 = vsub.f32 1.0, %v3362
      %v3491 = vsub.f32 1.0, %v3363
      %v3492 = vsub.f32 1.0, %v3364
      %v3493 = vsub.f32 1.0, %v3365
      %v3494 = vsub.f32 1.0, %v3366
      %v3495 = vsub.f32 1.0, %v3367
      %v3496 = vsub.f32 1.0, %v3368
      %v3497 = vsub.f32 1.0, %v3369
      %v3498 = vsub.f32 1.0, %v3370
      %v3499 = vsub.f32 1.0, %v3371
      %v3500 = vsub.f32 1.0, %v3372
      %v3501 = vsub.f32 1.0, %v3373
      %v3502 = vsub.f32 1.0, %v3374
      %v3503 = vsub.f32 1.0, %v3375
      %v3504 = vsub.f32 1.0, %v3376
      %v3505 = vsub.f32 1.0, %v3377
      %v3506 = vsub.f32 1.0, %v3378
      %v3507 = vsub.f32 1.0, %v3379
      %v3508 = vsub.f32 1.0, %v3380
      %v3509 = vsub.f32 1.0, %v3381
      %v3510 = vsub.f32 1.0, %v3382
      %v3511 = vsub.f32 1.0, %v3383
      %v3512 = vsub.f32 1.0, %v3384
      %v3513 = vsub.f32 1.0, %v3385
      %v3514 = vsub.f32 1.0, %v3386
      %v3515 = vsub.f32 1.0, %v3387
      %v3516 = vsub.f32 1.0, %v3388
      %v3517 = vsub.f32 1.0, %v3389
      %v3518 = vsub.f32 1.0, %v3390
      %v3519 = vsub.f32 1.0, %v3391
      %v3520 = vsub.f32 1.0, %v3392
      %v3521 = vsub.f32 1.0, %v3393
      %v3522 = vsub.f32 1.0, %v3394
      %v3523 = vsub.f32 1.0, %v3395
      %v3524 = vsub.f32 1.0, %v3396
      %v3525 = vsub.f32 1.0, %v3397
      %v3526 = vsub.f32 1.0, %v3398
      %v3527 = vsub.f32 1.0, %v3399
      %v3528 = vsub.f32 1.0, %v3400
      %v3529 = vsub.f32 1.0, %v3401
      %v3530 = vsub.f32 1.0, %v3402
      %v3531 = vsub.f32 1.0, %v3403
      %v3532 = vsub.f32 1.0, %v3404
      %v3533 = vsub.f32 1.0, %v3405
      %v3534 = vsub.f32 1.0, %v3406
      %v3535 = vsub.f32 1.0, %v3407
      %v3536 = vsub.f32 1.0, %v3408
      %v3537 = vsub.f32 1.0, %v3409
      %v3538 = vsub.f32 1.0, %v3410
      %v3539 = vsub.f32 1.0, %v3411
      %v3540 = vsub.f32 1.0, %v3412
      %v3541 = vsub.f32 1.0, %v3413
      %v3542 = vsub.f32 1.0, %v3414
      %v3543 = vsub.f32 1.0, %v3415
      %v3544 = vsub.f32 1.0, %v3416
      %v3545 = vmul.f32 %v3481, %v2301
      %v3546 = vmul.f32 %v3482, %v2302
      %v3547 = vmul.f32 %v3483, %v2303
      %v3548 = vmul.f32 %v3484, %v2304
      %v3549 = vmul.f32 %v3485, %v2305
      %v3550 = vmul.f32 %v3486, %v2306
      %v3551 = vmul.f32 %v3487, %v2307
      %v3552 = vmul.f32 %v3488, %v2308
      %v3553 = vmul.f32 %v3489, %v2309
      %v3554 = vmul.f32 %v3490, %v2310
      %v3555 = vmul.f32 %v3491, %v2311
      %v3556 = vmul.f32 %v3492, %v2312
      %v3557 = vmul.f32 %v3493, %v2313
      %v3558 = vmul.f32 %v3494, %v2314
      %v3559 = vmul.f32 %v3495, %v2315
      %v3560 = vmul.f32 %v3496, %v2316
      %v3561 = vmul.f32 %v3497, %v2317
      %v3562 = vmul.f32 %v3498, %v2318
      %v3563 = vmul.f32 %v3499, %v2319
      %v3564 = vmul.f32 %v3500, %v2320
      %v3565 = vmul.f32 %v3501, %v2321
      %v3566 = vmul.f32 %v3502, %v2322
      %v3567 = vmul.f32 %v3503, %v2323
      %v3568 = vmul.f32 %v3504, %v2324
      %v3569 = vmul.f32 %v3505, %v2325
      %v3570 = vmul.f32 %v3506, %v2326
      %v3571 = vmul.f32 %v3507, %v2327
      %v3572 = vmul.f32 %v3508, %v2328
      %v3573 = vmul.f32 %v3509, %v2329
      %v3574 = vmul.f32 %v3510, %v2330
      %v3575 = vmul.f32 %v3511, %v2331
      %v3576 = vmul.f32 %v3512, %v2332
      %v3577 = vmul.f32 %v3513, %v2333
      %v3578 = vmul.f32 %v3514, %v2334
      %v3579 = vmul.f32 %v3515, %v2335
      %v3580 = vmul.f32 %v3516, %v2336
      %v3581 = vmul.f32 %v3517, %v2337
      %v3582 = vmul.f32 %v3518, %v2338
      %v3583 = vmul.f32 %v3519, %v2339
      %v3584 = vmul.f32 %v3520, %v2340
      %v3585 = vmul.f32 %v3521, %v2341
      %v3586 = vmul.f32 %v3522, %v2342
      %v3587 = vmul.f32 %v3523, %v2343
      %v3588 = vmul.f32 %v3524, %v2344
      %v3589 = vmul.f32 %v3525, %v2345
      %v3590 = vmul.f32 %v3526, %v2346
      %v3591 = vmul.f32 %v3527, %v2347
      %v3592 = vmul.f32 %v3528, %v2348
      %v3593 = vmul.f32 %v3529, %v2349
      %v3594 = vmul.f32 %v3530, %v2350
      %v3595 = vmul.f32 %v3531, %v2351
      %v3596 = vmul.f32 %v3532, %v2352
      %v3597 = vmul.f32 %v3533, %v2353
      %v3598 = vmul.f32 %v3534, %v2354
      %v3599 = vmul.f32 %v3535, %v2355
      %v3600 = vmul.f32 %v3536, %v2356
      %v3601 = vmul.f32 %v3537, %v2357
      %v3602 = vmul.f32 %v3538, %v2358
      %v3603 = vmul.f32 %v3539, %v2359
      %v3604 = vmul.f32 %v3540, %v2360
      %v3605 = vmul.f32 %v3541, %v2361
      %v3606 = vmul.f32 %v3542, %v2362
      %v3607 = vmul.f32 %v3543, %v2363
      %v3608 = vmul.f32 %v3544, %v2364
      %v3609 = vadd.f32 %v3417, %v3545
      %v3610 = vadd.f32 %v3418, %v3546
      %v3611 = vadd.f32 %v3419, %v3547
      %v3612 = vadd.f32 %v3420, %v3548
      %v3613 = vadd.f32 %v3421, %v3549
      %v3614 = vadd.f32 %v3422, %v3550
      %v3615 = vadd.f32 %v3423, %v3551
      %v3616 = vadd.f32 %v3424, %v3552
      %v3617 = vadd.f32 %v3425, %v3553
      %v3618 = vadd.f32 %v3426, %v3554
      %v3619 = vadd.f32 %v3427, %v3555
      %v3620 = vadd.f32 %v3428, %v3556
      %v3621 = vadd.f32 %v3429, %v3557
      %v3622 = vadd.f32 %v3430, %v3558
      %v3623 = vadd.f32 %v3431, %v3559
      %v3624 = vadd.f32 %v3432, %v3560
      %v3625 = vadd.f32 %v3433, %v3561
      %v3626 = vadd.f32 %v3434, %v3562
      %v3627 = vadd.f32 %v3435, %v3563
      %v3628 = vadd.f32 %v3436, %v3564
      %v3629 = vadd.f32 %v3437, %v3565
      %v3630 = vadd.f32 %v3438, %v3566
      %v3631 = vadd.f32 %v3439, %v3567
      %v3632 = vadd.f32 %v3440, %v3568
      %v3633 = vadd.f32 %v3441, %v3569
      %v3634 = vadd.f32 %v3442, %v3570
      %v3635 = vadd.f32 %v3443, %v3571
      %v3636 = vadd.f32 %v3444, %v3572
      %v3637 = vadd.f32 %v3445, %v3573
      %v3638 = vadd.f32 %v3446, %v3574
      %v3639 = vadd.f32 %v3447, %v3575
      %v3640 = vadd.f32 %v3448, %v3576
      %v3641 = vadd.f32 %v3449, %v3577
      %v3642 = vadd.f32 %v3450, %v3578
      %v3643 = vadd.f32 %v3451, %v3579
      %v3644 = vadd.f32 %v3452, %v3580
      %v3645 = vadd.f32 %v3453, %v3581
      %v3646 = vadd.f32 %v3454, %v3582
      %v3647 = vadd.f32 %v3455, %v3583
      %v3648 = vadd.f32 %v3456, %v3584
      %v3649 = vadd.f32 %v3457, %v3585
      %v3650 = vadd.f32 %v3458, %v3586
      %v3651 = vadd.f32 %v3459, %v3587
      %v3652 = vadd.f32 %v3460, %v3588
      %v3653 = vadd.f32 %v3461, %v3589
      %v3654 = vadd.f32 %v3462, %v3590
      %v3655 = vadd.f32 %v3463, %v3591
      %v3656 = vadd.f32 %v3464, %v3592
      %v3657 = vadd.f32 %v3465, %v3593
      %v3658 = vadd.f32 %v3466, %v3594
      %v3659 = vadd.f32 %v3467, %v3595
      %v3660 = vadd.f32 %v3468, %v3596
      %v3661 = vadd.f32 %v3469, %v3597
      %v3662 = vadd.f32 %v3470, %v3598
      %v3663 = vadd.f32 %v3471, %v3599
      %v3664 = vadd.f32 %v3472, %v3600
      %v3665 = vadd.f32 %v3473, %v3601
      %v3666 = vadd.f32 %v3474, %v3602
      %v3667 = vadd.f32 %v3475, %v3603
      %v3668 = vadd.f32 %v3476, %v3604
      %v3669 = vadd.f32 %v3477, %v3605
      %v3670 = vadd.f32 %v3478, %v3606
      %v3671 = vadd.f32 %v3479, %v3607
      %v3672 = vadd.f32 %v3480, %v3608
      %v3673 = vpack.c.bf16 %v3610, %v3609
      %v3674 = vpack.c.bf16 %v3612, %v3611
      %v3675 = vpack.c.bf16 %v3614, %v3613
      %v3676 = vpack.c.bf16 %v3616, %v3615
      %v3677 = vpack.c.bf16 %v3618, %v3617
      %v3678 = vpack.c.bf16 %v3620, %v3619
      %v3679 = vpack.c.bf16 %v3622, %v3621
      %v3680 = vpack.c.bf16 %v3624, %v3623
      %v3681 = vpack.c.bf16 %v3626, %v3625
      %v3682 = vpack.c.bf16 %v3628, %v3627
      %v3683 = vpack.c.bf16 %v3630, %v3629
      %v3684 = vpack.c.bf16 %v3632, %v3631
      %v3685 = vpack.c.bf16 %v3634, %v3633
      %v3686 = vpack.c.bf16 %v3636, %v3635
      %v3687 = vpack.c.bf16 %v3638, %v3637
      %v3688 = vpack.c.bf16 %v3640, %v3639
      %v3689 = vpack.c.bf16 %v3642, %v3641
      %v3690 = vpack.c.bf16 %v3644, %v3643
      %v3691 = vpack.c.bf16 %v3646, %v3645
      %v3692 = vpack.c.bf16 %v3648, %v3647
      %v3693 = vpack.c.bf16 %v3650, %v3649
      %v3694 = vpack.c.bf16 %v3652, %v3651
      %v3695 = vpack.c.bf16 %v3654, %v3653
      %v3696 = vpack.c.bf16 %v3656, %v3655
      %v3697 = vpack.c.bf16 %v3658, %v3657
      %v3698 = vpack.c.bf16 %v3660, %v3659
      %v3699 = vpack.c.bf16 %v3662, %v3661
      %v3700 = vpack.c.bf16 %v3664, %v3663
      %v3701 = vpack.c.bf16 %v3666, %v3665
      %v3702 = vpack.c.bf16 %v3668, %v3667
      %v3703 = vpack.c.bf16 %v3670, %v3669
      %v3704 = vpack.c.bf16 %v3672, %v3671
      %v3721 = vunpack.c.l.b16 %v520
      %v3722 = vunpack.c.l.b16 %v521
      %v3723 = vunpack.c.l.b16 %v522
      %v3724 = vunpack.c.l.b16 %v523
      %v3725 = vunpack.c.l.b16 %v524
      %v3726 = vunpack.c.l.b16 %v525
      %v3727 = vunpack.c.l.b16 %v526
      %v3728 = vunpack.c.l.b16 %v527
      %v3729 = vunpack.c.l.b16 %v528
      %v3730 = vunpack.c.l.b16 %v529
      %v3731 = vunpack.c.l.b16 %v530
      %v3732 = vunpack.c.l.b16 %v531
      %v3733 = vunpack.c.l.b16 %v532
      %v3734 = vunpack.c.l.b16 %v533
      %v3735 = vunpack.c.l.b16 %v534
      %v3736 = vunpack.c.l.b16 %v535
      %v3737 = vpack.c.b16 %v3722, %v3721
      %v3738 = vpack.c.b16 %v3724, %v3723
      %v3739 = vpack.c.b16 %v3726, %v3725
      %v3740 = vpack.c.b16 %v3728, %v3727
      %v3741 = vpack.c.b16 %v3730, %v3729
      %v3742 = vpack.c.b16 %v3732, %v3731
      %v3743 = vpack.c.b16 %v3734, %v3733
      %v3744 = vpack.c.b16 %v3736, %v3735
      %3753 = vmatprep.subr.bf16.mxu0 0
      %3754 = vmatpush1.bf16.msra.mxu0 %v3744
      %3755 = vmatprep.subr.bf16.mxu0 0
      %3756 = vmatpush1.bf16.msra.mxu0 %v3743
      %3757 = vmatprep.subr.bf16.mxu0 0
      %3758 = vmatpush1.bf16.msra.mxu0 %v3742
      %3759 = vmatprep.subr.bf16.mxu0 0
      %3760 = vmatpush1.bf16.msra.mxu0 %v3741
      %3761 = vmatprep.subr.bf16.mxu0 0
      %3762 = vmatpush1.bf16.msra.mxu0 %v3740
      %3763 = vmatprep.subr.bf16.mxu0 0
      %3764 = vmatpush1.bf16.msra.mxu0 %v3739
      %3765 = vmatprep.subr.bf16.mxu0 0
      %3766 = vmatpush1.bf16.msra.mxu0 %v3738
      %3767 = vmatprep.subr.bf16.mxu0 0
      %3768 = vmatpush1.bf16.msra.mxu0 %v3737
      %3769 = vmatprep.subr.bf16.mxu0 0
      %3770 = vmatpush2.bf16.msra.mxu0 0
      %3771 = vmatprep.subr.bf16.mxu0 0
      %3772 = vmatpush2.bf16.msra.mxu0 0
      %3773 = vmatprep.subr.bf16.mxu0 0
      %3774 = vmatpush2.bf16.msra.mxu0 0
      %3775 = vmatprep.subr.bf16.mxu0 0
      %3776 = vmatpush2.bf16.msra.mxu0 0
      %3777 = vmatprep.subr.bf16.mxu0 0
      %3778 = vmatpush2.bf16.msra.mxu0 0
      %3779 = vmatprep.subr.bf16.mxu0 0
      %3780 = vmatpush2.bf16.msra.mxu0 0
      %3781 = vmatprep.subr.bf16.mxu0 0
      %3782 = vmatpush2.bf16.msra.mxu0 0
      %3783 = vmatprep.subr.bf16.mxu0 0
      %3784 = vmatpush2.bf16.msra.mxu0 0
      %3785 = vmatprep.mubr.bf16.mxu0 0
      %3786 = vmatmul.mubr.bf16.gmra.mxu0 %v3673
      %v3787 = vpop.f32.mrf.mxu0
      %v3788 = vadd.f32 0.0, %v3787
      %v3789 = vpop.f32.mrf.mxu0
      %v3790 = vpop.f32.mrf.mxu0
      %v3791 = vadd.f32 0.0, %v3790
      %v3792 = vpop.f32.mrf.mxu0
      %3793 = vmatprep.mubr.bf16.mxu0 0
      %3794 = vmatmul.mubr.bf16.gmra.mxu0 %v3674
      %v3795 = vpop.f32.mrf.mxu0
      %v3796 = vadd.f32 0.0, %v3795
      %v3797 = vpop.f32.mrf.mxu0
      %v3798 = vpop.f32.mrf.mxu0
      %v3799 = vadd.f32 0.0, %v3798
      %v3800 = vpop.f32.mrf.mxu0
      %3801 = vmatprep.mubr.bf16.mxu0 0
      %3802 = vmatmul.mubr.bf16.gmra.mxu0 %v3675
      %v3803 = vpop.f32.mrf.mxu0
      %v3804 = vadd.f32 0.0, %v3803
      %v3805 = vpop.f32.mrf.mxu0
      %v3806 = vpop.f32.mrf.mxu0
      %v3807 = vadd.f32 0.0, %v3806
      %v3808 = vpop.f32.mrf.mxu0
      %3809 = vmatprep.mubr.bf16.mxu0 0
      %3810 = vmatmul.mubr.bf16.gmra.mxu0 %v3676
      %v3811 = vpop.f32.mrf.mxu0
      %v3812 = vadd.f32 0.0, %v3811
      %v3813 = vpop.f32.mrf.mxu0
      %v3814 = vpop.f32.mrf.mxu0
      %v3815 = vadd.f32 0.0, %v3814
      %v3816 = vpop.f32.mrf.mxu0
      %3817 = vmatprep.mubr.bf16.mxu0 0
      %3818 = vmatmul.mubr.bf16.gmra.mxu0 %v3677
      %v3819 = vpop.f32.mrf.mxu0
      %v3820 = vadd.f32 0.0, %v3819
      %v3821 = vpop.f32.mrf.mxu0
      %v3822 = vpop.f32.mrf.mxu0
      %v3823 = vadd.f32 0.0, %v3822
      %v3824 = vpop.f32.mrf.mxu0
      %3825 = vmatprep.mubr.bf16.mxu0 0
      %3826 = vmatmul.mubr.bf16.gmra.mxu0 %v3678
      %v3827 = vpop.f32.mrf.mxu0
      %v3828 = vadd.f32 0.0, %v3827
      %v3829 = vpop.f32.mrf.mxu0
      %v3830 = vpop.f32.mrf.mxu0
      %v3831 = vadd.f32 0.0, %v3830
      %v3832 = vpop.f32.mrf.mxu0
      %3833 = vmatprep.mubr.bf16.mxu0 0
      %3834 = vmatmul.mubr.bf16.gmra.mxu0 %v3679
      %v3835 = vpop.f32.mrf.mxu0
      %v3836 = vadd.f32 0.0, %v3835
      %v3837 = vpop.f32.mrf.mxu0
      %v3838 = vpop.f32.mrf.mxu0
      %v3839 = vadd.f32 0.0, %v3838
      %v3840 = vpop.f32.mrf.mxu0
      %3841 = vmatprep.mubr.bf16.mxu0 0
      %3842 = vmatmul.mubr.bf16.gmra.mxu0 %v3680
      %v3843 = vpop.f32.mrf.mxu0
      %v3844 = vadd.f32 0.0, %v3843
      %v3845 = vpop.f32.mrf.mxu0
      %v3846 = vpop.f32.mrf.mxu0
      %v3847 = vadd.f32 0.0, %v3846
      %v3848 = vpop.f32.mrf.mxu0
      %3849 = vmatprep.mubr.bf16.mxu0 0
      %3850 = vmatmul.mubr.bf16.gmra.mxu0 %v3681
      %v3851 = vpop.f32.mrf.mxu0
      %v3852 = vadd.f32 0.0, %v3851
      %v3853 = vpop.f32.mrf.mxu0
      %v3854 = vpop.f32.mrf.mxu0
      %v3855 = vadd.f32 0.0, %v3854
      %v3856 = vpop.f32.mrf.mxu0
      %3857 = vmatprep.mubr.bf16.mxu0 0
      %3858 = vmatmul.mubr.bf16.gmra.mxu0 %v3682
      %v3859 = vpop.f32.mrf.mxu0
      %v3860 = vadd.f32 0.0, %v3859
      %v3861 = vpop.f32.mrf.mxu0
      %v3862 = vpop.f32.mrf.mxu0
      %v3863 = vadd.f32 0.0, %v3862
      %v3864 = vpop.f32.mrf.mxu0
      %3865 = vmatprep.mubr.bf16.mxu0 0
      %3866 = vmatmul.mubr.bf16.gmra.mxu0 %v3683
      %v3867 = vpop.f32.mrf.mxu0
      %v3868 = vadd.f32 0.0, %v3867
      %v3869 = vpop.f32.mrf.mxu0
      %v3870 = vpop.f32.mrf.mxu0
      %v3871 = vadd.f32 0.0, %v3870
      %v3872 = vpop.f32.mrf.mxu0
      %3873 = vmatprep.mubr.bf16.mxu0 0
      %3874 = vmatmul.mubr.bf16.gmra.mxu0 %v3684
      %v3875 = vpop.f32.mrf.mxu0
      %v3876 = vadd.f32 0.0, %v3875
      %v3877 = vpop.f32.mrf.mxu0
      %v3878 = vpop.f32.mrf.mxu0
      %v3879 = vadd.f32 0.0, %v3878
      %v3880 = vpop.f32.mrf.mxu0
      %3881 = vmatprep.mubr.bf16.mxu0 0
      %3882 = vmatmul.mubr.bf16.gmra.mxu0 %v3685
      %v3883 = vpop.f32.mrf.mxu0
      %v3884 = vadd.f32 0.0, %v3883
      %v3885 = vpop.f32.mrf.mxu0
      %v3886 = vpop.f32.mrf.mxu0
      %v3887 = vadd.f32 0.0, %v3886
      %v3888 = vpop.f32.mrf.mxu0
      %3889 = vmatprep.mubr.bf16.mxu0 0
      %3890 = vmatmul.mubr.bf16.gmra.mxu0 %v3686
      %v3891 = vpop.f32.mrf.mxu0
      %v3892 = vadd.f32 0.0, %v3891
      %v3893 = vpop.f32.mrf.mxu0
      %v3894 = vpop.f32.mrf.mxu0
      %v3895 = vadd.f32 0.0, %v3894
      %v3896 = vpop.f32.mrf.mxu0
      %3897 = vmatprep.mubr.bf16.mxu0 0
      %3898 = vmatmul.mubr.bf16.gmra.mxu0 %v3687
      %v3899 = vpop.f32.mrf.mxu0
      %v3900 = vadd.f32 0.0, %v3899
      %v3901 = vpop.f32.mrf.mxu0
      %v3902 = vpop.f32.mrf.mxu0
      %v3903 = vadd.f32 0.0, %v3902
      %v3904 = vpop.f32.mrf.mxu0
      %3905 = vmatprep.mubr.bf16.mxu0 0
      %3906 = vmatmul.mubr.bf16.gmra.mxu0 %v3688
      %v3907 = vpop.f32.mrf.mxu0
      %v3908 = vadd.f32 0.0, %v3907
      %v3909 = vpop.f32.mrf.mxu0
      %v3910 = vpop.f32.mrf.mxu0
      %v3911 = vadd.f32 0.0, %v3910
      %v3912 = vpop.f32.mrf.mxu0
      %3913 = vmatprep.mubr.bf16.mxu0 0
      %3914 = vmatmul.mubr.bf16.gmra.mxu0 %v3689
      %v3915 = vpop.f32.mrf.mxu0
      %v3916 = vadd.f32 0.0, %v3915
      %v3917 = vpop.f32.mrf.mxu0
      %v3918 = vpop.f32.mrf.mxu0
      %v3919 = vadd.f32 0.0, %v3918
      %v3920 = vpop.f32.mrf.mxu0
      %3921 = vmatprep.mubr.bf16.mxu0 0
      %3922 = vmatmul.mubr.bf16.gmra.mxu0 %v3690
      %v3923 = vpop.f32.mrf.mxu0
      %v3924 = vadd.f32 0.0, %v3923
      %v3925 = vpop.f32.mrf.mxu0
      %v3926 = vpop.f32.mrf.mxu0
      %v3927 = vadd.f32 0.0, %v3926
      %v3928 = vpop.f32.mrf.mxu0
      %3929 = vmatprep.mubr.bf16.mxu0 0
      %3930 = vmatmul.mubr.bf16.gmra.mxu0 %v3691
      %v3931 = vpop.f32.mrf.mxu0
      %v3932 = vadd.f32 0.0, %v3931
      %v3933 = vpop.f32.mrf.mxu0
      %v3934 = vpop.f32.mrf.mxu0
      %v3935 = vadd.f32 0.0, %v3934
      %v3936 = vpop.f32.mrf.mxu0
      %3937 = vmatprep.mubr.bf16.mxu0 0
      %3938 = vmatmul.mubr.bf16.gmra.mxu0 %v3692
      %v3939 = vpop.f32.mrf.mxu0
      %v3940 = vadd.f32 0.0, %v3939
      %v3941 = vpop.f32.mrf.mxu0
      %v3942 = vpop.f32.mrf.mxu0
      %v3943 = vadd.f32 0.0, %v3942
      %v3944 = vpop.f32.mrf.mxu0
      %3945 = vmatprep.mubr.bf16.mxu0 0
      %3946 = vmatmul.mubr.bf16.gmra.mxu0 %v3693
      %v3947 = vpop.f32.mrf.mxu0
      %v3948 = vadd.f32 0.0, %v3947
      %v3949 = vpop.f32.mrf.mxu0
      %v3950 = vpop.f32.mrf.mxu0
      %v3951 = vadd.f32 0.0, %v3950
      %v3952 = vpop.f32.mrf.mxu0
      %3953 = vmatprep.mubr.bf16.mxu0 0
      %3954 = vmatmul.mubr.bf16.gmra.mxu0 %v3694
      %v3955 = vpop.f32.mrf.mxu0
      %v3956 = vadd.f32 0.0, %v3955
      %v3957 = vpop.f32.mrf.mxu0
      %v3958 = vpop.f32.mrf.mxu0
      %v3959 = vadd.f32 0.0, %v3958
      %v3960 = vpop.f32.mrf.mxu0
      %3961 = vmatprep.mubr.bf16.mxu0 0
      %3962 = vmatmul.mubr.bf16.gmra.mxu0 %v3695
      %v3963 = vpop.f32.mrf.mxu0
      %v3964 = vadd.f32 0.0, %v3963
      %v3965 = vpop.f32.mrf.mxu0
      %v3966 = vpop.f32.mrf.mxu0
      %v3967 = vadd.f32 0.0, %v3966
      %v3968 = vpop.f32.mrf.mxu0
      %3969 = vmatprep.mubr.bf16.mxu0 0
      %3970 = vmatmul.mubr.bf16.gmra.mxu0 %v3696
      %v3971 = vpop.f32.mrf.mxu0
      %v3972 = vadd.f32 0.0, %v3971
      %v3973 = vpop.f32.mrf.mxu0
      %v3974 = vpop.f32.mrf.mxu0
      %v3975 = vadd.f32 0.0, %v3974
      %v3976 = vpop.f32.mrf.mxu0
      %3977 = vmatprep.mubr.bf16.mxu0 0
      %3978 = vmatmul.mubr.bf16.gmra.mxu0 %v3697
      %v3979 = vpop.f32.mrf.mxu0
      %v3980 = vadd.f32 0.0, %v3979
      %v3981 = vpop.f32.mrf.mxu0
      %v3982 = vpop.f32.mrf.mxu0
      %v3983 = vadd.f32 0.0, %v3982
      %v3984 = vpop.f32.mrf.mxu0
      %3985 = vmatprep.mubr.bf16.mxu0 0
      %3986 = vmatmul.mubr.bf16.gmra.mxu0 %v3698
      %v3987 = vpop.f32.mrf.mxu0
      %v3988 = vadd.f32 0.0, %v3987
      %v3989 = vpop.f32.mrf.mxu0
      %v3990 = vpop.f32.mrf.mxu0
      %v3991 = vadd.f32 0.0, %v3990
      %v3992 = vpop.f32.mrf.mxu0
      %3993 = vmatprep.mubr.bf16.mxu0 0
      %3994 = vmatmul.mubr.bf16.gmra.mxu0 %v3699
      %v3995 = vpop.f32.mrf.mxu0
      %v3996 = vadd.f32 0.0, %v3995
      %v3997 = vpop.f32.mrf.mxu0
      %v3998 = vpop.f32.mrf.mxu0
      %v3999 = vadd.f32 0.0, %v3998
      %v4000 = vpop.f32.mrf.mxu0
      %4001 = vmatprep.mubr.bf16.mxu0 0
      %4002 = vmatmul.mubr.bf16.gmra.mxu0 %v3700
      %v4003 = vpop.f32.mrf.mxu0
      %v4004 = vadd.f32 0.0, %v4003
      %v4005 = vpop.f32.mrf.mxu0
      %v4006 = vpop.f32.mrf.mxu0
      %v4007 = vadd.f32 0.0, %v4006
      %v4008 = vpop.f32.mrf.mxu0
      %4009 = vmatprep.mubr.bf16.mxu0 0
      %4010 = vmatmul.mubr.bf16.gmra.mxu0 %v3701
      %v4011 = vpop.f32.mrf.mxu0
      %v4012 = vadd.f32 0.0, %v4011
      %v4013 = vpop.f32.mrf.mxu0
      %v4014 = vpop.f32.mrf.mxu0
      %v4015 = vadd.f32 0.0, %v4014
      %v4016 = vpop.f32.mrf.mxu0
      %4017 = vmatprep.mubr.bf16.mxu0 0
      %4018 = vmatmul.mubr.bf16.gmra.mxu0 %v3702
      %v4019 = vpop.f32.mrf.mxu0
      %v4020 = vadd.f32 0.0, %v4019
      %v4021 = vpop.f32.mrf.mxu0
      %v4022 = vpop.f32.mrf.mxu0
      %v4023 = vadd.f32 0.0, %v4022
      %v4024 = vpop.f32.mrf.mxu0
      %4025 = vmatprep.mubr.bf16.mxu0 0
      %4026 = vmatmul.mubr.bf16.gmra.mxu0 %v3703
      %v4027 = vpop.f32.mrf.mxu0
      %v4028 = vadd.f32 0.0, %v4027
      %v4029 = vpop.f32.mrf.mxu0
      %v4030 = vpop.f32.mrf.mxu0
      %v4031 = vadd.f32 0.0, %v4030
      %v4032 = vpop.f32.mrf.mxu0
      %4033 = vmatprep.mubr.bf16.mxu0 0
      %4034 = vmatmul.mubr.bf16.gmra.mxu0 %v3704
      %v4035 = vpop.f32.mrf.mxu0
      %v4036 = vadd.f32 0.0, %v4035
      %v4037 = vpop.f32.mrf.mxu0
      %v4038 = vpop.f32.mrf.mxu0
      %v4039 = vadd.f32 0.0, %v4038
      %v4040 = vpop.f32.mrf.mxu0
      %4041 = vdwg.mxu0
      %vm4042 = vcmask 31744
      %v4043 = vsel %vm4042, %v3788, -inf
      %4044 = vmax.xlane.f32.xlu0 %v4043
      %v4045 = vpop.xlane.xlu0 %4044
      %v4046 = vsel %vm4042, %v3791, -inf
      %4047 = vmax.xlane.f32.xlu0 %v4046
      %v4048 = vpop.xlane.xlu0 %4047
      %v4049 = vsel %vm4042, %v3796, -inf
      %4050 = vmax.xlane.f32.xlu0 %v4049
      %v4051 = vpop.xlane.xlu0 %4050
      %v4052 = vsel %vm4042, %v3799, -inf
      %4053 = vmax.xlane.f32.xlu0 %v4052
      %v4054 = vpop.xlane.xlu0 %4053
      %v4055 = vsel %vm4042, %v3804, -inf
      %4056 = vmax.xlane.f32.xlu0 %v4055
      %v4057 = vpop.xlane.xlu0 %4056
      %v4058 = vsel %vm4042, %v3807, -inf
      %4059 = vmax.xlane.f32.xlu0 %v4058
      %v4060 = vpop.xlane.xlu0 %4059
      %v4061 = vsel %vm4042, %v3812, -inf
      %4062 = vmax.xlane.f32.xlu0 %v4061
      %v4063 = vpop.xlane.xlu0 %4062
      %v4064 = vsel %vm4042, %v3815, -inf
      %4065 = vmax.xlane.f32.xlu0 %v4064
      %v4066 = vpop.xlane.xlu0 %4065
      %v4067 = vsub.f32 %v3788, %v4045
      %v4068 = vsub.f32 %v3791, %v4048
      %v4069 = vsub.f32 %v3796, %v4051
      %v4070 = vsub.f32 %v3799, %v4054
      %v4071 = vsub.f32 %v3804, %v4057
      %v4072 = vsub.f32 %v3807, %v4060
      %v4073 = vsub.f32 %v3812, %v4063
      %v4074 = vsub.f32 %v3815, %v4066
      %v4075 = vmul.f32 %v4067, 1.442695
      %v4076 = vpow.pop %v4075
      %v4077 = vmul.f32 %v4068, 1.442695
      %v4078 = vpow.pop %v4077
      %v4079 = vmul.f32 %v4069, 1.442695
      %v4080 = vpow.pop %v4079
      %v4081 = vmul.f32 %v4070, 1.442695
      %v4082 = vpow.pop %v4081
      %v4083 = vmul.f32 %v4071, 1.442695
      %v4084 = vpow.pop %v4083
      %v4085 = vmul.f32 %v4072, 1.442695
      %v4086 = vpow.pop %v4085
      %v4087 = vmul.f32 %v4073, 1.442695
      %v4088 = vpow.pop %v4087
      %v4089 = vmul.f32 %v4074, 1.442695
      %v4090 = vpow.pop %v4089
      %v4091 = vsel %vm4042, %v4076, 0.0
      %4092 = vadd.xlane.f32.xlu0 %v4091
      %v4093 = vpop.xlane.xlu0 %4092
      %v4094 = vsel %vm4042, %v4078, 0.0
      %4095 = vadd.xlane.f32.xlu0 %v4094
      %v4096 = vpop.xlane.xlu0 %4095
      %v4097 = vsel %vm4042, %v4080, 0.0
      %4098 = vadd.xlane.f32.xlu0 %v4097
      %v4099 = vpop.xlane.xlu0 %4098
      %v4100 = vsel %vm4042, %v4082, 0.0
      %4101 = vadd.xlane.f32.xlu0 %v4100
      %v4102 = vpop.xlane.xlu0 %4101
      %v4103 = vsel %vm4042, %v4084, 0.0
      %4104 = vadd.xlane.f32.xlu0 %v4103
      %v4105 = vpop.xlane.xlu0 %4104
      %v4106 = vsel %vm4042, %v4086, 0.0
      %4107 = vadd.xlane.f32.xlu0 %v4106
      %v4108 = vpop.xlane.xlu0 %4107
      %v4109 = vsel %vm4042, %v4088, 0.0
      %4110 = vadd.xlane.f32.xlu0 %v4109
      %v4111 = vpop.xlane.xlu0 %4110
      %v4112 = vsel %vm4042, %v4090, 0.0
      %4113 = vadd.xlane.f32.xlu0 %v4112
      %v4114 = vpop.xlane.xlu0 %4113
      %v4115 = vrcp.pop %v4093
      %v4116 = vrcp.pop %v4096
      %v4117 = vrcp.pop %v4099
      %v4118 = vrcp.pop %v4102
      %v4119 = vrcp.pop %v4105
      %v4120 = vrcp.pop %v4108
      %v4121 = vrcp.pop %v4111
      %v4122 = vrcp.pop %v4114
      %v4123 = vmul.f32 %v4076, %v4115
      %v4124 = vmul.f32 %v4078, %v4116
      %v4125 = vmul.f32 %v4080, %v4117
      %v4126 = vmul.f32 %v4082, %v4118
      %v4127 = vmul.f32 %v4084, %v4119
      %v4128 = vmul.f32 %v4086, %v4120
      %v4129 = vmul.f32 %v4088, %v4121
      %v4130 = vmul.f32 %v4090, %v4122
      %4139 = vrot.lane.b32.xlu0 %v478, 124
      %v4140 = vpop.permute.xlu0 %4139
      %4141 = vrot.lane.b32.xlu0 %v479, 124
      %v4142 = vpop.permute.xlu0 %4141
      %4143 = vrot.lane.b32.xlu0 %v480, 124
      %v4144 = vpop.permute.xlu0 %4143
      %4145 = vrot.lane.b32.xlu0 %v481, 124
      %v4146 = vpop.permute.xlu0 %4145
      %4147 = vrot.lane.b32.xlu0 %v482, 124
      %v4148 = vpop.permute.xlu0 %4147
      %4149 = vrot.lane.b32.xlu0 %v483, 124
      %v4150 = vpop.permute.xlu0 %4149
      %4151 = vrot.lane.b32.xlu0 %v484, 124
      %v4152 = vpop.permute.xlu0 %4151
      %4153 = vrot.lane.b32.xlu0 %v485, 124
      %v4154 = vpop.permute.xlu0 %4153
      %v4163 = vmul.f32 %v4123, %v4140
      %v4164 = vmul.f32 %v4124, %v4142
      %v4165 = vmul.f32 %v4125, %v4144
      %v4166 = vmul.f32 %v4126, %v4146
      %v4167 = vmul.f32 %v4127, %v4148
      %v4168 = vmul.f32 %v4128, %v4150
      %v4169 = vmul.f32 %v4129, %v4152
      %v4170 = vmul.f32 %v4130, %v4154
      %v4171 = vsel %vm4042, %v4163, -inf
      %4172 = vmax.xlane.f32.xlu0 %v4171
      %v4173 = vpop.xlane.xlu0 %4172
      %v4174 = vsel %vm4042, %v4164, -inf
      %4175 = vmax.xlane.f32.xlu0 %v4174
      %v4176 = vpop.xlane.xlu0 %4175
      %v4177 = vsel %vm4042, %v4165, -inf
      %4178 = vmax.xlane.f32.xlu0 %v4177
      %v4179 = vpop.xlane.xlu0 %4178
      %v4180 = vsel %vm4042, %v4166, -inf
      %4181 = vmax.xlane.f32.xlu0 %v4180
      %v4182 = vpop.xlane.xlu0 %4181
      %v4183 = vsel %vm4042, %v4167, -inf
      %4184 = vmax.xlane.f32.xlu0 %v4183
      %v4185 = vpop.xlane.xlu0 %4184
      %v4186 = vsel %vm4042, %v4168, -inf
      %4187 = vmax.xlane.f32.xlu0 %v4186
      %v4188 = vpop.xlane.xlu0 %4187
      %v4189 = vsel %vm4042, %v4169, -inf
      %4190 = vmax.xlane.f32.xlu0 %v4189
      %v4191 = vpop.xlane.xlu0 %4190
      %v4192 = vsel %vm4042, %v4170, -inf
      %4193 = vmax.xlane.f32.xlu0 %v4192
      %v4194 = vpop.xlane.xlu0 %4193
      %vm4195 = vcmp.eq.f32.partialorder %v4163, %v4173
      %vm4196 = vcmp.eq.f32.partialorder %v4164, %v4176
      %vm4197 = vcmp.eq.f32.partialorder %v4165, %v4179
      %vm4198 = vcmp.eq.f32.partialorder %v4166, %v4182
      %vm4199 = vcmp.eq.f32.partialorder %v4167, %v4185
      %vm4200 = vcmp.eq.f32.partialorder %v4168, %v4188
      %vm4201 = vcmp.eq.f32.partialorder %v4169, %v4191
      %vm4202 = vcmp.eq.f32.partialorder %v4170, %v4194
      %v4203 = vsel %vm4195, %v4163, 0.0
      %v4204 = vsel %vm4196, %v4164, 0.0
      %v4205 = vsel %vm4197, %v4165, 0.0
      %v4206 = vsel %vm4198, %v4166, 0.0
      %v4207 = vsel %vm4199, %v4167, 0.0
      %v4208 = vsel %vm4200, %v4168, 0.0
      %v4209 = vsel %vm4201, %v4169, 0.0
      %v4210 = vsel %vm4202, %v4170, 0.0
      %v4211 = vadd.f32 %v4203, 1e-07
      %v4212 = vadd.f32 %v4204, 1e-07
      %v4213 = vadd.f32 %v4205, 1e-07
      %v4214 = vadd.f32 %v4206, 1e-07
      %v4215 = vadd.f32 %v4207, 1e-07
      %v4216 = vadd.f32 %v4208, 1e-07
      %v4217 = vadd.f32 %v4209, 1e-07
      %v4218 = vadd.f32 %v4210, 1e-07
      %v4219 = vrcp.pop %v4211
      %v4220 = vmul.f32 %v4203, %v4219
      %v4221 = vrcp.pop %v4212
      %v4222 = vmul.f32 %v4204, %v4221
      %v4223 = vrcp.pop %v4213
      %v4224 = vmul.f32 %v4205, %v4223
      %v4225 = vrcp.pop %v4214
      %v4226 = vmul.f32 %v4206, %v4225
      %v4227 = vrcp.pop %v4215
      %v4228 = vmul.f32 %v4207, %v4227
      %v4229 = vrcp.pop %v4216
      %v4230 = vmul.f32 %v4208, %v4229
      %v4231 = vrcp.pop %v4217
      %v4232 = vmul.f32 %v4209, %v4231
      %v4233 = vrcp.pop %v4218
      %v4234 = vmul.f32 %v4210, %v4233
      %4236 = vset.pattern.permute.xlu0 0
      %4237 = vperm.xlu0 %4236, %v4220
      %v4238 = vpop.permute.xlu0 %4237
      %4241 = vset.pattern.permute.xlu0 0
      %4242 = vperm.xlu0 %4241, %v4222
      %v4243 = vpop.permute.xlu0 %4242
      %4246 = vset.pattern.permute.xlu0 0
      %4247 = vperm.xlu0 %4246, %v4224
      %v4248 = vpop.permute.xlu0 %4247
      %4251 = vset.pattern.permute.xlu0 0
      %4252 = vperm.xlu0 %4251, %v4226
      %v4253 = vpop.permute.xlu0 %4252
      %4256 = vset.pattern.permute.xlu0 0
      %4257 = vperm.xlu0 %4256, %v4228
      %v4258 = vpop.permute.xlu0 %4257
      %4261 = vset.pattern.permute.xlu0 0
      %4262 = vperm.xlu0 %4261, %v4230
      %v4263 = vpop.permute.xlu0 %4262
      %4266 = vset.pattern.permute.xlu0 0
      %4267 = vperm.xlu0 %4266, %v4232
      %v4268 = vpop.permute.xlu0 %4267
      %4271 = vset.pattern.permute.xlu0 0
      %4272 = vperm.xlu0 %4271, %v4234
      %v4273 = vpop.permute.xlu0 %4272
      %v4275 = vmul.f32 %v4238, %v470
      %v4276 = vmul.f32 %v4243, %v471
      %v4277 = vmul.f32 %v4248, %v472
      %v4278 = vmul.f32 %v4253, %v473
      %v4279 = vmul.f32 %v4258, %v474
      %v4280 = vmul.f32 %v4263, %v475
      %v4281 = vmul.f32 %v4268, %v476
      %v4282 = vmul.f32 %v4273, %v477
      %4283 = vset.pattern.permute.xlu0 1
      %4284 = vperm.xlu0 %4283, %v4220
      %v4285 = vpop.permute.xlu0 %4284
      %4287 = vset.pattern.permute.xlu0 1
      %4288 = vperm.xlu0 %4287, %v4222
      %v4289 = vpop.permute.xlu0 %4288
      %4291 = vset.pattern.permute.xlu0 1
      %4292 = vperm.xlu0 %4291, %v4224
      %v4293 = vpop.permute.xlu0 %4292
      %4295 = vset.pattern.permute.xlu0 1
      %4296 = vperm.xlu0 %4295, %v4226
      %v4297 = vpop.permute.xlu0 %4296
      %4299 = vset.pattern.permute.xlu0 1
      %4300 = vperm.xlu0 %4299, %v4228
      %v4301 = vpop.permute.xlu0 %4300
      %4303 = vset.pattern.permute.xlu0 1
      %4304 = vperm.xlu0 %4303, %v4230
      %v4305 = vpop.permute.xlu0 %4304
      %4307 = vset.pattern.permute.xlu0 1
      %4308 = vperm.xlu0 %4307, %v4232
      %v4309 = vpop.permute.xlu0 %4308
      %4311 = vset.pattern.permute.xlu0 1
      %4312 = vperm.xlu0 %4311, %v4234
      %v4313 = vpop.permute.xlu0 %4312
      %v4315 = vmul.f32 %v4285, %v470
      %v4316 = vmul.f32 %v4289, %v471
      %v4317 = vmul.f32 %v4293, %v472
      %v4318 = vmul.f32 %v4297, %v473
      %v4319 = vmul.f32 %v4301, %v474
      %v4320 = vmul.f32 %v4305, %v475
      %v4321 = vmul.f32 %v4309, %v476
      %v4322 = vmul.f32 %v4313, %v477
      %4331 = vrot.lane.b32.xlu0 %v4315, 96
      %v4332 = vpop.permute.xlu0 %4331
      %4333 = vrot.lane.b32.xlu0 %v4316, 96
      %v4334 = vpop.permute.xlu0 %4333
      %4335 = vrot.lane.b32.xlu0 %v4317, 96
      %v4336 = vpop.permute.xlu0 %4335
      %4337 = vrot.lane.b32.xlu0 %v4318, 96
      %v4338 = vpop.permute.xlu0 %4337
      %4339 = vrot.lane.b32.xlu0 %v4319, 96
      %v4340 = vpop.permute.xlu0 %4339
      %4341 = vrot.lane.b32.xlu0 %v4320, 96
      %v4342 = vpop.permute.xlu0 %4341
      %4343 = vrot.lane.b32.xlu0 %v4321, 96
      %v4344 = vpop.permute.xlu0 %4343
      %4345 = vrot.lane.b32.xlu0 %v4322, 96
      %v4346 = vpop.permute.xlu0 %4345
      %v4355 = vadd.f32 %v4275, %v4332
      %v4356 = vadd.f32 %v4276, %v4334
      %v4357 = vadd.f32 %v4277, %v4336
      %v4358 = vadd.f32 %v4278, %v4338
      %v4359 = vadd.f32 %v4279, %v4340
      %v4360 = vadd.f32 %v4280, %v4342
      %v4361 = vadd.f32 %v4281, %v4344
      %v4362 = vadd.f32 %v4282, %v4346
      %4363 = vset.pattern.permute.xlu0 2
      %4364 = vperm.xlu0 %4363, %v4220
      %v4365 = vpop.permute.xlu0 %4364
      %4367 = vset.pattern.permute.xlu0 2
      %4368 = vperm.xlu0 %4367, %v4222
      %v4369 = vpop.permute.xlu0 %4368
      %4371 = vset.pattern.permute.xlu0 2
      %4372 = vperm.xlu0 %4371, %v4224
      %v4373 = vpop.permute.xlu0 %4372
      %4375 = vset.pattern.permute.xlu0 2
      %4376 = vperm.xlu0 %4375, %v4226
      %v4377 = vpop.permute.xlu0 %4376
      %4379 = vset.pattern.permute.xlu0 2
      %4380 = vperm.xlu0 %4379, %v4228
      %v4381 = vpop.permute.xlu0 %4380
      %4383 = vset.pattern.permute.xlu0 2
      %4384 = vperm.xlu0 %4383, %v4230
      %v4385 = vpop.permute.xlu0 %4384
      %4387 = vset.pattern.permute.xlu0 2
      %4388 = vperm.xlu0 %4387, %v4232
      %v4389 = vpop.permute.xlu0 %4388
      %4391 = vset.pattern.permute.xlu0 2
      %4392 = vperm.xlu0 %4391, %v4234
      %v4393 = vpop.permute.xlu0 %4392
      %v4395 = vmul.f32 %v4365, %v470
      %v4396 = vmul.f32 %v4369, %v471
      %v4397 = vmul.f32 %v4373, %v472
      %v4398 = vmul.f32 %v4377, %v473
      %v4399 = vmul.f32 %v4381, %v474
      %v4400 = vmul.f32 %v4385, %v475
      %v4401 = vmul.f32 %v4389, %v476
      %v4402 = vmul.f32 %v4393, %v477
      %4411 = vrot.lane.b32.xlu0 %v4395, 64
      %v4412 = vpop.permute.xlu0 %4411
      %4413 = vrot.lane.b32.xlu0 %v4396, 64
      %v4414 = vpop.permute.xlu0 %4413
      %4415 = vrot.lane.b32.xlu0 %v4397, 64
      %v4416 = vpop.permute.xlu0 %4415
      %4417 = vrot.lane.b32.xlu0 %v4398, 64
      %v4418 = vpop.permute.xlu0 %4417
      %4419 = vrot.lane.b32.xlu0 %v4399, 64
      %v4420 = vpop.permute.xlu0 %4419
      %4421 = vrot.lane.b32.xlu0 %v4400, 64
      %v4422 = vpop.permute.xlu0 %4421
      %4423 = vrot.lane.b32.xlu0 %v4401, 64
      %v4424 = vpop.permute.xlu0 %4423
      %4425 = vrot.lane.b32.xlu0 %v4402, 64
      %v4426 = vpop.permute.xlu0 %4425
      %v4435 = vadd.f32 %v4355, %v4412
      %v4436 = vadd.f32 %v4356, %v4414
      %v4437 = vadd.f32 %v4357, %v4416
      %v4438 = vadd.f32 %v4358, %v4418
      %v4439 = vadd.f32 %v4359, %v4420
      %v4440 = vadd.f32 %v4360, %v4422
      %v4441 = vadd.f32 %v4361, %v4424
      %v4442 = vadd.f32 %v4362, %v4426
      %4443 = vset.pattern.permute.xlu0 3
      %4444 = vperm.xlu0 %4443, %v4220
      %v4445 = vpop.permute.xlu0 %4444
      %4447 = vset.pattern.permute.xlu0 3
      %4448 = vperm.xlu0 %4447, %v4222
      %v4449 = vpop.permute.xlu0 %4448
      %4451 = vset.pattern.permute.xlu0 3
      %4452 = vperm.xlu0 %4451, %v4224
      %v4453 = vpop.permute.xlu0 %4452
      %4455 = vset.pattern.permute.xlu0 3
      %4456 = vperm.xlu0 %4455, %v4226
      %v4457 = vpop.permute.xlu0 %4456
      %4459 = vset.pattern.permute.xlu0 3
      %4460 = vperm.xlu0 %4459, %v4228
      %v4461 = vpop.permute.xlu0 %4460
      %4463 = vset.pattern.permute.xlu0 3
      %4464 = vperm.xlu0 %4463, %v4230
      %v4465 = vpop.permute.xlu0 %4464
      %4467 = vset.pattern.permute.xlu0 3
      %4468 = vperm.xlu0 %4467, %v4232
      %v4469 = vpop.permute.xlu0 %4468
      %4471 = vset.pattern.permute.xlu0 3
      %4472 = vperm.xlu0 %4471, %v4234
      %v4473 = vpop.permute.xlu0 %4472
      %v4475 = vmul.f32 %v4445, %v470
      %v4476 = vmul.f32 %v4449, %v471
      %v4477 = vmul.f32 %v4453, %v472
      %v4478 = vmul.f32 %v4457, %v473
      %v4479 = vmul.f32 %v4461, %v474
      %v4480 = vmul.f32 %v4465, %v475
      %v4481 = vmul.f32 %v4469, %v476
      %v4482 = vmul.f32 %v4473, %v477
      %4491 = vrot.lane.b32.xlu0 %v4475, 32
      %v4492 = vpop.permute.xlu0 %4491
      %4493 = vrot.lane.b32.xlu0 %v4476, 32
      %v4494 = vpop.permute.xlu0 %4493
      %4495 = vrot.lane.b32.xlu0 %v4477, 32
      %v4496 = vpop.permute.xlu0 %4495
      %4497 = vrot.lane.b32.xlu0 %v4478, 32
      %v4498 = vpop.permute.xlu0 %4497
      %4499 = vrot.lane.b32.xlu0 %v4479, 32
      %v4500 = vpop.permute.xlu0 %4499
      %4501 = vrot.lane.b32.xlu0 %v4480, 32
      %v4502 = vpop.permute.xlu0 %4501
      %4503 = vrot.lane.b32.xlu0 %v4481, 32
      %v4504 = vpop.permute.xlu0 %4503
      %4505 = vrot.lane.b32.xlu0 %v4482, 32
      %v4506 = vpop.permute.xlu0 %4505
      %v4515 = vadd.f32 %v4435, %v4492
      %v4516 = vadd.f32 %v4436, %v4494
      %v4517 = vadd.f32 %v4437, %v4496
      %v4518 = vadd.f32 %v4438, %v4498
      %v4519 = vadd.f32 %v4439, %v4500
      %v4520 = vadd.f32 %v4440, %v4502
      %v4521 = vadd.f32 %v4441, %v4504
      %v4522 = vadd.f32 %v4442, %v4506
      %v4523 = vsub.f32 %v462, %v4515
      %v4524 = vsub.f32 %v463, %v4516
      %v4525 = vsub.f32 %v464, %v4517
      %v4526 = vsub.f32 %v465, %v4518
      %v4527 = vsub.f32 %v466, %v4519
      %v4528 = vsub.f32 %v467, %v4520
      %v4529 = vsub.f32 %v468, %v4521
      %v4530 = vsub.f32 %v469, %v4522
      %v4531 = vand.u32 2147483647, %v4523
      %v4532 = vand.u32 2147483647, %v4524
      %v4533 = vand.u32 2147483647, %v4525
      %v4534 = vand.u32 2147483647, %v4526
      %v4535 = vand.u32 2147483647, %v4527
      %v4536 = vand.u32 2147483647, %v4528
      %v4537 = vand.u32 2147483647, %v4529
      %v4538 = vand.u32 2147483647, %v4530
      %v4539 = vadd.f32 %v4531, 0.0
      %v4540 = vadd.f32 %v4532, 0.0
      %v4541 = vadd.f32 %v4533, 0.0
      %v4542 = vadd.f32 %v4534, 0.0
      %v4543 = vadd.f32 %v4535, 0.0
      %v4544 = vadd.f32 %v4536, 0.0
      %v4545 = vadd.f32 %v4537, 0.0
      %v4546 = vadd.f32 %v4538, 0.0
      %v4547 = vpack.c.bf16 %v4532, %v4531
      %v4548 = vpack.c.bf16 %v4534, %v4533
      %v4549 = vpack.c.bf16 %v4536, %v4535
      %v4550 = vpack.c.bf16 %v4538, %v4537
      %v4551 = vsel %vm4042, %v3820, -inf
      %4552 = vmax.xlane.f32.xlu0 %v4551
      %v4553 = vpop.xlane.xlu0 %4552
      %v4554 = vsel %vm4042, %v3823, -inf
      %4555 = vmax.xlane.f32.xlu0 %v4554
      %v4556 = vpop.xlane.xlu0 %4555
      %v4557 = vsel %vm4042, %v3828, -inf
      %4558 = vmax.xlane.f32.xlu0 %v4557
      %v4559 = vpop.xlane.xlu0 %4558
      %v4560 = vsel %vm4042, %v3831, -inf
      %4561 = vmax.xlane.f32.xlu0 %v4560
      %v4562 = vpop.xlane.xlu0 %4561
      %v4563 = vsel %vm4042, %v3836, -inf
      %4564 = vmax.xlane.f32.xlu0 %v4563
      %v4565 = vpop.xlane.xlu0 %4564
      %v4566 = vsel %vm4042, %v3839, -inf
      %4567 = vmax.xlane.f32.xlu0 %v4566
      %v4568 = vpop.xlane.xlu0 %4567
      %v4569 = vsel %vm4042, %v3844, -inf
      %4570 = vmax.xlane.f32.xlu0 %v4569
      %v4571 = vpop.xlane.xlu0 %4570
      %v4572 = vsel %vm4042, %v3847, -inf
      %4573 = vmax.xlane.f32.xlu0 %v4572
      %v4574 = vpop.xlane.xlu0 %4573
      %v4575 = vsub.f32 %v3820, %v4553
      %v4576 = vsub.f32 %v3823, %v4556
      %v4577 = vsub.f32 %v3828, %v4559
      %v4578 = vsub.f32 %v3831, %v4562
      %v4579 = vsub.f32 %v3836, %v4565
      %v4580 = vsub.f32 %v3839, %v4568
      %v4581 = vsub.f32 %v3844, %v4571
      %v4582 = vsub.f32 %v3847, %v4574
      %v4583 = vmul.f32 %v4575, 1.442695
      %v4584 = vpow.pop %v4583
      %v4585 = vmul.f32 %v4576, 1.442695
      %v4586 = vpow.pop %v4585
      %v4587 = vmul.f32 %v4577, 1.442695
      %v4588 = vpow.pop %v4587
      %v4589 = vmul.f32 %v4578, 1.442695
      %v4590 = vpow.pop %v4589
      %v4591 = vmul.f32 %v4579, 1.442695
      %v4592 = vpow.pop %v4591
      %v4593 = vmul.f32 %v4580, 1.442695
      %v4594 = vpow.pop %v4593
      %v4595 = vmul.f32 %v4581, 1.442695
      %v4596 = vpow.pop %v4595
      %v4597 = vmul.f32 %v4582, 1.442695
      %v4598 = vpow.pop %v4597
      %v4599 = vsel %vm4042, %v4584, 0.0
      %4600 = vadd.xlane.f32.xlu0 %v4599
      %v4601 = vpop.xlane.xlu0 %4600
      %v4602 = vsel %vm4042, %v4586, 0.0
      %4603 = vadd.xlane.f32.xlu0 %v4602
      %v4604 = vpop.xlane.xlu0 %4603
      %v4605 = vsel %vm4042, %v4588, 0.0
      %4606 = vadd.xlane.f32.xlu0 %v4605
      %v4607 = vpop.xlane.xlu0 %4606
      %v4608 = vsel %vm4042, %v4590, 0.0
      %4609 = vadd.xlane.f32.xlu0 %v4608
      %v4610 = vpop.xlane.xlu0 %4609
      %v4611 = vsel %vm4042, %v4592, 0.0
      %4612 = vadd.xlane.f32.xlu0 %v4611
      %v4613 = vpop.xlane.xlu0 %4612
      %v4614 = vsel %vm4042, %v4594, 0.0
      %4615 = vadd.xlane.f32.xlu0 %v4614
      %v4616 = vpop.xlane.xlu0 %4615
      %v4617 = vsel %vm4042, %v4596, 0.0
      %4618 = vadd.xlane.f32.xlu0 %v4617
      %v4619 = vpop.xlane.xlu0 %4618
      %v4620 = vsel %vm4042, %v4598, 0.0
      %4621 = vadd.xlane.f32.xlu0 %v4620
      %v4622 = vpop.xlane.xlu0 %4621
      %v4623 = vrcp.pop %v4601
      %v4624 = vrcp.pop %v4604
      %v4625 = vrcp.pop %v4607
      %v4626 = vrcp.pop %v4610
      %v4627 = vrcp.pop %v4613
      %v4628 = vrcp.pop %v4616
      %v4629 = vrcp.pop %v4619
      %v4630 = vrcp.pop %v4622
      %v4631 = vmul.f32 %v4584, %v4623
      %v4632 = vmul.f32 %v4586, %v4624
      %v4633 = vmul.f32 %v4588, %v4625
      %v4634 = vmul.f32 %v4590, %v4626
      %v4635 = vmul.f32 %v4592, %v4627
      %v4636 = vmul.f32 %v4594, %v4628
      %v4637 = vmul.f32 %v4596, %v4629
      %v4638 = vmul.f32 %v4598, %v4630
      %v4639 = vmul.f32 %v4631, %v4140
      %v4640 = vmul.f32 %v4632, %v4142
      %v4641 = vmul.f32 %v4633, %v4144
      %v4642 = vmul.f32 %v4634, %v4146
      %v4643 = vmul.f32 %v4635, %v4148
      %v4644 = vmul.f32 %v4636, %v4150
      %v4645 = vmul.f32 %v4637, %v4152
      %v4646 = vmul.f32 %v4638, %v4154
      %v4647 = vsel %vm4042, %v4639, -inf
      %4648 = vmax.xlane.f32.xlu0 %v4647
      %v4649 = vpop.xlane.xlu0 %4648
      %v4650 = vsel %vm4042, %v4640, -inf
      %4651 = vmax.xlane.f32.xlu0 %v4650
      %v4652 = vpop.xlane.xlu0 %4651
      %v4653 = vsel %vm4042, %v4641, -inf
      %4654 = vmax.xlane.f32.xlu0 %v4653
      %v4655 = vpop.xlane.xlu0 %4654
      %v4656 = vsel %vm4042, %v4642, -inf
      %4657 = vmax.xlane.f32.xlu0 %v4656
      %v4658 = vpop.xlane.xlu0 %4657
      %v4659 = vsel %vm4042, %v4643, -inf
      %4660 = vmax.xlane.f32.xlu0 %v4659
      %v4661 = vpop.xlane.xlu0 %4660
      %v4662 = vsel %vm4042, %v4644, -inf
      %4663 = vmax.xlane.f32.xlu0 %v4662
      %v4664 = vpop.xlane.xlu0 %4663
      %v4665 = vsel %vm4042, %v4645, -inf
      %4666 = vmax.xlane.f32.xlu0 %v4665
      %v4667 = vpop.xlane.xlu0 %4666
      %v4668 = vsel %vm4042, %v4646, -inf
      %4669 = vmax.xlane.f32.xlu0 %v4668
      %v4670 = vpop.xlane.xlu0 %4669
      %vm4671 = vcmp.eq.f32.partialorder %v4639, %v4649
      %vm4672 = vcmp.eq.f32.partialorder %v4640, %v4652
      %vm4673 = vcmp.eq.f32.partialorder %v4641, %v4655
      %vm4674 = vcmp.eq.f32.partialorder %v4642, %v4658
      %vm4675 = vcmp.eq.f32.partialorder %v4643, %v4661
      %vm4676 = vcmp.eq.f32.partialorder %v4644, %v4664
      %vm4677 = vcmp.eq.f32.partialorder %v4645, %v4667
      %vm4678 = vcmp.eq.f32.partialorder %v4646, %v4670
      %v4679 = vsel %vm4671, %v4639, 0.0
      %v4680 = vsel %vm4672, %v4640, 0.0
      %v4681 = vsel %vm4673, %v4641, 0.0
      %v4682 = vsel %vm4674, %v4642, 0.0
      %v4683 = vsel %vm4675, %v4643, 0.0
      %v4684 = vsel %vm4676, %v4644, 0.0
      %v4685 = vsel %vm4677, %v4645, 0.0
      %v4686 = vsel %vm4678, %v4646, 0.0
      %v4687 = vadd.f32 %v4679, 1e-07
      %v4688 = vadd.f32 %v4680, 1e-07
      %v4689 = vadd.f32 %v4681, 1e-07
      %v4690 = vadd.f32 %v4682, 1e-07
      %v4691 = vadd.f32 %v4683, 1e-07
      %v4692 = vadd.f32 %v4684, 1e-07
      %v4693 = vadd.f32 %v4685, 1e-07
      %v4694 = vadd.f32 %v4686, 1e-07
      %v4695 = vrcp.pop %v4687
      %v4696 = vmul.f32 %v4679, %v4695
      %v4697 = vrcp.pop %v4688
      %v4698 = vmul.f32 %v4680, %v4697
      %v4699 = vrcp.pop %v4689
      %v4700 = vmul.f32 %v4681, %v4699
      %v4701 = vrcp.pop %v4690
      %v4702 = vmul.f32 %v4682, %v4701
      %v4703 = vrcp.pop %v4691
      %v4704 = vmul.f32 %v4683, %v4703
      %v4705 = vrcp.pop %v4692
      %v4706 = vmul.f32 %v4684, %v4705
      %v4707 = vrcp.pop %v4693
      %v4708 = vmul.f32 %v4685, %v4707
      %v4709 = vrcp.pop %v4694
      %v4710 = vmul.f32 %v4686, %v4709
      %4712 = vset.pattern.permute.xlu0 0
      %4713 = vperm.xlu0 %4712, %v4696
      %v4714 = vpop.permute.xlu0 %4713
      %4717 = vset.pattern.permute.xlu0 0
      %4718 = vperm.xlu0 %4717, %v4698
      %v4719 = vpop.permute.xlu0 %4718
      %4722 = vset.pattern.permute.xlu0 0
      %4723 = vperm.xlu0 %4722, %v4700
      %v4724 = vpop.permute.xlu0 %4723
      %4727 = vset.pattern.permute.xlu0 0
      %4728 = vperm.xlu0 %4727, %v4702
      %v4729 = vpop.permute.xlu0 %4728
      %4732 = vset.pattern.permute.xlu0 0
      %4733 = vperm.xlu0 %4732, %v4704
      %v4734 = vpop.permute.xlu0 %4733
      %4737 = vset.pattern.permute.xlu0 0
      %4738 = vperm.xlu0 %4737, %v4706
      %v4739 = vpop.permute.xlu0 %4738
      %4742 = vset.pattern.permute.xlu0 0
      %4743 = vperm.xlu0 %4742, %v4708
      %v4744 = vpop.permute.xlu0 %4743
      %4747 = vset.pattern.permute.xlu0 0
      %4748 = vperm.xlu0 %4747, %v4710
      %v4749 = vpop.permute.xlu0 %4748
      %v4751 = vmul.f32 %v4714, %v470
      %v4752 = vmul.f32 %v4719, %v471
      %v4753 = vmul.f32 %v4724, %v472
      %v4754 = vmul.f32 %v4729, %v473
      %v4755 = vmul.f32 %v4734, %v474
      %v4756 = vmul.f32 %v4739, %v475
      %v4757 = vmul.f32 %v4744, %v476
      %v4758 = vmul.f32 %v4749, %v477
      %4759 = vset.pattern.permute.xlu0 1
      %4760 = vperm.xlu0 %4759, %v4696
      %v4761 = vpop.permute.xlu0 %4760
      %4763 = vset.pattern.permute.xlu0 1
      %4764 = vperm.xlu0 %4763, %v4698
      %v4765 = vpop.permute.xlu0 %4764
      %4767 = vset.pattern.permute.xlu0 1
      %4768 = vperm.xlu0 %4767, %v4700
      %v4769 = vpop.permute.xlu0 %4768
      %4771 = vset.pattern.permute.xlu0 1
      %4772 = vperm.xlu0 %4771, %v4702
      %v4773 = vpop.permute.xlu0 %4772
      %4775 = vset.pattern.permute.xlu0 1
      %4776 = vperm.xlu0 %4775, %v4704
      %v4777 = vpop.permute.xlu0 %4776
      %4779 = vset.pattern.permute.xlu0 1
      %4780 = vperm.xlu0 %4779, %v4706
      %v4781 = vpop.permute.xlu0 %4780
      %4783 = vset.pattern.permute.xlu0 1
      %4784 = vperm.xlu0 %4783, %v4708
      %v4785 = vpop.permute.xlu0 %4784
      %4787 = vset.pattern.permute.xlu0 1
      %4788 = vperm.xlu0 %4787, %v4710
      %v4789 = vpop.permute.xlu0 %4788
      %v4791 = vmul.f32 %v4761, %v470
      %v4792 = vmul.f32 %v4765, %v471
      %v4793 = vmul.f32 %v4769, %v472
      %v4794 = vmul.f32 %v4773, %v473
      %v4795 = vmul.f32 %v4777, %v474
      %v4796 = vmul.f32 %v4781, %v475
      %v4797 = vmul.f32 %v4785, %v476
      %v4798 = vmul.f32 %v4789, %v477
      %4807 = vrot.lane.b32.xlu0 %v4791, 96
      %v4808 = vpop.permute.xlu0 %4807
      %4809 = vrot.lane.b32.xlu0 %v4792, 96
      %v4810 = vpop.permute.xlu0 %4809
      %4811 = vrot.lane.b32.xlu0 %v4793, 96
      %v4812 = vpop.permute.xlu0 %4811
      %4813 = vrot.lane.b32.xlu0 %v4794, 96
      %v4814 = vpop.permute.xlu0 %4813
      %4815 = vrot.lane.b32.xlu0 %v4795, 96
      %v4816 = vpop.permute.xlu0 %4815
      %4817 = vrot.lane.b32.xlu0 %v4796, 96
      %v4818 = vpop.permute.xlu0 %4817
      %4819 = vrot.lane.b32.xlu0 %v4797, 96
      %v4820 = vpop.permute.xlu0 %4819
      %4821 = vrot.lane.b32.xlu0 %v4798, 96
      %v4822 = vpop.permute.xlu0 %4821
      %v4831 = vadd.f32 %v4751, %v4808
      %v4832 = vadd.f32 %v4752, %v4810
      %v4833 = vadd.f32 %v4753, %v4812
      %v4834 = vadd.f32 %v4754, %v4814
      %v4835 = vadd.f32 %v4755, %v4816
      %v4836 = vadd.f32 %v4756, %v4818
      %v4837 = vadd.f32 %v4757, %v4820
      %v4838 = vadd.f32 %v4758, %v4822
      %4839 = vset.pattern.permute.xlu0 2
      %4840 = vperm.xlu0 %4839, %v4696
      %v4841 = vpop.permute.xlu0 %4840
      %4843 = vset.pattern.permute.xlu0 2
      %4844 = vperm.xlu0 %4843, %v4698
      %v4845 = vpop.permute.xlu0 %4844
      %4847 = vset.pattern.permute.xlu0 2
      %4848 = vperm.xlu0 %4847, %v4700
      %v4849 = vpop.permute.xlu0 %4848
      %4851 = vset.pattern.permute.xlu0 2
      %4852 = vperm.xlu0 %4851, %v4702
      %v4853 = vpop.permute.xlu0 %4852
      %4855 = vset.pattern.permute.xlu0 2
      %4856 = vperm.xlu0 %4855, %v4704
      %v4857 = vpop.permute.xlu0 %4856
      %4859 = vset.pattern.permute.xlu0 2
      %4860 = vperm.xlu0 %4859, %v4706
      %v4861 = vpop.permute.xlu0 %4860
      %4863 = vset.pattern.permute.xlu0 2
      %4864 = vperm.xlu0 %4863, %v4708
      %v4865 = vpop.permute.xlu0 %4864
      %4867 = vset.pattern.permute.xlu0 2
      %4868 = vperm.xlu0 %4867, %v4710
      %v4869 = vpop.permute.xlu0 %4868
      %v4871 = vmul.f32 %v4841, %v470
      %v4872 = vmul.f32 %v4845, %v471
      %v4873 = vmul.f32 %v4849, %v472
      %v4874 = vmul.f32 %v4853, %v473
      %v4875 = vmul.f32 %v4857, %v474
      %v4876 = vmul.f32 %v4861, %v475
      %v4877 = vmul.f32 %v4865, %v476
      %v4878 = vmul.f32 %v4869, %v477
      %4887 = vrot.lane.b32.xlu0 %v4871, 64
      %v4888 = vpop.permute.xlu0 %4887
      %4889 = vrot.lane.b32.xlu0 %v4872, 64
      %v4890 = vpop.permute.xlu0 %4889
      %4891 = vrot.lane.b32.xlu0 %v4873, 64
      %v4892 = vpop.permute.xlu0 %4891
      %4893 = vrot.lane.b32.xlu0 %v4874, 64
      %v4894 = vpop.permute.xlu0 %4893
      %4895 = vrot.lane.b32.xlu0 %v4875, 64
      %v4896 = vpop.permute.xlu0 %4895
      %4897 = vrot.lane.b32.xlu0 %v4876, 64
      %v4898 = vpop.permute.xlu0 %4897
      %4899 = vrot.lane.b32.xlu0 %v4877, 64
      %v4900 = vpop.permute.xlu0 %4899
      %4901 = vrot.lane.b32.xlu0 %v4878, 64
      %v4902 = vpop.permute.xlu0 %4901
      %v4911 = vadd.f32 %v4831, %v4888
      %v4912 = vadd.f32 %v4832, %v4890
      %v4913 = vadd.f32 %v4833, %v4892
      %v4914 = vadd.f32 %v4834, %v4894
      %v4915 = vadd.f32 %v4835, %v4896
      %v4916 = vadd.f32 %v4836, %v4898
      %v4917 = vadd.f32 %v4837, %v4900
      %v4918 = vadd.f32 %v4838, %v4902
      %4919 = vset.pattern.permute.xlu0 3
      %4920 = vperm.xlu0 %4919, %v4696
      %v4921 = vpop.permute.xlu0 %4920
      %4923 = vset.pattern.permute.xlu0 3
      %4924 = vperm.xlu0 %4923, %v4698
      %v4925 = vpop.permute.xlu0 %4924
      %4927 = vset.pattern.permute.xlu0 3
      %4928 = vperm.xlu0 %4927, %v4700
      %v4929 = vpop.permute.xlu0 %4928
      %4931 = vset.pattern.permute.xlu0 3
      %4932 = vperm.xlu0 %4931, %v4702
      %v4933 = vpop.permute.xlu0 %4932
      %4935 = vset.pattern.permute.xlu0 3
      %4936 = vperm.xlu0 %4935, %v4704
      %v4937 = vpop.permute.xlu0 %4936
      %4939 = vset.pattern.permute.xlu0 3
      %4940 = vperm.xlu0 %4939, %v4706
      %v4941 = vpop.permute.xlu0 %4940
      %4943 = vset.pattern.permute.xlu0 3
      %4944 = vperm.xlu0 %4943, %v4708
      %v4945 = vpop.permute.xlu0 %4944
      %4947 = vset.pattern.permute.xlu0 3
      %4948 = vperm.xlu0 %4947, %v4710
      %v4949 = vpop.permute.xlu0 %4948
      %v4951 = vmul.f32 %v4921, %v470
      %v4952 = vmul.f32 %v4925, %v471
      %v4953 = vmul.f32 %v4929, %v472
      %v4954 = vmul.f32 %v4933, %v473
      %v4955 = vmul.f32 %v4937, %v474
      %v4956 = vmul.f32 %v4941, %v475
      %v4957 = vmul.f32 %v4945, %v476
      %v4958 = vmul.f32 %v4949, %v477
      %4967 = vrot.lane.b32.xlu0 %v4951, 32
      %v4968 = vpop.permute.xlu0 %4967
      %4969 = vrot.lane.b32.xlu0 %v4952, 32
      %v4970 = vpop.permute.xlu0 %4969
      %4971 = vrot.lane.b32.xlu0 %v4953, 32
      %v4972 = vpop.permute.xlu0 %4971
      %4973 = vrot.lane.b32.xlu0 %v4954, 32
      %v4974 = vpop.permute.xlu0 %4973
      %4975 = vrot.lane.b32.xlu0 %v4955, 32
      %v4976 = vpop.permute.xlu0 %4975
      %4977 = vrot.lane.b32.xlu0 %v4956, 32
      %v4978 = vpop.permute.xlu0 %4977
      %4979 = vrot.lane.b32.xlu0 %v4957, 32
      %v4980 = vpop.permute.xlu0 %4979
      %4981 = vrot.lane.b32.xlu0 %v4958, 32
      %v4982 = vpop.permute.xlu0 %4981
      %v4991 = vadd.f32 %v4911, %v4968
      %v4992 = vadd.f32 %v4912, %v4970
      %v4993 = vadd.f32 %v4913, %v4972
      %v4994 = vadd.f32 %v4914, %v4974
      %v4995 = vadd.f32 %v4915, %v4976
      %v4996 = vadd.f32 %v4916, %v4978
      %v4997 = vadd.f32 %v4917, %v4980
      %v4998 = vadd.f32 %v4918, %v4982
      %5007 = vrot.lane.b32.xlu0 %v4991, 32
      %v5008 = vpop.permute.xlu0 %5007
      %5009 = vrot.lane.b32.xlu0 %v4992, 32
      %v5010 = vpop.permute.xlu0 %5009
      %5011 = vrot.lane.b32.xlu0 %v4993, 32
      %v5012 = vpop.permute.xlu0 %5011
      %5013 = vrot.lane.b32.xlu0 %v4994, 32
      %v5014 = vpop.permute.xlu0 %5013
      %5015 = vrot.lane.b32.xlu0 %v4995, 32
      %v5016 = vpop.permute.xlu0 %5015
      %5017 = vrot.lane.b32.xlu0 %v4996, 32
      %v5018 = vpop.permute.xlu0 %5017
      %5019 = vrot.lane.b32.xlu0 %v4997, 32
      %v5020 = vpop.permute.xlu0 %5019
      %5021 = vrot.lane.b32.xlu0 %v4998, 32
      %v5022 = vpop.permute.xlu0 %5021
      %v5031 = vsub.f32 %v462, %v5008
      %v5032 = vsub.f32 %v463, %v5010
      %v5033 = vsub.f32 %v464, %v5012
      %v5034 = vsub.f32 %v465, %v5014
      %v5035 = vsub.f32 %v466, %v5016
      %v5036 = vsub.f32 %v467, %v5018
      %v5037 = vsub.f32 %v468, %v5020
      %v5038 = vsub.f32 %v469, %v5022
      %v5039 = vand.u32 2147483647, %v5031
      %v5040 = vand.u32 2147483647, %v5032
      %v5041 = vand.u32 2147483647, %v5033
      %v5042 = vand.u32 2147483647, %v5034
      %v5043 = vand.u32 2147483647, %v5035
      %v5044 = vand.u32 2147483647, %v5036
      %v5045 = vand.u32 2147483647, %v5037
      %v5046 = vand.u32 2147483647, %v5038
      %5055 = vrot.lane.b32.xlu0 %v5039, 96
      %v5056 = vpop.permute.xlu0 %5055
      %5057 = vrot.lane.b32.xlu0 %v5040, 96
      %v5058 = vpop.permute.xlu0 %5057
      %5059 = vrot.lane.b32.xlu0 %v5041, 96
      %v5060 = vpop.permute.xlu0 %5059
      %5061 = vrot.lane.b32.xlu0 %v5042, 96
      %v5062 = vpop.permute.xlu0 %5061
      %5063 = vrot.lane.b32.xlu0 %v5043, 96
      %v5064 = vpop.permute.xlu0 %5063
      %5065 = vrot.lane.b32.xlu0 %v5044, 96
      %v5066 = vpop.permute.xlu0 %5065
      %5067 = vrot.lane.b32.xlu0 %v5045, 96
      %v5068 = vpop.permute.xlu0 %5067
      %5069 = vrot.lane.b32.xlu0 %v5046, 96
      %v5070 = vpop.permute.xlu0 %5069
      %v5079 = vadd.f32 %v4539, %v5056
      %v5080 = vadd.f32 %v4540, %v5058
      %v5081 = vadd.f32 %v4541, %v5060
      %v5082 = vadd.f32 %v4542, %v5062
      %v5083 = vadd.f32 %v4543, %v5064
      %v5084 = vadd.f32 %v4544, %v5066
      %v5085 = vadd.f32 %v4545, %v5068
      %v5086 = vadd.f32 %v4546, %v5070
      %v5087 = vpack.c.bf16 %v5040, %v5039
      %v5088 = vpack.c.bf16 %v5042, %v5041
      %v5089 = vpack.c.bf16 %v5044, %v5043
      %v5090 = vpack.c.bf16 %v5046, %v5045
      %5095 = vrot.lane.b32.xlu0 %v5087, 96
      %v5096 = vpop.permute.xlu0 %5095
      %5097 = vrot.lane.b32.xlu0 %v5088, 96
      %v5098 = vpop.permute.xlu0 %5097
      %5099 = vrot.lane.b32.xlu0 %v5089, 96
      %v5100 = vpop.permute.xlu0 %5099
      %5101 = vrot.lane.b32.xlu0 %v5090, 96
      %v5102 = vpop.permute.xlu0 %5101
      %v5107 = vunpack.c.l.b16 %v540
      %v5108 = vunpack.c.l.b16 %v541
      %v5109 = vunpack.c.l.b16 %v542
      %v5110 = vunpack.c.l.b16 %v543
      %v5111 = vpack.c.b16 %v5108, %v5107
      %v5112 = vpack.c.b16 %v5110, %v5109
      %v5116 = vsel %vm654, %v5096, 0
      %v5119 = vsel %vm654, %v5098, 0
      %v5122 = vsel %vm654, %v5100, 0
      %v5125 = vsel %vm654, %v5102, 0
      %5127 = vmatprep.subr.bf16.mxu0 0
      %5128 = vmatpush1.bf16.msra.mxu0 0
      %5129 = vmatprep.subr.bf16.mxu0 0
      %5130 = vmatpush1.bf16.msra.mxu0 0
      %5131 = vmatprep.subr.bf16.mxu0 0
      %5132 = vmatpush1.bf16.msra.mxu0 0
      %5133 = vmatprep.subr.bf16.mxu0 0
      %5134 = vmatpush1.bf16.msra.mxu0 0
      %5135 = vmatprep.subr.bf16.mxu0 0
      %5136 = vmatpush1.bf16.msra.mxu0 0
      %5137 = vmatprep.subr.bf16.mxu0 0
      %5138 = vmatpush1.bf16.msra.mxu0 0
      %5139 = vmatprep.subr.bf16.mxu0 0
      %5140 = vmatpush1.bf16.msra.mxu0 %v5112
      %5141 = vmatprep.subr.bf16.mxu0 0
      %5142 = vmatpush1.bf16.msra.mxu0 %v5111
      %5143 = vmatprep.subr.bf16.mxu0 0
      %5144 = vmatpush2.bf16.msra.mxu0 0
      %5145 = vmatprep.subr.bf16.mxu0 0
      %5146 = vmatpush2.bf16.msra.mxu0 0
      %5147 = vmatprep.subr.bf16.mxu0 0
      %5148 = vmatpush2.bf16.msra.mxu0 0
      %5149 = vmatprep.subr.bf16.mxu0 0
      %5150 = vmatpush2.bf16.msra.mxu0 0
      %5151 = vmatprep.subr.bf16.mxu0 0
      %5152 = vmatpush2.bf16.msra.mxu0 0
      %5153 = vmatprep.subr.bf16.mxu0 0
      %5154 = vmatpush2.bf16.msra.mxu0 0
      %5155 = vmatprep.subr.bf16.mxu0 0
      %5156 = vmatpush2.bf16.msra.mxu0 0
      %5157 = vmatprep.subr.bf16.mxu0 0
      %5158 = vmatpush2.bf16.msra.mxu0 0
      %5159 = vmatprep.mubr.bf16.mxu0 0
      %5160 = vmatmul.mubr.bf16.gmra.mxu0 %v5116
      %v5161 = vpop.f32.mrf.mxu0
      %v5162 = vadd.f32 0.0, %v5161
      %v5163 = vpop.f32.mrf.mxu0
      %v5164 = vpop.f32.mrf.mxu0
      %v5165 = vadd.f32 0.0, %v5164
      %v5166 = vpop.f32.mrf.mxu0
      %5167 = vmatprep.mubr.bf16.mxu0 0
      %5168 = vmatmul.mubr.bf16.gmra.mxu0 %v5119
      %v5169 = vpop.f32.mrf.mxu0
      %v5170 = vadd.f32 0.0, %v5169
      %v5171 = vpop.f32.mrf.mxu0
      %v5172 = vpop.f32.mrf.mxu0
      %v5173 = vadd.f32 0.0, %v5172
      %v5174 = vpop.f32.mrf.mxu0
      %5175 = vmatprep.mubr.bf16.mxu0 0
      %5176 = vmatmul.mubr.bf16.gmra.mxu0 %v5122
      %v5177 = vpop.f32.mrf.mxu0
      %v5178 = vadd.f32 0.0, %v5177
      %v5179 = vpop.f32.mrf.mxu0
      %v5180 = vpop.f32.mrf.mxu0
      %v5181 = vadd.f32 0.0, %v5180
      %v5182 = vpop.f32.mrf.mxu0
      %5183 = vmatprep.mubr.bf16.mxu0 0
      %5184 = vmatmul.mubr.bf16.gmra.mxu0 %v5125
      %v5185 = vpop.f32.mrf.mxu0
      %v5186 = vadd.f32 0.0, %v5185
      %v5187 = vpop.f32.mrf.mxu0
      %v5188 = vpop.f32.mrf.mxu0
      %v5189 = vadd.f32 0.0, %v5188
      %v5190 = vpop.f32.mrf.mxu0
      %5191 = vdwg.mxu0
      %v5196 = vunpack.c.l.b16 %v536
      %v5197 = vunpack.c.l.b16 %v537
      %v5198 = vunpack.c.l.b16 %v538
      %v5199 = vunpack.c.l.b16 %v539
      %v5200 = vpack.c.b16 %v5197, %v5196
      %v5201 = vpack.c.b16 %v5199, %v5198
      %v5205 = vsel %vm654, %v4547, 0
      %v5208 = vsel %vm654, %v4548, 0
      %v5211 = vsel %vm654, %v4549, 0
      %v5214 = vsel %vm654, %v4550, 0
      %5216 = vmatprep.subr.bf16.mxu0 0
      %5217 = vmatpush1.bf16.msra.mxu0 0
      %5218 = vmatprep.subr.bf16.mxu0 0
      %5219 = vmatpush1.bf16.msra.mxu0 0
      %5220 = vmatprep.subr.bf16.mxu0 0
      %5221 = vmatpush1.bf16.msra.mxu0 0
      %5222 = vmatprep.subr.bf16.mxu0 0
      %5223 = vmatpush1.bf16.msra.mxu0 0
      %5224 = vmatprep.subr.bf16.mxu0 0
      %5225 = vmatpush1.bf16.msra.mxu0 0
      %5226 = vmatprep.subr.bf16.mxu0 0
      %5227 = vmatpush1.bf16.msra.mxu0 0
      %5228 = vmatprep.subr.bf16.mxu0 0
      %5229 = vmatpush1.bf16.msra.mxu0 %v5201
      %5230 = vmatprep.subr.bf16.mxu0 0
      %5231 = vmatpush1.bf16.msra.mxu0 %v5200
      %5232 = vmatprep.subr.bf16.mxu0 0
      %5233 = vmatpush2.bf16.msra.mxu0 0
      %5234 = vmatprep.subr.bf16.mxu0 0
      %5235 = vmatpush2.bf16.msra.mxu0 0
      %5236 = vmatprep.subr.bf16.mxu0 0
      %5237 = vmatpush2.bf16.msra.mxu0 0
      %5238 = vmatprep.subr.bf16.mxu0 0
      %5239 = vmatpush2.bf16.msra.mxu0 0
      %5240 = vmatprep.subr.bf16.mxu0 0
      %5241 = vmatpush2.bf16.msra.mxu0 0
      %5242 = vmatprep.subr.bf16.mxu0 0
      %5243 = vmatpush2.bf16.msra.mxu0 0
      %5244 = vmatprep.subr.bf16.mxu0 0
      %5245 = vmatpush2.bf16.msra.mxu0 0
      %5246 = vmatprep.subr.bf16.mxu0 0
      %5247 = vmatpush2.bf16.msra.mxu0 0
      %5248 = vmatprep.mubr.bf16.mxu0 0
      %5249 = vmatmul.mubr.bf16.gmra.mxu0 %v5205
      %v5250 = vpop.f32.mrf.mxu0
      %v5251 = vadd.f32 %v5162, %v5250
      %v5252 = vpop.f32.mrf.mxu0
      %v5253 = vpop.f32.mrf.mxu0
      %v5254 = vadd.f32 %v5165, %v5253
      %v5255 = vpop.f32.mrf.mxu0
      %5256 = vmatprep.mubr.bf16.mxu0 0
      %5257 = vmatmul.mubr.bf16.gmra.mxu0 %v5208
      %v5258 = vpop.f32.mrf.mxu0
      %v5259 = vadd.f32 %v5170, %v5258
      %v5260 = vpop.f32.mrf.mxu0
      %v5261 = vpop.f32.mrf.mxu0
      %v5262 = vadd.f32 %v5173, %v5261
      %v5263 = vpop.f32.mrf.mxu0
      %5264 = vmatprep.mubr.bf16.mxu0 0
      %5265 = vmatmul.mubr.bf16.gmra.mxu0 %v5211
      %v5266 = vpop.f32.mrf.mxu0
      %v5267 = vadd.f32 %v5178, %v5266
      %v5268 = vpop.f32.mrf.mxu0
      %v5269 = vpop.f32.mrf.mxu0
      %v5270 = vadd.f32 %v5181, %v5269
      %v5271 = vpop.f32.mrf.mxu0
      %5272 = vmatprep.mubr.bf16.mxu0 0
      %5273 = vmatmul.mubr.bf16.gmra.mxu0 %v5214
      %v5274 = vpop.f32.mrf.mxu0
      %v5275 = vadd.f32 %v5186, %v5274
      %v5276 = vpop.f32.mrf.mxu0
      %v5277 = vpop.f32.mrf.mxu0
      %v5278 = vadd.f32 %v5189, %v5277
      %v5279 = vpop.f32.mrf.mxu0
      %5280 = vdwg.mxu0
      %v5281 = vsel %vm4042, %v3852, -inf
      %5282 = vmax.xlane.f32.xlu0 %v5281
      %v5283 = vpop.xlane.xlu0 %5282
      %v5284 = vsel %vm4042, %v3855, -inf
      %5285 = vmax.xlane.f32.xlu0 %v5284
      %v5286 = vpop.xlane.xlu0 %5285
      %v5287 = vsel %vm4042, %v3860, -inf
      %5288 = vmax.xlane.f32.xlu0 %v5287
      %v5289 = vpop.xlane.xlu0 %5288
      %v5290 = vsel %vm4042, %v3863, -inf
      %5291 = vmax.xlane.f32.xlu0 %v5290
      %v5292 = vpop.xlane.xlu0 %5291
      %v5293 = vsel %vm4042, %v3868, -inf
      %5294 = vmax.xlane.f32.xlu0 %v5293
      %v5295 = vpop.xlane.xlu0 %5294
      %v5296 = vsel %vm4042, %v3871, -inf
      %5297 = vmax.xlane.f32.xlu0 %v5296
      %v5298 = vpop.xlane.xlu0 %5297
      %v5299 = vsel %vm4042, %v3876, -inf
      %5300 = vmax.xlane.f32.xlu0 %v5299
      %v5301 = vpop.xlane.xlu0 %5300
      %v5302 = vsel %vm4042, %v3879, -inf
      %5303 = vmax.xlane.f32.xlu0 %v5302
      %v5304 = vpop.xlane.xlu0 %5303
      %v5305 = vsub.f32 %v3852, %v5283
      %v5306 = vsub.f32 %v3855, %v5286
      %v5307 = vsub.f32 %v3860, %v5289
      %v5308 = vsub.f32 %v3863, %v5292
      %v5309 = vsub.f32 %v3868, %v5295
      %v5310 = vsub.f32 %v3871, %v5298
      %v5311 = vsub.f32 %v3876, %v5301
      %v5312 = vsub.f32 %v3879, %v5304
      %v5313 = vmul.f32 %v5305, 1.442695
      %v5314 = vpow.pop %v5313
      %v5315 = vmul.f32 %v5306, 1.442695
      %v5316 = vpow.pop %v5315
      %v5317 = vmul.f32 %v5307, 1.442695
      %v5318 = vpow.pop %v5317
      %v5319 = vmul.f32 %v5308, 1.442695
      %v5320 = vpow.pop %v5319
      %v5321 = vmul.f32 %v5309, 1.442695
      %v5322 = vpow.pop %v5321
      %v5323 = vmul.f32 %v5310, 1.442695
      %v5324 = vpow.pop %v5323
      %v5325 = vmul.f32 %v5311, 1.442695
      %v5326 = vpow.pop %v5325
      %v5327 = vmul.f32 %v5312, 1.442695
      %v5328 = vpow.pop %v5327
      %v5329 = vsel %vm4042, %v5314, 0.0
      %5330 = vadd.xlane.f32.xlu0 %v5329
      %v5331 = vpop.xlane.xlu0 %5330
      %v5332 = vsel %vm4042, %v5316, 0.0
      %5333 = vadd.xlane.f32.xlu0 %v5332
      %v5334 = vpop.xlane.xlu0 %5333
      %v5335 = vsel %vm4042, %v5318, 0.0
      %5336 = vadd.xlane.f32.xlu0 %v5335
      %v5337 = vpop.xlane.xlu0 %5336
      %v5338 = vsel %vm4042, %v5320, 0.0
      %5339 = vadd.xlane.f32.xlu0 %v5338
      %v5340 = vpop.xlane.xlu0 %5339
      %v5341 = vsel %vm4042, %v5322, 0.0
      %5342 = vadd.xlane.f32.xlu0 %v5341
      %v5343 = vpop.xlane.xlu0 %5342
      %v5344 = vsel %vm4042, %v5324, 0.0
      %5345 = vadd.xlane.f32.xlu0 %v5344
      %v5346 = vpop.xlane.xlu0 %5345
      %v5347 = vsel %vm4042, %v5326, 0.0
      %5348 = vadd.xlane.f32.xlu0 %v5347
      %v5349 = vpop.xlane.xlu0 %5348
      %v5350 = vsel %vm4042, %v5328, 0.0
      %5351 = vadd.xlane.f32.xlu0 %v5350
      %v5352 = vpop.xlane.xlu0 %5351
      %v5353 = vrcp.pop %v5331
      %v5354 = vrcp.pop %v5334
      %v5355 = vrcp.pop %v5337
      %v5356 = vrcp.pop %v5340
      %v5357 = vrcp.pop %v5343
      %v5358 = vrcp.pop %v5346
      %v5359 = vrcp.pop %v5349
      %v5360 = vrcp.pop %v5352
      %v5361 = vmul.f32 %v5314, %v5353
      %v5362 = vmul.f32 %v5316, %v5354
      %v5363 = vmul.f32 %v5318, %v5355
      %v5364 = vmul.f32 %v5320, %v5356
      %v5365 = vmul.f32 %v5322, %v5357
      %v5366 = vmul.f32 %v5324, %v5358
      %v5367 = vmul.f32 %v5326, %v5359
      %v5368 = vmul.f32 %v5328, %v5360
      %v5369 = vmul.f32 %v5361, %v4140
      %v5370 = vmul.f32 %v5362, %v4142
      %v5371 = vmul.f32 %v5363, %v4144
      %v5372 = vmul.f32 %v5364, %v4146
      %v5373 = vmul.f32 %v5365, %v4148
      %v5374 = vmul.f32 %v5366, %v4150
      %v5375 = vmul.f32 %v5367, %v4152
      %v5376 = vmul.f32 %v5368, %v4154
      %v5377 = vsel %vm4042, %v5369, -inf
      %5378 = vmax.xlane.f32.xlu0 %v5377
      %v5379 = vpop.xlane.xlu0 %5378
      %v5380 = vsel %vm4042, %v5370, -inf
      %5381 = vmax.xlane.f32.xlu0 %v5380
      %v5382 = vpop.xlane.xlu0 %5381
      %v5383 = vsel %vm4042, %v5371, -inf
      %5384 = vmax.xlane.f32.xlu0 %v5383
      %v5385 = vpop.xlane.xlu0 %5384
      %v5386 = vsel %vm4042, %v5372, -inf
      %5387 = vmax.xlane.f32.xlu0 %v5386
      %v5388 = vpop.xlane.xlu0 %5387
      %v5389 = vsel %vm4042, %v5373, -inf
      %5390 = vmax.xlane.f32.xlu0 %v5389
      %v5391 = vpop.xlane.xlu0 %5390
      %v5392 = vsel %vm4042, %v5374, -inf
      %5393 = vmax.xlane.f32.xlu0 %v5392
      %v5394 = vpop.xlane.xlu0 %5393
      %v5395 = vsel %vm4042, %v5375, -inf
      %5396 = vmax.xlane.f32.xlu0 %v5395
      %v5397 = vpop.xlane.xlu0 %5396
      %v5398 = vsel %vm4042, %v5376, -inf
      %5399 = vmax.xlane.f32.xlu0 %v5398
      %v5400 = vpop.xlane.xlu0 %5399
      %vm5401 = vcmp.eq.f32.partialorder %v5369, %v5379
      %vm5402 = vcmp.eq.f32.partialorder %v5370, %v5382
      %vm5403 = vcmp.eq.f32.partialorder %v5371, %v5385
      %vm5404 = vcmp.eq.f32.partialorder %v5372, %v5388
      %vm5405 = vcmp.eq.f32.partialorder %v5373, %v5391
      %vm5406 = vcmp.eq.f32.partialorder %v5374, %v5394
      %vm5407 = vcmp.eq.f32.partialorder %v5375, %v5397
      %vm5408 = vcmp.eq.f32.partialorder %v5376, %v5400
      %v5409 = vsel %vm5401, %v5369, 0.0
      %v5410 = vsel %vm5402, %v5370, 0.0
      %v5411 = vsel %vm5403, %v5371, 0.0
      %v5412 = vsel %vm5404, %v5372, 0.0
      %v5413 = vsel %vm5405, %v5373, 0.0
      %v5414 = vsel %vm5406, %v5374, 0.0
      %v5415 = vsel %vm5407, %v5375, 0.0
      %v5416 = vsel %vm5408, %v5376, 0.0
      %v5417 = vadd.f32 %v5409, 1e-07
      %v5418 = vadd.f32 %v5410, 1e-07
      %v5419 = vadd.f32 %v5411, 1e-07
      %v5420 = vadd.f32 %v5412, 1e-07
      %v5421 = vadd.f32 %v5413, 1e-07
      %v5422 = vadd.f32 %v5414, 1e-07
      %v5423 = vadd.f32 %v5415, 1e-07
      %v5424 = vadd.f32 %v5416, 1e-07
      %v5425 = vrcp.pop %v5417
      %v5426 = vmul.f32 %v5409, %v5425
      %v5427 = vrcp.pop %v5418
      %v5428 = vmul.f32 %v5410, %v5427
      %v5429 = vrcp.pop %v5419
      %v5430 = vmul.f32 %v5411, %v5429
      %v5431 = vrcp.pop %v5420
      %v5432 = vmul.f32 %v5412, %v5431
      %v5433 = vrcp.pop %v5421
      %v5434 = vmul.f32 %v5413, %v5433
      %v5435 = vrcp.pop %v5422
      %v5436 = vmul.f32 %v5414, %v5435
      %v5437 = vrcp.pop %v5423
      %v5438 = vmul.f32 %v5415, %v5437
      %v5439 = vrcp.pop %v5424
      %v5440 = vmul.f32 %v5416, %v5439
      %5442 = vset.pattern.permute.xlu0 0
      %5443 = vperm.xlu0 %5442, %v5426
      %v5444 = vpop.permute.xlu0 %5443
      %5447 = vset.pattern.permute.xlu0 0
      %5448 = vperm.xlu0 %5447, %v5428
      %v5449 = vpop.permute.xlu0 %5448
      %5452 = vset.pattern.permute.xlu0 0
      %5453 = vperm.xlu0 %5452, %v5430
      %v5454 = vpop.permute.xlu0 %5453
      %5457 = vset.pattern.permute.xlu0 0
      %5458 = vperm.xlu0 %5457, %v5432
      %v5459 = vpop.permute.xlu0 %5458
      %5462 = vset.pattern.permute.xlu0 0
      %5463 = vperm.xlu0 %5462, %v5434
      %v5464 = vpop.permute.xlu0 %5463
      %5467 = vset.pattern.permute.xlu0 0
      %5468 = vperm.xlu0 %5467, %v5436
      %v5469 = vpop.permute.xlu0 %5468
      %5472 = vset.pattern.permute.xlu0 0
      %5473 = vperm.xlu0 %5472, %v5438
      %v5474 = vpop.permute.xlu0 %5473
      %5477 = vset.pattern.permute.xlu0 0
      %5478 = vperm.xlu0 %5477, %v5440
      %v5479 = vpop.permute.xlu0 %5478
      %v5481 = vmul.f32 %v5444, %v470
      %v5482 = vmul.f32 %v5449, %v471
      %v5483 = vmul.f32 %v5454, %v472
      %v5484 = vmul.f32 %v5459, %v473
      %v5485 = vmul.f32 %v5464, %v474
      %v5486 = vmul.f32 %v5469, %v475
      %v5487 = vmul.f32 %v5474, %v476
      %v5488 = vmul.f32 %v5479, %v477
      %5489 = vset.pattern.permute.xlu0 1
      %5490 = vperm.xlu0 %5489, %v5426
      %v5491 = vpop.permute.xlu0 %5490
      %5493 = vset.pattern.permute.xlu0 1
      %5494 = vperm.xlu0 %5493, %v5428
      %v5495 = vpop.permute.xlu0 %5494
      %5497 = vset.pattern.permute.xlu0 1
      %5498 = vperm.xlu0 %5497, %v5430
      %v5499 = vpop.permute.xlu0 %5498
      %5501 = vset.pattern.permute.xlu0 1
      %5502 = vperm.xlu0 %5501, %v5432
      %v5503 = vpop.permute.xlu0 %5502
      %5505 = vset.pattern.permute.xlu0 1
      %5506 = vperm.xlu0 %5505, %v5434
      %v5507 = vpop.permute.xlu0 %5506
      %5509 = vset.pattern.permute.xlu0 1
      %5510 = vperm.xlu0 %5509, %v5436
      %v5511 = vpop.permute.xlu0 %5510
      %5513 = vset.pattern.permute.xlu0 1
      %5514 = vperm.xlu0 %5513, %v5438
      %v5515 = vpop.permute.xlu0 %5514
      %5517 = vset.pattern.permute.xlu0 1
      %5518 = vperm.xlu0 %5517, %v5440
      %v5519 = vpop.permute.xlu0 %5518
      %v5521 = vmul.f32 %v5491, %v470
      %v5522 = vmul.f32 %v5495, %v471
      %v5523 = vmul.f32 %v5499, %v472
      %v5524 = vmul.f32 %v5503, %v473
      %v5525 = vmul.f32 %v5507, %v474
      %v5526 = vmul.f32 %v5511, %v475
      %v5527 = vmul.f32 %v5515, %v476
      %v5528 = vmul.f32 %v5519, %v477
      %5537 = vrot.lane.b32.xlu0 %v5521, 96
      %v5538 = vpop.permute.xlu0 %5537
      %5539 = vrot.lane.b32.xlu0 %v5522, 96
      %v5540 = vpop.permute.xlu0 %5539
      %5541 = vrot.lane.b32.xlu0 %v5523, 96
      %v5542 = vpop.permute.xlu0 %5541
      %5543 = vrot.lane.b32.xlu0 %v5524, 96
      %v5544 = vpop.permute.xlu0 %5543
      %5545 = vrot.lane.b32.xlu0 %v5525, 96
      %v5546 = vpop.permute.xlu0 %5545
      %5547 = vrot.lane.b32.xlu0 %v5526, 96
      %v5548 = vpop.permute.xlu0 %5547
      %5549 = vrot.lane.b32.xlu0 %v5527, 96
      %v5550 = vpop.permute.xlu0 %5549
      %5551 = vrot.lane.b32.xlu0 %v5528, 96
      %v5552 = vpop.permute.xlu0 %5551
      %v5561 = vadd.f32 %v5481, %v5538
      %v5562 = vadd.f32 %v5482, %v5540
      %v5563 = vadd.f32 %v5483, %v5542
      %v5564 = vadd.f32 %v5484, %v5544
      %v5565 = vadd.f32 %v5485, %v5546
      %v5566 = vadd.f32 %v5486, %v5548
      %v5567 = vadd.f32 %v5487, %v5550
      %v5568 = vadd.f32 %v5488, %v5552
      %5569 = vset.pattern.permute.xlu0 2
      %5570 = vperm.xlu0 %5569, %v5426
      %v5571 = vpop.permute.xlu0 %5570
      %5573 = vset.pattern.permute.xlu0 2
      %5574 = vperm.xlu0 %5573, %v5428
      %v5575 = vpop.permute.xlu0 %5574
      %5577 = vset.pattern.permute.xlu0 2
      %5578 = vperm.xlu0 %5577, %v5430
      %v5579 = vpop.permute.xlu0 %5578
      %5581 = vset.pattern.permute.xlu0 2
      %5582 = vperm.xlu0 %5581, %v5432
      %v5583 = vpop.permute.xlu0 %5582
      %5585 = vset.pattern.permute.xlu0 2
      %5586 = vperm.xlu0 %5585, %v5434
      %v5587 = vpop.permute.xlu0 %5586
      %5589 = vset.pattern.permute.xlu0 2
      %5590 = vperm.xlu0 %5589, %v5436
      %v5591 = vpop.permute.xlu0 %5590
      %5593 = vset.pattern.permute.xlu0 2
      %5594 = vperm.xlu0 %5593, %v5438
      %v5595 = vpop.permute.xlu0 %5594
      %5597 = vset.pattern.permute.xlu0 2
      %5598 = vperm.xlu0 %5597, %v5440
      %v5599 = vpop.permute.xlu0 %5598
      %v5601 = vmul.f32 %v5571, %v470
      %v5602 = vmul.f32 %v5575, %v471
      %v5603 = vmul.f32 %v5579, %v472
      %v5604 = vmul.f32 %v5583, %v473
      %v5605 = vmul.f32 %v5587, %v474
      %v5606 = vmul.f32 %v5591, %v475
      %v5607 = vmul.f32 %v5595, %v476
      %v5608 = vmul.f32 %v5599, %v477
      %5617 = vrot.lane.b32.xlu0 %v5601, 64
      %v5618 = vpop.permute.xlu0 %5617
      %5619 = vrot.lane.b32.xlu0 %v5602, 64
      %v5620 = vpop.permute.xlu0 %5619
      %5621 = vrot.lane.b32.xlu0 %v5603, 64
      %v5622 = vpop.permute.xlu0 %5621
      %5623 = vrot.lane.b32.xlu0 %v5604, 64
      %v5624 = vpop.permute.xlu0 %5623
      %5625 = vrot.lane.b32.xlu0 %v5605, 64
      %v5626 = vpop.permute.xlu0 %5625
      %5627 = vrot.lane.b32.xlu0 %v5606, 64
      %v5628 = vpop.permute.xlu0 %5627
      %5629 = vrot.lane.b32.xlu0 %v5607, 64
      %v5630 = vpop.permute.xlu0 %5629
      %5631 = vrot.lane.b32.xlu0 %v5608, 64
      %v5632 = vpop.permute.xlu0 %5631
      %v5641 = vadd.f32 %v5561, %v5618
      %v5642 = vadd.f32 %v5562, %v5620
      %v5643 = vadd.f32 %v5563, %v5622
      %v5644 = vadd.f32 %v5564, %v5624
      %v5645 = vadd.f32 %v5565, %v5626
      %v5646 = vadd.f32 %v5566, %v5628
      %v5647 = vadd.f32 %v5567, %v5630
      %v5648 = vadd.f32 %v5568, %v5632
      %5649 = vset.pattern.permute.xlu0 3
      %5650 = vperm.xlu0 %5649, %v5426
      %v5651 = vpop.permute.xlu0 %5650
      %5653 = vset.pattern.permute.xlu0 3
      %5654 = vperm.xlu0 %5653, %v5428
      %v5655 = vpop.permute.xlu0 %5654
      %5657 = vset.pattern.permute.xlu0 3
      %5658 = vperm.xlu0 %5657, %v5430
      %v5659 = vpop.permute.xlu0 %5658
      %5661 = vset.pattern.permute.xlu0 3
      %5662 = vperm.xlu0 %5661, %v5432
      %v5663 = vpop.permute.xlu0 %5662
      %5665 = vset.pattern.permute.xlu0 3
      %5666 = vperm.xlu0 %5665, %v5434
      %v5667 = vpop.permute.xlu0 %5666
      %5669 = vset.pattern.permute.xlu0 3
      %5670 = vperm.xlu0 %5669, %v5436
      %v5671 = vpop.permute.xlu0 %5670
      %5673 = vset.pattern.permute.xlu0 3
      %5674 = vperm.xlu0 %5673, %v5438
      %v5675 = vpop.permute.xlu0 %5674
      %5677 = vset.pattern.permute.xlu0 3
      %5678 = vperm.xlu0 %5677, %v5440
      %v5679 = vpop.permute.xlu0 %5678
      %v5681 = vmul.f32 %v5651, %v470
      %v5682 = vmul.f32 %v5655, %v471
      %v5683 = vmul.f32 %v5659, %v472
      %v5684 = vmul.f32 %v5663, %v473
      %v5685 = vmul.f32 %v5667, %v474
      %v5686 = vmul.f32 %v5671, %v475
      %v5687 = vmul.f32 %v5675, %v476
      %v5688 = vmul.f32 %v5679, %v477
      %5697 = vrot.lane.b32.xlu0 %v5681, 32
      %v5698 = vpop.permute.xlu0 %5697
      %5699 = vrot.lane.b32.xlu0 %v5682, 32
      %v5700 = vpop.permute.xlu0 %5699
      %5701 = vrot.lane.b32.xlu0 %v5683, 32
      %v5702 = vpop.permute.xlu0 %5701
      %5703 = vrot.lane.b32.xlu0 %v5684, 32
      %v5704 = vpop.permute.xlu0 %5703
      %5705 = vrot.lane.b32.xlu0 %v5685, 32
      %v5706 = vpop.permute.xlu0 %5705
      %5707 = vrot.lane.b32.xlu0 %v5686, 32
      %v5708 = vpop.permute.xlu0 %5707
      %5709 = vrot.lane.b32.xlu0 %v5687, 32
      %v5710 = vpop.permute.xlu0 %5709
      %5711 = vrot.lane.b32.xlu0 %v5688, 32
      %v5712 = vpop.permute.xlu0 %5711
      %v5721 = vadd.f32 %v5641, %v5698
      %v5722 = vadd.f32 %v5642, %v5700
      %v5723 = vadd.f32 %v5643, %v5702
      %v5724 = vadd.f32 %v5644, %v5704
      %v5725 = vadd.f32 %v5645, %v5706
      %v5726 = vadd.f32 %v5646, %v5708
      %v5727 = vadd.f32 %v5647, %v5710
      %v5728 = vadd.f32 %v5648, %v5712
      %5737 = vrot.lane.b32.xlu0 %v5721, 64
      %v5738 = vpop.permute.xlu0 %5737
      %5739 = vrot.lane.b32.xlu0 %v5722, 64
      %v5740 = vpop.permute.xlu0 %5739
      %5741 = vrot.lane.b32.xlu0 %v5723, 64
      %v5742 = vpop.permute.xlu0 %5741
      %5743 = vrot.lane.b32.xlu0 %v5724, 64
      %v5744 = vpop.permute.xlu0 %5743
      %5745 = vrot.lane.b32.xlu0 %v5725, 64
      %v5746 = vpop.permute.xlu0 %5745
      %5747 = vrot.lane.b32.xlu0 %v5726, 64
      %v5748 = vpop.permute.xlu0 %5747
      %5749 = vrot.lane.b32.xlu0 %v5727, 64
      %v5750 = vpop.permute.xlu0 %5749
      %5751 = vrot.lane.b32.xlu0 %v5728, 64
      %v5752 = vpop.permute.xlu0 %5751
      %v5761 = vsub.f32 %v462, %v5738
      %v5762 = vsub.f32 %v463, %v5740
      %v5763 = vsub.f32 %v464, %v5742
      %v5764 = vsub.f32 %v465, %v5744
      %v5765 = vsub.f32 %v466, %v5746
      %v5766 = vsub.f32 %v467, %v5748
      %v5767 = vsub.f32 %v468, %v5750
      %v5768 = vsub.f32 %v469, %v5752
      %v5769 = vand.u32 2147483647, %v5761
      %v5770 = vand.u32 2147483647, %v5762
      %v5771 = vand.u32 2147483647, %v5763
      %v5772 = vand.u32 2147483647, %v5764
      %v5773 = vand.u32 2147483647, %v5765
      %v5774 = vand.u32 2147483647, %v5766
      %v5775 = vand.u32 2147483647, %v5767
      %v5776 = vand.u32 2147483647, %v5768
      %5785 = vrot.lane.b32.xlu0 %v5769, 64
      %v5786 = vpop.permute.xlu0 %5785
      %5787 = vrot.lane.b32.xlu0 %v5770, 64
      %v5788 = vpop.permute.xlu0 %5787
      %5789 = vrot.lane.b32.xlu0 %v5771, 64
      %v5790 = vpop.permute.xlu0 %5789
      %5791 = vrot.lane.b32.xlu0 %v5772, 64
      %v5792 = vpop.permute.xlu0 %5791
      %5793 = vrot.lane.b32.xlu0 %v5773, 64
      %v5794 = vpop.permute.xlu0 %5793
      %5795 = vrot.lane.b32.xlu0 %v5774, 64
      %v5796 = vpop.permute.xlu0 %5795
      %5797 = vrot.lane.b32.xlu0 %v5775, 64
      %v5798 = vpop.permute.xlu0 %5797
      %5799 = vrot.lane.b32.xlu0 %v5776, 64
      %v5800 = vpop.permute.xlu0 %5799
      %v5809 = vadd.f32 %v5079, %v5786
      %v5810 = vadd.f32 %v5080, %v5788
      %v5811 = vadd.f32 %v5081, %v5790
      %v5812 = vadd.f32 %v5082, %v5792
      %v5813 = vadd.f32 %v5083, %v5794
      %v5814 = vadd.f32 %v5084, %v5796
      %v5815 = vadd.f32 %v5085, %v5798
      %v5816 = vadd.f32 %v5086, %v5800
      %v5817 = vpack.c.bf16 %v5770, %v5769
      %v5818 = vpack.c.bf16 %v5772, %v5771
      %v5819 = vpack.c.bf16 %v5774, %v5773
      %v5820 = vpack.c.bf16 %v5776, %v5775
      %5825 = vrot.lane.b32.xlu0 %v5817, 64
      %v5826 = vpop.permute.xlu0 %5825
      %5827 = vrot.lane.b32.xlu0 %v5818, 64
      %v5828 = vpop.permute.xlu0 %5827
      %5829 = vrot.lane.b32.xlu0 %v5819, 64
      %v5830 = vpop.permute.xlu0 %5829
      %5831 = vrot.lane.b32.xlu0 %v5820, 64
      %v5832 = vpop.permute.xlu0 %5831
      %v5837 = vunpack.c.l.b16 %v544
      %v5838 = vunpack.c.l.b16 %v545
      %v5839 = vunpack.c.l.b16 %v546
      %v5840 = vunpack.c.l.b16 %v547
      %v5841 = vpack.c.b16 %v5838, %v5837
      %v5842 = vpack.c.b16 %v5840, %v5839
      %v5846 = vsel %vm654, %v5826, 0
      %v5849 = vsel %vm654, %v5828, 0
      %v5852 = vsel %vm654, %v5830, 0
      %v5855 = vsel %vm654, %v5832, 0
      %5857 = vmatprep.subr.bf16.mxu0 0
      %5858 = vmatpush1.bf16.msra.mxu0 0
      %5859 = vmatprep.subr.bf16.mxu0 0
      %5860 = vmatpush1.bf16.msra.mxu0 0
      %5861 = vmatprep.subr.bf16.mxu0 0
      %5862 = vmatpush1.bf16.msra.mxu0 0
      %5863 = vmatprep.subr.bf16.mxu0 0
      %5864 = vmatpush1.bf16.msra.mxu0 0
      %5865 = vmatprep.subr.bf16.mxu0 0
      %5866 = vmatpush1.bf16.msra.mxu0 0
      %5867 = vmatprep.subr.bf16.mxu0 0
      %5868 = vmatpush1.bf16.msra.mxu0 0
      %5869 = vmatprep.subr.bf16.mxu0 0
      %5870 = vmatpush1.bf16.msra.mxu0 %v5842
      %5871 = vmatprep.subr.bf16.mxu0 0
      %5872 = vmatpush1.bf16.msra.mxu0 %v5841
      %5873 = vmatprep.subr.bf16.mxu0 0
      %5874 = vmatpush2.bf16.msra.mxu0 0
      %5875 = vmatprep.subr.bf16.mxu0 0
      %5876 = vmatpush2.bf16.msra.mxu0 0
      %5877 = vmatprep.subr.bf16.mxu0 0
      %5878 = vmatpush2.bf16.msra.mxu0 0
      %5879 = vmatprep.subr.bf16.mxu0 0
      %5880 = vmatpush2.bf16.msra.mxu0 0
      %5881 = vmatprep.subr.bf16.mxu0 0
      %5882 = vmatpush2.bf16.msra.mxu0 0
      %5883 = vmatprep.subr.bf16.mxu0 0
      %5884 = vmatpush2.bf16.msra.mxu0 0
      %5885 = vmatprep.subr.bf16.mxu0 0
      %5886 = vmatpush2.bf16.msra.mxu0 0
      %5887 = vmatprep.subr.bf16.mxu0 0
      %5888 = vmatpush2.bf16.msra.mxu0 0
      %5889 = vmatprep.mubr.bf16.mxu0 0
      %5890 = vmatmul.mubr.bf16.gmra.mxu0 %v5846
      %v5891 = vpop.f32.mrf.mxu0
      %v5892 = vadd.f32 0.0, %v5891
      %v5893 = vpop.f32.mrf.mxu0
      %v5894 = vpop.f32.mrf.mxu0
      %v5895 = vadd.f32 0.0, %v5894
      %v5896 = vpop.f32.mrf.mxu0
      %5897 = vmatprep.mubr.bf16.mxu0 0
      %5898 = vmatmul.mubr.bf16.gmra.mxu0 %v5849
      %v5899 = vpop.f32.mrf.mxu0
      %v5900 = vadd.f32 0.0, %v5899
      %v5901 = vpop.f32.mrf.mxu0
      %v5902 = vpop.f32.mrf.mxu0
      %v5903 = vadd.f32 0.0, %v5902
      %v5904 = vpop.f32.mrf.mxu0
      %5905 = vmatprep.mubr.bf16.mxu0 0
      %5906 = vmatmul.mubr.bf16.gmra.mxu0 %v5852
      %v5907 = vpop.f32.mrf.mxu0
      %v5908 = vadd.f32 0.0, %v5907
      %v5909 = vpop.f32.mrf.mxu0
      %v5910 = vpop.f32.mrf.mxu0
      %v5911 = vadd.f32 0.0, %v5910
      %v5912 = vpop.f32.mrf.mxu0
      %5913 = vmatprep.mubr.bf16.mxu0 0
      %5914 = vmatmul.mubr.bf16.gmra.mxu0 %v5855
      %v5915 = vpop.f32.mrf.mxu0
      %v5916 = vadd.f32 0.0, %v5915
      %v5917 = vpop.f32.mrf.mxu0
      %v5918 = vpop.f32.mrf.mxu0
      %v5919 = vadd.f32 0.0, %v5918
      %v5920 = vpop.f32.mrf.mxu0
      %5921 = vdwg.mxu0
      %v5922 = vadd.f32 %v5251, %v5892
      %v5923 = vadd.f32 %v5254, %v5895
      %v5924 = vadd.f32 %v5259, %v5900
      %v5925 = vadd.f32 %v5262, %v5903
      %v5926 = vadd.f32 %v5267, %v5908
      %v5927 = vadd.f32 %v5270, %v5911
      %v5928 = vadd.f32 %v5275, %v5916
      %v5929 = vadd.f32 %v5278, %v5919
      %v5930 = vsel %vm4042, %v3884, -inf
      %5931 = vmax.xlane.f32.xlu0 %v5930
      %v5932 = vpop.xlane.xlu0 %5931
      %v5933 = vsel %vm4042, %v3887, -inf
      %5934 = vmax.xlane.f32.xlu0 %v5933
      %v5935 = vpop.xlane.xlu0 %5934
      %v5936 = vsel %vm4042, %v3892, -inf
      %5937 = vmax.xlane.f32.xlu0 %v5936
      %v5938 = vpop.xlane.xlu0 %5937
      %v5939 = vsel %vm4042, %v3895, -inf
      %5940 = vmax.xlane.f32.xlu0 %v5939
      %v5941 = vpop.xlane.xlu0 %5940
      %v5942 = vsel %vm4042, %v3900, -inf
      %5943 = vmax.xlane.f32.xlu0 %v5942
      %v5944 = vpop.xlane.xlu0 %5943
      %v5945 = vsel %vm4042, %v3903, -inf
      %5946 = vmax.xlane.f32.xlu0 %v5945
      %v5947 = vpop.xlane.xlu0 %5946
      %v5948 = vsel %vm4042, %v3908, -inf
      %5949 = vmax.xlane.f32.xlu0 %v5948
      %v5950 = vpop.xlane.xlu0 %5949
      %v5951 = vsel %vm4042, %v3911, -inf
      %5952 = vmax.xlane.f32.xlu0 %v5951
      %v5953 = vpop.xlane.xlu0 %5952
      %v5954 = vsub.f32 %v3884, %v5932
      %v5955 = vsub.f32 %v3887, %v5935
      %v5956 = vsub.f32 %v3892, %v5938
      %v5957 = vsub.f32 %v3895, %v5941
      %v5958 = vsub.f32 %v3900, %v5944
      %v5959 = vsub.f32 %v3903, %v5947
      %v5960 = vsub.f32 %v3908, %v5950
      %v5961 = vsub.f32 %v3911, %v5953
      %v5962 = vmul.f32 %v5954, 1.442695
      %v5963 = vpow.pop %v5962
      %v5964 = vmul.f32 %v5955, 1.442695
      %v5965 = vpow.pop %v5964
      %v5966 = vmul.f32 %v5956, 1.442695
      %v5967 = vpow.pop %v5966
      %v5968 = vmul.f32 %v5957, 1.442695
      %v5969 = vpow.pop %v5968
      %v5970 = vmul.f32 %v5958, 1.442695
      %v5971 = vpow.pop %v5970
      %v5972 = vmul.f32 %v5959, 1.442695
      %v5973 = vpow.pop %v5972
      %v5974 = vmul.f32 %v5960, 1.442695
      %v5975 = vpow.pop %v5974
      %v5976 = vmul.f32 %v5961, 1.442695
      %v5977 = vpow.pop %v5976
      %v5978 = vsel %vm4042, %v5963, 0.0
      %5979 = vadd.xlane.f32.xlu0 %v5978
      %v5980 = vpop.xlane.xlu0 %5979
      %v5981 = vsel %vm4042, %v5965, 0.0
      %5982 = vadd.xlane.f32.xlu0 %v5981
      %v5983 = vpop.xlane.xlu0 %5982
      %v5984 = vsel %vm4042, %v5967, 0.0
      %5985 = vadd.xlane.f32.xlu0 %v5984
      %v5986 = vpop.xlane.xlu0 %5985
      %v5987 = vsel %vm4042, %v5969, 0.0
      %5988 = vadd.xlane.f32.xlu0 %v5987
      %v5989 = vpop.xlane.xlu0 %5988
      %v5990 = vsel %vm4042, %v5971, 0.0
      %5991 = vadd.xlane.f32.xlu0 %v5990
      %v5992 = vpop.xlane.xlu0 %5991
      %v5993 = vsel %vm4042, %v5973, 0.0
      %5994 = vadd.xlane.f32.xlu0 %v5993
      %v5995 = vpop.xlane.xlu0 %5994
      %v5996 = vsel %vm4042, %v5975, 0.0
      %5997 = vadd.xlane.f32.xlu0 %v5996
      %v5998 = vpop.xlane.xlu0 %5997
      %v5999 = vsel %vm4042, %v5977, 0.0
      %6000 = vadd.xlane.f32.xlu0 %v5999
      %v6001 = vpop.xlane.xlu0 %6000
      %v6002 = vrcp.pop %v5980
      %v6003 = vrcp.pop %v5983
      %v6004 = vrcp.pop %v5986
      %v6005 = vrcp.pop %v5989
      %v6006 = vrcp.pop %v5992
      %v6007 = vrcp.pop %v5995
      %v6008 = vrcp.pop %v5998
      %v6009 = vrcp.pop %v6001
      %v6010 = vmul.f32 %v5963, %v6002
      %v6011 = vmul.f32 %v5965, %v6003
      %v6012 = vmul.f32 %v5967, %v6004
      %v6013 = vmul.f32 %v5969, %v6005
      %v6014 = vmul.f32 %v5971, %v6006
      %v6015 = vmul.f32 %v5973, %v6007
      %v6016 = vmul.f32 %v5975, %v6008
      %v6017 = vmul.f32 %v5977, %v6009
      %v6018 = vmul.f32 %v6010, %v4140
      %v6019 = vmul.f32 %v6011, %v4142
      %v6020 = vmul.f32 %v6012, %v4144
      %v6021 = vmul.f32 %v6013, %v4146
      %v6022 = vmul.f32 %v6014, %v4148
      %v6023 = vmul.f32 %v6015, %v4150
      %v6024 = vmul.f32 %v6016, %v4152
      %v6025 = vmul.f32 %v6017, %v4154
      %v6026 = vsel %vm4042, %v6018, -inf
      %6027 = vmax.xlane.f32.xlu0 %v6026
      %v6028 = vpop.xlane.xlu0 %6027
      %v6029 = vsel %vm4042, %v6019, -inf
      %6030 = vmax.xlane.f32.xlu0 %v6029
      %v6031 = vpop.xlane.xlu0 %6030
      %v6032 = vsel %vm4042, %v6020, -inf
      %6033 = vmax.xlane.f32.xlu0 %v6032
      %v6034 = vpop.xlane.xlu0 %6033
      %v6035 = vsel %vm4042, %v6021, -inf
      %6036 = vmax.xlane.f32.xlu0 %v6035
      %v6037 = vpop.xlane.xlu0 %6036
      %v6038 = vsel %vm4042, %v6022, -inf
      %6039 = vmax.xlane.f32.xlu0 %v6038
      %v6040 = vpop.xlane.xlu0 %6039
      %v6041 = vsel %vm4042, %v6023, -inf
      %6042 = vmax.xlane.f32.xlu0 %v6041
      %v6043 = vpop.xlane.xlu0 %6042
      %v6044 = vsel %vm4042, %v6024, -inf
      %6045 = vmax.xlane.f32.xlu0 %v6044
      %v6046 = vpop.xlane.xlu0 %6045
      %v6047 = vsel %vm4042, %v6025, -inf
      %6048 = vmax.xlane.f32.xlu0 %v6047
      %v6049 = vpop.xlane.xlu0 %6048
      %vm6050 = vcmp.eq.f32.partialorder %v6018, %v6028
      %vm6051 = vcmp.eq.f32.partialorder %v6019, %v6031
      %vm6052 = vcmp.eq.f32.partialorder %v6020, %v6034
      %vm6053 = vcmp.eq.f32.partialorder %v6021, %v6037
      %vm6054 = vcmp.eq.f32.partialorder %v6022, %v6040
      %vm6055 = vcmp.eq.f32.partialorder %v6023, %v6043
      %vm6056 = vcmp.eq.f32.partialorder %v6024, %v6046
      %vm6057 = vcmp.eq.f32.partialorder %v6025, %v6049
      %v6058 = vsel %vm6050, %v6018, 0.0
      %v6059 = vsel %vm6051, %v6019, 0.0
      %v6060 = vsel %vm6052, %v6020, 0.0
      %v6061 = vsel %vm6053, %v6021, 0.0
      %v6062 = vsel %vm6054, %v6022, 0.0
      %v6063 = vsel %vm6055, %v6023, 0.0
      %v6064 = vsel %vm6056, %v6024, 0.0
      %v6065 = vsel %vm6057, %v6025, 0.0
      %v6066 = vadd.f32 %v6058, 1e-07
      %v6067 = vadd.f32 %v6059, 1e-07
      %v6068 = vadd.f32 %v6060, 1e-07
      %v6069 = vadd.f32 %v6061, 1e-07
      %v6070 = vadd.f32 %v6062, 1e-07
      %v6071 = vadd.f32 %v6063, 1e-07
      %v6072 = vadd.f32 %v6064, 1e-07
      %v6073 = vadd.f32 %v6065, 1e-07
      %v6074 = vrcp.pop %v6066
      %v6075 = vmul.f32 %v6058, %v6074
      %v6076 = vrcp.pop %v6067
      %v6077 = vmul.f32 %v6059, %v6076
      %v6078 = vrcp.pop %v6068
      %v6079 = vmul.f32 %v6060, %v6078
      %v6080 = vrcp.pop %v6069
      %v6081 = vmul.f32 %v6061, %v6080
      %v6082 = vrcp.pop %v6070
      %v6083 = vmul.f32 %v6062, %v6082
      %v6084 = vrcp.pop %v6071
      %v6085 = vmul.f32 %v6063, %v6084
      %v6086 = vrcp.pop %v6072
      %v6087 = vmul.f32 %v6064, %v6086
      %v6088 = vrcp.pop %v6073
      %v6089 = vmul.f32 %v6065, %v6088
      %6091 = vset.pattern.permute.xlu0 0
      %6092 = vperm.xlu0 %6091, %v6075
      %v6093 = vpop.permute.xlu0 %6092
      %6096 = vset.pattern.permute.xlu0 0
      %6097 = vperm.xlu0 %6096, %v6077
      %v6098 = vpop.permute.xlu0 %6097
      %6101 = vset.pattern.permute.xlu0 0
      %6102 = vperm.xlu0 %6101, %v6079
      %v6103 = vpop.permute.xlu0 %6102
      %6106 = vset.pattern.permute.xlu0 0
      %6107 = vperm.xlu0 %6106, %v6081
      %v6108 = vpop.permute.xlu0 %6107
      %6111 = vset.pattern.permute.xlu0 0
      %6112 = vperm.xlu0 %6111, %v6083
      %v6113 = vpop.permute.xlu0 %6112
      %6116 = vset.pattern.permute.xlu0 0
      %6117 = vperm.xlu0 %6116, %v6085
      %v6118 = vpop.permute.xlu0 %6117
      %6121 = vset.pattern.permute.xlu0 0
      %6122 = vperm.xlu0 %6121, %v6087
      %v6123 = vpop.permute.xlu0 %6122
      %6126 = vset.pattern.permute.xlu0 0
      %6127 = vperm.xlu0 %6126, %v6089
      %v6128 = vpop.permute.xlu0 %6127
      %v6130 = vmul.f32 %v6093, %v470
      %v6131 = vmul.f32 %v6098, %v471
      %v6132 = vmul.f32 %v6103, %v472
      %v6133 = vmul.f32 %v6108, %v473
      %v6134 = vmul.f32 %v6113, %v474
      %v6135 = vmul.f32 %v6118, %v475
      %v6136 = vmul.f32 %v6123, %v476
      %v6137 = vmul.f32 %v6128, %v477
      %6138 = vset.pattern.permute.xlu0 1
      %6139 = vperm.xlu0 %6138, %v6075
      %v6140 = vpop.permute.xlu0 %6139
      %6142 = vset.pattern.permute.xlu0 1
      %6143 = vperm.xlu0 %6142, %v6077
      %v6144 = vpop.permute.xlu0 %6143
      %6146 = vset.pattern.permute.xlu0 1
      %6147 = vperm.xlu0 %6146, %v6079
      %v6148 = vpop.permute.xlu0 %6147
      %6150 = vset.pattern.permute.xlu0 1
      %6151 = vperm.xlu0 %6150, %v6081
      %v6152 = vpop.permute.xlu0 %6151
      %6154 = vset.pattern.permute.xlu0 1
      %6155 = vperm.xlu0 %6154, %v6083
      %v6156 = vpop.permute.xlu0 %6155
      %6158 = vset.pattern.permute.xlu0 1
      %6159 = vperm.xlu0 %6158, %v6085
      %v6160 = vpop.permute.xlu0 %6159
      %6162 = vset.pattern.permute.xlu0 1
      %6163 = vperm.xlu0 %6162, %v6087
      %v6164 = vpop.permute.xlu0 %6163
      %6166 = vset.pattern.permute.xlu0 1
      %6167 = vperm.xlu0 %6166, %v6089
      %v6168 = vpop.permute.xlu0 %6167
      %v6170 = vmul.f32 %v6140, %v470
      %v6171 = vmul.f32 %v6144, %v471
      %v6172 = vmul.f32 %v6148, %v472
      %v6173 = vmul.f32 %v6152, %v473
      %v6174 = vmul.f32 %v6156, %v474
      %v6175 = vmul.f32 %v6160, %v475
      %v6176 = vmul.f32 %v6164, %v476
      %v6177 = vmul.f32 %v6168, %v477
      %6186 = vrot.lane.b32.xlu0 %v6170, 96
      %v6187 = vpop.permute.xlu0 %6186
      %6188 = vrot.lane.b32.xlu0 %v6171, 96
      %v6189 = vpop.permute.xlu0 %6188
      %6190 = vrot.lane.b32.xlu0 %v6172, 96
      %v6191 = vpop.permute.xlu0 %6190
      %6192 = vrot.lane.b32.xlu0 %v6173, 96
      %v6193 = vpop.permute.xlu0 %6192
      %6194 = vrot.lane.b32.xlu0 %v6174, 96
      %v6195 = vpop.permute.xlu0 %6194
      %6196 = vrot.lane.b32.xlu0 %v6175, 96
      %v6197 = vpop.permute.xlu0 %6196
      %6198 = vrot.lane.b32.xlu0 %v6176, 96
      %v6199 = vpop.permute.xlu0 %6198
      %6200 = vrot.lane.b32.xlu0 %v6177, 96
      %v6201 = vpop.permute.xlu0 %6200
      %v6210 = vadd.f32 %v6130, %v6187
      %v6211 = vadd.f32 %v6131, %v6189
      %v6212 = vadd.f32 %v6132, %v6191
      %v6213 = vadd.f32 %v6133, %v6193
      %v6214 = vadd.f32 %v6134, %v6195
      %v6215 = vadd.f32 %v6135, %v6197
      %v6216 = vadd.f32 %v6136, %v6199
      %v6217 = vadd.f32 %v6137, %v6201
      %6218 = vset.pattern.permute.xlu0 2
      %6219 = vperm.xlu0 %6218, %v6075
      %v6220 = vpop.permute.xlu0 %6219
      %6222 = vset.pattern.permute.xlu0 2
      %6223 = vperm.xlu0 %6222, %v6077
      %v6224 = vpop.permute.xlu0 %6223
      %6226 = vset.pattern.permute.xlu0 2
      %6227 = vperm.xlu0 %6226, %v6079
      %v6228 = vpop.permute.xlu0 %6227
      %6230 = vset.pattern.permute.xlu0 2
      %6231 = vperm.xlu0 %6230, %v6081
      %v6232 = vpop.permute.xlu0 %6231
      %6234 = vset.pattern.permute.xlu0 2
      %6235 = vperm.xlu0 %6234, %v6083
      %v6236 = vpop.permute.xlu0 %6235
      %6238 = vset.pattern.permute.xlu0 2
      %6239 = vperm.xlu0 %6238, %v6085
      %v6240 = vpop.permute.xlu0 %6239
      %6242 = vset.pattern.permute.xlu0 2
      %6243 = vperm.xlu0 %6242, %v6087
      %v6244 = vpop.permute.xlu0 %6243
      %6246 = vset.pattern.permute.xlu0 2
      %6247 = vperm.xlu0 %6246, %v6089
      %v6248 = vpop.permute.xlu0 %6247
      %v6250 = vmul.f32 %v6220, %v470
      %v6251 = vmul.f32 %v6224, %v471
      %v6252 = vmul.f32 %v6228, %v472
      %v6253 = vmul.f32 %v6232, %v473
      %v6254 = vmul.f32 %v6236, %v474
      %v6255 = vmul.f32 %v6240, %v475
      %v6256 = vmul.f32 %v6244, %v476
      %v6257 = vmul.f32 %v6248, %v477
      %6266 = vrot.lane.b32.xlu0 %v6250, 64
      %v6267 = vpop.permute.xlu0 %6266
      %6268 = vrot.lane.b32.xlu0 %v6251, 64
      %v6269 = vpop.permute.xlu0 %6268
      %6270 = vrot.lane.b32.xlu0 %v6252, 64
      %v6271 = vpop.permute.xlu0 %6270
      %6272 = vrot.lane.b32.xlu0 %v6253, 64
      %v6273 = vpop.permute.xlu0 %6272
      %6274 = vrot.lane.b32.xlu0 %v6254, 64
      %v6275 = vpop.permute.xlu0 %6274
      %6276 = vrot.lane.b32.xlu0 %v6255, 64
      %v6277 = vpop.permute.xlu0 %6276
      %6278 = vrot.lane.b32.xlu0 %v6256, 64
      %v6279 = vpop.permute.xlu0 %6278
      %6280 = vrot.lane.b32.xlu0 %v6257, 64
      %v6281 = vpop.permute.xlu0 %6280
      %v6290 = vadd.f32 %v6210, %v6267
      %v6291 = vadd.f32 %v6211, %v6269
      %v6292 = vadd.f32 %v6212, %v6271
      %v6293 = vadd.f32 %v6213, %v6273
      %v6294 = vadd.f32 %v6214, %v6275
      %v6295 = vadd.f32 %v6215, %v6277
      %v6296 = vadd.f32 %v6216, %v6279
      %v6297 = vadd.f32 %v6217, %v6281
      %6298 = vset.pattern.permute.xlu0 3
      %6299 = vperm.xlu0 %6298, %v6075
      %v6300 = vpop.permute.xlu0 %6299
      %6302 = vset.pattern.permute.xlu0 3
      %6303 = vperm.xlu0 %6302, %v6077
      %v6304 = vpop.permute.xlu0 %6303
      %6306 = vset.pattern.permute.xlu0 3
      %6307 = vperm.xlu0 %6306, %v6079
      %v6308 = vpop.permute.xlu0 %6307
      %6310 = vset.pattern.permute.xlu0 3
      %6311 = vperm.xlu0 %6310, %v6081
      %v6312 = vpop.permute.xlu0 %6311
      %6314 = vset.pattern.permute.xlu0 3
      %6315 = vperm.xlu0 %6314, %v6083
      %v6316 = vpop.permute.xlu0 %6315
      %6318 = vset.pattern.permute.xlu0 3
      %6319 = vperm.xlu0 %6318, %v6085
      %v6320 = vpop.permute.xlu0 %6319
      %6322 = vset.pattern.permute.xlu0 3
      %6323 = vperm.xlu0 %6322, %v6087
      %v6324 = vpop.permute.xlu0 %6323
      %6326 = vset.pattern.permute.xlu0 3
      %6327 = vperm.xlu0 %6326, %v6089
      %v6328 = vpop.permute.xlu0 %6327
      %v6330 = vmul.f32 %v6300, %v470
      %v6331 = vmul.f32 %v6304, %v471
      %v6332 = vmul.f32 %v6308, %v472
      %v6333 = vmul.f32 %v6312, %v473
      %v6334 = vmul.f32 %v6316, %v474
      %v6335 = vmul.f32 %v6320, %v475
      %v6336 = vmul.f32 %v6324, %v476
      %v6337 = vmul.f32 %v6328, %v477
      %6346 = vrot.lane.b32.xlu0 %v6330, 32
      %v6347 = vpop.permute.xlu0 %6346
      %6348 = vrot.lane.b32.xlu0 %v6331, 32
      %v6349 = vpop.permute.xlu0 %6348
      %6350 = vrot.lane.b32.xlu0 %v6332, 32
      %v6351 = vpop.permute.xlu0 %6350
      %6352 = vrot.lane.b32.xlu0 %v6333, 32
      %v6353 = vpop.permute.xlu0 %6352
      %6354 = vrot.lane.b32.xlu0 %v6334, 32
      %v6355 = vpop.permute.xlu0 %6354
      %6356 = vrot.lane.b32.xlu0 %v6335, 32
      %v6357 = vpop.permute.xlu0 %6356
      %6358 = vrot.lane.b32.xlu0 %v6336, 32
      %v6359 = vpop.permute.xlu0 %6358
      %6360 = vrot.lane.b32.xlu0 %v6337, 32
      %v6361 = vpop.permute.xlu0 %6360
      %v6370 = vadd.f32 %v6290, %v6347
      %v6371 = vadd.f32 %v6291, %v6349
      %v6372 = vadd.f32 %v6292, %v6351
      %v6373 = vadd.f32 %v6293, %v6353
      %v6374 = vadd.f32 %v6294, %v6355
      %v6375 = vadd.f32 %v6295, %v6357
      %v6376 = vadd.f32 %v6296, %v6359
      %v6377 = vadd.f32 %v6297, %v6361
      %6386 = vrot.lane.b32.xlu0 %v6370, 96
      %v6387 = vpop.permute.xlu0 %6386
      %6388 = vrot.lane.b32.xlu0 %v6371, 96
      %v6389 = vpop.permute.xlu0 %6388
      %6390 = vrot.lane.b32.xlu0 %v6372, 96
      %v6391 = vpop.permute.xlu0 %6390
      %6392 = vrot.lane.b32.xlu0 %v6373, 96
      %v6393 = vpop.permute.xlu0 %6392
      %6394 = vrot.lane.b32.xlu0 %v6374, 96
      %v6395 = vpop.permute.xlu0 %6394
      %6396 = vrot.lane.b32.xlu0 %v6375, 96
      %v6397 = vpop.permute.xlu0 %6396
      %6398 = vrot.lane.b32.xlu0 %v6376, 96
      %v6399 = vpop.permute.xlu0 %6398
      %6400 = vrot.lane.b32.xlu0 %v6377, 96
      %v6401 = vpop.permute.xlu0 %6400
      %v6410 = vsub.f32 %v462, %v6387
      %v6411 = vsub.f32 %v463, %v6389
      %v6412 = vsub.f32 %v464, %v6391
      %v6413 = vsub.f32 %v465, %v6393
      %v6414 = vsub.f32 %v466, %v6395
      %v6415 = vsub.f32 %v467, %v6397
      %v6416 = vsub.f32 %v468, %v6399
      %v6417 = vsub.f32 %v469, %v6401
      %v6418 = vand.u32 2147483647, %v6410
      %v6419 = vand.u32 2147483647, %v6411
      %v6420 = vand.u32 2147483647, %v6412
      %v6421 = vand.u32 2147483647, %v6413
      %v6422 = vand.u32 2147483647, %v6414
      %v6423 = vand.u32 2147483647, %v6415
      %v6424 = vand.u32 2147483647, %v6416
      %v6425 = vand.u32 2147483647, %v6417
      %6434 = vrot.lane.b32.xlu0 %v6418, 32
      %v6435 = vpop.permute.xlu0 %6434
      %6436 = vrot.lane.b32.xlu0 %v6419, 32
      %v6437 = vpop.permute.xlu0 %6436
      %6438 = vrot.lane.b32.xlu0 %v6420, 32
      %v6439 = vpop.permute.xlu0 %6438
      %6440 = vrot.lane.b32.xlu0 %v6421, 32
      %v6441 = vpop.permute.xlu0 %6440
      %6442 = vrot.lane.b32.xlu0 %v6422, 32
      %v6443 = vpop.permute.xlu0 %6442
      %6444 = vrot.lane.b32.xlu0 %v6423, 32
      %v6445 = vpop.permute.xlu0 %6444
      %6446 = vrot.lane.b32.xlu0 %v6424, 32
      %v6447 = vpop.permute.xlu0 %6446
      %6448 = vrot.lane.b32.xlu0 %v6425, 32
      %v6449 = vpop.permute.xlu0 %6448
      %v6458 = vadd.f32 %v5809, %v6435
      %v6459 = vadd.f32 %v5810, %v6437
      %v6460 = vadd.f32 %v5811, %v6439
      %v6461 = vadd.f32 %v5812, %v6441
      %v6462 = vadd.f32 %v5813, %v6443
      %v6463 = vadd.f32 %v5814, %v6445
      %v6464 = vadd.f32 %v5815, %v6447
      %v6465 = vadd.f32 %v5816, %v6449
      %v6466 = vpack.c.bf16 %v6419, %v6418
      %v6467 = vpack.c.bf16 %v6421, %v6420
      %v6468 = vpack.c.bf16 %v6423, %v6422
      %v6469 = vpack.c.bf16 %v6425, %v6424
      %6474 = vrot.lane.b32.xlu0 %v6466, 32
      %v6475 = vpop.permute.xlu0 %6474
      %6476 = vrot.lane.b32.xlu0 %v6467, 32
      %v6477 = vpop.permute.xlu0 %6476
      %6478 = vrot.lane.b32.xlu0 %v6468, 32
      %v6479 = vpop.permute.xlu0 %6478
      %6480 = vrot.lane.b32.xlu0 %v6469, 32
      %v6481 = vpop.permute.xlu0 %6480
      %v6486 = vunpack.c.l.b16 %v548
      %v6487 = vunpack.c.l.b16 %v549
      %v6488 = vunpack.c.l.b16 %v550
      %v6489 = vunpack.c.l.b16 %v551
      %v6490 = vpack.c.b16 %v6487, %v6486
      %v6491 = vpack.c.b16 %v6489, %v6488
      %v6495 = vsel %vm654, %v6475, 0
      %v6498 = vsel %vm654, %v6477, 0
      %v6501 = vsel %vm654, %v6479, 0
      %v6504 = vsel %vm654, %v6481, 0
      %6506 = vmatprep.subr.bf16.mxu0 0
      %6507 = vmatpush1.bf16.msra.mxu0 0
      %6508 = vmatprep.subr.bf16.mxu0 0
      %6509 = vmatpush1.bf16.msra.mxu0 0
      %6510 = vmatprep.subr.bf16.mxu0 0
      %6511 = vmatpush1.bf16.msra.mxu0 0
      %6512 = vmatprep.subr.bf16.mxu0 0
      %6513 = vmatpush1.bf16.msra.mxu0 0
      %6514 = vmatprep.subr.bf16.mxu0 0
      %6515 = vmatpush1.bf16.msra.mxu0 0
      %6516 = vmatprep.subr.bf16.mxu0 0
      %6517 = vmatpush1.bf16.msra.mxu0 0
      %6518 = vmatprep.subr.bf16.mxu0 0
      %6519 = vmatpush1.bf16.msra.mxu0 %v6491
      %6520 = vmatprep.subr.bf16.mxu0 0
      %6521 = vmatpush1.bf16.msra.mxu0 %v6490
      %6522 = vmatprep.subr.bf16.mxu0 0
      %6523 = vmatpush2.bf16.msra.mxu0 0
      %6524 = vmatprep.subr.bf16.mxu0 0
      %6525 = vmatpush2.bf16.msra.mxu0 0
      %6526 = vmatprep.subr.bf16.mxu0 0
      %6527 = vmatpush2.bf16.msra.mxu0 0
      %6528 = vmatprep.subr.bf16.mxu0 0
      %6529 = vmatpush2.bf16.msra.mxu0 0
      %6530 = vmatprep.subr.bf16.mxu0 0
      %6531 = vmatpush2.bf16.msra.mxu0 0
      %6532 = vmatprep.subr.bf16.mxu0 0
      %6533 = vmatpush2.bf16.msra.mxu0 0
      %6534 = vmatprep.subr.bf16.mxu0 0
      %6535 = vmatpush2.bf16.msra.mxu0 0
      %6536 = vmatprep.subr.bf16.mxu0 0
      %6537 = vmatpush2.bf16.msra.mxu0 0
      %6538 = vmatprep.mubr.bf16.mxu0 0
      %6539 = vmatmul.mubr.bf16.gmra.mxu0 %v6495
      %v6540 = vpop.f32.mrf.mxu0
      %v6541 = vadd.f32 0.0, %v6540
      %v6542 = vpop.f32.mrf.mxu0
      %v6543 = vpop.f32.mrf.mxu0
      %v6544 = vadd.f32 0.0, %v6543
      %v6545 = vpop.f32.mrf.mxu0
      %6546 = vmatprep.mubr.bf16.mxu0 0
      %6547 = vmatmul.mubr.bf16.gmra.mxu0 %v6498
      %v6548 = vpop.f32.mrf.mxu0
      %v6549 = vadd.f32 0.0, %v6548
      %v6550 = vpop.f32.mrf.mxu0
      %v6551 = vpop.f32.mrf.mxu0
      %v6552 = vadd.f32 0.0, %v6551
      %v6553 = vpop.f32.mrf.mxu0
      %6554 = vmatprep.mubr.bf16.mxu0 0
      %6555 = vmatmul.mubr.bf16.gmra.mxu0 %v6501
      %v6556 = vpop.f32.mrf.mxu0
      %v6557 = vadd.f32 0.0, %v6556
      %v6558 = vpop.f32.mrf.mxu0
      %v6559 = vpop.f32.mrf.mxu0
      %v6560 = vadd.f32 0.0, %v6559
      %v6561 = vpop.f32.mrf.mxu0
      %6562 = vmatprep.mubr.bf16.mxu0 0
      %6563 = vmatmul.mubr.bf16.gmra.mxu0 %v6504
      %v6564 = vpop.f32.mrf.mxu0
      %v6565 = vadd.f32 0.0, %v6564
      %v6566 = vpop.f32.mrf.mxu0
      %v6567 = vpop.f32.mrf.mxu0
      %v6568 = vadd.f32 0.0, %v6567
      %v6569 = vpop.f32.mrf.mxu0
      %6570 = vdwg.mxu0
      %v6571 = vadd.f32 %v5922, %v6541
      %v6572 = vadd.f32 %v5923, %v6544
      %v6573 = vadd.f32 %v5924, %v6549
      %v6574 = vadd.f32 %v5925, %v6552
      %v6575 = vadd.f32 %v5926, %v6557
      %v6576 = vadd.f32 %v5927, %v6560
      %v6577 = vadd.f32 %v5928, %v6565
      %v6578 = vadd.f32 %v5929, %v6568
      %v6579 = vsel %vm4042, %v3916, -inf
      %6580 = vmax.xlane.f32.xlu0 %v6579
      %v6581 = vpop.xlane.xlu0 %6580
      %v6582 = vsel %vm4042, %v3919, -inf
      %6583 = vmax.xlane.f32.xlu0 %v6582
      %v6584 = vpop.xlane.xlu0 %6583
      %v6585 = vsel %vm4042, %v3924, -inf
      %6586 = vmax.xlane.f32.xlu0 %v6585
      %v6587 = vpop.xlane.xlu0 %6586
      %v6588 = vsel %vm4042, %v3927, -inf
      %6589 = vmax.xlane.f32.xlu0 %v6588
      %v6590 = vpop.xlane.xlu0 %6589
      %v6591 = vsel %vm4042, %v3932, -inf
      %6592 = vmax.xlane.f32.xlu0 %v6591
      %v6593 = vpop.xlane.xlu0 %6592
      %v6594 = vsel %vm4042, %v3935, -inf
      %6595 = vmax.xlane.f32.xlu0 %v6594
      %v6596 = vpop.xlane.xlu0 %6595
      %v6597 = vsel %vm4042, %v3940, -inf
      %6598 = vmax.xlane.f32.xlu0 %v6597
      %v6599 = vpop.xlane.xlu0 %6598
      %v6600 = vsel %vm4042, %v3943, -inf
      %6601 = vmax.xlane.f32.xlu0 %v6600
      %v6602 = vpop.xlane.xlu0 %6601
      %v6603 = vsub.f32 %v3916, %v6581
      %v6604 = vsub.f32 %v3919, %v6584
      %v6605 = vsub.f32 %v3924, %v6587
      %v6606 = vsub.f32 %v3927, %v6590
      %v6607 = vsub.f32 %v3932, %v6593
      %v6608 = vsub.f32 %v3935, %v6596
      %v6609 = vsub.f32 %v3940, %v6599
      %v6610 = vsub.f32 %v3943, %v6602
      %v6611 = vmul.f32 %v6603, 1.442695
      %v6612 = vpow.pop %v6611
      %v6613 = vmul.f32 %v6604, 1.442695
      %v6614 = vpow.pop %v6613
      %v6615 = vmul.f32 %v6605, 1.442695
      %v6616 = vpow.pop %v6615
      %v6617 = vmul.f32 %v6606, 1.442695
      %v6618 = vpow.pop %v6617
      %v6619 = vmul.f32 %v6607, 1.442695
      %v6620 = vpow.pop %v6619
      %v6621 = vmul.f32 %v6608, 1.442695
      %v6622 = vpow.pop %v6621
      %v6623 = vmul.f32 %v6609, 1.442695
      %v6624 = vpow.pop %v6623
      %v6625 = vmul.f32 %v6610, 1.442695
      %v6626 = vpow.pop %v6625
      %v6627 = vsel %vm4042, %v6612, 0.0
      %6628 = vadd.xlane.f32.xlu0 %v6627
      %v6629 = vpop.xlane.xlu0 %6628
      %v6630 = vsel %vm4042, %v6614, 0.0
      %6631 = vadd.xlane.f32.xlu0 %v6630
      %v6632 = vpop.xlane.xlu0 %6631
      %v6633 = vsel %vm4042, %v6616, 0.0
      %6634 = vadd.xlane.f32.xlu0 %v6633
      %v6635 = vpop.xlane.xlu0 %6634
      %v6636 = vsel %vm4042, %v6618, 0.0
      %6637 = vadd.xlane.f32.xlu0 %v6636
      %v6638 = vpop.xlane.xlu0 %6637
      %v6639 = vsel %vm4042, %v6620, 0.0
      %6640 = vadd.xlane.f32.xlu0 %v6639
      %v6641 = vpop.xlane.xlu0 %6640
      %v6642 = vsel %vm4042, %v6622, 0.0
      %6643 = vadd.xlane.f32.xlu0 %v6642
      %v6644 = vpop.xlane.xlu0 %6643
      %v6645 = vsel %vm4042, %v6624, 0.0
      %6646 = vadd.xlane.f32.xlu0 %v6645
      %v6647 = vpop.xlane.xlu0 %6646
      %v6648 = vsel %vm4042, %v6626, 0.0
      %6649 = vadd.xlane.f32.xlu0 %v6648
      %v6650 = vpop.xlane.xlu0 %6649
      %v6651 = vrcp.pop %v6629
      %v6652 = vrcp.pop %v6632
      %v6653 = vrcp.pop %v6635
      %v6654 = vrcp.pop %v6638
      %v6655 = vrcp.pop %v6641
      %v6656 = vrcp.pop %v6644
      %v6657 = vrcp.pop %v6647
      %v6658 = vrcp.pop %v6650
      %v6659 = vmul.f32 %v6612, %v6651
      %v6660 = vmul.f32 %v6614, %v6652
      %v6661 = vmul.f32 %v6616, %v6653
      %v6662 = vmul.f32 %v6618, %v6654
      %v6663 = vmul.f32 %v6620, %v6655
      %v6664 = vmul.f32 %v6622, %v6656
      %v6665 = vmul.f32 %v6624, %v6657
      %v6666 = vmul.f32 %v6626, %v6658
      %v6667 = vmul.f32 %v6659, %v478
      %v6668 = vmul.f32 %v6660, %v479
      %v6669 = vmul.f32 %v6661, %v480
      %v6670 = vmul.f32 %v6662, %v481
      %v6671 = vmul.f32 %v6663, %v482
      %v6672 = vmul.f32 %v6664, %v483
      %v6673 = vmul.f32 %v6665, %v484
      %v6674 = vmul.f32 %v6666, %v485
      %v6675 = vsel %vm4042, %v6667, -inf
      %6676 = vmax.xlane.f32.xlu0 %v6675
      %v6677 = vpop.xlane.xlu0 %6676
      %v6678 = vsel %vm4042, %v6668, -inf
      %6679 = vmax.xlane.f32.xlu0 %v6678
      %v6680 = vpop.xlane.xlu0 %6679
      %v6681 = vsel %vm4042, %v6669, -inf
      %6682 = vmax.xlane.f32.xlu0 %v6681
      %v6683 = vpop.xlane.xlu0 %6682
      %v6684 = vsel %vm4042, %v6670, -inf
      %6685 = vmax.xlane.f32.xlu0 %v6684
      %v6686 = vpop.xlane.xlu0 %6685
      %v6687 = vsel %vm4042, %v6671, -inf
      %6688 = vmax.xlane.f32.xlu0 %v6687
      %v6689 = vpop.xlane.xlu0 %6688
      %v6690 = vsel %vm4042, %v6672, -inf
      %6691 = vmax.xlane.f32.xlu0 %v6690
      %v6692 = vpop.xlane.xlu0 %6691
      %v6693 = vsel %vm4042, %v6673, -inf
      %6694 = vmax.xlane.f32.xlu0 %v6693
      %v6695 = vpop.xlane.xlu0 %6694
      %v6696 = vsel %vm4042, %v6674, -inf
      %6697 = vmax.xlane.f32.xlu0 %v6696
      %v6698 = vpop.xlane.xlu0 %6697
      %vm6699 = vcmp.eq.f32.partialorder %v6667, %v6677
      %vm6700 = vcmp.eq.f32.partialorder %v6668, %v6680
      %vm6701 = vcmp.eq.f32.partialorder %v6669, %v6683
      %vm6702 = vcmp.eq.f32.partialorder %v6670, %v6686
      %vm6703 = vcmp.eq.f32.partialorder %v6671, %v6689
      %vm6704 = vcmp.eq.f32.partialorder %v6672, %v6692
      %vm6705 = vcmp.eq.f32.partialorder %v6673, %v6695
      %vm6706 = vcmp.eq.f32.partialorder %v6674, %v6698
      %v6707 = vsel %vm6699, %v6667, 0.0
      %v6708 = vsel %vm6700, %v6668, 0.0
      %v6709 = vsel %vm6701, %v6669, 0.0
      %v6710 = vsel %vm6702, %v6670, 0.0
      %v6711 = vsel %vm6703, %v6671, 0.0
      %v6712 = vsel %vm6704, %v6672, 0.0
      %v6713 = vsel %vm6705, %v6673, 0.0
      %v6714 = vsel %vm6706, %v6674, 0.0
      %v6715 = vadd.f32 %v6707, 1e-07
      %v6716 = vadd.f32 %v6708, 1e-07
      %v6717 = vadd.f32 %v6709, 1e-07
      %v6718 = vadd.f32 %v6710, 1e-07
      %v6719 = vadd.f32 %v6711, 1e-07
      %v6720 = vadd.f32 %v6712, 1e-07
      %v6721 = vadd.f32 %v6713, 1e-07
      %v6722 = vadd.f32 %v6714, 1e-07
      %v6723 = vrcp.pop %v6715
      %v6724 = vmul.f32 %v6707, %v6723
      %v6725 = vrcp.pop %v6716
      %v6726 = vmul.f32 %v6708, %v6725
      %v6727 = vrcp.pop %v6717
      %v6728 = vmul.f32 %v6709, %v6727
      %v6729 = vrcp.pop %v6718
      %v6730 = vmul.f32 %v6710, %v6729
      %v6731 = vrcp.pop %v6719
      %v6732 = vmul.f32 %v6711, %v6731
      %v6733 = vrcp.pop %v6720
      %v6734 = vmul.f32 %v6712, %v6733
      %v6735 = vrcp.pop %v6721
      %v6736 = vmul.f32 %v6713, %v6735
      %v6737 = vrcp.pop %v6722
      %v6738 = vmul.f32 %v6714, %v6737
      %6740 = vset.pattern.permute.xlu0 0
      %6741 = vperm.xlu0 %6740, %v6724
      %v6742 = vpop.permute.xlu0 %6741
      %6745 = vset.pattern.permute.xlu0 0
      %6746 = vperm.xlu0 %6745, %v6726
      %v6747 = vpop.permute.xlu0 %6746
      %6750 = vset.pattern.permute.xlu0 0
      %6751 = vperm.xlu0 %6750, %v6728
      %v6752 = vpop.permute.xlu0 %6751
      %6755 = vset.pattern.permute.xlu0 0
      %6756 = vperm.xlu0 %6755, %v6730
      %v6757 = vpop.permute.xlu0 %6756
      %6760 = vset.pattern.permute.xlu0 0
      %6761 = vperm.xlu0 %6760, %v6732
      %v6762 = vpop.permute.xlu0 %6761
      %6765 = vset.pattern.permute.xlu0 0
      %6766 = vperm.xlu0 %6765, %v6734
      %v6767 = vpop.permute.xlu0 %6766
      %6770 = vset.pattern.permute.xlu0 0
      %6771 = vperm.xlu0 %6770, %v6736
      %v6772 = vpop.permute.xlu0 %6771
      %6775 = vset.pattern.permute.xlu0 0
      %6776 = vperm.xlu0 %6775, %v6738
      %v6777 = vpop.permute.xlu0 %6776
      %v6779 = vmul.f32 %v6742, %v462
      %v6780 = vmul.f32 %v6747, %v463
      %v6781 = vmul.f32 %v6752, %v464
      %v6782 = vmul.f32 %v6757, %v465
      %v6783 = vmul.f32 %v6762, %v466
      %v6784 = vmul.f32 %v6767, %v467
      %v6785 = vmul.f32 %v6772, %v468
      %v6786 = vmul.f32 %v6777, %v469
      %6787 = vset.pattern.permute.xlu0 1
      %6788 = vperm.xlu0 %6787, %v6724
      %v6789 = vpop.permute.xlu0 %6788
      %6791 = vset.pattern.permute.xlu0 1
      %6792 = vperm.xlu0 %6791, %v6726
      %v6793 = vpop.permute.xlu0 %6792
      %6795 = vset.pattern.permute.xlu0 1
      %6796 = vperm.xlu0 %6795, %v6728
      %v6797 = vpop.permute.xlu0 %6796
      %6799 = vset.pattern.permute.xlu0 1
      %6800 = vperm.xlu0 %6799, %v6730
      %v6801 = vpop.permute.xlu0 %6800
      %6803 = vset.pattern.permute.xlu0 1
      %6804 = vperm.xlu0 %6803, %v6732
      %v6805 = vpop.permute.xlu0 %6804
      %6807 = vset.pattern.permute.xlu0 1
      %6808 = vperm.xlu0 %6807, %v6734
      %v6809 = vpop.permute.xlu0 %6808
      %6811 = vset.pattern.permute.xlu0 1
      %6812 = vperm.xlu0 %6811, %v6736
      %v6813 = vpop.permute.xlu0 %6812
      %6815 = vset.pattern.permute.xlu0 1
      %6816 = vperm.xlu0 %6815, %v6738
      %v6817 = vpop.permute.xlu0 %6816
      %v6819 = vmul.f32 %v6789, %v462
      %v6820 = vmul.f32 %v6793, %v463
      %v6821 = vmul.f32 %v6797, %v464
      %v6822 = vmul.f32 %v6801, %v465
      %v6823 = vmul.f32 %v6805, %v466
      %v6824 = vmul.f32 %v6809, %v467
      %v6825 = vmul.f32 %v6813, %v468
      %v6826 = vmul.f32 %v6817, %v469
      %6835 = vrot.lane.b32.xlu0 %v6819, 96
      %v6836 = vpop.permute.xlu0 %6835
      %6837 = vrot.lane.b32.xlu0 %v6820, 96
      %v6838 = vpop.permute.xlu0 %6837
      %6839 = vrot.lane.b32.xlu0 %v6821, 96
      %v6840 = vpop.permute.xlu0 %6839
      %6841 = vrot.lane.b32.xlu0 %v6822, 96
      %v6842 = vpop.permute.xlu0 %6841
      %6843 = vrot.lane.b32.xlu0 %v6823, 96
      %v6844 = vpop.permute.xlu0 %6843
      %6845 = vrot.lane.b32.xlu0 %v6824, 96
      %v6846 = vpop.permute.xlu0 %6845
      %6847 = vrot.lane.b32.xlu0 %v6825, 96
      %v6848 = vpop.permute.xlu0 %6847
      %6849 = vrot.lane.b32.xlu0 %v6826, 96
      %v6850 = vpop.permute.xlu0 %6849
      %v6859 = vadd.f32 %v6779, %v6836
      %v6860 = vadd.f32 %v6780, %v6838
      %v6861 = vadd.f32 %v6781, %v6840
      %v6862 = vadd.f32 %v6782, %v6842
      %v6863 = vadd.f32 %v6783, %v6844
      %v6864 = vadd.f32 %v6784, %v6846
      %v6865 = vadd.f32 %v6785, %v6848
      %v6866 = vadd.f32 %v6786, %v6850
      %6867 = vset.pattern.permute.xlu0 2
      %6868 = vperm.xlu0 %6867, %v6724
      %v6869 = vpop.permute.xlu0 %6868
      %6871 = vset.pattern.permute.xlu0 2
      %6872 = vperm.xlu0 %6871, %v6726
      %v6873 = vpop.permute.xlu0 %6872
      %6875 = vset.pattern.permute.xlu0 2
      %6876 = vperm.xlu0 %6875, %v6728
      %v6877 = vpop.permute.xlu0 %6876
      %6879 = vset.pattern.permute.xlu0 2
      %6880 = vperm.xlu0 %6879, %v6730
      %v6881 = vpop.permute.xlu0 %6880
      %6883 = vset.pattern.permute.xlu0 2
      %6884 = vperm.xlu0 %6883, %v6732
      %v6885 = vpop.permute.xlu0 %6884
      %6887 = vset.pattern.permute.xlu0 2
      %6888 = vperm.xlu0 %6887, %v6734
      %v6889 = vpop.permute.xlu0 %6888
      %6891 = vset.pattern.permute.xlu0 2
      %6892 = vperm.xlu0 %6891, %v6736
      %v6893 = vpop.permute.xlu0 %6892
      %6895 = vset.pattern.permute.xlu0 2
      %6896 = vperm.xlu0 %6895, %v6738
      %v6897 = vpop.permute.xlu0 %6896
      %v6899 = vmul.f32 %v6869, %v462
      %v6900 = vmul.f32 %v6873, %v463
      %v6901 = vmul.f32 %v6877, %v464
      %v6902 = vmul.f32 %v6881, %v465
      %v6903 = vmul.f32 %v6885, %v466
      %v6904 = vmul.f32 %v6889, %v467
      %v6905 = vmul.f32 %v6893, %v468
      %v6906 = vmul.f32 %v6897, %v469
      %6915 = vrot.lane.b32.xlu0 %v6899, 64
      %v6916 = vpop.permute.xlu0 %6915
      %6917 = vrot.lane.b32.xlu0 %v6900, 64
      %v6918 = vpop.permute.xlu0 %6917
      %6919 = vrot.lane.b32.xlu0 %v6901, 64
      %v6920 = vpop.permute.xlu0 %6919
      %6921 = vrot.lane.b32.xlu0 %v6902, 64
      %v6922 = vpop.permute.xlu0 %6921
      %6923 = vrot.lane.b32.xlu0 %v6903, 64
      %v6924 = vpop.permute.xlu0 %6923
      %6925 = vrot.lane.b32.xlu0 %v6904, 64
      %v6926 = vpop.permute.xlu0 %6925
      %6927 = vrot.lane.b32.xlu0 %v6905, 64
      %v6928 = vpop.permute.xlu0 %6927
      %6929 = vrot.lane.b32.xlu0 %v6906, 64
      %v6930 = vpop.permute.xlu0 %6929
      %v6939 = vadd.f32 %v6859, %v6916
      %v6940 = vadd.f32 %v6860, %v6918
      %v6941 = vadd.f32 %v6861, %v6920
      %v6942 = vadd.f32 %v6862, %v6922
      %v6943 = vadd.f32 %v6863, %v6924
      %v6944 = vadd.f32 %v6864, %v6926
      %v6945 = vadd.f32 %v6865, %v6928
      %v6946 = vadd.f32 %v6866, %v6930
      %6947 = vset.pattern.permute.xlu0 3
      %6948 = vperm.xlu0 %6947, %v6724
      %v6949 = vpop.permute.xlu0 %6948
      %6951 = vset.pattern.permute.xlu0 3
      %6952 = vperm.xlu0 %6951, %v6726
      %v6953 = vpop.permute.xlu0 %6952
      %6955 = vset.pattern.permute.xlu0 3
      %6956 = vperm.xlu0 %6955, %v6728
      %v6957 = vpop.permute.xlu0 %6956
      %6959 = vset.pattern.permute.xlu0 3
      %6960 = vperm.xlu0 %6959, %v6730
      %v6961 = vpop.permute.xlu0 %6960
      %6963 = vset.pattern.permute.xlu0 3
      %6964 = vperm.xlu0 %6963, %v6732
      %v6965 = vpop.permute.xlu0 %6964
      %6967 = vset.pattern.permute.xlu0 3
      %6968 = vperm.xlu0 %6967, %v6734
      %v6969 = vpop.permute.xlu0 %6968
      %6971 = vset.pattern.permute.xlu0 3
      %6972 = vperm.xlu0 %6971, %v6736
      %v6973 = vpop.permute.xlu0 %6972
      %6975 = vset.pattern.permute.xlu0 3
      %6976 = vperm.xlu0 %6975, %v6738
      %v6977 = vpop.permute.xlu0 %6976
      %v6979 = vmul.f32 %v6949, %v462
      %v6980 = vmul.f32 %v6953, %v463
      %v6981 = vmul.f32 %v6957, %v464
      %v6982 = vmul.f32 %v6961, %v465
      %v6983 = vmul.f32 %v6965, %v466
      %v6984 = vmul.f32 %v6969, %v467
      %v6985 = vmul.f32 %v6973, %v468
      %v6986 = vmul.f32 %v6977, %v469
      %6995 = vrot.lane.b32.xlu0 %v6979, 32
      %v6996 = vpop.permute.xlu0 %6995
      %6997 = vrot.lane.b32.xlu0 %v6980, 32
      %v6998 = vpop.permute.xlu0 %6997
      %6999 = vrot.lane.b32.xlu0 %v6981, 32
      %v7000 = vpop.permute.xlu0 %6999
      %7001 = vrot.lane.b32.xlu0 %v6982, 32
      %v7002 = vpop.permute.xlu0 %7001
      %7003 = vrot.lane.b32.xlu0 %v6983, 32
      %v7004 = vpop.permute.xlu0 %7003
      %7005 = vrot.lane.b32.xlu0 %v6984, 32
      %v7006 = vpop.permute.xlu0 %7005
      %7007 = vrot.lane.b32.xlu0 %v6985, 32
      %v7008 = vpop.permute.xlu0 %7007
      %7009 = vrot.lane.b32.xlu0 %v6986, 32
      %v7010 = vpop.permute.xlu0 %7009
      %v7019 = vadd.f32 %v6939, %v6996
      %v7020 = vadd.f32 %v6940, %v6998
      %v7021 = vadd.f32 %v6941, %v7000
      %v7022 = vadd.f32 %v6942, %v7002
      %v7023 = vadd.f32 %v6943, %v7004
      %v7024 = vadd.f32 %v6944, %v7006
      %v7025 = vadd.f32 %v6945, %v7008
      %v7026 = vadd.f32 %v6946, %v7010
      %v7027 = vsub.f32 %v470, %v7019
      %v7028 = vsub.f32 %v471, %v7020
      %v7029 = vsub.f32 %v472, %v7021
      %v7030 = vsub.f32 %v473, %v7022
      %v7031 = vsub.f32 %v474, %v7023
      %v7032 = vsub.f32 %v475, %v7024
      %v7033 = vsub.f32 %v476, %v7025
      %v7034 = vsub.f32 %v477, %v7026
      %v7035 = vand.u32 2147483647, %v7027
      %v7036 = vand.u32 2147483647, %v7028
      %v7037 = vand.u32 2147483647, %v7029
      %v7038 = vand.u32 2147483647, %v7030
      %v7039 = vand.u32 2147483647, %v7031
      %v7040 = vand.u32 2147483647, %v7032
      %v7041 = vand.u32 2147483647, %v7033
      %v7042 = vand.u32 2147483647, %v7034
      %v7043 = vadd.f32 %v6458, %v7035
      %v7044 = vadd.f32 %v6459, %v7036
      %v7045 = vadd.f32 %v6460, %v7037
      %v7046 = vadd.f32 %v6461, %v7038
      %v7047 = vadd.f32 %v6462, %v7039
      %v7048 = vadd.f32 %v6463, %v7040
      %v7049 = vadd.f32 %v6464, %v7041
      %v7050 = vadd.f32 %v6465, %v7042
      %v7051 = vpack.c.bf16 %v7036, %v7035
      %v7052 = vpack.c.bf16 %v7038, %v7037
      %v7053 = vpack.c.bf16 %v7040, %v7039
      %v7054 = vpack.c.bf16 %v7042, %v7041
      %v7059 = vunpack.c.l.b16 %v552
      %v7060 = vunpack.c.l.b16 %v553
      %v7061 = vunpack.c.l.b16 %v554
      %v7062 = vunpack.c.l.b16 %v555
      %v7063 = vpack.c.b16 %v7060, %v7059
      %v7064 = vpack.c.b16 %v7062, %v7061
      %v7068 = vsel %vm654, %v7051, 0
      %v7071 = vsel %vm654, %v7052, 0
      %v7074 = vsel %vm654, %v7053, 0
      %v7077 = vsel %vm654, %v7054, 0
      %7079 = vmatprep.subr.bf16.mxu0 0
      %7080 = vmatpush1.bf16.msra.mxu0 0
      %7081 = vmatprep.subr.bf16.mxu0 0
      %7082 = vmatpush1.bf16.msra.mxu0 0
      %7083 = vmatprep.subr.bf16.mxu0 0
      %7084 = vmatpush1.bf16.msra.mxu0 0
      %7085 = vmatprep.subr.bf16.mxu0 0
      %7086 = vmatpush1.bf16.msra.mxu0 0
      %7087 = vmatprep.subr.bf16.mxu0 0
      %7088 = vmatpush1.bf16.msra.mxu0 0
      %7089 = vmatprep.subr.bf16.mxu0 0
      %7090 = vmatpush1.bf16.msra.mxu0 0
      %7091 = vmatprep.subr.bf16.mxu0 0
      %7092 = vmatpush1.bf16.msra.mxu0 %v7064
      %7093 = vmatprep.subr.bf16.mxu0 0
      %7094 = vmatpush1.bf16.msra.mxu0 %v7063
      %7095 = vmatprep.subr.bf16.mxu0 0
      %7096 = vmatpush2.bf16.msra.mxu0 0
      %7097 = vmatprep.subr.bf16.mxu0 0
      %7098 = vmatpush2.bf16.msra.mxu0 0
      %7099 = vmatprep.subr.bf16.mxu0 0
      %7100 = vmatpush2.bf16.msra.mxu0 0
      %7101 = vmatprep.subr.bf16.mxu0 0
      %7102 = vmatpush2.bf16.msra.mxu0 0
      %7103 = vmatprep.subr.bf16.mxu0 0
      %7104 = vmatpush2.bf16.msra.mxu0 0
      %7105 = vmatprep.subr.bf16.mxu0 0
      %7106 = vmatpush2.bf16.msra.mxu0 0
      %7107 = vmatprep.subr.bf16.mxu0 0
      %7108 = vmatpush2.bf16.msra.mxu0 0
      %7109 = vmatprep.subr.bf16.mxu0 0
      %7110 = vmatpush2.bf16.msra.mxu0 0
      %7111 = vmatprep.mubr.bf16.mxu0 0
      %7112 = vmatmul.mubr.bf16.gmra.mxu0 %v7068
      %v7113 = vpop.f32.mrf.mxu0
      %v7114 = vadd.f32 0.0, %v7113
      %v7115 = vpop.f32.mrf.mxu0
      %v7116 = vpop.f32.mrf.mxu0
      %v7117 = vadd.f32 0.0, %v7116
      %v7118 = vpop.f32.mrf.mxu0
      %7119 = vmatprep.mubr.bf16.mxu0 0
      %7120 = vmatmul.mubr.bf16.gmra.mxu0 %v7071
      %v7121 = vpop.f32.mrf.mxu0
      %v7122 = vadd.f32 0.0, %v7121
      %v7123 = vpop.f32.mrf.mxu0
      %v7124 = vpop.f32.mrf.mxu0
      %v7125 = vadd.f32 0.0, %v7124
      %v7126 = vpop.f32.mrf.mxu0
      %7127 = vmatprep.mubr.bf16.mxu0 0
      %7128 = vmatmul.mubr.bf16.gmra.mxu0 %v7074
      %v7129 = vpop.f32.mrf.mxu0
      %v7130 = vadd.f32 0.0, %v7129
      %v7131 = vpop.f32.mrf.mxu0
      %v7132 = vpop.f32.mrf.mxu0
      %v7133 = vadd.f32 0.0, %v7132
      %v7134 = vpop.f32.mrf.mxu0
      %7135 = vmatprep.mubr.bf16.mxu0 0
      %7136 = vmatmul.mubr.bf16.gmra.mxu0 %v7077
      %v7137 = vpop.f32.mrf.mxu0
      %v7138 = vadd.f32 0.0, %v7137
      %v7139 = vpop.f32.mrf.mxu0
      %v7140 = vpop.f32.mrf.mxu0
      %v7141 = vadd.f32 0.0, %v7140
      %v7142 = vpop.f32.mrf.mxu0
      %7143 = vdwg.mxu0
      %v7144 = vadd.f32 %v6571, %v7114
      %v7145 = vadd.f32 %v6572, %v7117
      %v7146 = vadd.f32 %v6573, %v7122
      %v7147 = vadd.f32 %v6574, %v7125
      %v7148 = vadd.f32 %v6575, %v7130
      %v7149 = vadd.f32 %v6576, %v7133
      %v7150 = vadd.f32 %v6577, %v7138
      %v7151 = vadd.f32 %v6578, %v7141
      %v7152 = vsel %vm4042, %v3948, -inf
      %7153 = vmax.xlane.f32.xlu0 %v7152
      %v7154 = vpop.xlane.xlu0 %7153
      %v7155 = vsel %vm4042, %v3951, -inf
      %7156 = vmax.xlane.f32.xlu0 %v7155
      %v7157 = vpop.xlane.xlu0 %7156
      %v7158 = vsel %vm4042, %v3956, -inf
      %7159 = vmax.xlane.f32.xlu0 %v7158
      %v7160 = vpop.xlane.xlu0 %7159
      %v7161 = vsel %vm4042, %v3959, -inf
      %7162 = vmax.xlane.f32.xlu0 %v7161
      %v7163 = vpop.xlane.xlu0 %7162
      %v7164 = vsel %vm4042, %v3964, -inf
      %7165 = vmax.xlane.f32.xlu0 %v7164
      %v7166 = vpop.xlane.xlu0 %7165
      %v7167 = vsel %vm4042, %v3967, -inf
      %7168 = vmax.xlane.f32.xlu0 %v7167
      %v7169 = vpop.xlane.xlu0 %7168
      %v7170 = vsel %vm4042, %v3972, -inf
      %7171 = vmax.xlane.f32.xlu0 %v7170
      %v7172 = vpop.xlane.xlu0 %7171
      %v7173 = vsel %vm4042, %v3975, -inf
      %7174 = vmax.xlane.f32.xlu0 %v7173
      %v7175 = vpop.xlane.xlu0 %7174
      %v7176 = vsub.f32 %v3948, %v7154
      %v7177 = vsub.f32 %v3951, %v7157
      %v7178 = vsub.f32 %v3956, %v7160
      %v7179 = vsub.f32 %v3959, %v7163
      %v7180 = vsub.f32 %v3964, %v7166
      %v7181 = vsub.f32 %v3967, %v7169
      %v7182 = vsub.f32 %v3972, %v7172
      %v7183 = vsub.f32 %v3975, %v7175
      %v7184 = vmul.f32 %v7176, 1.442695
      %v7185 = vpow.pop %v7184
      %v7186 = vmul.f32 %v7177, 1.442695
      %v7187 = vpow.pop %v7186
      %v7188 = vmul.f32 %v7178, 1.442695
      %v7189 = vpow.pop %v7188
      %v7190 = vmul.f32 %v7179, 1.442695
      %v7191 = vpow.pop %v7190
      %v7192 = vmul.f32 %v7180, 1.442695
      %v7193 = vpow.pop %v7192
      %v7194 = vmul.f32 %v7181, 1.442695
      %v7195 = vpow.pop %v7194
      %v7196 = vmul.f32 %v7182, 1.442695
      %v7197 = vpow.pop %v7196
      %v7198 = vmul.f32 %v7183, 1.442695
      %v7199 = vpow.pop %v7198
      %v7200 = vsel %vm4042, %v7185, 0.0
      %7201 = vadd.xlane.f32.xlu0 %v7200
      %v7202 = vpop.xlane.xlu0 %7201
      %v7203 = vsel %vm4042, %v7187, 0.0
      %7204 = vadd.xlane.f32.xlu0 %v7203
      %v7205 = vpop.xlane.xlu0 %7204
      %v7206 = vsel %vm4042, %v7189, 0.0
      %7207 = vadd.xlane.f32.xlu0 %v7206
      %v7208 = vpop.xlane.xlu0 %7207
      %v7209 = vsel %vm4042, %v7191, 0.0
      %7210 = vadd.xlane.f32.xlu0 %v7209
      %v7211 = vpop.xlane.xlu0 %7210
      %v7212 = vsel %vm4042, %v7193, 0.0
      %7213 = vadd.xlane.f32.xlu0 %v7212
      %v7214 = vpop.xlane.xlu0 %7213
      %v7215 = vsel %vm4042, %v7195, 0.0
      %7216 = vadd.xlane.f32.xlu0 %v7215
      %v7217 = vpop.xlane.xlu0 %7216
      %v7218 = vsel %vm4042, %v7197, 0.0
      %7219 = vadd.xlane.f32.xlu0 %v7218
      %v7220 = vpop.xlane.xlu0 %7219
      %v7221 = vsel %vm4042, %v7199, 0.0
      %7222 = vadd.xlane.f32.xlu0 %v7221
      %v7223 = vpop.xlane.xlu0 %7222
      %v7224 = vrcp.pop %v7202
      %v7225 = vrcp.pop %v7205
      %v7226 = vrcp.pop %v7208
      %v7227 = vrcp.pop %v7211
      %v7228 = vrcp.pop %v7214
      %v7229 = vrcp.pop %v7217
      %v7230 = vrcp.pop %v7220
      %v7231 = vrcp.pop %v7223
      %v7232 = vmul.f32 %v7185, %v7224
      %v7233 = vmul.f32 %v7187, %v7225
      %v7234 = vmul.f32 %v7189, %v7226
      %v7235 = vmul.f32 %v7191, %v7227
      %v7236 = vmul.f32 %v7193, %v7228
      %v7237 = vmul.f32 %v7195, %v7229
      %v7238 = vmul.f32 %v7197, %v7230
      %v7239 = vmul.f32 %v7199, %v7231
      %v7240 = vmul.f32 %v7232, %v478
      %v7241 = vmul.f32 %v7233, %v479
      %v7242 = vmul.f32 %v7234, %v480
      %v7243 = vmul.f32 %v7235, %v481
      %v7244 = vmul.f32 %v7236, %v482
      %v7245 = vmul.f32 %v7237, %v483
      %v7246 = vmul.f32 %v7238, %v484
      %v7247 = vmul.f32 %v7239, %v485
      %v7248 = vsel %vm4042, %v7240, -inf
      %7249 = vmax.xlane.f32.xlu0 %v7248
      %v7250 = vpop.xlane.xlu0 %7249
      %v7251 = vsel %vm4042, %v7241, -inf
      %7252 = vmax.xlane.f32.xlu0 %v7251
      %v7253 = vpop.xlane.xlu0 %7252
      %v7254 = vsel %vm4042, %v7242, -inf
      %7255 = vmax.xlane.f32.xlu0 %v7254
      %v7256 = vpop.xlane.xlu0 %7255
      %v7257 = vsel %vm4042, %v7243, -inf
      %7258 = vmax.xlane.f32.xlu0 %v7257
      %v7259 = vpop.xlane.xlu0 %7258
      %v7260 = vsel %vm4042, %v7244, -inf
      %7261 = vmax.xlane.f32.xlu0 %v7260
      %v7262 = vpop.xlane.xlu0 %7261
      %v7263 = vsel %vm4042, %v7245, -inf
      %7264 = vmax.xlane.f32.xlu0 %v7263
      %v7265 = vpop.xlane.xlu0 %7264
      %v7266 = vsel %vm4042, %v7246, -inf
      %7267 = vmax.xlane.f32.xlu0 %v7266
      %v7268 = vpop.xlane.xlu0 %7267
      %v7269 = vsel %vm4042, %v7247, -inf
      %7270 = vmax.xlane.f32.xlu0 %v7269
      %v7271 = vpop.xlane.xlu0 %7270
      %vm7272 = vcmp.eq.f32.partialorder %v7240, %v7250
      %vm7273 = vcmp.eq.f32.partialorder %v7241, %v7253
      %vm7274 = vcmp.eq.f32.partialorder %v7242, %v7256
      %vm7275 = vcmp.eq.f32.partialorder %v7243, %v7259
      %vm7276 = vcmp.eq.f32.partialorder %v7244, %v7262
      %vm7277 = vcmp.eq.f32.partialorder %v7245, %v7265
      %vm7278 = vcmp.eq.f32.partialorder %v7246, %v7268
      %vm7279 = vcmp.eq.f32.partialorder %v7247, %v7271
      %v7280 = vsel %vm7272, %v7240, 0.0
      %v7281 = vsel %vm7273, %v7241, 0.0
      %v7282 = vsel %vm7274, %v7242, 0.0
      %v7283 = vsel %vm7275, %v7243, 0.0
      %v7284 = vsel %vm7276, %v7244, 0.0
      %v7285 = vsel %vm7277, %v7245, 0.0
      %v7286 = vsel %vm7278, %v7246, 0.0
      %v7287 = vsel %vm7279, %v7247, 0.0
      %v7288 = vadd.f32 %v7280, 1e-07
      %v7289 = vadd.f32 %v7281, 1e-07
      %v7290 = vadd.f32 %v7282, 1e-07
      %v7291 = vadd.f32 %v7283, 1e-07
      %v7292 = vadd.f32 %v7284, 1e-07
      %v7293 = vadd.f32 %v7285, 1e-07
      %v7294 = vadd.f32 %v7286, 1e-07
      %v7295 = vadd.f32 %v7287, 1e-07
      %v7296 = vrcp.pop %v7288
      %v7297 = vmul.f32 %v7280, %v7296
      %v7298 = vrcp.pop %v7289
      %v7299 = vmul.f32 %v7281, %v7298
      %v7300 = vrcp.pop %v7290
      %v7301 = vmul.f32 %v7282, %v7300
      %v7302 = vrcp.pop %v7291
      %v7303 = vmul.f32 %v7283, %v7302
      %v7304 = vrcp.pop %v7292
      %v7305 = vmul.f32 %v7284, %v7304
      %v7306 = vrcp.pop %v7293
      %v7307 = vmul.f32 %v7285, %v7306
      %v7308 = vrcp.pop %v7294
      %v7309 = vmul.f32 %v7286, %v7308
      %v7310 = vrcp.pop %v7295
      %v7311 = vmul.f32 %v7287, %v7310
      %7313 = vset.pattern.permute.xlu0 0
      %7314 = vperm.xlu0 %7313, %v7297
      %v7315 = vpop.permute.xlu0 %7314
      %7318 = vset.pattern.permute.xlu0 0
      %7319 = vperm.xlu0 %7318, %v7299
      %v7320 = vpop.permute.xlu0 %7319
      %7323 = vset.pattern.permute.xlu0 0
      %7324 = vperm.xlu0 %7323, %v7301
      %v7325 = vpop.permute.xlu0 %7324
      %7328 = vset.pattern.permute.xlu0 0
      %7329 = vperm.xlu0 %7328, %v7303
      %v7330 = vpop.permute.xlu0 %7329
      %7333 = vset.pattern.permute.xlu0 0
      %7334 = vperm.xlu0 %7333, %v7305
      %v7335 = vpop.permute.xlu0 %7334
      %7338 = vset.pattern.permute.xlu0 0
      %7339 = vperm.xlu0 %7338, %v7307
      %v7340 = vpop.permute.xlu0 %7339
      %7343 = vset.pattern.permute.xlu0 0
      %7344 = vperm.xlu0 %7343, %v7309
      %v7345 = vpop.permute.xlu0 %7344
      %7348 = vset.pattern.permute.xlu0 0
      %7349 = vperm.xlu0 %7348, %v7311
      %v7350 = vpop.permute.xlu0 %7349
      %v7352 = vmul.f32 %v7315, %v462
      %v7353 = vmul.f32 %v7320, %v463
      %v7354 = vmul.f32 %v7325, %v464
      %v7355 = vmul.f32 %v7330, %v465
      %v7356 = vmul.f32 %v7335, %v466
      %v7357 = vmul.f32 %v7340, %v467
      %v7358 = vmul.f32 %v7345, %v468
      %v7359 = vmul.f32 %v7350, %v469
      %7360 = vset.pattern.permute.xlu0 1
      %7361 = vperm.xlu0 %7360, %v7297
      %v7362 = vpop.permute.xlu0 %7361
      %7364 = vset.pattern.permute.xlu0 1
      %7365 = vperm.xlu0 %7364, %v7299
      %v7366 = vpop.permute.xlu0 %7365
      %7368 = vset.pattern.permute.xlu0 1
      %7369 = vperm.xlu0 %7368, %v7301
      %v7370 = vpop.permute.xlu0 %7369
      %7372 = vset.pattern.permute.xlu0 1
      %7373 = vperm.xlu0 %7372, %v7303
      %v7374 = vpop.permute.xlu0 %7373
      %7376 = vset.pattern.permute.xlu0 1
      %7377 = vperm.xlu0 %7376, %v7305
      %v7378 = vpop.permute.xlu0 %7377
      %7380 = vset.pattern.permute.xlu0 1
      %7381 = vperm.xlu0 %7380, %v7307
      %v7382 = vpop.permute.xlu0 %7381
      %7384 = vset.pattern.permute.xlu0 1
      %7385 = vperm.xlu0 %7384, %v7309
      %v7386 = vpop.permute.xlu0 %7385
      %7388 = vset.pattern.permute.xlu0 1
      %7389 = vperm.xlu0 %7388, %v7311
      %v7390 = vpop.permute.xlu0 %7389
      %v7392 = vmul.f32 %v7362, %v462
      %v7393 = vmul.f32 %v7366, %v463
      %v7394 = vmul.f32 %v7370, %v464
      %v7395 = vmul.f32 %v7374, %v465
      %v7396 = vmul.f32 %v7378, %v466
      %v7397 = vmul.f32 %v7382, %v467
      %v7398 = vmul.f32 %v7386, %v468
      %v7399 = vmul.f32 %v7390, %v469
      %7408 = vrot.lane.b32.xlu0 %v7392, 96
      %v7409 = vpop.permute.xlu0 %7408
      %7410 = vrot.lane.b32.xlu0 %v7393, 96
      %v7411 = vpop.permute.xlu0 %7410
      %7412 = vrot.lane.b32.xlu0 %v7394, 96
      %v7413 = vpop.permute.xlu0 %7412
      %7414 = vrot.lane.b32.xlu0 %v7395, 96
      %v7415 = vpop.permute.xlu0 %7414
      %7416 = vrot.lane.b32.xlu0 %v7396, 96
      %v7417 = vpop.permute.xlu0 %7416
      %7418 = vrot.lane.b32.xlu0 %v7397, 96
      %v7419 = vpop.permute.xlu0 %7418
      %7420 = vrot.lane.b32.xlu0 %v7398, 96
      %v7421 = vpop.permute.xlu0 %7420
      %7422 = vrot.lane.b32.xlu0 %v7399, 96
      %v7423 = vpop.permute.xlu0 %7422
      %v7432 = vadd.f32 %v7352, %v7409
      %v7433 = vadd.f32 %v7353, %v7411
      %v7434 = vadd.f32 %v7354, %v7413
      %v7435 = vadd.f32 %v7355, %v7415
      %v7436 = vadd.f32 %v7356, %v7417
      %v7437 = vadd.f32 %v7357, %v7419
      %v7438 = vadd.f32 %v7358, %v7421
      %v7439 = vadd.f32 %v7359, %v7423
      %7440 = vset.pattern.permute.xlu0 2
      %7441 = vperm.xlu0 %7440, %v7297
      %v7442 = vpop.permute.xlu0 %7441
      %7444 = vset.pattern.permute.xlu0 2
      %7445 = vperm.xlu0 %7444, %v7299
      %v7446 = vpop.permute.xlu0 %7445
      %7448 = vset.pattern.permute.xlu0 2
      %7449 = vperm.xlu0 %7448, %v7301
      %v7450 = vpop.permute.xlu0 %7449
      %7452 = vset.pattern.permute.xlu0 2
      %7453 = vperm.xlu0 %7452, %v7303
      %v7454 = vpop.permute.xlu0 %7453
      %7456 = vset.pattern.permute.xlu0 2
      %7457 = vperm.xlu0 %7456, %v7305
      %v7458 = vpop.permute.xlu0 %7457
      %7460 = vset.pattern.permute.xlu0 2
      %7461 = vperm.xlu0 %7460, %v7307
      %v7462 = vpop.permute.xlu0 %7461
      %7464 = vset.pattern.permute.xlu0 2
      %7465 = vperm.xlu0 %7464, %v7309
      %v7466 = vpop.permute.xlu0 %7465
      %7468 = vset.pattern.permute.xlu0 2
      %7469 = vperm.xlu0 %7468, %v7311
      %v7470 = vpop.permute.xlu0 %7469
      %v7472 = vmul.f32 %v7442, %v462
      %v7473 = vmul.f32 %v7446, %v463
      %v7474 = vmul.f32 %v7450, %v464
      %v7475 = vmul.f32 %v7454, %v465
      %v7476 = vmul.f32 %v7458, %v466
      %v7477 = vmul.f32 %v7462, %v467
      %v7478 = vmul.f32 %v7466, %v468
      %v7479 = vmul.f32 %v7470, %v469
      %7488 = vrot.lane.b32.xlu0 %v7472, 64
      %v7489 = vpop.permute.xlu0 %7488
      %7490 = vrot.lane.b32.xlu0 %v7473, 64
      %v7491 = vpop.permute.xlu0 %7490
      %7492 = vrot.lane.b32.xlu0 %v7474, 64
      %v7493 = vpop.permute.xlu0 %7492
      %7494 = vrot.lane.b32.xlu0 %v7475, 64
      %v7495 = vpop.permute.xlu0 %7494
      %7496 = vrot.lane.b32.xlu0 %v7476, 64
      %v7497 = vpop.permute.xlu0 %7496
      %7498 = vrot.lane.b32.xlu0 %v7477, 64
      %v7499 = vpop.permute.xlu0 %7498
      %7500 = vrot.lane.b32.xlu0 %v7478, 64
      %v7501 = vpop.permute.xlu0 %7500
      %7502 = vrot.lane.b32.xlu0 %v7479, 64
      %v7503 = vpop.permute.xlu0 %7502
      %v7512 = vadd.f32 %v7432, %v7489
      %v7513 = vadd.f32 %v7433, %v7491
      %v7514 = vadd.f32 %v7434, %v7493
      %v7515 = vadd.f32 %v7435, %v7495
      %v7516 = vadd.f32 %v7436, %v7497
      %v7517 = vadd.f32 %v7437, %v7499
      %v7518 = vadd.f32 %v7438, %v7501
      %v7519 = vadd.f32 %v7439, %v7503
      %7520 = vset.pattern.permute.xlu0 3
      %7521 = vperm.xlu0 %7520, %v7297
      %v7522 = vpop.permute.xlu0 %7521
      %7524 = vset.pattern.permute.xlu0 3
      %7525 = vperm.xlu0 %7524, %v7299
      %v7526 = vpop.permute.xlu0 %7525
      %7528 = vset.pattern.permute.xlu0 3
      %7529 = vperm.xlu0 %7528, %v7301
      %v7530 = vpop.permute.xlu0 %7529
      %7532 = vset.pattern.permute.xlu0 3
      %7533 = vperm.xlu0 %7532, %v7303
      %v7534 = vpop.permute.xlu0 %7533
      %7536 = vset.pattern.permute.xlu0 3
      %7537 = vperm.xlu0 %7536, %v7305
      %v7538 = vpop.permute.xlu0 %7537
      %7540 = vset.pattern.permute.xlu0 3
      %7541 = vperm.xlu0 %7540, %v7307
      %v7542 = vpop.permute.xlu0 %7541
      %7544 = vset.pattern.permute.xlu0 3
      %7545 = vperm.xlu0 %7544, %v7309
      %v7546 = vpop.permute.xlu0 %7545
      %7548 = vset.pattern.permute.xlu0 3
      %7549 = vperm.xlu0 %7548, %v7311
      %v7550 = vpop.permute.xlu0 %7549
      %v7552 = vmul.f32 %v7522, %v462
      %v7553 = vmul.f32 %v7526, %v463
      %v7554 = vmul.f32 %v7530, %v464
      %v7555 = vmul.f32 %v7534, %v465
      %v7556 = vmul.f32 %v7538, %v466
      %v7557 = vmul.f32 %v7542, %v467
      %v7558 = vmul.f32 %v7546, %v468
      %v7559 = vmul.f32 %v7550, %v469
      %7568 = vrot.lane.b32.xlu0 %v7552, 32
      %v7569 = vpop.permute.xlu0 %7568
      %7570 = vrot.lane.b32.xlu0 %v7553, 32
      %v7571 = vpop.permute.xlu0 %7570
      %7572 = vrot.lane.b32.xlu0 %v7554, 32
      %v7573 = vpop.permute.xlu0 %7572
      %7574 = vrot.lane.b32.xlu0 %v7555, 32
      %v7575 = vpop.permute.xlu0 %7574
      %7576 = vrot.lane.b32.xlu0 %v7556, 32
      %v7577 = vpop.permute.xlu0 %7576
      %7578 = vrot.lane.b32.xlu0 %v7557, 32
      %v7579 = vpop.permute.xlu0 %7578
      %7580 = vrot.lane.b32.xlu0 %v7558, 32
      %v7581 = vpop.permute.xlu0 %7580
      %7582 = vrot.lane.b32.xlu0 %v7559, 32
      %v7583 = vpop.permute.xlu0 %7582
      %v7592 = vadd.f32 %v7512, %v7569
      %v7593 = vadd.f32 %v7513, %v7571
      %v7594 = vadd.f32 %v7514, %v7573
      %v7595 = vadd.f32 %v7515, %v7575
      %v7596 = vadd.f32 %v7516, %v7577
      %v7597 = vadd.f32 %v7517, %v7579
      %v7598 = vadd.f32 %v7518, %v7581
      %v7599 = vadd.f32 %v7519, %v7583
      %7608 = vrot.lane.b32.xlu0 %v7592, 32
      %v7609 = vpop.permute.xlu0 %7608
      %7610 = vrot.lane.b32.xlu0 %v7593, 32
      %v7611 = vpop.permute.xlu0 %7610
      %7612 = vrot.lane.b32.xlu0 %v7594, 32
      %v7613 = vpop.permute.xlu0 %7612
      %7614 = vrot.lane.b32.xlu0 %v7595, 32
      %v7615 = vpop.permute.xlu0 %7614
      %7616 = vrot.lane.b32.xlu0 %v7596, 32
      %v7617 = vpop.permute.xlu0 %7616
      %7618 = vrot.lane.b32.xlu0 %v7597, 32
      %v7619 = vpop.permute.xlu0 %7618
      %7620 = vrot.lane.b32.xlu0 %v7598, 32
      %v7621 = vpop.permute.xlu0 %7620
      %7622 = vrot.lane.b32.xlu0 %v7599, 32
      %v7623 = vpop.permute.xlu0 %7622
      %v7632 = vsub.f32 %v470, %v7609
      %v7633 = vsub.f32 %v471, %v7611
      %v7634 = vsub.f32 %v472, %v7613
      %v7635 = vsub.f32 %v473, %v7615
      %v7636 = vsub.f32 %v474, %v7617
      %v7637 = vsub.f32 %v475, %v7619
      %v7638 = vsub.f32 %v476, %v7621
      %v7639 = vsub.f32 %v477, %v7623
      %v7640 = vand.u32 2147483647, %v7632
      %v7641 = vand.u32 2147483647, %v7633
      %v7642 = vand.u32 2147483647, %v7634
      %v7643 = vand.u32 2147483647, %v7635
      %v7644 = vand.u32 2147483647, %v7636
      %v7645 = vand.u32 2147483647, %v7637
      %v7646 = vand.u32 2147483647, %v7638
      %v7647 = vand.u32 2147483647, %v7639
      %7656 = vrot.lane.b32.xlu0 %v7640, 96
      %v7657 = vpop.permute.xlu0 %7656
      %7658 = vrot.lane.b32.xlu0 %v7641, 96
      %v7659 = vpop.permute.xlu0 %7658
      %7660 = vrot.lane.b32.xlu0 %v7642, 96
      %v7661 = vpop.permute.xlu0 %7660
      %7662 = vrot.lane.b32.xlu0 %v7643, 96
      %v7663 = vpop.permute.xlu0 %7662
      %7664 = vrot.lane.b32.xlu0 %v7644, 96
      %v7665 = vpop.permute.xlu0 %7664
      %7666 = vrot.lane.b32.xlu0 %v7645, 96
      %v7667 = vpop.permute.xlu0 %7666
      %7668 = vrot.lane.b32.xlu0 %v7646, 96
      %v7669 = vpop.permute.xlu0 %7668
      %7670 = vrot.lane.b32.xlu0 %v7647, 96
      %v7671 = vpop.permute.xlu0 %7670
      %v7680 = vadd.f32 %v7043, %v7657
      %v7681 = vadd.f32 %v7044, %v7659
      %v7682 = vadd.f32 %v7045, %v7661
      %v7683 = vadd.f32 %v7046, %v7663
      %v7684 = vadd.f32 %v7047, %v7665
      %v7685 = vadd.f32 %v7048, %v7667
      %v7686 = vadd.f32 %v7049, %v7669
      %v7687 = vadd.f32 %v7050, %v7671
      %v7688 = vpack.c.bf16 %v7641, %v7640
      %v7689 = vpack.c.bf16 %v7643, %v7642
      %v7690 = vpack.c.bf16 %v7645, %v7644
      %v7691 = vpack.c.bf16 %v7647, %v7646
      %7696 = vrot.lane.b32.xlu0 %v7688, 96
      %v7697 = vpop.permute.xlu0 %7696
      %7698 = vrot.lane.b32.xlu0 %v7689, 96
      %v7699 = vpop.permute.xlu0 %7698
      %7700 = vrot.lane.b32.xlu0 %v7690, 96
      %v7701 = vpop.permute.xlu0 %7700
      %7702 = vrot.lane.b32.xlu0 %v7691, 96
      %v7703 = vpop.permute.xlu0 %7702
      %v7708 = vunpack.c.l.b16 %v556
      %v7709 = vunpack.c.l.b16 %v557
      %v7710 = vunpack.c.l.b16 %v558
      %v7711 = vunpack.c.l.b16 %v559
      %v7712 = vpack.c.b16 %v7709, %v7708
      %v7713 = vpack.c.b16 %v7711, %v7710
      %v7717 = vsel %vm654, %v7697, 0
      %v7720 = vsel %vm654, %v7699, 0
      %v7723 = vsel %vm654, %v7701, 0
      %v7726 = vsel %vm654, %v7703, 0
      %7728 = vmatprep.subr.bf16.mxu0 0
      %7729 = vmatpush1.bf16.msra.mxu0 0
      %7730 = vmatprep.subr.bf16.mxu0 0
      %7731 = vmatpush1.bf16.msra.mxu0 0
      %7732 = vmatprep.subr.bf16.mxu0 0
      %7733 = vmatpush1.bf16.msra.mxu0 0
      %7734 = vmatprep.subr.bf16.mxu0 0
      %7735 = vmatpush1.bf16.msra.mxu0 0
      %7736 = vmatprep.subr.bf16.mxu0 0
      %7737 = vmatpush1.bf16.msra.mxu0 0
      %7738 = vmatprep.subr.bf16.mxu0 0
      %7739 = vmatpush1.bf16.msra.mxu0 0
      %7740 = vmatprep.subr.bf16.mxu0 0
      %7741 = vmatpush1.bf16.msra.mxu0 %v7713
      %7742 = vmatprep.subr.bf16.mxu0 0
      %7743 = vmatpush1.bf16.msra.mxu0 %v7712
      %7744 = vmatprep.subr.bf16.mxu0 0
      %7745 = vmatpush2.bf16.msra.mxu0 0
      %7746 = vmatprep.subr.bf16.mxu0 0
      %7747 = vmatpush2.bf16.msra.mxu0 0
      %7748 = vmatprep.subr.bf16.mxu0 0
      %7749 = vmatpush2.bf16.msra.mxu0 0
      %7750 = vmatprep.subr.bf16.mxu0 0
      %7751 = vmatpush2.bf16.msra.mxu0 0
      %7752 = vmatprep.subr.bf16.mxu0 0
      %7753 = vmatpush2.bf16.msra.mxu0 0
      %7754 = vmatprep.subr.bf16.mxu0 0
      %7755 = vmatpush2.bf16.msra.mxu0 0
      %7756 = vmatprep.subr.bf16.mxu0 0
      %7757 = vmatpush2.bf16.msra.mxu0 0
      %7758 = vmatprep.subr.bf16.mxu0 0
      %7759 = vmatpush2.bf16.msra.mxu0 0
      %7760 = vmatprep.mubr.bf16.mxu0 0
      %7761 = vmatmul.mubr.bf16.gmra.mxu0 %v7717
      %v7762 = vpop.f32.mrf.mxu0
      %v7763 = vadd.f32 0.0, %v7762
      %v7764 = vpop.f32.mrf.mxu0
      %v7765 = vpop.f32.mrf.mxu0
      %v7766 = vadd.f32 0.0, %v7765
      %v7767 = vpop.f32.mrf.mxu0
      %7768 = vmatprep.mubr.bf16.mxu0 0
      %7769 = vmatmul.mubr.bf16.gmra.mxu0 %v7720
      %v7770 = vpop.f32.mrf.mxu0
      %v7771 = vadd.f32 0.0, %v7770
      %v7772 = vpop.f32.mrf.mxu0
      %v7773 = vpop.f32.mrf.mxu0
      %v7774 = vadd.f32 0.0, %v7773
      %v7775 = vpop.f32.mrf.mxu0
      %7776 = vmatprep.mubr.bf16.mxu0 0
      %7777 = vmatmul.mubr.bf16.gmra.mxu0 %v7723
      %v7778 = vpop.f32.mrf.mxu0
      %v7779 = vadd.f32 0.0, %v7778
      %v7780 = vpop.f32.mrf.mxu0
      %v7781 = vpop.f32.mrf.mxu0
      %v7782 = vadd.f32 0.0, %v7781
      %v7783 = vpop.f32.mrf.mxu0
      %7784 = vmatprep.mubr.bf16.mxu0 0
      %7785 = vmatmul.mubr.bf16.gmra.mxu0 %v7726
      %v7786 = vpop.f32.mrf.mxu0
      %v7787 = vadd.f32 0.0, %v7786
      %v7788 = vpop.f32.mrf.mxu0
      %v7789 = vpop.f32.mrf.mxu0
      %v7790 = vadd.f32 0.0, %v7789
      %v7791 = vpop.f32.mrf.mxu0
      %7792 = vdwg.mxu0
      %v7793 = vadd.f32 %v7144, %v7763
      %v7794 = vadd.f32 %v7145, %v7766
      %v7795 = vadd.f32 %v7146, %v7771
      %v7796 = vadd.f32 %v7147, %v7774
      %v7797 = vadd.f32 %v7148, %v7779
      %v7798 = vadd.f32 %v7149, %v7782
      %v7799 = vadd.f32 %v7150, %v7787
      %v7800 = vadd.f32 %v7151, %v7790
      %v7801 = vsel %vm4042, %v3980, -inf
      %7802 = vmax.xlane.f32.xlu0 %v7801
      %v7803 = vpop.xlane.xlu0 %7802
      %v7804 = vsel %vm4042, %v3983, -inf
      %7805 = vmax.xlane.f32.xlu0 %v7804
      %v7806 = vpop.xlane.xlu0 %7805
      %v7807 = vsel %vm4042, %v3988, -inf
      %7808 = vmax.xlane.f32.xlu0 %v7807
      %v7809 = vpop.xlane.xlu0 %7808
      %v7810 = vsel %vm4042, %v3991, -inf
      %7811 = vmax.xlane.f32.xlu0 %v7810
      %v7812 = vpop.xlane.xlu0 %7811
      %v7813 = vsel %vm4042, %v3996, -inf
      %7814 = vmax.xlane.f32.xlu0 %v7813
      %v7815 = vpop.xlane.xlu0 %7814
      %v7816 = vsel %vm4042, %v3999, -inf
      %7817 = vmax.xlane.f32.xlu0 %v7816
      %v7818 = vpop.xlane.xlu0 %7817
      %v7819 = vsel %vm4042, %v4004, -inf
      %7820 = vmax.xlane.f32.xlu0 %v7819
      %v7821 = vpop.xlane.xlu0 %7820
      %v7822 = vsel %vm4042, %v4007, -inf
      %7823 = vmax.xlane.f32.xlu0 %v7822
      %v7824 = vpop.xlane.xlu0 %7823
      %v7825 = vsub.f32 %v3980, %v7803
      %v7826 = vsub.f32 %v3983, %v7806
      %v7827 = vsub.f32 %v3988, %v7809
      %v7828 = vsub.f32 %v3991, %v7812
      %v7829 = vsub.f32 %v3996, %v7815
      %v7830 = vsub.f32 %v3999, %v7818
      %v7831 = vsub.f32 %v4004, %v7821
      %v7832 = vsub.f32 %v4007, %v7824
      %v7833 = vmul.f32 %v7825, 1.442695
      %v7834 = vpow.pop %v7833
      %v7835 = vmul.f32 %v7826, 1.442695
      %v7836 = vpow.pop %v7835
      %v7837 = vmul.f32 %v7827, 1.442695
      %v7838 = vpow.pop %v7837
      %v7839 = vmul.f32 %v7828, 1.442695
      %v7840 = vpow.pop %v7839
      %v7841 = vmul.f32 %v7829, 1.442695
      %v7842 = vpow.pop %v7841
      %v7843 = vmul.f32 %v7830, 1.442695
      %v7844 = vpow.pop %v7843
      %v7845 = vmul.f32 %v7831, 1.442695
      %v7846 = vpow.pop %v7845
      %v7847 = vmul.f32 %v7832, 1.442695
      %v7848 = vpow.pop %v7847
      %v7849 = vsel %vm4042, %v7834, 0.0
      %7850 = vadd.xlane.f32.xlu0 %v7849
      %v7851 = vpop.xlane.xlu0 %7850
      %v7852 = vsel %vm4042, %v7836, 0.0
      %7853 = vadd.xlane.f32.xlu0 %v7852
      %v7854 = vpop.xlane.xlu0 %7853
      %v7855 = vsel %vm4042, %v7838, 0.0
      %7856 = vadd.xlane.f32.xlu0 %v7855
      %v7857 = vpop.xlane.xlu0 %7856
      %v7858 = vsel %vm4042, %v7840, 0.0
      %7859 = vadd.xlane.f32.xlu0 %v7858
      %v7860 = vpop.xlane.xlu0 %7859
      %v7861 = vsel %vm4042, %v7842, 0.0
      %7862 = vadd.xlane.f32.xlu0 %v7861
      %v7863 = vpop.xlane.xlu0 %7862
      %v7864 = vsel %vm4042, %v7844, 0.0
      %7865 = vadd.xlane.f32.xlu0 %v7864
      %v7866 = vpop.xlane.xlu0 %7865
      %v7867 = vsel %vm4042, %v7846, 0.0
      %7868 = vadd.xlane.f32.xlu0 %v7867
      %v7869 = vpop.xlane.xlu0 %7868
      %v7870 = vsel %vm4042, %v7848, 0.0
      %7871 = vadd.xlane.f32.xlu0 %v7870
      %v7872 = vpop.xlane.xlu0 %7871
      %v7873 = vrcp.pop %v7851
      %v7874 = vrcp.pop %v7854
      %v7875 = vrcp.pop %v7857
      %v7876 = vrcp.pop %v7860
      %v7877 = vrcp.pop %v7863
      %v7878 = vrcp.pop %v7866
      %v7879 = vrcp.pop %v7869
      %v7880 = vrcp.pop %v7872
      %v7881 = vmul.f32 %v7834, %v7873
      %v7882 = vmul.f32 %v7836, %v7874
      %v7883 = vmul.f32 %v7838, %v7875
      %v7884 = vmul.f32 %v7840, %v7876
      %v7885 = vmul.f32 %v7842, %v7877
      %v7886 = vmul.f32 %v7844, %v7878
      %v7887 = vmul.f32 %v7846, %v7879
      %v7888 = vmul.f32 %v7848, %v7880
      %v7889 = vmul.f32 %v7881, %v478
      %v7890 = vmul.f32 %v7882, %v479
      %v7891 = vmul.f32 %v7883, %v480
      %v7892 = vmul.f32 %v7884, %v481
      %v7893 = vmul.f32 %v7885, %v482
      %v7894 = vmul.f32 %v7886, %v483
      %v7895 = vmul.f32 %v7887, %v484
      %v7896 = vmul.f32 %v7888, %v485
      %v7897 = vsel %vm4042, %v7889, -inf
      %7898 = vmax.xlane.f32.xlu0 %v7897
      %v7899 = vpop.xlane.xlu0 %7898
      %v7900 = vsel %vm4042, %v7890, -inf
      %7901 = vmax.xlane.f32.xlu0 %v7900
      %v7902 = vpop.xlane.xlu0 %7901
      %v7903 = vsel %vm4042, %v7891, -inf
      %7904 = vmax.xlane.f32.xlu0 %v7903
      %v7905 = vpop.xlane.xlu0 %7904
      %v7906 = vsel %vm4042, %v7892, -inf
      %7907 = vmax.xlane.f32.xlu0 %v7906
      %v7908 = vpop.xlane.xlu0 %7907
      %v7909 = vsel %vm4042, %v7893, -inf
      %7910 = vmax.xlane.f32.xlu0 %v7909
      %v7911 = vpop.xlane.xlu0 %7910
      %v7912 = vsel %vm4042, %v7894, -inf
      %7913 = vmax.xlane.f32.xlu0 %v7912
      %v7914 = vpop.xlane.xlu0 %7913
      %v7915 = vsel %vm4042, %v7895, -inf
      %7916 = vmax.xlane.f32.xlu0 %v7915
      %v7917 = vpop.xlane.xlu0 %7916
      %v7918 = vsel %vm4042, %v7896, -inf
      %7919 = vmax.xlane.f32.xlu0 %v7918
      %v7920 = vpop.xlane.xlu0 %7919
      %vm7921 = vcmp.eq.f32.partialorder %v7889, %v7899
      %vm7922 = vcmp.eq.f32.partialorder %v7890, %v7902
      %vm7923 = vcmp.eq.f32.partialorder %v7891, %v7905
      %vm7924 = vcmp.eq.f32.partialorder %v7892, %v7908
      %vm7925 = vcmp.eq.f32.partialorder %v7893, %v7911
      %vm7926 = vcmp.eq.f32.partialorder %v7894, %v7914
      %vm7927 = vcmp.eq.f32.partialorder %v7895, %v7917
      %vm7928 = vcmp.eq.f32.partialorder %v7896, %v7920
      %v7929 = vsel %vm7921, %v7889, 0.0
      %v7930 = vsel %vm7922, %v7890, 0.0
      %v7931 = vsel %vm7923, %v7891, 0.0
      %v7932 = vsel %vm7924, %v7892, 0.0
      %v7933 = vsel %vm7925, %v7893, 0.0
      %v7934 = vsel %vm7926, %v7894, 0.0
      %v7935 = vsel %vm7927, %v7895, 0.0
      %v7936 = vsel %vm7928, %v7896, 0.0
      %v7937 = vadd.f32 %v7929, 1e-07
      %v7938 = vadd.f32 %v7930, 1e-07
      %v7939 = vadd.f32 %v7931, 1e-07
      %v7940 = vadd.f32 %v7932, 1e-07
      %v7941 = vadd.f32 %v7933, 1e-07
      %v7942 = vadd.f32 %v7934, 1e-07
      %v7943 = vadd.f32 %v7935, 1e-07
      %v7944 = vadd.f32 %v7936, 1e-07
      %v7945 = vrcp.pop %v7937
      %v7946 = vmul.f32 %v7929, %v7945
      %v7947 = vrcp.pop %v7938
      %v7948 = vmul.f32 %v7930, %v7947
      %v7949 = vrcp.pop %v7939
      %v7950 = vmul.f32 %v7931, %v7949
      %v7951 = vrcp.pop %v7940
      %v7952 = vmul.f32 %v7932, %v7951
      %v7953 = vrcp.pop %v7941
      %v7954 = vmul.f32 %v7933, %v7953
      %v7955 = vrcp.pop %v7942
      %v7956 = vmul.f32 %v7934, %v7955
      %v7957 = vrcp.pop %v7943
      %v7958 = vmul.f32 %v7935, %v7957
      %v7959 = vrcp.pop %v7944
      %v7960 = vmul.f32 %v7936, %v7959
      %7962 = vset.pattern.permute.xlu0 0
      %7963 = vperm.xlu0 %7962, %v7946
      %v7964 = vpop.permute.xlu0 %7963
      %7967 = vset.pattern.permute.xlu0 0
      %7968 = vperm.xlu0 %7967, %v7948
      %v7969 = vpop.permute.xlu0 %7968
      %7972 = vset.pattern.permute.xlu0 0
      %7973 = vperm.xlu0 %7972, %v7950
      %v7974 = vpop.permute.xlu0 %7973
      %7977 = vset.pattern.permute.xlu0 0
      %7978 = vperm.xlu0 %7977, %v7952
      %v7979 = vpop.permute.xlu0 %7978
      %7982 = vset.pattern.permute.xlu0 0
      %7983 = vperm.xlu0 %7982, %v7954
      %v7984 = vpop.permute.xlu0 %7983
      %7987 = vset.pattern.permute.xlu0 0
      %7988 = vperm.xlu0 %7987, %v7956
      %v7989 = vpop.permute.xlu0 %7988
      %7992 = vset.pattern.permute.xlu0 0
      %7993 = vperm.xlu0 %7992, %v7958
      %v7994 = vpop.permute.xlu0 %7993
      %7997 = vset.pattern.permute.xlu0 0
      %7998 = vperm.xlu0 %7997, %v7960
      %v7999 = vpop.permute.xlu0 %7998
      %v8001 = vmul.f32 %v7964, %v462
      %v8002 = vmul.f32 %v7969, %v463
      %v8003 = vmul.f32 %v7974, %v464
      %v8004 = vmul.f32 %v7979, %v465
      %v8005 = vmul.f32 %v7984, %v466
      %v8006 = vmul.f32 %v7989, %v467
      %v8007 = vmul.f32 %v7994, %v468
      %v8008 = vmul.f32 %v7999, %v469
      %8009 = vset.pattern.permute.xlu0 1
      %8010 = vperm.xlu0 %8009, %v7946
      %v8011 = vpop.permute.xlu0 %8010
      %8013 = vset.pattern.permute.xlu0 1
      %8014 = vperm.xlu0 %8013, %v7948
      %v8015 = vpop.permute.xlu0 %8014
      %8017 = vset.pattern.permute.xlu0 1
      %8018 = vperm.xlu0 %8017, %v7950
      %v8019 = vpop.permute.xlu0 %8018
      %8021 = vset.pattern.permute.xlu0 1
      %8022 = vperm.xlu0 %8021, %v7952
      %v8023 = vpop.permute.xlu0 %8022
      %8025 = vset.pattern.permute.xlu0 1
      %8026 = vperm.xlu0 %8025, %v7954
      %v8027 = vpop.permute.xlu0 %8026
      %8029 = vset.pattern.permute.xlu0 1
      %8030 = vperm.xlu0 %8029, %v7956
      %v8031 = vpop.permute.xlu0 %8030
      %8033 = vset.pattern.permute.xlu0 1
      %8034 = vperm.xlu0 %8033, %v7958
      %v8035 = vpop.permute.xlu0 %8034
      %8037 = vset.pattern.permute.xlu0 1
      %8038 = vperm.xlu0 %8037, %v7960
      %v8039 = vpop.permute.xlu0 %8038
      %v8041 = vmul.f32 %v8011, %v462
      %v8042 = vmul.f32 %v8015, %v463
      %v8043 = vmul.f32 %v8019, %v464
      %v8044 = vmul.f32 %v8023, %v465
      %v8045 = vmul.f32 %v8027, %v466
      %v8046 = vmul.f32 %v8031, %v467
      %v8047 = vmul.f32 %v8035, %v468
      %v8048 = vmul.f32 %v8039, %v469
      %8057 = vrot.lane.b32.xlu0 %v8041, 96
      %v8058 = vpop.permute.xlu0 %8057
      %8059 = vrot.lane.b32.xlu0 %v8042, 96
      %v8060 = vpop.permute.xlu0 %8059
      %8061 = vrot.lane.b32.xlu0 %v8043, 96
      %v8062 = vpop.permute.xlu0 %8061
      %8063 = vrot.lane.b32.xlu0 %v8044, 96
      %v8064 = vpop.permute.xlu0 %8063
      %8065 = vrot.lane.b32.xlu0 %v8045, 96
      %v8066 = vpop.permute.xlu0 %8065
      %8067 = vrot.lane.b32.xlu0 %v8046, 96
      %v8068 = vpop.permute.xlu0 %8067
      %8069 = vrot.lane.b32.xlu0 %v8047, 96
      %v8070 = vpop.permute.xlu0 %8069
      %8071 = vrot.lane.b32.xlu0 %v8048, 96
      %v8072 = vpop.permute.xlu0 %8071
      %v8081 = vadd.f32 %v8001, %v8058
      %v8082 = vadd.f32 %v8002, %v8060
      %v8083 = vadd.f32 %v8003, %v8062
      %v8084 = vadd.f32 %v8004, %v8064
      %v8085 = vadd.f32 %v8005, %v8066
      %v8086 = vadd.f32 %v8006, %v8068
      %v8087 = vadd.f32 %v8007, %v8070
      %v8088 = vadd.f32 %v8008, %v8072
      %8089 = vset.pattern.permute.xlu0 2
      %8090 = vperm.xlu0 %8089, %v7946
      %v8091 = vpop.permute.xlu0 %8090
      %8093 = vset.pattern.permute.xlu0 2
      %8094 = vperm.xlu0 %8093, %v7948
      %v8095 = vpop.permute.xlu0 %8094
      %8097 = vset.pattern.permute.xlu0 2
      %8098 = vperm.xlu0 %8097, %v7950
      %v8099 = vpop.permute.xlu0 %8098
      %8101 = vset.pattern.permute.xlu0 2
      %8102 = vperm.xlu0 %8101, %v7952
      %v8103 = vpop.permute.xlu0 %8102
      %8105 = vset.pattern.permute.xlu0 2
      %8106 = vperm.xlu0 %8105, %v7954
      %v8107 = vpop.permute.xlu0 %8106
      %8109 = vset.pattern.permute.xlu0 2
      %8110 = vperm.xlu0 %8109, %v7956
      %v8111 = vpop.permute.xlu0 %8110
      %8113 = vset.pattern.permute.xlu0 2
      %8114 = vperm.xlu0 %8113, %v7958
      %v8115 = vpop.permute.xlu0 %8114
      %8117 = vset.pattern.permute.xlu0 2
      %8118 = vperm.xlu0 %8117, %v7960
      %v8119 = vpop.permute.xlu0 %8118
      %v8121 = vmul.f32 %v8091, %v462
      %v8122 = vmul.f32 %v8095, %v463
      %v8123 = vmul.f32 %v8099, %v464
      %v8124 = vmul.f32 %v8103, %v465
      %v8125 = vmul.f32 %v8107, %v466
      %v8126 = vmul.f32 %v8111, %v467
      %v8127 = vmul.f32 %v8115, %v468
      %v8128 = vmul.f32 %v8119, %v469
      %8137 = vrot.lane.b32.xlu0 %v8121, 64
      %v8138 = vpop.permute.xlu0 %8137
      %8139 = vrot.lane.b32.xlu0 %v8122, 64
      %v8140 = vpop.permute.xlu0 %8139
      %8141 = vrot.lane.b32.xlu0 %v8123, 64
      %v8142 = vpop.permute.xlu0 %8141
      %8143 = vrot.lane.b32.xlu0 %v8124, 64
      %v8144 = vpop.permute.xlu0 %8143
      %8145 = vrot.lane.b32.xlu0 %v8125, 64
      %v8146 = vpop.permute.xlu0 %8145
      %8147 = vrot.lane.b32.xlu0 %v8126, 64
      %v8148 = vpop.permute.xlu0 %8147
      %8149 = vrot.lane.b32.xlu0 %v8127, 64
      %v8150 = vpop.permute.xlu0 %8149
      %8151 = vrot.lane.b32.xlu0 %v8128, 64
      %v8152 = vpop.permute.xlu0 %8151
      %v8161 = vadd.f32 %v8081, %v8138
      %v8162 = vadd.f32 %v8082, %v8140
      %v8163 = vadd.f32 %v8083, %v8142
      %v8164 = vadd.f32 %v8084, %v8144
      %v8165 = vadd.f32 %v8085, %v8146
      %v8166 = vadd.f32 %v8086, %v8148
      %v8167 = vadd.f32 %v8087, %v8150
      %v8168 = vadd.f32 %v8088, %v8152
      %8169 = vset.pattern.permute.xlu0 3
      %8170 = vperm.xlu0 %8169, %v7946
      %v8171 = vpop.permute.xlu0 %8170
      %8173 = vset.pattern.permute.xlu0 3
      %8174 = vperm.xlu0 %8173, %v7948
      %v8175 = vpop.permute.xlu0 %8174
      %8177 = vset.pattern.permute.xlu0 3
      %8178 = vperm.xlu0 %8177, %v7950
      %v8179 = vpop.permute.xlu0 %8178
      %8181 = vset.pattern.permute.xlu0 3
      %8182 = vperm.xlu0 %8181, %v7952
      %v8183 = vpop.permute.xlu0 %8182
      %8185 = vset.pattern.permute.xlu0 3
      %8186 = vperm.xlu0 %8185, %v7954
      %v8187 = vpop.permute.xlu0 %8186
      %8189 = vset.pattern.permute.xlu0 3
      %8190 = vperm.xlu0 %8189, %v7956
      %v8191 = vpop.permute.xlu0 %8190
      %8193 = vset.pattern.permute.xlu0 3
      %8194 = vperm.xlu0 %8193, %v7958
      %v8195 = vpop.permute.xlu0 %8194
      %8197 = vset.pattern.permute.xlu0 3
      %8198 = vperm.xlu0 %8197, %v7960
      %v8199 = vpop.permute.xlu0 %8198
      %v8201 = vmul.f32 %v8171, %v462
      %v8202 = vmul.f32 %v8175, %v463
      %v8203 = vmul.f32 %v8179, %v464
      %v8204 = vmul.f32 %v8183, %v465
      %v8205 = vmul.f32 %v8187, %v466
      %v8206 = vmul.f32 %v8191, %v467
      %v8207 = vmul.f32 %v8195, %v468
      %v8208 = vmul.f32 %v8199, %v469
      %8217 = vrot.lane.b32.xlu0 %v8201, 32
      %v8218 = vpop.permute.xlu0 %8217
      %8219 = vrot.lane.b32.xlu0 %v8202, 32
      %v8220 = vpop.permute.xlu0 %8219
      %8221 = vrot.lane.b32.xlu0 %v8203, 32
      %v8222 = vpop.permute.xlu0 %8221
      %8223 = vrot.lane.b32.xlu0 %v8204, 32
      %v8224 = vpop.permute.xlu0 %8223
      %8225 = vrot.lane.b32.xlu0 %v8205, 32
      %v8226 = vpop.permute.xlu0 %8225
      %8227 = vrot.lane.b32.xlu0 %v8206, 32
      %v8228 = vpop.permute.xlu0 %8227
      %8229 = vrot.lane.b32.xlu0 %v8207, 32
      %v8230 = vpop.permute.xlu0 %8229
      %8231 = vrot.lane.b32.xlu0 %v8208, 32
      %v8232 = vpop.permute.xlu0 %8231
      %v8241 = vadd.f32 %v8161, %v8218
      %v8242 = vadd.f32 %v8162, %v8220
      %v8243 = vadd.f32 %v8163, %v8222
      %v8244 = vadd.f32 %v8164, %v8224
      %v8245 = vadd.f32 %v8165, %v8226
      %v8246 = vadd.f32 %v8166, %v8228
      %v8247 = vadd.f32 %v8167, %v8230
      %v8248 = vadd.f32 %v8168, %v8232
      %8257 = vrot.lane.b32.xlu0 %v8241, 64
      %v8258 = vpop.permute.xlu0 %8257
      %8259 = vrot.lane.b32.xlu0 %v8242, 64
      %v8260 = vpop.permute.xlu0 %8259
      %8261 = vrot.lane.b32.xlu0 %v8243, 64
      %v8262 = vpop.permute.xlu0 %8261
      %8263 = vrot.lane.b32.xlu0 %v8244, 64
      %v8264 = vpop.permute.xlu0 %8263
      %8265 = vrot.lane.b32.xlu0 %v8245, 64
      %v8266 = vpop.permute.xlu0 %8265
      %8267 = vrot.lane.b32.xlu0 %v8246, 64
      %v8268 = vpop.permute.xlu0 %8267
      %8269 = vrot.lane.b32.xlu0 %v8247, 64
      %v8270 = vpop.permute.xlu0 %8269
      %8271 = vrot.lane.b32.xlu0 %v8248, 64
      %v8272 = vpop.permute.xlu0 %8271
      %v8281 = vsub.f32 %v470, %v8258
      %v8282 = vsub.f32 %v471, %v8260
      %v8283 = vsub.f32 %v472, %v8262
      %v8284 = vsub.f32 %v473, %v8264
      %v8285 = vsub.f32 %v474, %v8266
      %v8286 = vsub.f32 %v475, %v8268
      %v8287 = vsub.f32 %v476, %v8270
      %v8288 = vsub.f32 %v477, %v8272
      %v8289 = vand.u32 2147483647, %v8281
      %v8290 = vand.u32 2147483647, %v8282
      %v8291 = vand.u32 2147483647, %v8283
      %v8292 = vand.u32 2147483647, %v8284
      %v8293 = vand.u32 2147483647, %v8285
      %v8294 = vand.u32 2147483647, %v8286
      %v8295 = vand.u32 2147483647, %v8287
      %v8296 = vand.u32 2147483647, %v8288
      %8305 = vrot.lane.b32.xlu0 %v8289, 64
      %v8306 = vpop.permute.xlu0 %8305
      %8307 = vrot.lane.b32.xlu0 %v8290, 64
      %v8308 = vpop.permute.xlu0 %8307
      %8309 = vrot.lane.b32.xlu0 %v8291, 64
      %v8310 = vpop.permute.xlu0 %8309
      %8311 = vrot.lane.b32.xlu0 %v8292, 64
      %v8312 = vpop.permute.xlu0 %8311
      %8313 = vrot.lane.b32.xlu0 %v8293, 64
      %v8314 = vpop.permute.xlu0 %8313
      %8315 = vrot.lane.b32.xlu0 %v8294, 64
      %v8316 = vpop.permute.xlu0 %8315
      %8317 = vrot.lane.b32.xlu0 %v8295, 64
      %v8318 = vpop.permute.xlu0 %8317
      %8319 = vrot.lane.b32.xlu0 %v8296, 64
      %v8320 = vpop.permute.xlu0 %8319
      %v8329 = vadd.f32 %v7680, %v8306
      %v8330 = vadd.f32 %v7681, %v8308
      %v8331 = vadd.f32 %v7682, %v8310
      %v8332 = vadd.f32 %v7683, %v8312
      %v8333 = vadd.f32 %v7684, %v8314
      %v8334 = vadd.f32 %v7685, %v8316
      %v8335 = vadd.f32 %v7686, %v8318
      %v8336 = vadd.f32 %v7687, %v8320
      %v8337 = vpack.c.bf16 %v8290, %v8289
      %v8338 = vpack.c.bf16 %v8292, %v8291
      %v8339 = vpack.c.bf16 %v8294, %v8293
      %v8340 = vpack.c.bf16 %v8296, %v8295
      %8345 = vrot.lane.b32.xlu0 %v8337, 64
      %v8346 = vpop.permute.xlu0 %8345
      %8347 = vrot.lane.b32.xlu0 %v8338, 64
      %v8348 = vpop.permute.xlu0 %8347
      %8349 = vrot.lane.b32.xlu0 %v8339, 64
      %v8350 = vpop.permute.xlu0 %8349
      %8351 = vrot.lane.b32.xlu0 %v8340, 64
      %v8352 = vpop.permute.xlu0 %8351
      %v8357 = vunpack.c.l.b16 %v560
      %v8358 = vunpack.c.l.b16 %v561
      %v8359 = vunpack.c.l.b16 %v562
      %v8360 = vunpack.c.l.b16 %v563
      %v8361 = vpack.c.b16 %v8358, %v8357
      %v8362 = vpack.c.b16 %v8360, %v8359
      %v8366 = vsel %vm654, %v8346, 0
      %v8369 = vsel %vm654, %v8348, 0
      %v8372 = vsel %vm654, %v8350, 0
      %v8375 = vsel %vm654, %v8352, 0
      %8377 = vmatprep.subr.bf16.mxu0 0
      %8378 = vmatpush1.bf16.msra.mxu0 0
      %8379 = vmatprep.subr.bf16.mxu0 0
      %8380 = vmatpush1.bf16.msra.mxu0 0
      %8381 = vmatprep.subr.bf16.mxu0 0
      %8382 = vmatpush1.bf16.msra.mxu0 0
      %8383 = vmatprep.subr.bf16.mxu0 0
      %8384 = vmatpush1.bf16.msra.mxu0 0
      %8385 = vmatprep.subr.bf16.mxu0 0
      %8386 = vmatpush1.bf16.msra.mxu0 0
      %8387 = vmatprep.subr.bf16.mxu0 0
      %8388 = vmatpush1.bf16.msra.mxu0 0
      %8389 = vmatprep.subr.bf16.mxu0 0
      %8390 = vmatpush1.bf16.msra.mxu0 %v8362
      %8391 = vmatprep.subr.bf16.mxu0 0
      %8392 = vmatpush1.bf16.msra.mxu0 %v8361
      %8393 = vmatprep.subr.bf16.mxu0 0
      %8394 = vmatpush2.bf16.msra.mxu0 0
      %8395 = vmatprep.subr.bf16.mxu0 0
      %8396 = vmatpush2.bf16.msra.mxu0 0
      %8397 = vmatprep.subr.bf16.mxu0 0
      %8398 = vmatpush2.bf16.msra.mxu0 0
      %8399 = vmatprep.subr.bf16.mxu0 0
      %8400 = vmatpush2.bf16.msra.mxu0 0
      %8401 = vmatprep.subr.bf16.mxu0 0
      %8402 = vmatpush2.bf16.msra.mxu0 0
      %8403 = vmatprep.subr.bf16.mxu0 0
      %8404 = vmatpush2.bf16.msra.mxu0 0
      %8405 = vmatprep.subr.bf16.mxu0 0
      %8406 = vmatpush2.bf16.msra.mxu0 0
      %8407 = vmatprep.subr.bf16.mxu0 0
      %8408 = vmatpush2.bf16.msra.mxu0 0
      %8409 = vmatprep.mubr.bf16.mxu0 0
      %8410 = vmatmul.mubr.bf16.gmra.mxu0 %v8366
      %v8411 = vpop.f32.mrf.mxu0
      %v8412 = vadd.f32 0.0, %v8411
      %v8413 = vpop.f32.mrf.mxu0
      %v8414 = vpop.f32.mrf.mxu0
      %v8415 = vadd.f32 0.0, %v8414
      %v8416 = vpop.f32.mrf.mxu0
      %8417 = vmatprep.mubr.bf16.mxu0 0
      %8418 = vmatmul.mubr.bf16.gmra.mxu0 %v8369
      %v8419 = vpop.f32.mrf.mxu0
      %v8420 = vadd.f32 0.0, %v8419
      %v8421 = vpop.f32.mrf.mxu0
      %v8422 = vpop.f32.mrf.mxu0
      %v8423 = vadd.f32 0.0, %v8422
      %v8424 = vpop.f32.mrf.mxu0
      %8425 = vmatprep.mubr.bf16.mxu0 0
      %8426 = vmatmul.mubr.bf16.gmra.mxu0 %v8372
      %v8427 = vpop.f32.mrf.mxu0
      %v8428 = vadd.f32 0.0, %v8427
      %v8429 = vpop.f32.mrf.mxu0
      %v8430 = vpop.f32.mrf.mxu0
      %v8431 = vadd.f32 0.0, %v8430
      %v8432 = vpop.f32.mrf.mxu0
      %8433 = vmatprep.mubr.bf16.mxu0 0
      %8434 = vmatmul.mubr.bf16.gmra.mxu0 %v8375
      %v8435 = vpop.f32.mrf.mxu0
      %v8436 = vadd.f32 0.0, %v8435
      %v8437 = vpop.f32.mrf.mxu0
      %v8438 = vpop.f32.mrf.mxu0
      %v8439 = vadd.f32 0.0, %v8438
      %v8440 = vpop.f32.mrf.mxu0
      %8441 = vdwg.mxu0
      %v8442 = vadd.f32 %v7793, %v8412
      %v8443 = vadd.f32 %v7794, %v8415
      %v8444 = vadd.f32 %v7795, %v8420
      %v8445 = vadd.f32 %v7796, %v8423
      %v8446 = vadd.f32 %v7797, %v8428
      %v8447 = vadd.f32 %v7798, %v8431
      %v8448 = vadd.f32 %v7799, %v8436
      %v8449 = vadd.f32 %v7800, %v8439
      %v8450 = vsel %vm4042, %v4012, -inf
      %8451 = vmax.xlane.f32.xlu0 %v8450
      %v8452 = vpop.xlane.xlu0 %8451
      %v8453 = vsel %vm4042, %v4015, -inf
      %8454 = vmax.xlane.f32.xlu0 %v8453
      %v8455 = vpop.xlane.xlu0 %8454
      %v8456 = vsel %vm4042, %v4020, -inf
      %8457 = vmax.xlane.f32.xlu0 %v8456
      %v8458 = vpop.xlane.xlu0 %8457
      %v8459 = vsel %vm4042, %v4023, -inf
      %8460 = vmax.xlane.f32.xlu0 %v8459
      %v8461 = vpop.xlane.xlu0 %8460
      %v8462 = vsel %vm4042, %v4028, -inf
      %8463 = vmax.xlane.f32.xlu0 %v8462
      %v8464 = vpop.xlane.xlu0 %8463
      %v8465 = vsel %vm4042, %v4031, -inf
      %8466 = vmax.xlane.f32.xlu0 %v8465
      %v8467 = vpop.xlane.xlu0 %8466
      %v8468 = vsel %vm4042, %v4036, -inf
      %8469 = vmax.xlane.f32.xlu0 %v8468
      %v8470 = vpop.xlane.xlu0 %8469
      %v8471 = vsel %vm4042, %v4039, -inf
      %8472 = vmax.xlane.f32.xlu0 %v8471
      %v8473 = vpop.xlane.xlu0 %8472
      %v8474 = vsub.f32 %v4012, %v8452
      %v8475 = vsub.f32 %v4015, %v8455
      %v8476 = vsub.f32 %v4020, %v8458
      %v8477 = vsub.f32 %v4023, %v8461
      %v8478 = vsub.f32 %v4028, %v8464
      %v8479 = vsub.f32 %v4031, %v8467
      %v8480 = vsub.f32 %v4036, %v8470
      %v8481 = vsub.f32 %v4039, %v8473
      %v8482 = vmul.f32 %v8474, 1.442695
      %v8483 = vpow.pop %v8482
      %v8484 = vmul.f32 %v8475, 1.442695
      %v8485 = vpow.pop %v8484
      %v8486 = vmul.f32 %v8476, 1.442695
      %v8487 = vpow.pop %v8486
      %v8488 = vmul.f32 %v8477, 1.442695
      %v8489 = vpow.pop %v8488
      %v8490 = vmul.f32 %v8478, 1.442695
      %v8491 = vpow.pop %v8490
      %v8492 = vmul.f32 %v8479, 1.442695
      %v8493 = vpow.pop %v8492
      %v8494 = vmul.f32 %v8480, 1.442695
      %v8495 = vpow.pop %v8494
      %v8496 = vmul.f32 %v8481, 1.442695
      %v8497 = vpow.pop %v8496
      %v8498 = vsel %vm4042, %v8483, 0.0
      %8499 = vadd.xlane.f32.xlu0 %v8498
      %v8500 = vpop.xlane.xlu0 %8499
      %v8501 = vsel %vm4042, %v8485, 0.0
      %8502 = vadd.xlane.f32.xlu0 %v8501
      %v8503 = vpop.xlane.xlu0 %8502
      %v8504 = vsel %vm4042, %v8487, 0.0
      %8505 = vadd.xlane.f32.xlu0 %v8504
      %v8506 = vpop.xlane.xlu0 %8505
      %v8507 = vsel %vm4042, %v8489, 0.0
      %8508 = vadd.xlane.f32.xlu0 %v8507
      %v8509 = vpop.xlane.xlu0 %8508
      %v8510 = vsel %vm4042, %v8491, 0.0
      %8511 = vadd.xlane.f32.xlu0 %v8510
      %v8512 = vpop.xlane.xlu0 %8511
      %v8513 = vsel %vm4042, %v8493, 0.0
      %8514 = vadd.xlane.f32.xlu0 %v8513
      %v8515 = vpop.xlane.xlu0 %8514
      %v8516 = vsel %vm4042, %v8495, 0.0
      %8517 = vadd.xlane.f32.xlu0 %v8516
      %v8518 = vpop.xlane.xlu0 %8517
      %v8519 = vsel %vm4042, %v8497, 0.0
      %8520 = vadd.xlane.f32.xlu0 %v8519
      %v8521 = vpop.xlane.xlu0 %8520
      %v8522 = vrcp.pop %v8500
      %v8523 = vrcp.pop %v8503
      %v8524 = vrcp.pop %v8506
      %v8525 = vrcp.pop %v8509
      %v8526 = vrcp.pop %v8512
      %v8527 = vrcp.pop %v8515
      %v8528 = vrcp.pop %v8518
      %v8529 = vrcp.pop %v8521
      %v8530 = vmul.f32 %v8483, %v8522
      %v8531 = vmul.f32 %v8485, %v8523
      %v8532 = vmul.f32 %v8487, %v8524
      %v8533 = vmul.f32 %v8489, %v8525
      %v8534 = vmul.f32 %v8491, %v8526
      %v8535 = vmul.f32 %v8493, %v8527
      %v8536 = vmul.f32 %v8495, %v8528
      %v8537 = vmul.f32 %v8497, %v8529
      %v8538 = vmul.f32 %v8530, %v478
      %v8539 = vmul.f32 %v8531, %v479
      %v8540 = vmul.f32 %v8532, %v480
      %v8541 = vmul.f32 %v8533, %v481
      %v8542 = vmul.f32 %v8534, %v482
      %v8543 = vmul.f32 %v8535, %v483
      %v8544 = vmul.f32 %v8536, %v484
      %v8545 = vmul.f32 %v8537, %v485
      %v8546 = vsel %vm4042, %v8538, -inf
      %8547 = vmax.xlane.f32.xlu0 %v8546
      %v8548 = vpop.xlane.xlu0 %8547
      %v8549 = vsel %vm4042, %v8539, -inf
      %8550 = vmax.xlane.f32.xlu0 %v8549
      %v8551 = vpop.xlane.xlu0 %8550
      %v8552 = vsel %vm4042, %v8540, -inf
      %8553 = vmax.xlane.f32.xlu0 %v8552
      %v8554 = vpop.xlane.xlu0 %8553
      %v8555 = vsel %vm4042, %v8541, -inf
      %8556 = vmax.xlane.f32.xlu0 %v8555
      %v8557 = vpop.xlane.xlu0 %8556
      %v8558 = vsel %vm4042, %v8542, -inf
      %8559 = vmax.xlane.f32.xlu0 %v8558
      %v8560 = vpop.xlane.xlu0 %8559
      %v8561 = vsel %vm4042, %v8543, -inf
      %8562 = vmax.xlane.f32.xlu0 %v8561
      %v8563 = vpop.xlane.xlu0 %8562
      %v8564 = vsel %vm4042, %v8544, -inf
      %8565 = vmax.xlane.f32.xlu0 %v8564
      %v8566 = vpop.xlane.xlu0 %8565
      %v8567 = vsel %vm4042, %v8545, -inf
      %8568 = vmax.xlane.f32.xlu0 %v8567
      %v8569 = vpop.xlane.xlu0 %8568
      %vm8570 = vcmp.eq.f32.partialorder %v8538, %v8548
      %vm8571 = vcmp.eq.f32.partialorder %v8539, %v8551
      %vm8572 = vcmp.eq.f32.partialorder %v8540, %v8554
      %vm8573 = vcmp.eq.f32.partialorder %v8541, %v8557
      %vm8574 = vcmp.eq.f32.partialorder %v8542, %v8560
      %vm8575 = vcmp.eq.f32.partialorder %v8543, %v8563
      %vm8576 = vcmp.eq.f32.partialorder %v8544, %v8566
      %vm8577 = vcmp.eq.f32.partialorder %v8545, %v8569
      %v8578 = vsel %vm8570, %v8538, 0.0
      %v8579 = vsel %vm8571, %v8539, 0.0
      %v8580 = vsel %vm8572, %v8540, 0.0
      %v8581 = vsel %vm8573, %v8541, 0.0
      %v8582 = vsel %vm8574, %v8542, 0.0
      %v8583 = vsel %vm8575, %v8543, 0.0
      %v8584 = vsel %vm8576, %v8544, 0.0
      %v8585 = vsel %vm8577, %v8545, 0.0
      %v8586 = vadd.f32 %v8578, 1e-07
      %v8587 = vadd.f32 %v8579, 1e-07
      %v8588 = vadd.f32 %v8580, 1e-07
      %v8589 = vadd.f32 %v8581, 1e-07
      %v8590 = vadd.f32 %v8582, 1e-07
      %v8591 = vadd.f32 %v8583, 1e-07
      %v8592 = vadd.f32 %v8584, 1e-07
      %v8593 = vadd.f32 %v8585, 1e-07
      %v8594 = vrcp.pop %v8586
      %v8595 = vmul.f32 %v8578, %v8594
      %v8596 = vrcp.pop %v8587
      %v8597 = vmul.f32 %v8579, %v8596
      %v8598 = vrcp.pop %v8588
      %v8599 = vmul.f32 %v8580, %v8598
      %v8600 = vrcp.pop %v8589
      %v8601 = vmul.f32 %v8581, %v8600
      %v8602 = vrcp.pop %v8590
      %v8603 = vmul.f32 %v8582, %v8602
      %v8604 = vrcp.pop %v8591
      %v8605 = vmul.f32 %v8583, %v8604
      %v8606 = vrcp.pop %v8592
      %v8607 = vmul.f32 %v8584, %v8606
      %v8608 = vrcp.pop %v8593
      %v8609 = vmul.f32 %v8585, %v8608
      %8611 = vset.pattern.permute.xlu0 0
      %8612 = vperm.xlu0 %8611, %v8595
      %v8613 = vpop.permute.xlu0 %8612
      %8616 = vset.pattern.permute.xlu0 0
      %8617 = vperm.xlu0 %8616, %v8597
      %v8618 = vpop.permute.xlu0 %8617
      %8621 = vset.pattern.permute.xlu0 0
      %8622 = vperm.xlu0 %8621, %v8599
      %v8623 = vpop.permute.xlu0 %8622
      %8626 = vset.pattern.permute.xlu0 0
      %8627 = vperm.xlu0 %8626, %v8601
      %v8628 = vpop.permute.xlu0 %8627
      %8631 = vset.pattern.permute.xlu0 0
      %8632 = vperm.xlu0 %8631, %v8603
      %v8633 = vpop.permute.xlu0 %8632
      %8636 = vset.pattern.permute.xlu0 0
      %8637 = vperm.xlu0 %8636, %v8605
      %v8638 = vpop.permute.xlu0 %8637
      %8641 = vset.pattern.permute.xlu0 0
      %8642 = vperm.xlu0 %8641, %v8607
      %v8643 = vpop.permute.xlu0 %8642
      %8646 = vset.pattern.permute.xlu0 0
      %8647 = vperm.xlu0 %8646, %v8609
      %v8648 = vpop.permute.xlu0 %8647
      %v8650 = vmul.f32 %v8613, %v462
      %v8651 = vmul.f32 %v8618, %v463
      %v8652 = vmul.f32 %v8623, %v464
      %v8653 = vmul.f32 %v8628, %v465
      %v8654 = vmul.f32 %v8633, %v466
      %v8655 = vmul.f32 %v8638, %v467
      %v8656 = vmul.f32 %v8643, %v468
      %v8657 = vmul.f32 %v8648, %v469
      %8658 = vset.pattern.permute.xlu0 1
      %8659 = vperm.xlu0 %8658, %v8595
      %v8660 = vpop.permute.xlu0 %8659
      %8662 = vset.pattern.permute.xlu0 1
      %8663 = vperm.xlu0 %8662, %v8597
      %v8664 = vpop.permute.xlu0 %8663
      %8666 = vset.pattern.permute.xlu0 1
      %8667 = vperm.xlu0 %8666, %v8599
      %v8668 = vpop.permute.xlu0 %8667
      %8670 = vset.pattern.permute.xlu0 1
      %8671 = vperm.xlu0 %8670, %v8601
      %v8672 = vpop.permute.xlu0 %8671
      %8674 = vset.pattern.permute.xlu0 1
      %8675 = vperm.xlu0 %8674, %v8603
      %v8676 = vpop.permute.xlu0 %8675
      %8678 = vset.pattern.permute.xlu0 1
      %8679 = vperm.xlu0 %8678, %v8605
      %v8680 = vpop.permute.xlu0 %8679
      %8682 = vset.pattern.permute.xlu0 1
      %8683 = vperm.xlu0 %8682, %v8607
      %v8684 = vpop.permute.xlu0 %8683
      %8686 = vset.pattern.permute.xlu0 1
      %8687 = vperm.xlu0 %8686, %v8609
      %v8688 = vpop.permute.xlu0 %8687
      %v8690 = vmul.f32 %v8660, %v462
      %v8691 = vmul.f32 %v8664, %v463
      %v8692 = vmul.f32 %v8668, %v464
      %v8693 = vmul.f32 %v8672, %v465
      %v8694 = vmul.f32 %v8676, %v466
      %v8695 = vmul.f32 %v8680, %v467
      %v8696 = vmul.f32 %v8684, %v468
      %v8697 = vmul.f32 %v8688, %v469
      %8706 = vrot.lane.b32.xlu0 %v8690, 96
      %v8707 = vpop.permute.xlu0 %8706
      %8708 = vrot.lane.b32.xlu0 %v8691, 96
      %v8709 = vpop.permute.xlu0 %8708
      %8710 = vrot.lane.b32.xlu0 %v8692, 96
      %v8711 = vpop.permute.xlu0 %8710
      %8712 = vrot.lane.b32.xlu0 %v8693, 96
      %v8713 = vpop.permute.xlu0 %8712
      %8714 = vrot.lane.b32.xlu0 %v8694, 96
      %v8715 = vpop.permute.xlu0 %8714
      %8716 = vrot.lane.b32.xlu0 %v8695, 96
      %v8717 = vpop.permute.xlu0 %8716
      %8718 = vrot.lane.b32.xlu0 %v8696, 96
      %v8719 = vpop.permute.xlu0 %8718
      %8720 = vrot.lane.b32.xlu0 %v8697, 96
      %v8721 = vpop.permute.xlu0 %8720
      %v8730 = vadd.f32 %v8650, %v8707
      %v8731 = vadd.f32 %v8651, %v8709
      %v8732 = vadd.f32 %v8652, %v8711
      %v8733 = vadd.f32 %v8653, %v8713
      %v8734 = vadd.f32 %v8654, %v8715
      %v8735 = vadd.f32 %v8655, %v8717
      %v8736 = vadd.f32 %v8656, %v8719
      %v8737 = vadd.f32 %v8657, %v8721
      %8738 = vset.pattern.permute.xlu0 2
      %8739 = vperm.xlu0 %8738, %v8595
      %v8740 = vpop.permute.xlu0 %8739
      %8742 = vset.pattern.permute.xlu0 2
      %8743 = vperm.xlu0 %8742, %v8597
      %v8744 = vpop.permute.xlu0 %8743
      %8746 = vset.pattern.permute.xlu0 2
      %8747 = vperm.xlu0 %8746, %v8599
      %v8748 = vpop.permute.xlu0 %8747
      %8750 = vset.pattern.permute.xlu0 2
      %8751 = vperm.xlu0 %8750, %v8601
      %v8752 = vpop.permute.xlu0 %8751
      %8754 = vset.pattern.permute.xlu0 2
      %8755 = vperm.xlu0 %8754, %v8603
      %v8756 = vpop.permute.xlu0 %8755
      %8758 = vset.pattern.permute.xlu0 2
      %8759 = vperm.xlu0 %8758, %v8605
      %v8760 = vpop.permute.xlu0 %8759
      %8762 = vset.pattern.permute.xlu0 2
      %8763 = vperm.xlu0 %8762, %v8607
      %v8764 = vpop.permute.xlu0 %8763
      %8766 = vset.pattern.permute.xlu0 2
      %8767 = vperm.xlu0 %8766, %v8609
      %v8768 = vpop.permute.xlu0 %8767
      %v8770 = vmul.f32 %v8740, %v462
      %v8771 = vmul.f32 %v8744, %v463
      %v8772 = vmul.f32 %v8748, %v464
      %v8773 = vmul.f32 %v8752, %v465
      %v8774 = vmul.f32 %v8756, %v466
      %v8775 = vmul.f32 %v8760, %v467
      %v8776 = vmul.f32 %v8764, %v468
      %v8777 = vmul.f32 %v8768, %v469
      %8786 = vrot.lane.b32.xlu0 %v8770, 64
      %v8787 = vpop.permute.xlu0 %8786
      %8788 = vrot.lane.b32.xlu0 %v8771, 64
      %v8789 = vpop.permute.xlu0 %8788
      %8790 = vrot.lane.b32.xlu0 %v8772, 64
      %v8791 = vpop.permute.xlu0 %8790
      %8792 = vrot.lane.b32.xlu0 %v8773, 64
      %v8793 = vpop.permute.xlu0 %8792
      %8794 = vrot.lane.b32.xlu0 %v8774, 64
      %v8795 = vpop.permute.xlu0 %8794
      %8796 = vrot.lane.b32.xlu0 %v8775, 64
      %v8797 = vpop.permute.xlu0 %8796
      %8798 = vrot.lane.b32.xlu0 %v8776, 64
      %v8799 = vpop.permute.xlu0 %8798
      %8800 = vrot.lane.b32.xlu0 %v8777, 64
      %v8801 = vpop.permute.xlu0 %8800
      %v8810 = vadd.f32 %v8730, %v8787
      %v8811 = vadd.f32 %v8731, %v8789
      %v8812 = vadd.f32 %v8732, %v8791
      %v8813 = vadd.f32 %v8733, %v8793
      %v8814 = vadd.f32 %v8734, %v8795
      %v8815 = vadd.f32 %v8735, %v8797
      %v8816 = vadd.f32 %v8736, %v8799
      %v8817 = vadd.f32 %v8737, %v8801
      %8818 = vset.pattern.permute.xlu0 3
      %8819 = vperm.xlu0 %8818, %v8595
      %v8820 = vpop.permute.xlu0 %8819
      %8822 = vset.pattern.permute.xlu0 3
      %8823 = vperm.xlu0 %8822, %v8597
      %v8824 = vpop.permute.xlu0 %8823
      %8826 = vset.pattern.permute.xlu0 3
      %8827 = vperm.xlu0 %8826, %v8599
      %v8828 = vpop.permute.xlu0 %8827
      %8830 = vset.pattern.permute.xlu0 3
      %8831 = vperm.xlu0 %8830, %v8601
      %v8832 = vpop.permute.xlu0 %8831
      %8834 = vset.pattern.permute.xlu0 3
      %8835 = vperm.xlu0 %8834, %v8603
      %v8836 = vpop.permute.xlu0 %8835
      %8838 = vset.pattern.permute.xlu0 3
      %8839 = vperm.xlu0 %8838, %v8605
      %v8840 = vpop.permute.xlu0 %8839
      %8842 = vset.pattern.permute.xlu0 3
      %8843 = vperm.xlu0 %8842, %v8607
      %v8844 = vpop.permute.xlu0 %8843
      %8846 = vset.pattern.permute.xlu0 3
      %8847 = vperm.xlu0 %8846, %v8609
      %v8848 = vpop.permute.xlu0 %8847
      %v8850 = vmul.f32 %v8820, %v462
      %v8851 = vmul.f32 %v8824, %v463
      %v8852 = vmul.f32 %v8828, %v464
      %v8853 = vmul.f32 %v8832, %v465
      %v8854 = vmul.f32 %v8836, %v466
      %v8855 = vmul.f32 %v8840, %v467
      %v8856 = vmul.f32 %v8844, %v468
      %v8857 = vmul.f32 %v8848, %v469
      %8866 = vrot.lane.b32.xlu0 %v8850, 32
      %v8867 = vpop.permute.xlu0 %8866
      %8868 = vrot.lane.b32.xlu0 %v8851, 32
      %v8869 = vpop.permute.xlu0 %8868
      %8870 = vrot.lane.b32.xlu0 %v8852, 32
      %v8871 = vpop.permute.xlu0 %8870
      %8872 = vrot.lane.b32.xlu0 %v8853, 32
      %v8873 = vpop.permute.xlu0 %8872
      %8874 = vrot.lane.b32.xlu0 %v8854, 32
      %v8875 = vpop.permute.xlu0 %8874
      %8876 = vrot.lane.b32.xlu0 %v8855, 32
      %v8877 = vpop.permute.xlu0 %8876
      %8878 = vrot.lane.b32.xlu0 %v8856, 32
      %v8879 = vpop.permute.xlu0 %8878
      %8880 = vrot.lane.b32.xlu0 %v8857, 32
      %v8881 = vpop.permute.xlu0 %8880
      %v8890 = vadd.f32 %v8810, %v8867
      %v8891 = vadd.f32 %v8811, %v8869
      %v8892 = vadd.f32 %v8812, %v8871
      %v8893 = vadd.f32 %v8813, %v8873
      %v8894 = vadd.f32 %v8814, %v8875
      %v8895 = vadd.f32 %v8815, %v8877
      %v8896 = vadd.f32 %v8816, %v8879
      %v8897 = vadd.f32 %v8817, %v8881
      %8906 = vrot.lane.b32.xlu0 %v8890, 96
      %v8907 = vpop.permute.xlu0 %8906
      %8908 = vrot.lane.b32.xlu0 %v8891, 96
      %v8909 = vpop.permute.xlu0 %8908
      %8910 = vrot.lane.b32.xlu0 %v8892, 96
      %v8911 = vpop.permute.xlu0 %8910
      %8912 = vrot.lane.b32.xlu0 %v8893, 96
      %v8913 = vpop.permute.xlu0 %8912
      %8914 = vrot.lane.b32.xlu0 %v8894, 96
      %v8915 = vpop.permute.xlu0 %8914
      %8916 = vrot.lane.b32.xlu0 %v8895, 96
      %v8917 = vpop.permute.xlu0 %8916
      %8918 = vrot.lane.b32.xlu0 %v8896, 96
      %v8919 = vpop.permute.xlu0 %8918
      %8920 = vrot.lane.b32.xlu0 %v8897, 96
      %v8921 = vpop.permute.xlu0 %8920
      %v8930 = vsub.f32 %v470, %v8907
      %v8931 = vsub.f32 %v471, %v8909
      %v8932 = vsub.f32 %v472, %v8911
      %v8933 = vsub.f32 %v473, %v8913
      %v8934 = vsub.f32 %v474, %v8915
      %v8935 = vsub.f32 %v475, %v8917
      %v8936 = vsub.f32 %v476, %v8919
      %v8937 = vsub.f32 %v477, %v8921
      %v8938 = vand.u32 2147483647, %v8930
      %v8939 = vand.u32 2147483647, %v8931
      %v8940 = vand.u32 2147483647, %v8932
      %v8941 = vand.u32 2147483647, %v8933
      %v8942 = vand.u32 2147483647, %v8934
      %v8943 = vand.u32 2147483647, %v8935
      %v8944 = vand.u32 2147483647, %v8936
      %v8945 = vand.u32 2147483647, %v8937
      %8954 = vrot.lane.b32.xlu0 %v8938, 32
      %v8955 = vpop.permute.xlu0 %8954
      %8956 = vrot.lane.b32.xlu0 %v8939, 32
      %v8957 = vpop.permute.xlu0 %8956
      %8958 = vrot.lane.b32.xlu0 %v8940, 32
      %v8959 = vpop.permute.xlu0 %8958
      %8960 = vrot.lane.b32.xlu0 %v8941, 32
      %v8961 = vpop.permute.xlu0 %8960
      %8962 = vrot.lane.b32.xlu0 %v8942, 32
      %v8963 = vpop.permute.xlu0 %8962
      %8964 = vrot.lane.b32.xlu0 %v8943, 32
      %v8965 = vpop.permute.xlu0 %8964
      %8966 = vrot.lane.b32.xlu0 %v8944, 32
      %v8967 = vpop.permute.xlu0 %8966
      %8968 = vrot.lane.b32.xlu0 %v8945, 32
      %v8969 = vpop.permute.xlu0 %8968
      %v8978 = vadd.f32 %v8329, %v8955
      %v8979 = vadd.f32 %v8330, %v8957
      %v8980 = vadd.f32 %v8331, %v8959
      %v8981 = vadd.f32 %v8332, %v8961
      %v8982 = vadd.f32 %v8333, %v8963
      %v8983 = vadd.f32 %v8334, %v8965
      %v8984 = vadd.f32 %v8335, %v8967
      %v8985 = vadd.f32 %v8336, %v8969
      %v8986 = vpack.c.bf16 %v8939, %v8938
      %v8987 = vpack.c.bf16 %v8941, %v8940
      %v8988 = vpack.c.bf16 %v8943, %v8942
      %v8989 = vpack.c.bf16 %v8945, %v8944
      %8994 = vrot.lane.b32.xlu0 %v8986, 32
      %v8995 = vpop.permute.xlu0 %8994
      %8996 = vrot.lane.b32.xlu0 %v8987, 32
      %v8997 = vpop.permute.xlu0 %8996
      %8998 = vrot.lane.b32.xlu0 %v8988, 32
      %v8999 = vpop.permute.xlu0 %8998
      %9000 = vrot.lane.b32.xlu0 %v8989, 32
      %v9001 = vpop.permute.xlu0 %9000
      %v9006 = vunpack.c.l.b16 %v564
      %v9007 = vunpack.c.l.b16 %v565
      %v9008 = vunpack.c.l.b16 %v566
      %v9009 = vunpack.c.l.b16 %v567
      %v9010 = vpack.c.b16 %v9007, %v9006
      %v9011 = vpack.c.b16 %v9009, %v9008
      %v9015 = vsel %vm654, %v8995, 0
      %v9018 = vsel %vm654, %v8997, 0
      %v9021 = vsel %vm654, %v8999, 0
      %v9024 = vsel %vm654, %v9001, 0
      %9026 = vmatprep.subr.bf16.mxu0 0
      %9027 = vmatpush1.bf16.msra.mxu0 0
      %9028 = vmatprep.subr.bf16.mxu0 0
      %9029 = vmatpush1.bf16.msra.mxu0 0
      %9030 = vmatprep.subr.bf16.mxu0 0
      %9031 = vmatpush1.bf16.msra.mxu0 0
      %9032 = vmatprep.subr.bf16.mxu0 0
      %9033 = vmatpush1.bf16.msra.mxu0 0
      %9034 = vmatprep.subr.bf16.mxu0 0
      %9035 = vmatpush1.bf16.msra.mxu0 0
      %9036 = vmatprep.subr.bf16.mxu0 0
      %9037 = vmatpush1.bf16.msra.mxu0 0
      %9038 = vmatprep.subr.bf16.mxu0 0
      %9039 = vmatpush1.bf16.msra.mxu0 %v9011
      %9040 = vmatprep.subr.bf16.mxu0 0
      %9041 = vmatpush1.bf16.msra.mxu0 %v9010
      %9042 = vmatprep.subr.bf16.mxu0 0
      %9043 = vmatpush2.bf16.msra.mxu0 0
      %9044 = vmatprep.subr.bf16.mxu0 0
      %9045 = vmatpush2.bf16.msra.mxu0 0
      %9046 = vmatprep.subr.bf16.mxu0 0
      %9047 = vmatpush2.bf16.msra.mxu0 0
      %9048 = vmatprep.subr.bf16.mxu0 0
      %9049 = vmatpush2.bf16.msra.mxu0 0
      %9050 = vmatprep.subr.bf16.mxu0 0
      %9051 = vmatpush2.bf16.msra.mxu0 0
      %9052 = vmatprep.subr.bf16.mxu0 0
      %9053 = vmatpush2.bf16.msra.mxu0 0
      %9054 = vmatprep.subr.bf16.mxu0 0
      %9055 = vmatpush2.bf16.msra.mxu0 0
      %9056 = vmatprep.subr.bf16.mxu0 0
      %9057 = vmatpush2.bf16.msra.mxu0 0
      %9058 = vmatprep.mubr.bf16.mxu0 0
      %9059 = vmatmul.mubr.bf16.gmra.mxu0 %v9015
      %v9060 = vpop.f32.mrf.mxu0
      %v9061 = vadd.f32 0.0, %v9060
      %v9062 = vpop.f32.mrf.mxu0
      %v9063 = vpop.f32.mrf.mxu0
      %v9064 = vadd.f32 0.0, %v9063
      %v9065 = vpop.f32.mrf.mxu0
      %9066 = vmatprep.mubr.bf16.mxu0 0
      %9067 = vmatmul.mubr.bf16.gmra.mxu0 %v9018
      %v9068 = vpop.f32.mrf.mxu0
      %v9069 = vadd.f32 0.0, %v9068
      %v9070 = vpop.f32.mrf.mxu0
      %v9071 = vpop.f32.mrf.mxu0
      %v9072 = vadd.f32 0.0, %v9071
      %v9073 = vpop.f32.mrf.mxu0
      %9074 = vmatprep.mubr.bf16.mxu0 0
      %9075 = vmatmul.mubr.bf16.gmra.mxu0 %v9021
      %v9076 = vpop.f32.mrf.mxu0
      %v9077 = vadd.f32 0.0, %v9076
      %v9078 = vpop.f32.mrf.mxu0
      %v9079 = vpop.f32.mrf.mxu0
      %v9080 = vadd.f32 0.0, %v9079
      %v9081 = vpop.f32.mrf.mxu0
      %9082 = vmatprep.mubr.bf16.mxu0 0
      %9083 = vmatmul.mubr.bf16.gmra.mxu0 %v9024
      %v9084 = vpop.f32.mrf.mxu0
      %v9085 = vadd.f32 0.0, %v9084
      %v9086 = vpop.f32.mrf.mxu0
      %v9087 = vpop.f32.mrf.mxu0
      %v9088 = vadd.f32 0.0, %v9087
      %v9089 = vpop.f32.mrf.mxu0
      %9090 = vdwg.mxu0
      %v9091 = vadd.f32 %v8442, %v9061
      %v9092 = vadd.f32 %v8443, %v9064
      %v9093 = vadd.f32 %v8444, %v9069
      %v9094 = vadd.f32 %v8445, %v9072
      %v9095 = vadd.f32 %v8446, %v9077
      %v9096 = vadd.f32 %v8447, %v9080
      %v9097 = vadd.f32 %v8448, %v9085
      %v9098 = vadd.f32 %v8449, %v9088
      %v9099 = vmul.f32 %v8978, 0.35355338
      %v9100 = vmul.f32 %v8979, 0.35355338
      %v9101 = vmul.f32 %v8980, 0.35355338
      %v9102 = vmul.f32 %v8981, 0.35355338
      %v9103 = vmul.f32 %v8982, 0.35355338
      %v9104 = vmul.f32 %v8983, 0.35355338
      %v9105 = vmul.f32 %v8984, 0.35355338
      %v9106 = vmul.f32 %v8985, 0.35355338
      %v9108 = vlaneseq
      %v9109 = vshrl.u32 %v9108, 7
      %v9110 = vsub.s32 0, %v9109
      %v9111 = vrot.slane %v568, %v9110
      %v9113 = vadd.f32 %v9091, %v9111
      %v9114 = vadd.f32 %v9092, %v9111
      %v9115 = vadd.f32 %v9093, %v9111
      %v9116 = vadd.f32 %v9094, %v9111
      %v9117 = vadd.f32 %v9095, %v9111
      %v9118 = vadd.f32 %v9096, %v9111
      %v9119 = vadd.f32 %v9097, %v9111
      %v9120 = vadd.f32 %v9098, %v9111
      %vm9121 = vcmp.ge.f32.partialorder %v9113, 0.0
      %vm9122 = vcmp.ge.f32.partialorder %v9114, 0.0
      %vm9123 = vcmp.ge.f32.partialorder %v9115, 0.0
      %vm9124 = vcmp.ge.f32.partialorder %v9116, 0.0
      %vm9125 = vcmp.ge.f32.partialorder %v9117, 0.0
      %vm9126 = vcmp.ge.f32.partialorder %v9118, 0.0
      %vm9127 = vcmp.ge.f32.partialorder %v9119, 0.0
      %vm9128 = vcmp.ge.f32.partialorder %v9120, 0.0
      %v9129 = vmul.f32 %v9113, 0.01
      %v9130 = vmul.f32 %v9114, 0.01
      %v9131 = vmul.f32 %v9115, 0.01
      %v9132 = vmul.f32 %v9116, 0.01
      %v9133 = vmul.f32 %v9117, 0.01
      %v9134 = vmul.f32 %v9118, 0.01
      %v9135 = vmul.f32 %v9119, 0.01
      %v9136 = vmul.f32 %v9120, 0.01
      %v9137 = vsel %vm9121, %v9113, %v9129
      %v9138 = vsel %vm9122, %v9114, %v9130
      %v9139 = vsel %vm9123, %v9115, %v9131
      %v9140 = vsel %vm9124, %v9116, %v9132
      %v9141 = vsel %vm9125, %v9117, %v9133
      %v9142 = vsel %vm9126, %v9118, %v9134
      %v9143 = vsel %vm9127, %v9119, %v9135
      %v9144 = vsel %vm9128, %v9120, %v9136
      %v9145 = vadd.f32 %v9113, -2.0
      %v9146 = vadd.f32 %v9114, -2.0
      %v9147 = vadd.f32 %v9115, -2.0
      %v9148 = vadd.f32 %v9116, -2.0
      %v9149 = vadd.f32 %v9117, -2.0
      %v9150 = vadd.f32 %v9118, -2.0
      %v9151 = vadd.f32 %v9119, -2.0
      %v9152 = vadd.f32 %v9120, -2.0
      %v9153 = vsub.f32 0.0, %v9145
      %v9154 = vsub.f32 0.0, %v9146
      %v9155 = vsub.f32 0.0, %v9147
      %v9156 = vsub.f32 0.0, %v9148
      %v9157 = vsub.f32 0.0, %v9149
      %v9158 = vsub.f32 0.0, %v9150
      %v9159 = vsub.f32 0.0, %v9151
      %v9160 = vsub.f32 0.0, %v9152
      %v9161 = vmul.f32 %v9153, 1.442695
      %v9162 = vpow.pop %v9161
      %v9163 = vmul.f32 %v9154, 1.442695
      %v9164 = vpow.pop %v9163
      %v9165 = vmul.f32 %v9155, 1.442695
      %v9166 = vpow.pop %v9165
      %v9167 = vmul.f32 %v9156, 1.442695
      %v9168 = vpow.pop %v9167
      %v9169 = vmul.f32 %v9157, 1.442695
      %v9170 = vpow.pop %v9169
      %v9171 = vmul.f32 %v9158, 1.442695
      %v9172 = vpow.pop %v9171
      %v9173 = vmul.f32 %v9159, 1.442695
      %v9174 = vpow.pop %v9173
      %v9175 = vmul.f32 %v9160, 1.442695
      %v9176 = vpow.pop %v9175
      %v9177 = vadd.f32 %v9162, 1.0
      %v9178 = vadd.f32 %v9164, 1.0
      %v9179 = vadd.f32 %v9166, 1.0
      %v9180 = vadd.f32 %v9168, 1.0
      %v9181 = vadd.f32 %v9170, 1.0
      %v9182 = vadd.f32 %v9172, 1.0
      %v9183 = vadd.f32 %v9174, 1.0
      %v9184 = vadd.f32 %v9176, 1.0
      %v9185 = vrcp.pop %v9177
      %v9186 = vrcp.pop %v9178
      %v9187 = vrcp.pop %v9179
      %v9188 = vrcp.pop %v9180
      %v9189 = vrcp.pop %v9181
      %v9190 = vrcp.pop %v9182
      %v9191 = vrcp.pop %v9183
      %v9192 = vrcp.pop %v9184
      %9201 = vrot.lane.b32.xlu0 %v9137, 32
      %v9202 = vpop.permute.xlu0 %9201
      %9203 = vrot.lane.b32.xlu0 %v9138, 32
      %v9204 = vpop.permute.xlu0 %9203
      %9205 = vrot.lane.b32.xlu0 %v9139, 32
      %v9206 = vpop.permute.xlu0 %9205
      %9207 = vrot.lane.b32.xlu0 %v9140, 32
      %v9208 = vpop.permute.xlu0 %9207
      %9209 = vrot.lane.b32.xlu0 %v9141, 32
      %v9210 = vpop.permute.xlu0 %9209
      %9211 = vrot.lane.b32.xlu0 %v9142, 32
      %v9212 = vpop.permute.xlu0 %9211
      %9213 = vrot.lane.b32.xlu0 %v9143, 32
      %v9214 = vpop.permute.xlu0 %9213
      %9215 = vrot.lane.b32.xlu0 %v9144, 32
      %v9216 = vpop.permute.xlu0 %9215
      %v9225 = vmul.f32 %v9185, %v9202
      %v9226 = vmul.f32 %v9186, %v9204
      %v9227 = vmul.f32 %v9187, %v9206
      %v9228 = vmul.f32 %v9188, %v9208
      %v9229 = vmul.f32 %v9189, %v9210
      %v9230 = vmul.f32 %v9190, %v9212
      %v9231 = vmul.f32 %v9191, %v9214
      %v9232 = vmul.f32 %v9192, %v9216
      %v9233 = vsub.f32 1.0, %v9185
      %v9234 = vsub.f32 1.0, %v9186
      %v9235 = vsub.f32 1.0, %v9187
      %v9236 = vsub.f32 1.0, %v9188
      %v9237 = vsub.f32 1.0, %v9189
      %v9238 = vsub.f32 1.0, %v9190
      %v9239 = vsub.f32 1.0, %v9191
      %v9240 = vsub.f32 1.0, %v9192
      %9249 = vrot.lane.b32.xlu0 %v9099, 32
      %v9250 = vpop.permute.xlu0 %9249
      %9251 = vrot.lane.b32.xlu0 %v9100, 32
      %v9252 = vpop.permute.xlu0 %9251
      %9253 = vrot.lane.b32.xlu0 %v9101, 32
      %v9254 = vpop.permute.xlu0 %9253
      %9255 = vrot.lane.b32.xlu0 %v9102, 32
      %v9256 = vpop.permute.xlu0 %9255
      %9257 = vrot.lane.b32.xlu0 %v9103, 32
      %v9258 = vpop.permute.xlu0 %9257
      %9259 = vrot.lane.b32.xlu0 %v9104, 32
      %v9260 = vpop.permute.xlu0 %9259
      %9261 = vrot.lane.b32.xlu0 %v9105, 32
      %v9262 = vpop.permute.xlu0 %9261
      %9263 = vrot.lane.b32.xlu0 %v9106, 32
      %v9264 = vpop.permute.xlu0 %9263
      %v9273 = vmul.f32 %v9233, %v9250
      %v9274 = vmul.f32 %v9234, %v9252
      %v9275 = vmul.f32 %v9235, %v9254
      %v9276 = vmul.f32 %v9236, %v9256
      %v9277 = vmul.f32 %v9237, %v9258
      %v9278 = vmul.f32 %v9238, %v9260
      %v9279 = vmul.f32 %v9239, %v9262
      %v9280 = vmul.f32 %v9240, %v9264
      %v9281 = vadd.f32 %v9225, %v9273
      %v9282 = vadd.f32 %v9226, %v9274
      %v9283 = vadd.f32 %v9227, %v9275
      %v9284 = vadd.f32 %v9228, %v9276
      %v9285 = vadd.f32 %v9229, %v9277
      %v9286 = vadd.f32 %v9230, %v9278
      %v9287 = vadd.f32 %v9231, %v9279
      %v9288 = vadd.f32 %v9232, %v9280
      %v9289 = vpack.c.bf16 %v9282, %v9281
      %v9290 = vpack.c.bf16 %v9284, %v9283
      %v9291 = vpack.c.bf16 %v9286, %v9285
      %v9292 = vpack.c.bf16 %v9288, %v9287
      %v9294 = vlaneseq
      %v9295 = vshrl.u32 %v9294, 7
      %v9296 = vsub.s32 0, %v9295
      %v9297 = vrot.slane %v573, %v9296
      %9303 = vrot.lane.b32.xlu0 %v9289, 96
      %v9304 = vpop.permute.xlu0 %9303
      %9305 = vrot.lane.b32.xlu0 %v9290, 96
      %v9306 = vpop.permute.xlu0 %9305
      %9307 = vrot.lane.b32.xlu0 %v9291, 96
      %v9308 = vpop.permute.xlu0 %9307
      %9309 = vrot.lane.b32.xlu0 %v9292, 96
      %v9310 = vpop.permute.xlu0 %9309
      %v9315 = vunpack.c.l.b16 %v569
      %v9316 = vunpack.c.l.b16 %v570
      %v9317 = vunpack.c.l.b16 %v571
      %v9318 = vunpack.c.l.b16 %v572
      %v9319 = vpack.c.b16 %v9316, %v9315
      %v9320 = vpack.c.b16 %v9318, %v9317
      %v9324 = vsel %vm654, %v9304, 0
      %v9327 = vsel %vm654, %v9306, 0
      %v9330 = vsel %vm654, %v9308, 0
      %v9333 = vsel %vm654, %v9310, 0
      %9335 = vmatprep.subr.bf16.mxu0 0
      %9336 = vmatpush1.bf16.msra.mxu0 0
      %9337 = vmatprep.subr.bf16.mxu0 0
      %9338 = vmatpush1.bf16.msra.mxu0 0
      %9339 = vmatprep.subr.bf16.mxu0 0
      %9340 = vmatpush1.bf16.msra.mxu0 0
      %9341 = vmatprep.subr.bf16.mxu0 0
      %9342 = vmatpush1.bf16.msra.mxu0 0
      %9343 = vmatprep.subr.bf16.mxu0 0
      %9344 = vmatpush1.bf16.msra.mxu0 0
      %9345 = vmatprep.subr.bf16.mxu0 0
      %9346 = vmatpush1.bf16.msra.mxu0 0
      %9347 = vmatprep.subr.bf16.mxu0 0
      %9348 = vmatpush1.bf16.msra.mxu0 %v9320
      %9349 = vmatprep.subr.bf16.mxu0 0
      %9350 = vmatpush1.bf16.msra.mxu0 %v9319
      %9351 = vmatprep.subr.bf16.mxu0 0
      %9352 = vmatpush2.bf16.msra.mxu0 0
      %9353 = vmatprep.subr.bf16.mxu0 0
      %9354 = vmatpush2.bf16.msra.mxu0 0
      %9355 = vmatprep.subr.bf16.mxu0 0
      %9356 = vmatpush2.bf16.msra.mxu0 0
      %9357 = vmatprep.subr.bf16.mxu0 0
      %9358 = vmatpush2.bf16.msra.mxu0 0
      %9359 = vmatprep.subr.bf16.mxu0 0
      %9360 = vmatpush2.bf16.msra.mxu0 0
      %9361 = vmatprep.subr.bf16.mxu0 0
      %9362 = vmatpush2.bf16.msra.mxu0 0
      %9363 = vmatprep.subr.bf16.mxu0 0
      %9364 = vmatpush2.bf16.msra.mxu0 0
      %9365 = vmatprep.subr.bf16.mxu0 0
      %9366 = vmatpush2.bf16.msra.mxu0 0
      %9367 = vmatprep.mubr.bf16.mxu0 0
      %9368 = vmatmul.mubr.bf16.gmra.mxu0 %v9324
      %v9369 = vpop.f32.mrf.mxu0
      %v9370 = vadd.f32 %v9297, %v9369
      %v9371 = vpop.f32.mrf.mxu0
      %v9372 = vpop.f32.mrf.mxu0
      %v9373 = vadd.f32 %v9297, %v9372
      %v9374 = vpop.f32.mrf.mxu0
      %9375 = vmatprep.mubr.bf16.mxu0 0
      %9376 = vmatmul.mubr.bf16.gmra.mxu0 %v9327
      %v9377 = vpop.f32.mrf.mxu0
      %v9378 = vadd.f32 %v9297, %v9377
      %v9379 = vpop.f32.mrf.mxu0
      %v9380 = vpop.f32.mrf.mxu0
      %v9381 = vadd.f32 %v9297, %v9380
      %v9382 = vpop.f32.mrf.mxu0
      %9383 = vmatprep.mubr.bf16.mxu0 0
      %9384 = vmatmul.mubr.bf16.gmra.mxu0 %v9330
      %v9385 = vpop.f32.mrf.mxu0
      %v9386 = vadd.f32 %v9297, %v9385
      %v9387 = vpop.f32.mrf.mxu0
      %v9388 = vpop.f32.mrf.mxu0
      %v9389 = vadd.f32 %v9297, %v9388
      %v9390 = vpop.f32.mrf.mxu0
      %9391 = vmatprep.mubr.bf16.mxu0 0
      %9392 = vmatmul.mubr.bf16.gmra.mxu0 %v9333
      %v9393 = vpop.f32.mrf.mxu0
      %v9394 = vadd.f32 %v9297, %v9393
      %v9395 = vpop.f32.mrf.mxu0
      %v9396 = vpop.f32.mrf.mxu0
      %v9397 = vadd.f32 %v9297, %v9396
      %v9398 = vpop.f32.mrf.mxu0
      %9399 = vdwg.mxu0
      %vm9400 = vcmp.ge.f32.partialorder %v9370, 0.0
      %vm9401 = vcmp.ge.f32.partialorder %v9373, 0.0
      %vm9402 = vcmp.ge.f32.partialorder %v9378, 0.0
      %vm9403 = vcmp.ge.f32.partialorder %v9381, 0.0
      %vm9404 = vcmp.ge.f32.partialorder %v9386, 0.0
      %vm9405 = vcmp.ge.f32.partialorder %v9389, 0.0
      %vm9406 = vcmp.ge.f32.partialorder %v9394, 0.0
      %vm9407 = vcmp.ge.f32.partialorder %v9397, 0.0
      %v9408 = vmul.f32 %v9370, 0.01
      %v9409 = vmul.f32 %v9373, 0.01
      %v9410 = vmul.f32 %v9378, 0.01
      %v9411 = vmul.f32 %v9381, 0.01
      %v9412 = vmul.f32 %v9386, 0.01
      %v9413 = vmul.f32 %v9389, 0.01
      %v9414 = vmul.f32 %v9394, 0.01
      %v9415 = vmul.f32 %v9397, 0.01
      %v9416 = vsel %vm9400, %v9370, %v9408
      %v9417 = vsel %vm9401, %v9373, %v9409
      %v9418 = vsel %vm9402, %v9378, %v9410
      %v9419 = vsel %vm9403, %v9381, %v9411
      %v9420 = vsel %vm9404, %v9386, %v9412
      %v9421 = vsel %vm9405, %v9389, %v9413
      %v9422 = vsel %vm9406, %v9394, %v9414
      %v9423 = vsel %vm9407, %v9397, %v9415
      %v9424 = vadd.f32 %v9370, -2.0
      %v9425 = vadd.f32 %v9373, -2.0
      %v9426 = vadd.f32 %v9378, -2.0
      %v9427 = vadd.f32 %v9381, -2.0
      %v9428 = vadd.f32 %v9386, -2.0
      %v9429 = vadd.f32 %v9389, -2.0
      %v9430 = vadd.f32 %v9394, -2.0
      %v9431 = vadd.f32 %v9397, -2.0
      %v9432 = vsub.f32 0.0, %v9424
      %v9433 = vsub.f32 0.0, %v9425
      %v9434 = vsub.f32 0.0, %v9426
      %v9435 = vsub.f32 0.0, %v9427
      %v9436 = vsub.f32 0.0, %v9428
      %v9437 = vsub.f32 0.0, %v9429
      %v9438 = vsub.f32 0.0, %v9430
      %v9439 = vsub.f32 0.0, %v9431
      %v9440 = vmul.f32 %v9432, 1.442695
      %v9441 = vpow.pop %v9440
      %v9442 = vmul.f32 %v9433, 1.442695
      %v9443 = vpow.pop %v9442
      %v9444 = vmul.f32 %v9434, 1.442695
      %v9445 = vpow.pop %v9444
      %v9446 = vmul.f32 %v9435, 1.442695
      %v9447 = vpow.pop %v9446
      %v9448 = vmul.f32 %v9436, 1.442695
      %v9449 = vpow.pop %v9448
      %v9450 = vmul.f32 %v9437, 1.442695
      %v9451 = vpow.pop %v9450
      %v9452 = vmul.f32 %v9438, 1.442695
      %v9453 = vpow.pop %v9452
      %v9454 = vmul.f32 %v9439, 1.442695
      %v9455 = vpow.pop %v9454
      %v9456 = vadd.f32 %v9441, 1.0
      %v9457 = vadd.f32 %v9443, 1.0
      %v9458 = vadd.f32 %v9445, 1.0
      %v9459 = vadd.f32 %v9447, 1.0
      %v9460 = vadd.f32 %v9449, 1.0
      %v9461 = vadd.f32 %v9451, 1.0
      %v9462 = vadd.f32 %v9453, 1.0
      %v9463 = vadd.f32 %v9455, 1.0
      %v9464 = vrcp.pop %v9456
      %v9465 = vrcp.pop %v9457
      %v9466 = vrcp.pop %v9458
      %v9467 = vrcp.pop %v9459
      %v9468 = vrcp.pop %v9460
      %v9469 = vrcp.pop %v9461
      %v9470 = vrcp.pop %v9462
      %v9471 = vrcp.pop %v9463
      %9480 = vrot.lane.b32.xlu0 %v9416, 32
      %v9481 = vpop.permute.xlu0 %9480
      %9482 = vrot.lane.b32.xlu0 %v9417, 32
      %v9483 = vpop.permute.xlu0 %9482
      %9484 = vrot.lane.b32.xlu0 %v9418, 32
      %v9485 = vpop.permute.xlu0 %9484
      %9486 = vrot.lane.b32.xlu0 %v9419, 32
      %v9487 = vpop.permute.xlu0 %9486
      %9488 = vrot.lane.b32.xlu0 %v9420, 32
      %v9489 = vpop.permute.xlu0 %9488
      %9490 = vrot.lane.b32.xlu0 %v9421, 32
      %v9491 = vpop.permute.xlu0 %9490
      %9492 = vrot.lane.b32.xlu0 %v9422, 32
      %v9493 = vpop.permute.xlu0 %9492
      %9494 = vrot.lane.b32.xlu0 %v9423, 32
      %v9495 = vpop.permute.xlu0 %9494
      %v9504 = vmul.f32 %v9464, %v9481
      %v9505 = vmul.f32 %v9465, %v9483
      %v9506 = vmul.f32 %v9466, %v9485
      %v9507 = vmul.f32 %v9467, %v9487
      %v9508 = vmul.f32 %v9468, %v9489
      %v9509 = vmul.f32 %v9469, %v9491
      %v9510 = vmul.f32 %v9470, %v9493
      %v9511 = vmul.f32 %v9471, %v9495
      %v9512 = vsub.f32 1.0, %v9464
      %v9513 = vsub.f32 1.0, %v9465
      %v9514 = vsub.f32 1.0, %v9466
      %v9515 = vsub.f32 1.0, %v9467
      %v9516 = vsub.f32 1.0, %v9468
      %v9517 = vsub.f32 1.0, %v9469
      %v9518 = vsub.f32 1.0, %v9470
      %v9519 = vsub.f32 1.0, %v9471
      %v9520 = vmul.f32 %v9512, %v9281
      %v9521 = vmul.f32 %v9513, %v9282
      %v9522 = vmul.f32 %v9514, %v9283
      %v9523 = vmul.f32 %v9515, %v9284
      %v9524 = vmul.f32 %v9516, %v9285
      %v9525 = vmul.f32 %v9517, %v9286
      %v9526 = vmul.f32 %v9518, %v9287
      %v9527 = vmul.f32 %v9519, %v9288
      %v9528 = vadd.f32 %v9504, %v9520
      %v9529 = vadd.f32 %v9505, %v9521
      %v9530 = vadd.f32 %v9506, %v9522
      %v9531 = vadd.f32 %v9507, %v9523
      %v9532 = vadd.f32 %v9508, %v9524
      %v9533 = vadd.f32 %v9509, %v9525
      %v9534 = vadd.f32 %v9510, %v9526
      %v9535 = vadd.f32 %v9511, %v9527
      %9544 = vrot.lane.b32.xlu0 %v9528, 96
      %v9545 = vpop.permute.xlu0 %9544
      %9546 = vrot.lane.b32.xlu0 %v9529, 96
      %v9547 = vpop.permute.xlu0 %9546
      %9548 = vrot.lane.b32.xlu0 %v9530, 96
      %v9549 = vpop.permute.xlu0 %9548
      %9550 = vrot.lane.b32.xlu0 %v9531, 96
      %v9551 = vpop.permute.xlu0 %9550
      %9552 = vrot.lane.b32.xlu0 %v9532, 96
      %v9553 = vpop.permute.xlu0 %9552
      %9554 = vrot.lane.b32.xlu0 %v9533, 96
      %v9555 = vpop.permute.xlu0 %9554
      %9556 = vrot.lane.b32.xlu0 %v9534, 96
      %v9557 = vpop.permute.xlu0 %9556
      %9558 = vrot.lane.b32.xlu0 %v9535, 96
      %v9559 = vpop.permute.xlu0 %9558
      %9568 = vst.msk [vmem:[%s459] sm:$0xff] %vm654, %v9545
      %9569 = vst.msk [vmem:[%s459 + $0x8] sm:$0xff] %vm654, %v9547
      %9570 = vst.msk [vmem:[%s459 + $0x10] sm:$0xff] %vm654, %v9549
      %9571 = vst.msk [vmem:[%s459 + $0x18] sm:$0xff] %vm654, %v9551
      %9572 = vst.msk [vmem:[%s459 + $0x20] sm:$0xff] %vm654, %v9553
      %9573 = vst.msk [vmem:[%s459 + $0x28] sm:$0xff] %vm654, %v9555
      %9574 = vst.msk [vmem:[%s459 + $0x30] sm:$0xff] %vm654, %v9557
      %9575 = vst.msk [vmem:[%s459 + $0x38] sm:$0xff] %vm654, %v9559
      %s9576 = smul.u32 8, %s23
      %p9577 = scmp.lt.s32.totalorder %s9576, 31
      %s9578 = scalar_select %p9577, %s9576, 31
      %s9579 = smul.addr %s9578, 8
      %s9580 = scalar_lea.vmem %s12, %s9579
      // Predicated region
      $region69: #{mcan_pallas.1} parent=67 // pred_check
        %p9581 = pneg %p308
      $region70: #{mcan_pallas.1} parent=67 // pred_check_branch
        %9583 = sbr.rel (%p9581) target = $region72
      $region71: #{mcan_pallas.1} parent=67 // pred_region
        %s9584 = smul.u32 8, %s23
      $region72: #{mcan_pallas.1} parent=67 // pred_fallthru
        _
    $region68: #{mcan_pallas.1} parent=5 // pred_fallthru
      _
    %p9585 = scmp.le.s32.totalorder 2, %s18
    // Predicated region
    $region73: #{mcan_pallas.1} parent=5 // pred_check
      %p9586 = pneg %p9585
    $region74: #{mcan_pallas.1} parent=5 // pred_check_branch
      %9588 = sbr.rel (%p9586) target = $region76
    $region75: #{mcan_pallas.1} parent=5 // pred_region
      %s9589 = ssub.s32 %s18, 2
      // Predicated region
      $region77: #{mcan_pallas.1} parent=75 // pred_check
        %p9590 = pneg %p314
      $region78: #{mcan_pallas.1} parent=75 // pred_check_branch
        %9592 = sbr.rel (%p9590) target = $region80
      $region79: #{mcan_pallas.1} parent=75 // pred_region
        %s9593 = smul.u32 8, %s24
        %p9594 = scmp.lt.s32.totalorder %s9593, 31
        %s9595 = scalar_select %p9594, %s9593, 31
        %s9596 = smul.addr %s9595, 8
        %s9597 = scalar_lea.vmem %s12, %s9596
      $region80: #{mcan_pallas.1} parent=75 // pred_fallthru
        _
    $region76: #{mcan_pallas.1} parent=5 // pred_fallthru
      _
  $region6: #{mcan_pallas.1} parent=0 // loop_footer
    %s22 = sadd.s32 1, %s18
  $region7: #{mcan_pallas.1} parent=0 // loop_footer_branch
    %17 = sbr.rel target = $region3
  $region8: #{mcan_pallas.1} parent=0 // loop_exit
    _

</llo_original>
